<compile_context>
chip_gen: v6e
topology: v6e:2x2x1
jax: 0.10.0
libtpu: 0.0.40
codegen_flags: <defaults>
</compile_context>

<pallas_src>
import math
import functools

import jax
import jax.numpy as jnp
from jax.experimental import pallas as pl
from jax.experimental.pallas import tpu as pltpu

# ---------------- config (toy shapes consistent with the module) ----------------
VOCAB = 128
HIDDEN = 32
NUM_LAYERS = 2          # BERT encoder layers
NUM_HEADS = 2
HEAD_DIM = HIDDEN // NUM_HEADS
INTERMEDIATE = 64
MAX_POS = 64
TYPE_VOCAB = 2
LSTM_HIDDEN = 16        # config['hidden_size'] of the BiLSTM
CLASS_NUM = 9
SEQ = 8
BATCH = 2
LN_EPS = 1e-12
LANES = 128             # lane-dense packing width for the parameter slab
USE_CRF = False         # implemented inference branch: target=None, use_crf=False


# ---------------------------- in-kernel math helpers ----------------------------

def _sigmoid(z):
    return 1.0 / (1.0 + jnp.exp(-z))


def _gelu(h):
    # TODO(synk): HF BERT 'gelu' is exact erf-GELU; tanh approximation used for portable
    # Mosaic transcendental lowering.
    c = math.sqrt(2.0 / math.pi)
    return 0.5 * h * (1.0 + jnp.tanh(c * (h + 0.044715 * h * h * h)))


def _layernorm(x, g, b):
    mu = jnp.mean(x, axis=-1, keepdims=True)
    d = x - mu
    var = jnp.mean(d * d, axis=-1, keepdims=True)
    return d * jax.lax.rsqrt(var + LN_EPS) * g + b


def _lstm_direction(x_b, w_ih, w_hh, bias, reverse):
    """One-direction LSTM over a single sequence. x_b: (S, H) -> (S, LH), time order."""
    s_len = x_b.shape[0]
    lh = w_hh.shape[0]
    # Hoist the input->hidden projection out of the recurrence: one (S,H)x(H,4LH) matmul.
    xz = jnp.dot(x_b, w_ih, preferred_element_type=jnp.float32) + bias      # (S, 4*LH)
    h = jnp.zeros((1, lh), jnp.float32)
    c = jnp.zeros((1, lh), jnp.float32)
    out = jnp.zeros((s_len, lh), jnp.float32)
    row_ids = jax.lax.broadcasted_iota(jnp.int32, (s_len, 1), 0)
    order = range(s_len - 1, -1, -1) if reverse else range(s_len)
    for t in order:                                   # static unroll (S=8)
        z = xz[t:t + 1, :] + jnp.dot(h, w_hh, preferred_element_type=jnp.float32)
        i = _sigmoid(z[:, 0:lh])
        f = _sigmoid(z[:, lh:2 * lh])
        g = jnp.tanh(z[:, 2 * lh:3 * lh])
        o = _sigmoid(z[:, 3 * lh:4 * lh])
        c = f * c + i * g
        h = o * jnp.tanh(c)
        out = jnp.where(row_ids == t, h, out)         # scatter row t without relayout
    return out


# ---------------------------- the single fused kernel ----------------------------

def _fused_kernel(ids_ref, amask_ref, slab_ref, out_ref, *, offs):
    f32 = jnp.float32
    bs = BATCH * SEQ

    def P(name):
        o, r, c = offs[name]                          # static Python ints
        return slab_ref[o:o + r, 0:c]

    # ---- embeddings: one-hot gather on the MXU (no XLA gather, table resident in VMEM) ----
    ids = ids_ref[...]                                                  # (BS, 1) int32
    iota_v = jax.lax.broadcasted_iota(jnp.int32, (bs, VOCAB), 1)
    one_hot = (iota_v == ids).astype(f32)                               # (BS, VOCAB)
    x = jnp.dot(one_hot, P('word_emb'), preferred_element_type=f32)     # (BS, H)
    pos = P('pos_emb')                                                  # (SEQ, H)
    x = x + jnp.concatenate([pos] * BATCH, axis=0)
    x = x + P('type_emb')                                               # token_type_ids == 0
    x = _layernorm(x, P('emb_ln_g'), P('emb_ln_b'))

    # extended additive attention mask: (1 - mask) * -10000, shape (B, S)
    add_mask = (1.0 - amask_ref[...]) * -10000.0

    scale = 1.0 / math.sqrt(HEAD_DIM)
    for l in range(NUM_LAYERS):
        # fused QKV projection: one (BS,H) x (H,3H) matmul
        qkv = jnp.dot(x, P(f'wqkv{l}'), preferred_element_type=f32) + P(f'bqkv{l}')
        wo = P(f'wo{l}')
        attn_rows = []
        for b in range(BATCH):                         # static unroll; no grid loop
            r0 = b * SEQ
            am_b = add_mask[b:b + 1, :]                # (1, S) broadcast over query rows
            acc = jnp.zeros((SEQ, HIDDEN), f32)
            for h in range(NUM_HEADS):                 # heads via static lane slices
                c0 = h * HEAD_DIM
                q = qkv[r0:r0 + SEQ, c0:c0 + HEAD_DIM]
                k = qkv[r0:r0 + SEQ, HIDDEN + c0:HIDDEN + c0 + HEAD_DIM]
                v = qkv[r0:r0 + SEQ, 2 * HIDDEN + c0:2 * HIDDEN + c0 + HEAD_DIM]
                s = jax.lax.dot_general(q, k, (((1,), (1,)), ((), ())),
                                        preferred_element_type=f32) * scale + am_b
                s = s - jnp.max(s, axis=-1, keepdims=True)
                e = jnp.exp(s)
                p_attn = e * pl.reciprocal(jnp.sum(e, axis=-1, keepdims=True), approx=True)
                ctx = jnp.dot(p_attn, v, preferred_element_type=f32)    # (S, dH)
                # fold the output projection per head: sum_h ctx_h @ Wo[h*dH:(h+1)*dH, :]
                acc = acc + jnp.dot(ctx, wo[c0:c0 + HEAD_DIM, :],
                                    preferred_element_type=f32)
            attn_rows.append(acc)
        attn_out = jnp.concatenate(attn_rows, axis=0) + P(f'bo{l}')      # (BS, H)
        x = _layernorm(x + attn_out, P(f'ln1_g{l}'), P(f'ln1_b{l}'))

        hmid = _gelu(jnp.dot(x, P(f'w1{l}'), preferred_element_type=f32) + P(f'b1{l}'))
        ffn = jnp.dot(hmid, P(f'w2{l}'), preferred_element_type=f32) + P(f'b2{l}')
        x = _layernorm(x + ffn, P(f'ln2_g{l}'), P(f'ln2_b{l}'))

    # ---- BiLSTM over the BERT output, then classifier + argmax (logits never hit HBM) ----
    # dropout(lstm_out) is identity at inference (eval mode).
    wc = P('wc')
    bc = P('bc')
    wc_fwd = wc[0:LSTM_HIDDEN, :]
    wc_bwd = wc[LSTM_HIDDEN:2 * LSTM_HIDDEN, :]
    for b in range(BATCH):
        x_b = x[b * SEQ:(b + 1) * SEQ, :]                                # (S, H)
        fwd = _lstm_direction(x_b, P('lstm_wih_f'), P('lstm_whh_f'), P('lstm_b_f'),
                              reverse=False)                              # (S, LH)
        bwd = _lstm_direction(x_b, P('lstm_wih_b'), P('lstm_whh_b'), P('lstm_b_b'),
                              reverse=True)                               # (S, LH)
        logits_b = (jnp.dot(fwd, wc_fwd, preferred_element_type=f32)
                    + jnp.dot(bwd, wc_bwd, preferred_element_type=f32) + bc)   # (S, C)
        # first-occurrence argmax over classes (matches torch.max indices)
        m = jnp.max(logits_b, axis=-1, keepdims=True)
        idx = jax.lax.broadcasted_iota(jnp.int32, logits_b.shape, 1)
        pred_b = jnp.min(jnp.where(logits_b == m, idx, jnp.int32(CLASS_NUM)),
                         axis=-1, keepdims=True)                          # (S, 1) int32
        out_ref[b * SEQ:(b + 1) * SEQ, :] = pred_b


# ---------------------------- parameter packing ----------------------------

def _pad8(n):
    return ((n + 7) // 8) * 8


class _Packer:
    """Packs every parameter into one lane-dense (rows, 128) f32 slab (8-aligned rows)."""

    def __init__(self):
        self._blocks = []
        self._offsets = {}
        self._row = 0

    def add(self, name, arr):
        arr = jnp.asarray(arr, jnp.float32)
        if arr.ndim == 1:
            arr = arr.reshape(1, -1)
        r, c = arr.shape
        assert c <= LANES
        rp = _pad8(r)
        blk = jnp.zeros((rp, LANES), jnp.float32).at[:r, :c].set(arr)
        self._blocks.append(blk)
        self._offsets[name] = (self._row, r, c)
        self._row += rp

    def finish(self):
        return jnp.concatenate(self._blocks, axis=0), self._offsets


def init_params_packed(key):
    def dense(k, shape):
        return 0.02 * jax.random.normal(k, shape, dtype=jnp.float32)

    keys = jax.random.split(key, 5 + NUM_LAYERS)
    pk = _Packer()
    pk.add('word_emb', dense(keys[0], (VOCAB, HIDDEN)))
    pk.add('pos_emb', dense(keys[1], (MAX_POS, HIDDEN))[:SEQ])           # only first SEQ rows used
    pk.add('type_emb', dense(keys[2], (TYPE_VOCAB, HIDDEN))[0:1])        # token_type_ids == 0
    pk.add('emb_ln_g', jnp.ones((HIDDEN,), jnp.float32))
    pk.add('emb_ln_b', jnp.zeros((HIDDEN,), jnp.float32))
    for l in range(NUM_LAYERS):
        lk = jax.random.split(keys[4 + l], 6)
        wq = dense(lk[0], (HIDDEN, HIDDEN))
        wk = dense(lk[1], (HIDDEN, HIDDEN))
        wv = dense(lk[2], (HIDDEN, HIDDEN))
        pk.add(f'wqkv{l}', jnp.concatenate([wq, wk, wv], axis=1))        # fused QKV weight
        pk.add(f'bqkv{l}', jnp.zeros((3 * HIDDEN,), jnp.float32))
        pk.add(f'wo{l}', dense(lk[3], (HIDDEN, HIDDEN)))
        pk.add(f'bo{l}', jnp.zeros((HIDDEN,), jnp.float32))
        pk.add(f'ln1_g{l}', jnp.ones((HIDDEN,), jnp.float32))
        pk.add(f'ln1_b{l}', jnp.zeros((HIDDEN,), jnp.float32))
        pk.add(f'w1{l}', dense(lk[4], (HIDDEN, INTERMEDIATE)))
        pk.add(f'b1{l}', jnp.zeros((INTERMEDIATE,), jnp.float32))
        pk.add(f'w2{l}', dense(lk[5], (INTERMEDIATE, HIDDEN)))
        pk.add(f'b2{l}', jnp.zeros((HIDDEN,), jnp.float32))
        pk.add(f'ln2_g{l}', jnp.ones((HIDDEN,), jnp.float32))
        pk.add(f'ln2_b{l}', jnp.zeros((HIDDEN,), jnp.float32))
    # BiLSTM (num_layers=1), weights stored as (in, 4*LH), gate order i,f,g,o; bias = b_ih + b_hh
    lkeys = jax.random.split(keys[4 + NUM_LAYERS], 4)
    pk.add('lstm_wih_f', dense(lkeys[0], (HIDDEN, 4 * LSTM_HIDDEN)))
    pk.add('lstm_whh_f', dense(lkeys[1], (LSTM_HIDDEN, 4 * LSTM_HIDDEN)))
    pk.add('lstm_b_f', jnp.zeros((4 * LSTM_HIDDEN,), jnp.float32))
    pk.add('lstm_wih_b', dense(lkeys[2], (HIDDEN, 4 * LSTM_HIDDEN)))
    pk.add('lstm_whh_b', dense(lkeys[3], (LSTM_HIDDEN, 4 * LSTM_HIDDEN)))
    pk.add('lstm_b_b', jnp.zeros((4 * LSTM_HIDDEN,), jnp.float32))
    pk.add('wc', dense(keys[3], (2 * LSTM_HIDDEN, CLASS_NUM)))
    pk.add('bc', jnp.zeros((CLASS_NUM,), jnp.float32))
    # TODO(synk): CRF transition params / Viterbi decode / CRF log-likelihood and the
    # CrossEntropyLoss(ignore_index=-1) training branch are not implemented; only the
    # target=None, use_crf=False path is built.
    return pk.finish()


# ---------------------------- forward ----------------------------

def bert_lstm_crf_forward(param_slab, offsets, input_ids, attention_mask, target=None):
    """BERTLSTMCRF.forward for target=None, use_crf=False: returns (B, S) int32 tag ids."""
    if target is not None:
        # TODO(synk): CRF NLL / CrossEntropyLoss(ignore_index=-1) training branches not implemented.
        raise NotImplementedError("loss branches not implemented in this synthetic kernel")
    B, S = input_ids.shape
    assert (B, S) == (BATCH, SEQ)
    total_rows = param_slab.shape[0]

    pred = pl.pallas_call(
        functools.partial(_fused_kernel, offs=offsets),
        out_shape=jax.ShapeDtypeStruct((B * S, 1), jnp.int32),
        in_specs=[pl.BlockSpec((B * S, 1), lambda: (0, 0)),
                  pl.BlockSpec((B, S), lambda: (0, 0)),
                  pl.BlockSpec((total_rows, LANES), lambda: (0, 0))],
        out_specs=pl.BlockSpec((B * S, 1), lambda: (0, 0)),
    )(input_ids.reshape(B * S, 1).astype(jnp.int32),
      attention_mask.astype(jnp.float32),
      param_slab)
    # torch.max returns int64 indices; int32 here.
    return pred.reshape(B, S)


if __name__ == "__main__":
    key = jax.random.PRNGKey(0)
    pkey, ikey = jax.random.split(key)
    param_slab, offsets = init_params_packed(pkey)

    input_ids = jax.random.randint(ikey, (BATCH, SEQ), 0, VOCAB, dtype=jnp.int32)
    attention_mask = jnp.array([[1, 1, 1, 1, 1, 1, 1, 1],
                                [1, 1, 1, 1, 1, 0, 0, 0]], dtype=jnp.int32)

    pred = bert_lstm_crf_forward(param_slab, offsets, input_ids, attention_mask)
    jax.block_until_ready(pred)
    assert pred.shape == (BATCH, SEQ) and pred.dtype == jnp.int32
    print("KERNEL_OK")
</pallas_src>

<mosaic_0001>
module attributes {stable_mosaic.version = 11 : i64} {
  func.func @_fused_kernel(%arg0: memref<16x1xi32, #tpu.memory_space<vmem>>, %arg1: memref<2x8xf32, #tpu.memory_space<vmem>>, %arg2: memref<760x128xf32, #tpu.memory_space<vmem>>, %arg3: memref<16x1xi32, #tpu.memory_space<vmem>>) attributes {dimension_semantics = [], scalar_prefetch = 0 : i64, scratch_operands = 0 : i64, tpu.core_type = #tpu.core_type<tc>} {
    %c0 = arith.constant 0 : index
    %c0_0 = arith.constant 0 : index
    %0 = vector.load %arg0[%c0, %c0_0] : memref<16x1xi32, #tpu.memory_space<vmem>>, vector<16x1xi32>
    %1 = tpu.iota {dimensions = array<i32: 1>} : vector<16x128xi32>
    %2 = vector.broadcast %0 : vector<16x1xi32> to vector<16x128xi32>
    %3 = arith.cmpi eq, %1, %2 : vector<16x128xi32>
    %4 = arith.extui %3 : vector<16x128xi1> to vector<16x128xi32>
    %5 = arith.sitofp %4 : vector<16x128xi32> to vector<16x128xf32>
    %c0_1 = arith.constant 0 : index
    %c0_2 = arith.constant 0 : index
    %6 = vector.load %arg2[%c0_1, %c0_2] : memref<760x128xf32, #tpu.memory_space<vmem>>, vector<128x32xf32>
    %cst = arith.constant dense<0.000000e+00> : vector<16x32xf32>
    %7 = tpu.matmul %5, %6, %cst {dimension_numbers = #tpu.dot_dimension_numbers<[1], [0], [0], [1], [0, 0, 1, 1], [], []>} : vector<16x128xf32>, vector<128x32xf32>, vector<16x32xf32> -> vector<16x32xf32>
    %c128 = arith.constant 128 : index
    %c0_3 = arith.constant 0 : index
    %8 = vector.load %arg2[%c128, %c0_3] : memref<760x128xf32, #tpu.memory_space<vmem>>, vector<8x32xf32>
    %9 = tpu.concatenate %8, %8 in 0 : vector<8x32xf32>, vector<8x32xf32> -> vector<16x32xf32>
    %10 = arith.addf %7, %9 : vector<16x32xf32>
    %c136 = arith.constant 136 : index
    %c0_4 = arith.constant 0 : index
    %11 = vector.load %arg2[%c136, %c0_4] : memref<760x128xf32, #tpu.memory_space<vmem>>, vector<1x32xf32>
    %12 = vector.broadcast %11 : vector<1x32xf32> to vector<16x32xf32>
    %13 = arith.addf %10, %12 : vector<16x32xf32>
    %c144 = arith.constant 144 : index
    %c0_5 = arith.constant 0 : index
    %14 = vector.load %arg2[%c144, %c0_5] : memref<760x128xf32, #tpu.memory_space<vmem>>, vector<1x32xf32>
    %c152 = arith.constant 152 : index
    %c0_6 = arith.constant 0 : index
    %15 = vector.load %arg2[%c152, %c0_6] : memref<760x128xf32, #tpu.memory_space<vmem>>, vector<1x32xf32>
    %cst_7 = arith.constant dense<0.000000e+00> : vector<16xf32>
    %16 = vector.multi_reduction <add>, %13, %cst_7 [1] : vector<16x32xf32> to vector<16xf32>
    %17 = vector.shape_cast %16 : vector<16xf32> to vector<16x1xf32>
    %cst_8 = arith.constant 3.200000e+01 : f32
    %18 = vector.broadcast %cst_8 : f32 to vector<16x1xf32>
    %19 = arith.divf %17, %18 : vector<16x1xf32>
    %20 = vector.broadcast %19 : vector<16x1xf32> to vector<16x32xf32>
    %21 = arith.subf %13, %20 : vector<16x32xf32>
    %22 = arith.mulf %21, %21 : vector<16x32xf32>
    %cst_9 = arith.constant dense<0.000000e+00> : vector<16xf32>
    %23 = vector.multi_reduction <add>, %22, %cst_9 [1] : vector<16x32xf32> to vector<16xf32>
    %24 = vector.shape_cast %23 : vector<16xf32> to vector<16x1xf32>
    %cst_10 = arith.constant 3.200000e+01 : f32
    %25 = vector.broadcast %cst_10 : f32 to vector<16x1xf32>
    %26 = arith.divf %24, %25 : vector<16x1xf32>
    %cst_11 = arith.constant 9.99999996E-13 : f32
    %27 = vector.broadcast %cst_11 : f32 to vector<16x1xf32>
    %28 = arith.addf %26, %27 : vector<16x1xf32>
    %29 = math.rsqrt %28 : vector<16x1xf32>
    %30 = vector.broadcast %29 : vector<16x1xf32> to vector<16x32xf32>
    %31 = arith.mulf %21, %30 : vector<16x32xf32>
    %32 = vector.broadcast %14 : vector<1x32xf32> to vector<16x32xf32>
    %33 = arith.mulf %31, %32 : vector<16x32xf32>
    %34 = vector.broadcast %15 : vector<1x32xf32> to vector<16x32xf32>
    %35 = arith.addf %33, %34 : vector<16x32xf32>
    %c0_12 = arith.constant 0 : index
    %c0_13 = arith.constant 0 : index
    %36 = vector.load %arg1[%c0_12, %c0_13] : memref<2x8xf32, #tpu.memory_space<vmem>>, vector<2x8xf32>
    %cst_14 = arith.constant 1.000000e+00 : f32
    %37 = vector.broadcast %cst_14 : f32 to vector<2x8xf32>
    %38 = arith.subf %37, %36 : vector<2x8xf32>
    %cst_15 = arith.constant -1.000000e+04 : f32
    %39 = vector.broadcast %cst_15 : f32 to vector<2x8xf32>
    %40 = arith.mulf %38, %39 : vector<2x8xf32>
    %c160 = arith.constant 160 : index
    %c0_16 = arith.constant 0 : index
    %41 = vector.load %arg2[%c160, %c0_16] : memref<760x128xf32, #tpu.memory_space<vmem>>, vector<32x96xf32>
    %cst_17 = arith.constant dense<0.000000e+00> : vector<16x96xf32>
    %42 = tpu.matmul %35, %41, %cst_17 {dimension_numbers = #tpu.dot_dimension_numbers<[1], [0], [0], [1], [0, 0, 1, 1], [], []>} : vector<16x32xf32>, vector<32x96xf32>, vector<16x96xf32> -> vector<16x96xf32>
    %c192 = arith.constant 192 : index
    %c0_18 = arith.constant 0 : index
    %43 = vector.load %arg2[%c192, %c0_18] : memref<760x128xf32, #tpu.memory_space<vmem>>, vector<1x96xf32>
    %44 = vector.broadcast %43 : vector<1x96xf32> to vector<16x96xf32>
    %45 = arith.addf %42, %44 : vector<16x96xf32>
    %c200 = arith.constant 200 : index
    %c0_19 = arith.constant 0 : index
    %46 = vector.load %arg2[%c200, %c0_19] : memref<760x128xf32, #tpu.memory_space<vmem>>, vector<32x32xf32>
    %47 = vector.extract_strided_slice %40 {offsets = [0, 0], sizes = [1, 8], strides = [1, 1]} : vector<2x8xf32> to vector<1x8xf32>
    %cst_20 = arith.constant 0.000000e+00 : f32
    %48 = vector.broadcast %cst_20 : f32 to vector<8x32xf32>
    %49 = vector.extract_strided_slice %45 {offsets = [0, 0], sizes = [8, 16], strides = [1, 1]} : vector<16x96xf32> to vector<8x16xf32>
    %50 = vector.extract_strided_slice %45 {offsets = [0, 32], sizes = [8, 16], strides = [1, 1]} : vector<16x96xf32> to vector<8x16xf32>
    %51 = vector.extract_strided_slice %45 {offsets = [0, 64], sizes = [8, 16], strides = [1, 1]} : vector<16x96xf32> to vector<8x16xf32>
    %cst_21 = arith.constant dense<0.000000e+00> : vector<8x8xf32>
    %52 = tpu.matmul %49, %50, %cst_21 {dimension_numbers = #tpu.dot_dimension_numbers<[1], [1], [0], [0], [0, 0, 1, 0], [], []>} : vector<8x16xf32>, vector<8x16xf32>, vector<8x8xf32> -> vector<8x8xf32>
    %cst_22 = arith.constant 2.500000e-01 : f32
    %53 = vector.broadcast %cst_22 : f32 to vector<8x8xf32>
    %54 = arith.mulf %52, %53 : vector<8x8xf32>
    %55 = vector.broadcast %47 : vector<1x8xf32> to vector<8x8xf32>
    %56 = arith.addf %54, %55 : vector<8x8xf32>
    %cst_23 = arith.constant dense<0xFF800000> : vector<8xf32>
    %57 = vector.multi_reduction <maximumf>, %56, %cst_23 [1] : vector<8x8xf32> to vector<8xf32>
    %58 = vector.shape_cast %57 : vector<8xf32> to vector<8x1xf32>
    %59 = vector.broadcast %58 : vector<8x1xf32> to vector<8x8xf32>
    %60 = arith.subf %56, %59 : vector<8x8xf32>
    %61 = math.exp %60 : vector<8x8xf32>
    %cst_24 = arith.constant dense<0.000000e+00> : vector<8xf32>
    %62 = vector.multi_reduction <add>, %61, %cst_24 [1] : vector<8x8xf32> to vector<8xf32>
    %63 = vector.shape_cast %62 : vector<8xf32> to vector<8x1xf32>
    %64 = tpu.reciprocal %63 {approx = true} : vector<8x1xf32> -> vector<8x1xf32>
    %65 = vector.broadcast %64 : vector<8x1xf32> to vector<8x8xf32>
    %66 = arith.mulf %61, %65 : vector<8x8xf32>
    %cst_25 = arith.constant dense<0.000000e+00> : vector<8x16xf32>
    %67 = tpu.matmul %66, %51, %cst_25 {dimension_numbers = #tpu.dot_dimension_numbers<[1], [0], [0], [1], [0, 0, 1, 1], [], []>} : vector<8x8xf32>, vector<8x16xf32>, vector<8x16xf32> -> vector<8x16xf32>
    %68 = vector.extract_strided_slice %46 {offsets = [0, 0], sizes = [16, 32], strides = [1, 1]} : vector<32x32xf32> to vector<16x32xf32>
    %cst_26 = arith.constant dense<0.000000e+00> : vector<8x32xf32>
    %69 = tpu.matmul %67, %68, %cst_26 {dimension_numbers = #tpu.dot_dimension_numbers<[1], [0], [0], [1], [0, 0, 1, 1], [], []>} : vector<8x16xf32>, vector<16x32xf32>, vector<8x32xf32> -> vector<8x32xf32>
    %70 = arith.addf %48, %69 : vector<8x32xf32>
    %71 = vector.extract_strided_slice %45 {offsets = [0, 16], sizes = [8, 16], strides = [1, 1]} : vector<16x96xf32> to vector<8x16xf32>
    %72 = vector.extract_strided_slice %45 {offsets = [0, 48], sizes = [8, 16], strides = [1, 1]} : vector<16x96xf32> to vector<8x16xf32>
    %73 = vector.extract_strided_slice %45 {offsets = [0, 80], sizes = [8, 16], strides = [1, 1]} : vector<16x96xf32> to vector<8x16xf32>
    %cst_27 = arith.constant dense<0.000000e+00> : vector<8x8xf32>
    %74 = tpu.matmul %71, %72, %cst_27 {dimension_numbers = #tpu.dot_dimension_numbers<[1], [1], [0], [0], [0, 0, 1, 0], [], []>} : vector<8x16xf32>, vector<8x16xf32>, vector<8x8xf32> -> vector<8x8xf32>
    %cst_28 = arith.constant 2.500000e-01 : f32
    %75 = vector.broadcast %cst_28 : f32 to vector<8x8xf32>
    %76 = arith.mulf %74, %75 : vector<8x8xf32>
    %77 = vector.broadcast %47 : vector<1x8xf32> to vector<8x8xf32>
    %78 = arith.addf %76, %77 : vector<8x8xf32>
    %cst_29 = arith.constant dense<0xFF800000> : vector<8xf32>
    %79 = vector.multi_reduction <maximumf>, %78, %cst_29 [1] : vector<8x8xf32> to vector<8xf32>
    %80 = vector.shape_cast %79 : vector<8xf32> to vector<8x1xf32>
    %81 = vector.broadcast %80 : vector<8x1xf32> to vector<8x8xf32>
    %82 = arith.subf %78, %81 : vector<8x8xf32>
    %83 = math.exp %82 : vector<8x8xf32>
    %cst_30 = arith.constant dense<0.000000e+00> : vector<8xf32>
    %84 = vector.multi_reduction <add>, %83, %cst_30 [1] : vector<8x8xf32> to vector<8xf32>
    %85 = vector.shape_cast %84 : vector<8xf32> to vector<8x1xf32>
    %86 = tpu.reciprocal %85 {approx = true} : vector<8x1xf32> -> vector<8x1xf32>
    %87 = vector.broadcast %86 : vector<8x1xf32> to vector<8x8xf32>
    %88 = arith.mulf %83, %87 : vector<8x8xf32>
    %cst_31 = arith.constant dense<0.000000e+00> : vector<8x16xf32>
    %89 = tpu.matmul %88, %73, %cst_31 {dimension_numbers = #tpu.dot_dimension_numbers<[1], [0], [0], [1], [0, 0, 1, 1], [], []>} : vector<8x8xf32>, vector<8x16xf32>, vector<8x16xf32> -> vector<8x16xf32>
    %90 = vector.extract_strided_slice %46 {offsets = [16, 0], sizes = [16, 32], strides = [1, 1]} : vector<32x32xf32> to vector<16x32xf32>
    %cst_32 = arith.constant dense<0.000000e+00> : vector<8x32xf32>
    %91 = tpu.matmul %89, %90, %cst_32 {dimension_numbers = #tpu.dot_dimension_numbers<[1], [0], [0], [1], [0, 0, 1, 1], [], []>} : vector<8x16xf32>, vector<16x32xf32>, vector<8x32xf32> -> vector<8x32xf32>
    %92 = arith.addf %70, %91 : vector<8x32xf32>
    %93 = vector.extract_strided_slice %40 {offsets = [1, 0], sizes = [1, 8], strides = [1, 1]} : vector<2x8xf32> to vector<1x8xf32>
    %cst_33 = arith.constant 0.000000e+00 : f32
    %94 = vector.broadcast %cst_33 : f32 to vector<8x32xf32>
    %95 = vector.extract_strided_slice %45 {offsets = [8, 0], sizes = [8, 16], strides = [1, 1]} : vector<16x96xf32> to vector<8x16xf32>
    %96 = vector.extract_strided_slice %45 {offsets = [8, 32], sizes = [8, 16], strides = [1, 1]} : vector<16x96xf32> to vector<8x16xf32>
    %97 = vector.extract_strided_slice %45 {offsets = [8, 64], sizes = [8, 16], strides = [1, 1]} : vector<16x96xf32> to vector<8x16xf32>
    %cst_34 = arith.constant dense<0.000000e+00> : vector<8x8xf32>
    %98 = tpu.matmul %95, %96, %cst_34 {dimension_numbers = #tpu.dot_dimension_numbers<[1], [1], [0], [0], [0, 0, 1, 0], [], []>} : vector<8x16xf32>, vector<8x16xf32>, vector<8x8xf32> -> vector<8x8xf32>
    %cst_35 = arith.constant 2.500000e-01 : f32
    %99 = vector.broadcast %cst_35 : f32 to vector<8x8xf32>
    %100 = arith.mulf %98, %99 : vector<8x8xf32>
    %101 = vector.broadcast %93 : vector<1x8xf32> to vector<8x8xf32>
    %102 = arith.addf %100, %101 : vector<8x8xf32>
    %cst_36 = arith.constant dense<0xFF800000> : vector<8xf32>
    %103 = vector.multi_reduction <maximumf>, %102, %cst_36 [1] : vector<8x8xf32> to vector<8xf32>
    %104 = vector.shape_cast %103 : vector<8xf32> to vector<8x1xf32>
    %105 = vector.broadcast %104 : vector<8x1xf32> to vector<8x8xf32>
    %106 = arith.subf %102, %105 : vector<8x8xf32>
    %107 = math.exp %106 : vector<8x8xf32>
    %cst_37 = arith.constant dense<0.000000e+00> : vector<8xf32>
    %108 = vector.multi_reduction <add>, %107, %cst_37 [1] : vector<8x8xf32> to vector<8xf32>
    %109 = vector.shape_cast %108 : vector<8xf32> to vector<8x1xf32>
    %110 = tpu.reciprocal %109 {approx = true} : vector<8x1xf32> -> vector<8x1xf32>
    %111 = vector.broadcast %110 : vector<8x1xf32> to vector<8x8xf32>
    %112 = arith.mulf %107, %111 : vector<8x8xf32>
    %cst_38 = arith.constant dense<0.000000e+00> : vector<8x16xf32>
    %113 = tpu.matmul %112, %97, %cst_38 {dimension_numbers = #tpu.dot_dimension_numbers<[1], [0], [0], [1], [0, 0, 1, 1], [], []>} : vector<8x8xf32>, vector<8x16xf32>, vector<8x16xf32> -> vector<8x16xf32>
    %114 = vector.extract_strided_slice %46 {offsets = [0, 0], sizes = [16, 32], strides = [1, 1]} : vector<32x32xf32> to vector<16x32xf32>
    %cst_39 = arith.constant dense<0.000000e+00> : vector<8x32xf32>
    %115 = tpu.matmul %113, %114, %cst_39 {dimension_numbers = #tpu.dot_dimension_numbers<[1], [0], [0], [1], [0, 0, 1, 1], [], []>} : vector<8x16xf32>, vector<16x32xf32>, vector<8x32xf32> -> vector<8x32xf32>
    %116 = arith.addf %94, %115 : vector<8x32xf32>
    %117 = vector.extract_strided_slice %45 {offsets = [8, 16], sizes = [8, 16], strides = [1, 1]} : vector<16x96xf32> to vector<8x16xf32>
    %118 = vector.extract_strided_slice %45 {offsets = [8, 48], sizes = [8, 16], strides = [1, 1]} : vector<16x96xf32> to vector<8x16xf32>
    %119 = vector.extract_strided_slice %45 {offsets = [8, 80], sizes = [8, 16], strides = [1, 1]} : vector<16x96xf32> to vector<8x16xf32>
    %cst_40 = arith.constant dense<0.000000e+00> : vector<8x8xf32>
    %120 = tpu.matmul %117, %118, %cst_40 {dimension_numbers = #tpu.dot_dimension_numbers<[1], [1], [0], [0], [0, 0, 1, 0], [], []>} : vector<8x16xf32>, vector<8x16xf32>, vector<8x8xf32> -> vector<8x8xf32>
    %cst_41 = arith.constant 2.500000e-01 : f32
    %121 = vector.broadcast %cst_41 : f32 to vector<8x8xf32>
    %122 = arith.mulf %120, %121 : vector<8x8xf32>
    %123 = vector.broadcast %93 : vector<1x8xf32> to vector<8x8xf32>
    %124 = arith.addf %122, %123 : vector<8x8xf32>
    %cst_42 = arith.constant dense<0xFF800000> : vector<8xf32>
    %125 = vector.multi_reduction <maximumf>, %124, %cst_42 [1] : vector<8x8xf32> to vector<8xf32>
    %126 = vector.shape_cast %125 : vector<8xf32> to vector<8x1xf32>
    %127 = vector.broadcast %126 : vector<8x1xf32> to vector<8x8xf32>
    %128 = arith.subf %124, %127 : vector<8x8xf32>
    %129 = math.exp %128 : vector<8x8xf32>
    %cst_43 = arith.constant dense<0.000000e+00> : vector<8xf32>
    %130 = vector.multi_reduction <add>, %129, %cst_43 [1] : vector<8x8xf32> to vector<8xf32>
    %131 = vector.shape_cast %130 : vector<8xf32> to vector<8x1xf32>
    %132 = tpu.reciprocal %131 {approx = true} : vector<8x1xf32> -> vector<8x1xf32>
    %133 = vector.broadcast %132 : vector<8x1xf32> to vector<8x8xf32>
    %134 = arith.mulf %129, %133 : vector<8x8xf32>
    %cst_44 = arith.constant dense<0.000000e+00> : vector<8x16xf32>
    %135 = tpu.matmul %134, %119, %cst_44 {dimension_numbers = #tpu.dot_dimension_numbers<[1], [0], [0], [1], [0, 0, 1, 1], [], []>} : vector<8x8xf32>, vector<8x16xf32>, vector<8x16xf32> -> vector<8x16xf32>
    %136 = vector.extract_strided_slice %46 {offsets = [16, 0], sizes = [16, 32], strides = [1, 1]} : vector<32x32xf32> to vector<16x32xf32>
    %cst_45 = arith.constant dense<0.000000e+00> : vector<8x32xf32>
    %137 = tpu.matmul %135, %136, %cst_45 {dimension_numbers = #tpu.dot_dimension_numbers<[1], [0], [0], [1], [0, 0, 1, 1], [], []>} : vector<8x16xf32>, vector<16x32xf32>, vector<8x32xf32> -> vector<8x32xf32>
    %138 = arith.addf %116, %137 : vector<8x32xf32>
    %139 = tpu.concatenate %92, %138 in 0 : vector<8x32xf32>, vector<8x32xf32> -> vector<16x32xf32>
    %c232 = arith.constant 232 : index
    %c0_46 = arith.constant 0 : index
    %140 = vector.load %arg2[%c232, %c0_46] : memref<760x128xf32, #tpu.memory_space<vmem>>, vector<1x32xf32>
    %141 = vector.broadcast %140 : vector<1x32xf32> to vector<16x32xf32>
    %142 = arith.addf %139, %141 : vector<16x32xf32>
    %143 = arith.addf %35, %142 : vector<16x32xf32>
    %c240 = arith.constant 240 : index
    %c0_47 = arith.constant 0 : index
    %144 = vector.load %arg2[%c240, %c0_47] : memref<760x128xf32, #tpu.memory_space<vmem>>, vector<1x32xf32>
    %c248 = arith.constant 248 : index
    %c0_48 = arith.constant 0 : index
    %145 = vector.load %arg2[%c248, %c0_48] : memref<760x128xf32, #tpu.memory_space<vmem>>, vector<1x32xf32>
    %cst_49 = arith.constant dense<0.000000e+00> : vector<16xf32>
    %146 = vector.multi_reduction <add>, %143, %cst_49 [1] : vector<16x32xf32> to vector<16xf32>
    %147 = vector.shape_cast %146 : vector<16xf32> to vector<16x1xf32>
    %cst_50 = arith.constant 3.200000e+01 : f32
    %148 = vector.broadcast %cst_50 : f32 to vector<16x1xf32>
    %149 = arith.divf %147, %148 : vector<16x1xf32>
    %150 = vector.broadcast %149 : vector<16x1xf32> to vector<16x32xf32>
    %151 = arith.subf %143, %150 : vector<16x32xf32>
    %152 = arith.mulf %151, %151 : vector<16x32xf32>
    %cst_51 = arith.constant dense<0.000000e+00> : vector<16xf32>
    %153 = vector.multi_reduction <add>, %152, %cst_51 [1] : vector<16x32xf32> to vector<16xf32>
    %154 = vector.shape_cast %153 : vector<16xf32> to vector<16x1xf32>
    %cst_52 = arith.constant 3.200000e+01 : f32
    %155 = vector.broadcast %cst_52 : f32 to vector<16x1xf32>
    %156 = arith.divf %154, %155 : vector<16x1xf32>
    %cst_53 = arith.constant 9.99999996E-13 : f32
    %157 = vector.broadcast %cst_53 : f32 to vector<16x1xf32>
    %158 = arith.addf %156, %157 : vector<16x1xf32>
    %159 = math.rsqrt %158 : vector<16x1xf32>
    %160 = vector.broadcast %159 : vector<16x1xf32> to vector<16x32xf32>
    %161 = arith.mulf %151, %160 : vector<16x32xf32>
    %162 = vector.broadcast %144 : vector<1x32xf32> to vector<16x32xf32>
    %163 = arith.mulf %161, %162 : vector<16x32xf32>
    %164 = vector.broadcast %145 : vector<1x32xf32> to vector<16x32xf32>
    %165 = arith.addf %163, %164 : vector<16x32xf32>
    %c256 = arith.constant 256 : index
    %c0_54 = arith.constant 0 : index
    %166 = vector.load %arg2[%c256, %c0_54] : memref<760x128xf32, #tpu.memory_space<vmem>>, vector<32x64xf32>
    %cst_55 = arith.constant dense<0.000000e+00> : vector<16x64xf32>
    %167 = tpu.matmul %165, %166, %cst_55 {dimension_numbers = #tpu.dot_dimension_numbers<[1], [0], [0], [1], [0, 0, 1, 1], [], []>} : vector<16x32xf32>, vector<32x64xf32>, vector<16x64xf32> -> vector<16x64xf32>
    %c288 = arith.constant 288 : index
    %c0_56 = arith.constant 0 : index
    %168 = vector.load %arg2[%c288, %c0_56] : memref<760x128xf32, #tpu.memory_space<vmem>>, vector<1x64xf32>
    %169 = vector.broadcast %168 : vector<1x64xf32> to vector<16x64xf32>
    %170 = arith.addf %167, %169 : vector<16x64xf32>
    %cst_57 = arith.constant 5.000000e-01 : f32
    %171 = vector.broadcast %cst_57 : f32 to vector<16x64xf32>
    %172 = arith.mulf %171, %170 : vector<16x64xf32>
    %cst_58 = arith.constant 4.471500e-02 : f32
    %173 = vector.broadcast %cst_58 : f32 to vector<16x64xf32>
    %174 = arith.mulf %173, %170 : vector<16x64xf32>
    %175 = arith.mulf %174, %170 : vector<16x64xf32>
    %176 = arith.mulf %175, %170 : vector<16x64xf32>
    %177 = arith.addf %170, %176 : vector<16x64xf32>
    %cst_59 = arith.constant 0.797884583 : f32
    %178 = vector.broadcast %cst_59 : f32 to vector<16x64xf32>
    %179 = arith.mulf %178, %177 : vector<16x64xf32>
    %180 = math.tanh %179 : vector<16x64xf32>
    %cst_60 = arith.constant 1.000000e+00 : f32
    %181 = vector.broadcast %cst_60 : f32 to vector<16x64xf32>
    %182 = arith.addf %181, %180 : vector<16x64xf32>
    %183 = arith.mulf %172, %182 : vector<16x64xf32>
    %c296 = arith.constant 296 : index
    %c0_61 = arith.constant 0 : index
    %184 = vector.load %arg2[%c296, %c0_61] : memref<760x128xf32, #tpu.memory_space<vmem>>, vector<64x32xf32>
    %cst_62 = arith.constant dense<0.000000e+00> : vector<16x32xf32>
    %185 = tpu.matmul %183, %184, %cst_62 {dimension_numbers = #tpu.dot_dimension_numbers<[1], [0], [0], [1], [0, 0, 1, 1], [], []>} : vector<16x64xf32>, vector<64x32xf32>, vector<16x32xf32> -> vector<16x32xf32>
    %c360 = arith.constant 360 : index
    %c0_63 = arith.constant 0 : index
    %186 = vector.load %arg2[%c360, %c0_63] : memref<760x128xf32, #tpu.memory_space<vmem>>, vector<1x32xf32>
    %187 = vector.broadcast %186 : vector<1x32xf32> to vector<16x32xf32>
    %188 = arith.addf %185, %187 : vector<16x32xf32>
    %189 = arith.addf %165, %188 : vector<16x32xf32>
    %c368 = arith.constant 368 : index
    %c0_64 = arith.constant 0 : index
    %190 = vector.load %arg2[%c368, %c0_64] : memref<760x128xf32, #tpu.memory_space<vmem>>, vector<1x32xf32>
    %c376 = arith.constant 376 : index
    %c0_65 = arith.constant 0 : index
    %191 = vector.load %arg2[%c376, %c0_65] : memref<760x128xf32, #tpu.memory_space<vmem>>, vector<1x32xf32>
    %cst_66 = arith.constant dense<0.000000e+00> : vector<16xf32>
    %192 = vector.multi_reduction <add>, %189, %cst_66 [1] : vector<16x32xf32> to vector<16xf32>
    %193 = vector.shape_cast %192 : vector<16xf32> to vector<16x1xf32>
    %cst_67 = arith.constant 3.200000e+01 : f32
    %194 = vector.broadcast %cst_67 : f32 to vector<16x1xf32>
    %195 = arith.divf %193, %194 : vector<16x1xf32>
    %196 = vector.broadcast %195 : vector<16x1xf32> to vector<16x32xf32>
    %197 = arith.subf %189, %196 : vector<16x32xf32>
    %198 = arith.mulf %197, %197 : vector<16x32xf32>
    %cst_68 = arith.constant dense<0.000000e+00> : vector<16xf32>
    %199 = vector.multi_reduction <add>, %198, %cst_68 [1] : vector<16x32xf32> to vector<16xf32>
    %200 = vector.shape_cast %199 : vector<16xf32> to vector<16x1xf32>
    %cst_69 = arith.constant 3.200000e+01 : f32
    %201 = vector.broadcast %cst_69 : f32 to vector<16x1xf32>
    %202 = arith.divf %200, %201 : vector<16x1xf32>
    %cst_70 = arith.constant 9.99999996E-13 : f32
    %203 = vector.broadcast %cst_70 : f32 to vector<16x1xf32>
    %204 = arith.addf %202, %203 : vector<16x1xf32>
    %205 = math.rsqrt %204 : vector<16x1xf32>
    %206 = vector.broadcast %205 : vector<16x1xf32> to vector<16x32xf32>
    %207 = arith.mulf %197, %206 : vector<16x32xf32>
    %208 = vector.broadcast %190 : vector<1x32xf32> to vector<16x32xf32>
    %209 = arith.mulf %207, %208 : vector<16x32xf32>
    %210 = vector.broadcast %191 : vector<1x32xf32> to vector<16x32xf32>
    %211 = arith.addf %209, %210 : vector<16x32xf32>
    %c384 = arith.constant 384 : index
    %c0_71 = arith.constant 0 : index
    %212 = vector.load %arg2[%c384, %c0_71] : memref<760x128xf32, #tpu.memory_space<vmem>>, vector<32x96xf32>
    %cst_72 = arith.constant dense<0.000000e+00> : vector<16x96xf32>
    %213 = tpu.matmul %211, %212, %cst_72 {dimension_numbers = #tpu.dot_dimension_numbers<[1], [0], [0], [1], [0, 0, 1, 1], [], []>} : vector<16x32xf32>, vector<32x96xf32>, vector<16x96xf32> -> vector<16x96xf32>
    %c416 = arith.constant 416 : index
    %c0_73 = arith.constant 0 : index
    %214 = vector.load %arg2[%c416, %c0_73] : memref<760x128xf32, #tpu.memory_space<vmem>>, vector<1x96xf32>
    %215 = vector.broadcast %214 : vector<1x96xf32> to vector<16x96xf32>
    %216 = arith.addf %213, %215 : vector<16x96xf32>
    %c424 = arith.constant 424 : index
    %c0_74 = arith.constant 0 : index
    %217 = vector.load %arg2[%c424, %c0_74] : memref<760x128xf32, #tpu.memory_space<vmem>>, vector<32x32xf32>
    %218 = vector.extract_strided_slice %40 {offsets = [0, 0], sizes = [1, 8], strides = [1, 1]} : vector<2x8xf32> to vector<1x8xf32>
    %cst_75 = arith.constant 0.000000e+00 : f32
    %219 = vector.broadcast %cst_75 : f32 to vector<8x32xf32>
    %220 = vector.extract_strided_slice %216 {offsets = [0, 0], sizes = [8, 16], strides = [1, 1]} : vector<16x96xf32> to vector<8x16xf32>
    %221 = vector.extract_strided_slice %216 {offsets = [0, 32], sizes = [8, 16], strides = [1, 1]} : vector<16x96xf32> to vector<8x16xf32>
    %222 = vector.extract_strided_slice %216 {offsets = [0, 64], sizes = [8, 16], strides = [1, 1]} : vector<16x96xf32> to vector<8x16xf32>
    %cst_76 = arith.constant dense<0.000000e+00> : vector<8x8xf32>
    %223 = tpu.matmul %220, %221, %cst_76 {dimension_numbers = #tpu.dot_dimension_numbers<[1], [1], [0], [0], [0, 0, 1, 0], [], []>} : vector<8x16xf32>, vector<8x16xf32>, vector<8x8xf32> -> vector<8x8xf32>
    %cst_77 = arith.constant 2.500000e-01 : f32
    %224 = vector.broadcast %cst_77 : f32 to vector<8x8xf32>
    %225 = arith.mulf %223, %224 : vector<8x8xf32>
    %226 = vector.broadcast %218 : vector<1x8xf32> to vector<8x8xf32>
    %227 = arith.addf %225, %226 : vector<8x8xf32>
    %cst_78 = arith.constant dense<0xFF800000> : vector<8xf32>
    %228 = vector.multi_reduction <maximumf>, %227, %cst_78 [1] : vector<8x8xf32> to vector<8xf32>
    %229 = vector.shape_cast %228 : vector<8xf32> to vector<8x1xf32>
    %230 = vector.broadcast %229 : vector<8x1xf32> to vector<8x8xf32>
    %231 = arith.subf %227, %230 : vector<8x8xf32>
    %232 = math.exp %231 : vector<8x8xf32>
    %cst_79 = arith.constant dense<0.000000e+00> : vector<8xf32>
    %233 = vector.multi_reduction <add>, %232, %cst_79 [1] : vector<8x8xf32> to vector<8xf32>
    %234 = vector.shape_cast %233 : vector<8xf32> to vector<8x1xf32>
    %235 = tpu.reciprocal %234 {approx = true} : vector<8x1xf32> -> vector<8x1xf32>
    %236 = vector.broadcast %235 : vector<8x1xf32> to vector<8x8xf32>
    %237 = arith.mulf %232, %236 : vector<8x8xf32>
    %cst_80 = arith.constant dense<0.000000e+00> : vector<8x16xf32>
    %238 = tpu.matmul %237, %222, %cst_80 {dimension_numbers = #tpu.dot_dimension_numbers<[1], [0], [0], [1], [0, 0, 1, 1], [], []>} : vector<8x8xf32>, vector<8x16xf32>, vector<8x16xf32> -> vector<8x16xf32>
    %239 = vector.extract_strided_slice %217 {offsets = [0, 0], sizes = [16, 32], strides = [1, 1]} : vector<32x32xf32> to vector<16x32xf32>
    %cst_81 = arith.constant dense<0.000000e+00> : vector<8x32xf32>
    %240 = tpu.matmul %238, %239, %cst_81 {dimension_numbers = #tpu.dot_dimension_numbers<[1], [0], [0], [1], [0, 0, 1, 1], [], []>} : vector<8x16xf32>, vector<16x32xf32>, vector<8x32xf32> -> vector<8x32xf32>
    %241 = arith.addf %219, %240 : vector<8x32xf32>
    %242 = vector.extract_strided_slice %216 {offsets = [0, 16], sizes = [8, 16], strides = [1, 1]} : vector<16x96xf32> to vector<8x16xf32>
    %243 = vector.extract_strided_slice %216 {offsets = [0, 48], sizes = [8, 16], strides = [1, 1]} : vector<16x96xf32> to vector<8x16xf32>
    %244 = vector.extract_strided_slice %216 {offsets = [0, 80], sizes = [8, 16], strides = [1, 1]} : vector<16x96xf32> to vector<8x16xf32>
    %cst_82 = arith.constant dense<0.000000e+00> : vector<8x8xf32>
    %245 = tpu.matmul %242, %243, %cst_82 {dimension_numbers = #tpu.dot_dimension_numbers<[1], [1], [0], [0], [0, 0, 1, 0], [], []>} : vector<8x16xf32>, vector<8x16xf32>, vector<8x8xf32> -> vector<8x8xf32>
    %cst_83 = arith.constant 2.500000e-01 : f32
    %246 = vector.broadcast %cst_83 : f32 to vector<8x8xf32>
    %247 = arith.mulf %245, %246 : vector<8x8xf32>
    %248 = vector.broadcast %218 : vector<1x8xf32> to vector<8x8xf32>
    %249 = arith.addf %247, %248 : vector<8x8xf32>
    %cst_84 = arith.constant dense<0xFF800000> : vector<8xf32>
    %250 = vector.multi_reduction <maximumf>, %249, %cst_84 [1] : vector<8x8xf32> to vector<8xf32>
    %251 = vector.shape_cast %250 : vector<8xf32> to vector<8x1xf32>
    %252 = vector.broadcast %251 : vector<8x1xf32> to vector<8x8xf32>
    %253 = arith.subf %249, %252 : vector<8x8xf32>
    %254 = math.exp %253 : vector<8x8xf32>
    %cst_85 = arith.constant dense<0.000000e+00> : vector<8xf32>
    %255 = vector.multi_reduction <add>, %254, %cst_85 [1] : vector<8x8xf32> to vector<8xf32>
    %256 = vector.shape_cast %255 : vector<8xf32> to vector<8x1xf32>
    %257 = tpu.reciprocal %256 {approx = true} : vector<8x1xf32> -> vector<8x1xf32>
    %258 = vector.broadcast %257 : vector<8x1xf32> to vector<8x8xf32>
    %259 = arith.mulf %254, %258 : vector<8x8xf32>
    %cst_86 = arith.constant dense<0.000000e+00> : vector<8x16xf32>
    %260 = tpu.matmul %259, %244, %cst_86 {dimension_numbers = #tpu.dot_dimension_numbers<[1], [0], [0], [1], [0, 0, 1, 1], [], []>} : vector<8x8xf32>, vector<8x16xf32>, vector<8x16xf32> -> vector<8x16xf32>
    %261 = vector.extract_strided_slice %217 {offsets = [16, 0], sizes = [16, 32], strides = [1, 1]} : vector<32x32xf32> to vector<16x32xf32>
    %cst_87 = arith.constant dense<0.000000e+00> : vector<8x32xf32>
    %262 = tpu.matmul %260, %261, %cst_87 {dimension_numbers = #tpu.dot_dimension_numbers<[1], [0], [0], [1], [0, 0, 1, 1], [], []>} : vector<8x16xf32>, vector<16x32xf32>, vector<8x32xf32> -> vector<8x32xf32>
    %263 = arith.addf %241, %262 : vector<8x32xf32>
    %264 = vector.extract_strided_slice %40 {offsets = [1, 0], sizes = [1, 8], strides = [1, 1]} : vector<2x8xf32> to vector<1x8xf32>
    %cst_88 = arith.constant 0.000000e+00 : f32
    %265 = vector.broadcast %cst_88 : f32 to vector<8x32xf32>
    %266 = vector.extract_strided_slice %216 {offsets = [8, 0], sizes = [8, 16], strides = [1, 1]} : vector<16x96xf32> to vector<8x16xf32>
    %267 = vector.extract_strided_slice %216 {offsets = [8, 32], sizes = [8, 16], strides = [1, 1]} : vector<16x96xf32> to vector<8x16xf32>
    %268 = vector.extract_strided_slice %216 {offsets = [8, 64], sizes = [8, 16], strides = [1, 1]} : vector<16x96xf32> to vector<8x16xf32>
    %cst_89 = arith.constant dense<0.000000e+00> : vector<8x8xf32>
    %269 = tpu.matmul %266, %267, %cst_89 {dimension_numbers = #tpu.dot_dimension_numbers<[1], [1], [0], [0], [0, 0, 1, 0], [], []>} : vector<8x16xf32>, vector<8x16xf32>, vector<8x8xf32> -> vector<8x8xf32>
    %cst_90 = arith.constant 2.500000e-01 : f32
    %270 = vector.broadcast %cst_90 : f32 to vector<8x8xf32>
    %271 = arith.mulf %269, %270 : vector<8x8xf32>
    %272 = vector.broadcast %264 : vector<1x8xf32> to vector<8x8xf32>
    %273 = arith.addf %271, %272 : vector<8x8xf32>
    %cst_91 = arith.constant dense<0xFF800000> : vector<8xf32>
    %274 = vector.multi_reduction <maximumf>, %273, %cst_91 [1] : vector<8x8xf32> to vector<8xf32>
    %275 = vector.shape_cast %274 : vector<8xf32> to vector<8x1xf32>
    %276 = vector.broadcast %275 : vector<8x1xf32> to vector<8x8xf32>
    %277 = arith.subf %273, %276 : vector<8x8xf32>
    %278 = math.exp %277 : vector<8x8xf32>
    %cst_92 = arith.constant dense<0.000000e+00> : vector<8xf32>
    %279 = vector.multi_reduction <add>, %278, %cst_92 [1] : vector<8x8xf32> to vector<8xf32>
    %280 = vector.shape_cast %279 : vector<8xf32> to vector<8x1xf32>
    %281 = tpu.reciprocal %280 {approx = true} : vector<8x1xf32> -> vector<8x1xf32>
    %282 = vector.broadcast %281 : vector<8x1xf32> to vector<8x8xf32>
    %283 = arith.mulf %278, %282 : vector<8x8xf32>
    %cst_93 = arith.constant dense<0.000000e+00> : vector<8x16xf32>
    %284 = tpu.matmul %283, %268, %cst_93 {dimension_numbers = #tpu.dot_dimension_numbers<[1], [0], [0], [1], [0, 0, 1, 1], [], []>} : vector<8x8xf32>, vector<8x16xf32>, vector<8x16xf32> -> vector<8x16xf32>
    %285 = vector.extract_strided_slice %217 {offsets = [0, 0], sizes = [16, 32], strides = [1, 1]} : vector<32x32xf32> to vector<16x32xf32>
    %cst_94 = arith.constant dense<0.000000e+00> : vector<8x32xf32>
    %286 = tpu.matmul %284, %285, %cst_94 {dimension_numbers = #tpu.dot_dimension_numbers<[1], [0], [0], [1], [0, 0, 1, 1], [], []>} : vector<8x16xf32>, vector<16x32xf32>, vector<8x32xf32> -> vector<8x32xf32>
    %287 = arith.addf %265, %286 : vector<8x32xf32>
    %288 = vector.extract_strided_slice %216 {offsets = [8, 16], sizes = [8, 16], strides = [1, 1]} : vector<16x96xf32> to vector<8x16xf32>
    %289 = vector.extract_strided_slice %216 {offsets = [8, 48], sizes = [8, 16], strides = [1, 1]} : vector<16x96xf32> to vector<8x16xf32>
    %290 = vector.extract_strided_slice %216 {offsets = [8, 80], sizes = [8, 16], strides = [1, 1]} : vector<16x96xf32> to vector<8x16xf32>
    %cst_95 = arith.constant dense<0.000000e+00> : vector<8x8xf32>
    %291 = tpu.matmul %288, %289, %cst_95 {dimension_numbers = #tpu.dot_dimension_numbers<[1], [1], [0], [0], [0, 0, 1, 0], [], []>} : vector<8x16xf32>, vector<8x16xf32>, vector<8x8xf32> -> vector<8x8xf32>
    %cst_96 = arith.constant 2.500000e-01 : f32
    %292 = vector.broadcast %cst_96 : f32 to vector<8x8xf32>
    %293 = arith.mulf %291, %292 : vector<8x8xf32>
    %294 = vector.broadcast %264 : vector<1x8xf32> to vector<8x8xf32>
    %295 = arith.addf %293, %294 : vector<8x8xf32>
    %cst_97 = arith.constant dense<0xFF800000> : vector<8xf32>
    %296 = vector.multi_reduction <maximumf>, %295, %cst_97 [1] : vector<8x8xf32> to vector<8xf32>
    %297 = vector.shape_cast %296 : vector<8xf32> to vector<8x1xf32>
    %298 = vector.broadcast %297 : vector<8x1xf32> to vector<8x8xf32>
    %299 = arith.subf %295, %298 : vector<8x8xf32>
    %300 = math.exp %299 : vector<8x8xf32>
    %cst_98 = arith.constant dense<0.000000e+00> : vector<8xf32>
    %301 = vector.multi_reduction <add>, %300, %cst_98 [1] : vector<8x8xf32> to vector<8xf32>
    %302 = vector.shape_cast %301 : vector<8xf32> to vector<8x1xf32>
    %303 = tpu.reciprocal %302 {approx = true} : vector<8x1xf32> -> vector<8x1xf32>
    %304 = vector.broadcast %303 : vector<8x1xf32> to vector<8x8xf32>
    %305 = arith.mulf %300, %304 : vector<8x8xf32>
    %cst_99 = arith.constant dense<0.000000e+00> : vector<8x16xf32>
    %306 = tpu.matmul %305, %290, %cst_99 {dimension_numbers = #tpu.dot_dimension_numbers<[1], [0], [0], [1], [0, 0, 1, 1], [], []>} : vector<8x8xf32>, vector<8x16xf32>, vector<8x16xf32> -> vector<8x16xf32>
    %307 = vector.extract_strided_slice %217 {offsets = [16, 0], sizes = [16, 32], strides = [1, 1]} : vector<32x32xf32> to vector<16x32xf32>
    %cst_100 = arith.constant dense<0.000000e+00> : vector<8x32xf32>
    %308 = tpu.matmul %306, %307, %cst_100 {dimension_numbers = #tpu.dot_dimension_numbers<[1], [0], [0], [1], [0, 0, 1, 1], [], []>} : vector<8x16xf32>, vector<16x32xf32>, vector<8x32xf32> -> vector<8x32xf32>
    %309 = arith.addf %287, %308 : vector<8x32xf32>
    %310 = tpu.concatenate %263, %309 in 0 : vector<8x32xf32>, vector<8x32xf32> -> vector<16x32xf32>
    %c456 = arith.constant 456 : index
    %c0_101 = arith.constant 0 : index
    %311 = vector.load %arg2[%c456, %c0_101] : memref<760x128xf32, #tpu.memory_space<vmem>>, vector<1x32xf32>
    %312 = vector.broadcast %311 : vector<1x32xf32> to vector<16x32xf32>
    %313 = arith.addf %310, %312 : vector<16x32xf32>
    %314 = arith.addf %211, %313 : vector<16x32xf32>
    %c464 = arith.constant 464 : index
    %c0_102 = arith.constant 0 : index
    %315 = vector.load %arg2[%c464, %c0_102] : memref<760x128xf32, #tpu.memory_space<vmem>>, vector<1x32xf32>
    %c472 = arith.constant 472 : index
    %c0_103 = arith.constant 0 : index
    %316 = vector.load %arg2[%c472, %c0_103] : memref<760x128xf32, #tpu.memory_space<vmem>>, vector<1x32xf32>
    %cst_104 = arith.constant dense<0.000000e+00> : vector<16xf32>
    %317 = vector.multi_reduction <add>, %314, %cst_104 [1] : vector<16x32xf32> to vector<16xf32>
    %318 = vector.shape_cast %317 : vector<16xf32> to vector<16x1xf32>
    %cst_105 = arith.constant 3.200000e+01 : f32
    %319 = vector.broadcast %cst_105 : f32 to vector<16x1xf32>
    %320 = arith.divf %318, %319 : vector<16x1xf32>
    %321 = vector.broadcast %320 : vector<16x1xf32> to vector<16x32xf32>
    %322 = arith.subf %314, %321 : vector<16x32xf32>
    %323 = arith.mulf %322, %322 : vector<16x32xf32>
    %cst_106 = arith.constant dense<0.000000e+00> : vector<16xf32>
    %324 = vector.multi_reduction <add>, %323, %cst_106 [1] : vector<16x32xf32> to vector<16xf32>
    %325 = vector.shape_cast %324 : vector<16xf32> to vector<16x1xf32>
    %cst_107 = arith.constant 3.200000e+01 : f32
    %326 = vector.broadcast %cst_107 : f32 to vector<16x1xf32>
    %327 = arith.divf %325, %326 : vector<16x1xf32>
    %cst_108 = arith.constant 9.99999996E-13 : f32
    %328 = vector.broadcast %cst_108 : f32 to vector<16x1xf32>
    %329 = arith.addf %327, %328 : vector<16x1xf32>
    %330 = math.rsqrt %329 : vector<16x1xf32>
    %331 = vector.broadcast %330 : vector<16x1xf32> to vector<16x32xf32>
    %332 = arith.mulf %322, %331 : vector<16x32xf32>
    %333 = vector.broadcast %315 : vector<1x32xf32> to vector<16x32xf32>
    %334 = arith.mulf %332, %333 : vector<16x32xf32>
    %335 = vector.broadcast %316 : vector<1x32xf32> to vector<16x32xf32>
    %336 = arith.addf %334, %335 : vector<16x32xf32>
    %c480 = arith.constant 480 : index
    %c0_109 = arith.constant 0 : index
    %337 = vector.load %arg2[%c480, %c0_109] : memref<760x128xf32, #tpu.memory_space<vmem>>, vector<32x64xf32>
    %cst_110 = arith.constant dense<0.000000e+00> : vector<16x64xf32>
    %338 = tpu.matmul %336, %337, %cst_110 {dimension_numbers = #tpu.dot_dimension_numbers<[1], [0], [0], [1], [0, 0, 1, 1], [], []>} : vector<16x32xf32>, vector<32x64xf32>, vector<16x64xf32> -> vector<16x64xf32>
    %c512 = arith.constant 512 : index
    %c0_111 = arith.constant 0 : index
    %339 = vector.load %arg2[%c512, %c0_111] : memref<760x128xf32, #tpu.memory_space<vmem>>, vector<1x64xf32>
    %340 = vector.broadcast %339 : vector<1x64xf32> to vector<16x64xf32>
    %341 = arith.addf %338, %340 : vector<16x64xf32>
    %cst_112 = arith.constant 5.000000e-01 : f32
    %342 = vector.broadcast %cst_112 : f32 to vector<16x64xf32>
    %343 = arith.mulf %342, %341 : vector<16x64xf32>
    %cst_113 = arith.constant 4.471500e-02 : f32
    %344 = vector.broadcast %cst_113 : f32 to vector<16x64xf32>
    %345 = arith.mulf %344, %341 : vector<16x64xf32>
    %346 = arith.mulf %345, %341 : vector<16x64xf32>
    %347 = arith.mulf %346, %341 : vector<16x64xf32>
    %348 = arith.addf %341, %347 : vector<16x64xf32>
    %cst_114 = arith.constant 0.797884583 : f32
    %349 = vector.broadcast %cst_114 : f32 to vector<16x64xf32>
    %350 = arith.mulf %349, %348 : vector<16x64xf32>
    %351 = math.tanh %350 : vector<16x64xf32>
    %cst_115 = arith.constant 1.000000e+00 : f32
    %352 = vector.broadcast %cst_115 : f32 to vector<16x64xf32>
    %353 = arith.addf %352, %351 : vector<16x64xf32>
    %354 = arith.mulf %343, %353 : vector<16x64xf32>
    %c520 = arith.constant 520 : index
    %c0_116 = arith.constant 0 : index
    %355 = vector.load %arg2[%c520, %c0_116] : memref<760x128xf32, #tpu.memory_space<vmem>>, vector<64x32xf32>
    %cst_117 = arith.constant dense<0.000000e+00> : vector<16x32xf32>
    %356 = tpu.matmul %354, %355, %cst_117 {dimension_numbers = #tpu.dot_dimension_numbers<[1], [0], [0], [1], [0, 0, 1, 1], [], []>} : vector<16x64xf32>, vector<64x32xf32>, vector<16x32xf32> -> vector<16x32xf32>
    %c584 = arith.constant 584 : index
    %c0_118 = arith.constant 0 : index
    %357 = vector.load %arg2[%c584, %c0_118] : memref<760x128xf32, #tpu.memory_space<vmem>>, vector<1x32xf32>
    %358 = vector.broadcast %357 : vector<1x32xf32> to vector<16x32xf32>
    %359 = arith.addf %356, %358 : vector<16x32xf32>
    %360 = arith.addf %336, %359 : vector<16x32xf32>
    %c592 = arith.constant 592 : index
    %c0_119 = arith.constant 0 : index
    %361 = vector.load %arg2[%c592, %c0_119] : memref<760x128xf32, #tpu.memory_space<vmem>>, vector<1x32xf32>
    %c600 = arith.constant 600 : index
    %c0_120 = arith.constant 0 : index
    %362 = vector.load %arg2[%c600, %c0_120] : memref<760x128xf32, #tpu.memory_space<vmem>>, vector<1x32xf32>
    %cst_121 = arith.constant dense<0.000000e+00> : vector<16xf32>
    %363 = vector.multi_reduction <add>, %360, %cst_121 [1] : vector<16x32xf32> to vector<16xf32>
    %364 = vector.shape_cast %363 : vector<16xf32> to vector<16x1xf32>
    %cst_122 = arith.constant 3.200000e+01 : f32
    %365 = vector.broadcast %cst_122 : f32 to vector<16x1xf32>
    %366 = arith.divf %364, %365 : vector<16x1xf32>
    %367 = vector.broadcast %366 : vector<16x1xf32> to vector<16x32xf32>
    %368 = arith.subf %360, %367 : vector<16x32xf32>
    %369 = arith.mulf %368, %368 : vector<16x32xf32>
    %cst_123 = arith.constant dense<0.000000e+00> : vector<16xf32>
    %370 = vector.multi_reduction <add>, %369, %cst_123 [1] : vector<16x32xf32> to vector<16xf32>
    %371 = vector.shape_cast %370 : vector<16xf32> to vector<16x1xf32>
    %cst_124 = arith.constant 3.200000e+01 : f32
    %372 = vector.broadcast %cst_124 : f32 to vector<16x1xf32>
    %373 = arith.divf %371, %372 : vector<16x1xf32>
    %cst_125 = arith.constant 9.99999996E-13 : f32
    %374 = vector.broadcast %cst_125 : f32 to vector<16x1xf32>
    %375 = arith.addf %373, %374 : vector<16x1xf32>
    %376 = math.rsqrt %375 : vector<16x1xf32>
    %377 = vector.broadcast %376 : vector<16x1xf32> to vector<16x32xf32>
    %378 = arith.mulf %368, %377 : vector<16x32xf32>
    %379 = vector.broadcast %361 : vector<1x32xf32> to vector<16x32xf32>
    %380 = arith.mulf %378, %379 : vector<16x32xf32>
    %381 = vector.broadcast %362 : vector<1x32xf32> to vector<16x32xf32>
    %382 = arith.addf %380, %381 : vector<16x32xf32>
    %c720 = arith.constant 720 : index
    %c0_126 = arith.constant 0 : index
    %383 = vector.load %arg2[%c720, %c0_126] : memref<760x128xf32, #tpu.memory_space<vmem>>, vector<32x9xf32>
    %c752 = arith.constant 752 : index
    %c0_127 = arith.constant 0 : index
    %384 = vector.load %arg2[%c752, %c0_127] : memref<760x128xf32, #tpu.memory_space<vmem>>, vector<1x9xf32>
    %385 = vector.extract_strided_slice %383 {offsets = [0, 0], sizes = [16, 9], strides = [1, 1]} : vector<32x9xf32> to vector<16x9xf32>
    %386 = vector.extract_strided_slice %383 {offsets = [16, 0], sizes = [16, 9], strides = [1, 1]} : vector<32x9xf32> to vector<16x9xf32>
    %387 = vector.extract_strided_slice %382 {offsets = [0, 0], sizes = [8, 32], strides = [1, 1]} : vector<16x32xf32> to vector<8x32xf32>
    %c608 = arith.constant 608 : index
    %c0_128 = arith.constant 0 : index
    %388 = vector.load %arg2[%c608, %c0_128] : memref<760x128xf32, #tpu.memory_space<vmem>>, vector<32x64xf32>
    %c640 = arith.constant 640 : index
    %c0_129 = arith.constant 0 : index
    %389 = vector.load %arg2[%c640, %c0_129] : memref<760x128xf32, #tpu.memory_space<vmem>>, vector<16x64xf32>
    %c656 = arith.constant 656 : index
    %c0_130 = arith.constant 0 : index
    %390 = vector.load %arg2[%c656, %c0_130] : memref<760x128xf32, #tpu.memory_space<vmem>>, vector<1x64xf32>
    %cst_131 = arith.constant dense<0.000000e+00> : vector<8x64xf32>
    %391 = tpu.matmul %387, %388, %cst_131 {dimension_numbers = #tpu.dot_dimension_numbers<[1], [0], [0], [1], [0, 0, 1, 1], [], []>} : vector<8x32xf32>, vector<32x64xf32>, vector<8x64xf32> -> vector<8x64xf32>
    %392 = vector.broadcast %390 : vector<1x64xf32> to vector<8x64xf32>
    %393 = arith.addf %391, %392 : vector<8x64xf32>
    %cst_132 = arith.constant 0.000000e+00 : f32
    %394 = vector.broadcast %cst_132 : f32 to vector<1x16xf32>
    %cst_133 = arith.constant 0.000000e+00 : f32
    %395 = vector.broadcast %cst_133 : f32 to vector<1x16xf32>
    %cst_134 = arith.constant 0.000000e+00 : f32
    %396 = vector.broadcast %cst_134 : f32 to vector<8x16xf32>
    %397 = tpu.iota {dimensions = array<i32: 0>} : vector<8x1xi32>
    %398 = vector.extract_strided_slice %393 {offsets = [0, 0], sizes = [1, 64], strides = [1, 1]} : vector<8x64xf32> to vector<1x64xf32>
    %cst_135 = arith.constant dense<0.000000e+00> : vector<1x64xf32>
    %399 = tpu.matmul %394, %389, %cst_135 {dimension_numbers = #tpu.dot_dimension_numbers<[1], [0], [0], [1], [0, 0, 1, 1], [], []>} : vector<1x16xf32>, vector<16x64xf32>, vector<1x64xf32> -> vector<1x64xf32>
    %400 = arith.addf %398, %399 : vector<1x64xf32>
    %401 = vector.extract_strided_slice %400 {offsets = [0, 0], sizes = [1, 16], strides = [1, 1]} : vector<1x64xf32> to vector<1x16xf32>
    %cst_136 = arith.constant 0.000000e+00 : f32
    %402 = vector.broadcast %cst_136 : f32 to vector<1x16xf32>
    %403 = arith.subf %402, %401 : vector<1x16xf32>
    %404 = math.exp %403 : vector<1x16xf32>
    %cst_137 = arith.constant 1.000000e+00 : f32
    %405 = vector.broadcast %cst_137 : f32 to vector<1x16xf32>
    %406 = arith.addf %405, %404 : vector<1x16xf32>
    %cst_138 = arith.constant 1.000000e+00 : f32
    %407 = vector.broadcast %cst_138 : f32 to vector<1x16xf32>
    %408 = arith.divf %407, %406 : vector<1x16xf32>
    %409 = vector.extract_strided_slice %400 {offsets = [0, 16], sizes = [1, 16], strides = [1, 1]} : vector<1x64xf32> to vector<1x16xf32>
    %cst_139 = arith.constant 0.000000e+00 : f32
    %410 = vector.broadcast %cst_139 : f32 to vector<1x16xf32>
    %411 = arith.subf %410, %409 : vector<1x16xf32>
    %412 = math.exp %411 : vector<1x16xf32>
    %cst_140 = arith.constant 1.000000e+00 : f32
    %413 = vector.broadcast %cst_140 : f32 to vector<1x16xf32>
    %414 = arith.addf %413, %412 : vector<1x16xf32>
    %cst_141 = arith.constant 1.000000e+00 : f32
    %415 = vector.broadcast %cst_141 : f32 to vector<1x16xf32>
    %416 = arith.divf %415, %414 : vector<1x16xf32>
    %417 = vector.extract_strided_slice %400 {offsets = [0, 32], sizes = [1, 16], strides = [1, 1]} : vector<1x64xf32> to vector<1x16xf32>
    %418 = math.tanh %417 : vector<1x16xf32>
    %419 = vector.extract_strided_slice %400 {offsets = [0, 48], sizes = [1, 16], strides = [1, 1]} : vector<1x64xf32> to vector<1x16xf32>
    %cst_142 = arith.constant 0.000000e+00 : f32
    %420 = vector.broadcast %cst_142 : f32 to vector<1x16xf32>
    %421 = arith.subf %420, %419 : vector<1x16xf32>
    %422 = math.exp %421 : vector<1x16xf32>
    %cst_143 = arith.constant 1.000000e+00 : f32
    %423 = vector.broadcast %cst_143 : f32 to vector<1x16xf32>
    %424 = arith.addf %423, %422 : vector<1x16xf32>
    %cst_144 = arith.constant 1.000000e+00 : f32
    %425 = vector.broadcast %cst_144 : f32 to vector<1x16xf32>
    %426 = arith.divf %425, %424 : vector<1x16xf32>
    %427 = arith.mulf %416, %395 : vector<1x16xf32>
    %428 = arith.mulf %408, %418 : vector<1x16xf32>
    %429 = arith.addf %427, %428 : vector<1x16xf32>
    %430 = math.tanh %429 : vector<1x16xf32>
    %431 = arith.mulf %426, %430 : vector<1x16xf32>
    %c0_i32 = arith.constant 0 : i32
    %432 = vector.broadcast %c0_i32 : i32 to vector<8x1xi32>
    %433 = arith.cmpi eq, %397, %432 : vector<8x1xi32>
    %434 = vector.shape_cast %433 : vector<8x1xi1> to vector<8x1xi1>
    %435 = vector.broadcast %434 : vector<8x1xi1> to vector<8x16xi1>
    %436 = vector.shape_cast %431 : vector<1x16xf32> to vector<1x16xf32>
    %437 = vector.broadcast %436 : vector<1x16xf32> to vector<8x16xf32>
    %438 = arith.select %435, %437, %396 : vector<8x16xi1>, vector<8x16xf32>
    %439 = vector.extract_strided_slice %393 {offsets = [1, 0], sizes = [1, 64], strides = [1, 1]} : vector<8x64xf32> to vector<1x64xf32>
    %cst_145 = arith.constant dense<0.000000e+00> : vector<1x64xf32>
    %440 = tpu.matmul %431, %389, %cst_145 {dimension_numbers = #tpu.dot_dimension_numbers<[1], [0], [0], [1], [0, 0, 1, 1], [], []>} : vector<1x16xf32>, vector<16x64xf32>, vector<1x64xf32> -> vector<1x64xf32>
    %441 = arith.addf %439, %440 : vector<1x64xf32>
    %442 = vector.extract_strided_slice %441 {offsets = [0, 0], sizes = [1, 16], strides = [1, 1]} : vector<1x64xf32> to vector<1x16xf32>
    %cst_146 = arith.constant 0.000000e+00 : f32
    %443 = vector.broadcast %cst_146 : f32 to vector<1x16xf32>
    %444 = arith.subf %443, %442 : vector<1x16xf32>
    %445 = math.exp %444 : vector<1x16xf32>
    %cst_147 = arith.constant 1.000000e+00 : f32
    %446 = vector.broadcast %cst_147 : f32 to vector<1x16xf32>
    %447 = arith.addf %446, %445 : vector<1x16xf32>
    %cst_148 = arith.constant 1.000000e+00 : f32
    %448 = vector.broadcast %cst_148 : f32 to vector<1x16xf32>
    %449 = arith.divf %448, %447 : vector<1x16xf32>
    %450 = vector.extract_strided_slice %441 {offsets = [0, 16], sizes = [1, 16], strides = [1, 1]} : vector<1x64xf32> to vector<1x16xf32>
    %cst_149 = arith.constant 0.000000e+00 : f32
    %451 = vector.broadcast %cst_149 : f32 to vector<1x16xf32>
    %452 = arith.subf %451, %450 : vector<1x16xf32>
    %453 = math.exp %452 : vector<1x16xf32>
    %cst_150 = arith.constant 1.000000e+00 : f32
    %454 = vector.broadcast %cst_150 : f32 to vector<1x16xf32>
    %455 = arith.addf %454, %453 : vector<1x16xf32>
    %cst_151 = arith.constant 1.000000e+00 : f32
    %456 = vector.broadcast %cst_151 : f32 to vector<1x16xf32>
    %457 = arith.divf %456, %455 : vector<1x16xf32>
    %458 = vector.extract_strided_slice %441 {offsets = [0, 32], sizes = [1, 16], strides = [1, 1]} : vector<1x64xf32> to vector<1x16xf32>
    %459 = math.tanh %458 : vector<1x16xf32>
    %460 = vector.extract_strided_slice %441 {offsets = [0, 48], sizes = [1, 16], strides = [1, 1]} : vector<1x64xf32> to vector<1x16xf32>
    %cst_152 = arith.constant 0.000000e+00 : f32
    %461 = vector.broadcast %cst_152 : f32 to vector<1x16xf32>
    %462 = arith.subf %461, %460 : vector<1x16xf32>
    %463 = math.exp %462 : vector<1x16xf32>
    %cst_153 = arith.constant 1.000000e+00 : f32
    %464 = vector.broadcast %cst_153 : f32 to vector<1x16xf32>
    %465 = arith.addf %464, %463 : vector<1x16xf32>
    %cst_154 = arith.constant 1.000000e+00 : f32
    %466 = vector.broadcast %cst_154 : f32 to vector<1x16xf32>
    %467 = arith.divf %466, %465 : vector<1x16xf32>
    %468 = arith.mulf %457, %429 : vector<1x16xf32>
    %469 = arith.mulf %449, %459 : vector<1x16xf32>
    %470 = arith.addf %468, %469 : vector<1x16xf32>
    %471 = math.tanh %470 : vector<1x16xf32>
    %472 = arith.mulf %467, %471 : vector<1x16xf32>
    %c1_i32 = arith.constant 1 : i32
    %473 = vector.broadcast %c1_i32 : i32 to vector<8x1xi32>
    %474 = arith.cmpi eq, %397, %473 : vector<8x1xi32>
    %475 = vector.shape_cast %474 : vector<8x1xi1> to vector<8x1xi1>
    %476 = vector.broadcast %475 : vector<8x1xi1> to vector<8x16xi1>
    %477 = vector.shape_cast %472 : vector<1x16xf32> to vector<1x16xf32>
    %478 = vector.broadcast %477 : vector<1x16xf32> to vector<8x16xf32>
    %479 = arith.select %476, %478, %438 : vector<8x16xi1>, vector<8x16xf32>
    %480 = vector.extract_strided_slice %393 {offsets = [2, 0], sizes = [1, 64], strides = [1, 1]} : vector<8x64xf32> to vector<1x64xf32>
    %cst_155 = arith.constant dense<0.000000e+00> : vector<1x64xf32>
    %481 = tpu.matmul %472, %389, %cst_155 {dimension_numbers = #tpu.dot_dimension_numbers<[1], [0], [0], [1], [0, 0, 1, 1], [], []>} : vector<1x16xf32>, vector<16x64xf32>, vector<1x64xf32> -> vector<1x64xf32>
    %482 = arith.addf %480, %481 : vector<1x64xf32>
    %483 = vector.extract_strided_slice %482 {offsets = [0, 0], sizes = [1, 16], strides = [1, 1]} : vector<1x64xf32> to vector<1x16xf32>
    %cst_156 = arith.constant 0.000000e+00 : f32
    %484 = vector.broadcast %cst_156 : f32 to vector<1x16xf32>
    %485 = arith.subf %484, %483 : vector<1x16xf32>
    %486 = math.exp %485 : vector<1x16xf32>
    %cst_157 = arith.constant 1.000000e+00 : f32
    %487 = vector.broadcast %cst_157 : f32 to vector<1x16xf32>
    %488 = arith.addf %487, %486 : vector<1x16xf32>
    %cst_158 = arith.constant 1.000000e+00 : f32
    %489 = vector.broadcast %cst_158 : f32 to vector<1x16xf32>
    %490 = arith.divf %489, %488 : vector<1x16xf32>
    %491 = vector.extract_strided_slice %482 {offsets = [0, 16], sizes = [1, 16], strides = [1, 1]} : vector<1x64xf32> to vector<1x16xf32>
    %cst_159 = arith.constant 0.000000e+00 : f32
    %492 = vector.broadcast %cst_159 : f32 to vector<1x16xf32>
    %493 = arith.subf %492, %491 : vector<1x16xf32>
    %494 = math.exp %493 : vector<1x16xf32>
    %cst_160 = arith.constant 1.000000e+00 : f32
    %495 = vector.broadcast %cst_160 : f32 to vector<1x16xf32>
    %496 = arith.addf %495, %494 : vector<1x16xf32>
    %cst_161 = arith.constant 1.000000e+00 : f32
    %497 = vector.broadcast %cst_161 : f32 to vector<1x16xf32>
    %498 = arith.divf %497, %496 : vector<1x16xf32>
    %499 = vector.extract_strided_slice %482 {offsets = [0, 32], sizes = [1, 16], strides = [1, 1]} : vector<1x64xf32> to vector<1x16xf32>
    %500 = math.tanh %499 : vector<1x16xf32>
    %501 = vector.extract_strided_slice %482 {offsets = [0, 48], sizes = [1, 16], strides = [1, 1]} : vector<1x64xf32> to vector<1x16xf32>
    %cst_162 = arith.constant 0.000000e+00 : f32
    %502 = vector.broadcast %cst_162 : f32 to vector<1x16xf32>
    %503 = arith.subf %502, %501 : vector<1x16xf32>
    %504 = math.exp %503 : vector<1x16xf32>
    %cst_163 = arith.constant 1.000000e+00 : f32
    %505 = vector.broadcast %cst_163 : f32 to vector<1x16xf32>
    %506 = arith.addf %505, %504 : vector<1x16xf32>
    %cst_164 = arith.constant 1.000000e+00 : f32
    %507 = vector.broadcast %cst_164 : f32 to vector<1x16xf32>
    %508 = arith.divf %507, %506 : vector<1x16xf32>
    %509 = arith.mulf %498, %470 : vector<1x16xf32>
    %510 = arith.mulf %490, %500 : vector<1x16xf32>
    %511 = arith.addf %509, %510 : vector<1x16xf32>
    %512 = math.tanh %511 : vector<1x16xf32>
    %513 = arith.mulf %508, %512 : vector<1x16xf32>
    %c2_i32 = arith.constant 2 : i32
    %514 = vector.broadcast %c2_i32 : i32 to vector<8x1xi32>
    %515 = arith.cmpi eq, %397, %514 : vector<8x1xi32>
    %516 = vector.shape_cast %515 : vector<8x1xi1> to vector<8x1xi1>
    %517 = vector.broadcast %516 : vector<8x1xi1> to vector<8x16xi1>
    %518 = vector.shape_cast %513 : vector<1x16xf32> to vector<1x16xf32>
    %519 = vector.broadcast %518 : vector<1x16xf32> to vector<8x16xf32>
    %520 = arith.select %517, %519, %479 : vector<8x16xi1>, vector<8x16xf32>
    %521 = vector.extract_strided_slice %393 {offsets = [3, 0], sizes = [1, 64], strides = [1, 1]} : vector<8x64xf32> to vector<1x64xf32>
    %cst_165 = arith.constant dense<0.000000e+00> : vector<1x64xf32>
    %522 = tpu.matmul %513, %389, %cst_165 {dimension_numbers = #tpu.dot_dimension_numbers<[1], [0], [0], [1], [0, 0, 1, 1], [], []>} : vector<1x16xf32>, vector<16x64xf32>, vector<1x64xf32> -> vector<1x64xf32>
    %523 = arith.addf %521, %522 : vector<1x64xf32>
    %524 = vector.extract_strided_slice %523 {offsets = [0, 0], sizes = [1, 16], strides = [1, 1]} : vector<1x64xf32> to vector<1x16xf32>
    %cst_166 = arith.constant 0.000000e+00 : f32
    %525 = vector.broadcast %cst_166 : f32 to vector<1x16xf32>
    %526 = arith.subf %525, %524 : vector<1x16xf32>
    %527 = math.exp %526 : vector<1x16xf32>
    %cst_167 = arith.constant 1.000000e+00 : f32
    %528 = vector.broadcast %cst_167 : f32 to vector<1x16xf32>
    %529 = arith.addf %528, %527 : vector<1x16xf32>
    %cst_168 = arith.constant 1.000000e+00 : f32
    %530 = vector.broadcast %cst_168 : f32 to vector<1x16xf32>
    %531 = arith.divf %530, %529 : vector<1x16xf32>
    %532 = vector.extract_strided_slice %523 {offsets = [0, 16], sizes = [1, 16], strides = [1, 1]} : vector<1x64xf32> to vector<1x16xf32>
    %cst_169 = arith.constant 0.000000e+00 : f32
    %533 = vector.broadcast %cst_169 : f32 to vector<1x16xf32>
    %534 = arith.subf %533, %532 : vector<1x16xf32>
    %535 = math.exp %534 : vector<1x16xf32>
    %cst_170 = arith.constant 1.000000e+00 : f32
    %536 = vector.broadcast %cst_170 : f32 to vector<1x16xf32>
    %537 = arith.addf %536, %535 : vector<1x16xf32>
    %cst_171 = arith.constant 1.000000e+00 : f32
    %538 = vector.broadcast %cst_171 : f32 to vector<1x16xf32>
    %539 = arith.divf %538, %537 : vector<1x16xf32>
    %540 = vector.extract_strided_slice %523 {offsets = [0, 32], sizes = [1, 16], strides = [1, 1]} : vector<1x64xf32> to vector<1x16xf32>
    %541 = math.tanh %540 : vector<1x16xf32>
    %542 = vector.extract_strided_slice %523 {offsets = [0, 48], sizes = [1, 16], strides = [1, 1]} : vector<1x64xf32> to vector<1x16xf32>
    %cst_172 = arith.constant 0.000000e+00 : f32
    %543 = vector.broadcast %cst_172 : f32 to vector<1x16xf32>
    %544 = arith.subf %543, %542 : vector<1x16xf32>
    %545 = math.exp %544 : vector<1x16xf32>
    %cst_173 = arith.constant 1.000000e+00 : f32
    %546 = vector.broadcast %cst_173 : f32 to vector<1x16xf32>
    %547 = arith.addf %546, %545 : vector<1x16xf32>
    %cst_174 = arith.constant 1.000000e+00 : f32
    %548 = vector.broadcast %cst_174 : f32 to vector<1x16xf32>
    %549 = arith.divf %548, %547 : vector<1x16xf32>
    %550 = arith.mulf %539, %511 : vector<1x16xf32>
    %551 = arith.mulf %531, %541 : vector<1x16xf32>
    %552 = arith.addf %550, %551 : vector<1x16xf32>
    %553 = math.tanh %552 : vector<1x16xf32>
    %554 = arith.mulf %549, %553 : vector<1x16xf32>
    %c3_i32 = arith.constant 3 : i32
    %555 = vector.broadcast %c3_i32 : i32 to vector<8x1xi32>
    %556 = arith.cmpi eq, %397, %555 : vector<8x1xi32>
    %557 = vector.shape_cast %556 : vector<8x1xi1> to vector<8x1xi1>
    %558 = vector.broadcast %557 : vector<8x1xi1> to vector<8x16xi1>
    %559 = vector.shape_cast %554 : vector<1x16xf32> to vector<1x16xf32>
    %560 = vector.broadcast %559 : vector<1x16xf32> to vector<8x16xf32>
    %561 = arith.select %558, %560, %520 : vector<8x16xi1>, vector<8x16xf32>
    %562 = vector.extract_strided_slice %393 {offsets = [4, 0], sizes = [1, 64], strides = [1, 1]} : vector<8x64xf32> to vector<1x64xf32>
    %cst_175 = arith.constant dense<0.000000e+00> : vector<1x64xf32>
    %563 = tpu.matmul %554, %389, %cst_175 {dimension_numbers = #tpu.dot_dimension_numbers<[1], [0], [0], [1], [0, 0, 1, 1], [], []>} : vector<1x16xf32>, vector<16x64xf32>, vector<1x64xf32> -> vector<1x64xf32>
    %564 = arith.addf %562, %563 : vector<1x64xf32>
    %565 = vector.extract_strided_slice %564 {offsets = [0, 0], sizes = [1, 16], strides = [1, 1]} : vector<1x64xf32> to vector<1x16xf32>
    %cst_176 = arith.constant 0.000000e+00 : f32
    %566 = vector.broadcast %cst_176 : f32 to vector<1x16xf32>
    %567 = arith.subf %566, %565 : vector<1x16xf32>
    %568 = math.exp %567 : vector<1x16xf32>
    %cst_177 = arith.constant 1.000000e+00 : f32
    %569 = vector.broadcast %cst_177 : f32 to vector<1x16xf32>
    %570 = arith.addf %569, %568 : vector<1x16xf32>
    %cst_178 = arith.constant 1.000000e+00 : f32
    %571 = vector.broadcast %cst_178 : f32 to vector<1x16xf32>
    %572 = arith.divf %571, %570 : vector<1x16xf32>
    %573 = vector.extract_strided_slice %564 {offsets = [0, 16], sizes = [1, 16], strides = [1, 1]} : vector<1x64xf32> to vector<1x16xf32>
    %cst_179 = arith.constant 0.000000e+00 : f32
    %574 = vector.broadcast %cst_179 : f32 to vector<1x16xf32>
    %575 = arith.subf %574, %573 : vector<1x16xf32>
    %576 = math.exp %575 : vector<1x16xf32>
    %cst_180 = arith.constant 1.000000e+00 : f32
    %577 = vector.broadcast %cst_180 : f32 to vector<1x16xf32>
    %578 = arith.addf %577, %576 : vector<1x16xf32>
    %cst_181 = arith.constant 1.000000e+00 : f32
    %579 = vector.broadcast %cst_181 : f32 to vector<1x16xf32>
    %580 = arith.divf %579, %578 : vector<1x16xf32>
    %581 = vector.extract_strided_slice %564 {offsets = [0, 32], sizes = [1, 16], strides = [1, 1]} : vector<1x64xf32> to vector<1x16xf32>
    %582 = math.tanh %581 : vector<1x16xf32>
    %583 = vector.extract_strided_slice %564 {offsets = [0, 48], sizes = [1, 16], strides = [1, 1]} : vector<1x64xf32> to vector<1x16xf32>
    %cst_182 = arith.constant 0.000000e+00 : f32
    %584 = vector.broadcast %cst_182 : f32 to vector<1x16xf32>
    %585 = arith.subf %584, %583 : vector<1x16xf32>
    %586 = math.exp %585 : vector<1x16xf32>
    %cst_183 = arith.constant 1.000000e+00 : f32
    %587 = vector.broadcast %cst_183 : f32 to vector<1x16xf32>
    %588 = arith.addf %587, %586 : vector<1x16xf32>
    %cst_184 = arith.constant 1.000000e+00 : f32
    %589 = vector.broadcast %cst_184 : f32 to vector<1x16xf32>
    %590 = arith.divf %589, %588 : vector<1x16xf32>
    %591 = arith.mulf %580, %552 : vector<1x16xf32>
    %592 = arith.mulf %572, %582 : vector<1x16xf32>
    %593 = arith.addf %591, %592 : vector<1x16xf32>
    %594 = math.tanh %593 : vector<1x16xf32>
    %595 = arith.mulf %590, %594 : vector<1x16xf32>
    %c4_i32 = arith.constant 4 : i32
    %596 = vector.broadcast %c4_i32 : i32 to vector<8x1xi32>
    %597 = arith.cmpi eq, %397, %596 : vector<8x1xi32>
    %598 = vector.shape_cast %597 : vector<8x1xi1> to vector<8x1xi1>
    %599 = vector.broadcast %598 : vector<8x1xi1> to vector<8x16xi1>
    %600 = vector.shape_cast %595 : vector<1x16xf32> to vector<1x16xf32>
    %601 = vector.broadcast %600 : vector<1x16xf32> to vector<8x16xf32>
    %602 = arith.select %599, %601, %561 : vector<8x16xi1>, vector<8x16xf32>
    %603 = vector.extract_strided_slice %393 {offsets = [5, 0], sizes = [1, 64], strides = [1, 1]} : vector<8x64xf32> to vector<1x64xf32>
    %cst_185 = arith.constant dense<0.000000e+00> : vector<1x64xf32>
    %604 = tpu.matmul %595, %389, %cst_185 {dimension_numbers = #tpu.dot_dimension_numbers<[1], [0], [0], [1], [0, 0, 1, 1], [], []>} : vector<1x16xf32>, vector<16x64xf32>, vector<1x64xf32> -> vector<1x64xf32>
    %605 = arith.addf %603, %604 : vector<1x64xf32>
    %606 = vector.extract_strided_slice %605 {offsets = [0, 0], sizes = [1, 16], strides = [1, 1]} : vector<1x64xf32> to vector<1x16xf32>
    %cst_186 = arith.constant 0.000000e+00 : f32
    %607 = vector.broadcast %cst_186 : f32 to vector<1x16xf32>
    %608 = arith.subf %607, %606 : vector<1x16xf32>
    %609 = math.exp %608 : vector<1x16xf32>
    %cst_187 = arith.constant 1.000000e+00 : f32
    %610 = vector.broadcast %cst_187 : f32 to vector<1x16xf32>
    %611 = arith.addf %610, %609 : vector<1x16xf32>
    %cst_188 = arith.constant 1.000000e+00 : f32
    %612 = vector.broadcast %cst_188 : f32 to vector<1x16xf32>
    %613 = arith.divf %612, %611 : vector<1x16xf32>
    %614 = vector.extract_strided_slice %605 {offsets = [0, 16], sizes = [1, 16], strides = [1, 1]} : vector<1x64xf32> to vector<1x16xf32>
    %cst_189 = arith.constant 0.000000e+00 : f32
    %615 = vector.broadcast %cst_189 : f32 to vector<1x16xf32>
    %616 = arith.subf %615, %614 : vector<1x16xf32>
    %617 = math.exp %616 : vector<1x16xf32>
    %cst_190 = arith.constant 1.000000e+00 : f32
    %618 = vector.broadcast %cst_190 : f32 to vector<1x16xf32>
    %619 = arith.addf %618, %617 : vector<1x16xf32>
    %cst_191 = arith.constant 1.000000e+00 : f32
    %620 = vector.broadcast %cst_191 : f32 to vector<1x16xf32>
    %621 = arith.divf %620, %619 : vector<1x16xf32>
    %622 = vector.extract_strided_slice %605 {offsets = [0, 32], sizes = [1, 16], strides = [1, 1]} : vector<1x64xf32> to vector<1x16xf32>
    %623 = math.tanh %622 : vector<1x16xf32>
    %624 = vector.extract_strided_slice %605 {offsets = [0, 48], sizes = [1, 16], strides = [1, 1]} : vector<1x64xf32> to vector<1x16xf32>
    %cst_192 = arith.constant 0.000000e+00 : f32
    %625 = vector.broadcast %cst_192 : f32 to vector<1x16xf32>
    %626 = arith.subf %625, %624 : vector<1x16xf32>
    %627 = math.exp %626 : vector<1x16xf32>
    %cst_193 = arith.constant 1.000000e+00 : f32
    %628 = vector.broadcast %cst_193 : f32 to vector<1x16xf32>
    %629 = arith.addf %628, %627 : vector<1x16xf32>
    %cst_194 = arith.constant 1.000000e+00 : f32
    %630 = vector.broadcast %cst_194 : f32 to vector<1x16xf32>
    %631 = arith.divf %630, %629 : vector<1x16xf32>
    %632 = arith.mulf %621, %593 : vector<1x16xf32>
    %633 = arith.mulf %613, %623 : vector<1x16xf32>
    %634 = arith.addf %632, %633 : vector<1x16xf32>
    %635 = math.tanh %634 : vector<1x16xf32>
    %636 = arith.mulf %631, %635 : vector<1x16xf32>
    %c5_i32 = arith.constant 5 : i32
    %637 = vector.broadcast %c5_i32 : i32 to vector<8x1xi32>
    %638 = arith.cmpi eq, %397, %637 : vector<8x1xi32>
    %639 = vector.shape_cast %638 : vector<8x1xi1> to vector<8x1xi1>
    %640 = vector.broadcast %639 : vector<8x1xi1> to vector<8x16xi1>
    %641 = vector.shape_cast %636 : vector<1x16xf32> to vector<1x16xf32>
    %642 = vector.broadcast %641 : vector<1x16xf32> to vector<8x16xf32>
    %643 = arith.select %640, %642, %602 : vector<8x16xi1>, vector<8x16xf32>
    %644 = vector.extract_strided_slice %393 {offsets = [6, 0], sizes = [1, 64], strides = [1, 1]} : vector<8x64xf32> to vector<1x64xf32>
    %cst_195 = arith.constant dense<0.000000e+00> : vector<1x64xf32>
    %645 = tpu.matmul %636, %389, %cst_195 {dimension_numbers = #tpu.dot_dimension_numbers<[1], [0], [0], [1], [0, 0, 1, 1], [], []>} : vector<1x16xf32>, vector<16x64xf32>, vector<1x64xf32> -> vector<1x64xf32>
    %646 = arith.addf %644, %645 : vector<1x64xf32>
    %647 = vector.extract_strided_slice %646 {offsets = [0, 0], sizes = [1, 16], strides = [1, 1]} : vector<1x64xf32> to vector<1x16xf32>
    %cst_196 = arith.constant 0.000000e+00 : f32
    %648 = vector.broadcast %cst_196 : f32 to vector<1x16xf32>
    %649 = arith.subf %648, %647 : vector<1x16xf32>
    %650 = math.exp %649 : vector<1x16xf32>
    %cst_197 = arith.constant 1.000000e+00 : f32
    %651 = vector.broadcast %cst_197 : f32 to vector<1x16xf32>
    %652 = arith.addf %651, %650 : vector<1x16xf32>
    %cst_198 = arith.constant 1.000000e+00 : f32
    %653 = vector.broadcast %cst_198 : f32 to vector<1x16xf32>
    %654 = arith.divf %653, %652 : vector<1x16xf32>
    %655 = vector.extract_strided_slice %646 {offsets = [0, 16], sizes = [1, 16], strides = [1, 1]} : vector<1x64xf32> to vector<1x16xf32>
    %cst_199 = arith.constant 0.000000e+00 : f32
    %656 = vector.broadcast %cst_199 : f32 to vector<1x16xf32>
    %657 = arith.subf %656, %655 : vector<1x16xf32>
    %658 = math.exp %657 : vector<1x16xf32>
    %cst_200 = arith.constant 1.000000e+00 : f32
    %659 = vector.broadcast %cst_200 : f32 to vector<1x16xf32>
    %660 = arith.addf %659, %658 : vector<1x16xf32>
    %cst_201 = arith.constant 1.000000e+00 : f32
    %661 = vector.broadcast %cst_201 : f32 to vector<1x16xf32>
    %662 = arith.divf %661, %660 : vector<1x16xf32>
    %663 = vector.extract_strided_slice %646 {offsets = [0, 32], sizes = [1, 16], strides = [1, 1]} : vector<1x64xf32> to vector<1x16xf32>
    %664 = math.tanh %663 : vector<1x16xf32>
    %665 = vector.extract_strided_slice %646 {offsets = [0, 48], sizes = [1, 16], strides = [1, 1]} : vector<1x64xf32> to vector<1x16xf32>
    %cst_202 = arith.constant 0.000000e+00 : f32
    %666 = vector.broadcast %cst_202 : f32 to vector<1x16xf32>
    %667 = arith.subf %666, %665 : vector<1x16xf32>
    %668 = math.exp %667 : vector<1x16xf32>
    %cst_203 = arith.constant 1.000000e+00 : f32
    %669 = vector.broadcast %cst_203 : f32 to vector<1x16xf32>
    %670 = arith.addf %669, %668 : vector<1x16xf32>
    %cst_204 = arith.constant 1.000000e+00 : f32
    %671 = vector.broadcast %cst_204 : f32 to vector<1x16xf32>
    %672 = arith.divf %671, %670 : vector<1x16xf32>
    %673 = arith.mulf %662, %634 : vector<1x16xf32>
    %674 = arith.mulf %654, %664 : vector<1x16xf32>
    %675 = arith.addf %673, %674 : vector<1x16xf32>
    %676 = math.tanh %675 : vector<1x16xf32>
    %677 = arith.mulf %672, %676 : vector<1x16xf32>
    %c6_i32 = arith.constant 6 : i32
    %678 = vector.broadcast %c6_i32 : i32 to vector<8x1xi32>
    %679 = arith.cmpi eq, %397, %678 : vector<8x1xi32>
    %680 = vector.shape_cast %679 : vector<8x1xi1> to vector<8x1xi1>
    %681 = vector.broadcast %680 : vector<8x1xi1> to vector<8x16xi1>
    %682 = vector.shape_cast %677 : vector<1x16xf32> to vector<1x16xf32>
    %683 = vector.broadcast %682 : vector<1x16xf32> to vector<8x16xf32>
    %684 = arith.select %681, %683, %643 : vector<8x16xi1>, vector<8x16xf32>
    %685 = vector.extract_strided_slice %393 {offsets = [7, 0], sizes = [1, 64], strides = [1, 1]} : vector<8x64xf32> to vector<1x64xf32>
    %cst_205 = arith.constant dense<0.000000e+00> : vector<1x64xf32>
    %686 = tpu.matmul %677, %389, %cst_205 {dimension_numbers = #tpu.dot_dimension_numbers<[1], [0], [0], [1], [0, 0, 1, 1], [], []>} : vector<1x16xf32>, vector<16x64xf32>, vector<1x64xf32> -> vector<1x64xf32>
    %687 = arith.addf %685, %686 : vector<1x64xf32>
    %688 = vector.extract_strided_slice %687 {offsets = [0, 0], sizes = [1, 16], strides = [1, 1]} : vector<1x64xf32> to vector<1x16xf32>
    %cst_206 = arith.constant 0.000000e+00 : f32
    %689 = vector.broadcast %cst_206 : f32 to vector<1x16xf32>
    %690 = arith.subf %689, %688 : vector<1x16xf32>
    %691 = math.exp %690 : vector<1x16xf32>
    %cst_207 = arith.constant 1.000000e+00 : f32
    %692 = vector.broadcast %cst_207 : f32 to vector<1x16xf32>
    %693 = arith.addf %692, %691 : vector<1x16xf32>
    %cst_208 = arith.constant 1.000000e+00 : f32
    %694 = vector.broadcast %cst_208 : f32 to vector<1x16xf32>
    %695 = arith.divf %694, %693 : vector<1x16xf32>
    %696 = vector.extract_strided_slice %687 {offsets = [0, 16], sizes = [1, 16], strides = [1, 1]} : vector<1x64xf32> to vector<1x16xf32>
    %cst_209 = arith.constant 0.000000e+00 : f32
    %697 = vector.broadcast %cst_209 : f32 to vector<1x16xf32>
    %698 = arith.subf %697, %696 : vector<1x16xf32>
    %699 = math.exp %698 : vector<1x16xf32>
    %cst_210 = arith.constant 1.000000e+00 : f32
    %700 = vector.broadcast %cst_210 : f32 to vector<1x16xf32>
    %701 = arith.addf %700, %699 : vector<1x16xf32>
    %cst_211 = arith.constant 1.000000e+00 : f32
    %702 = vector.broadcast %cst_211 : f32 to vector<1x16xf32>
    %703 = arith.divf %702, %701 : vector<1x16xf32>
    %704 = vector.extract_strided_slice %687 {offsets = [0, 32], sizes = [1, 16], strides = [1, 1]} : vector<1x64xf32> to vector<1x16xf32>
    %705 = math.tanh %704 : vector<1x16xf32>
    %706 = vector.extract_strided_slice %687 {offsets = [0, 48], sizes = [1, 16], strides = [1, 1]} : vector<1x64xf32> to vector<1x16xf32>
    %cst_212 = arith.constant 0.000000e+00 : f32
    %707 = vector.broadcast %cst_212 : f32 to vector<1x16xf32>
    %708 = arith.subf %707, %706 : vector<1x16xf32>
    %709 = math.exp %708 : vector<1x16xf32>
    %cst_213 = arith.constant 1.000000e+00 : f32
    %710 = vector.broadcast %cst_213 : f32 to vector<1x16xf32>
    %711 = arith.addf %710, %709 : vector<1x16xf32>
    %cst_214 = arith.constant 1.000000e+00 : f32
    %712 = vector.broadcast %cst_214 : f32 to vector<1x16xf32>
    %713 = arith.divf %712, %711 : vector<1x16xf32>
    %714 = arith.mulf %703, %675 : vector<1x16xf32>
    %715 = arith.mulf %695, %705 : vector<1x16xf32>
    %716 = arith.addf %714, %715 : vector<1x16xf32>
    %717 = math.tanh %716 : vector<1x16xf32>
    %718 = arith.mulf %713, %717 : vector<1x16xf32>
    %c7_i32 = arith.constant 7 : i32
    %719 = vector.broadcast %c7_i32 : i32 to vector<8x1xi32>
    %720 = arith.cmpi eq, %397, %719 : vector<8x1xi32>
    %721 = vector.shape_cast %720 : vector<8x1xi1> to vector<8x1xi1>
    %722 = vector.broadcast %721 : vector<8x1xi1> to vector<8x16xi1>
    %723 = vector.shape_cast %718 : vector<1x16xf32> to vector<1x16xf32>
    %724 = vector.broadcast %723 : vector<1x16xf32> to vector<8x16xf32>
    %725 = arith.select %722, %724, %684 : vector<8x16xi1>, vector<8x16xf32>
    %c664 = arith.constant 664 : index
    %c0_215 = arith.constant 0 : index
    %726 = vector.load %arg2[%c664, %c0_215] : memref<760x128xf32, #tpu.memory_space<vmem>>, vector<32x64xf32>
    %c696 = arith.constant 696 : index
    %c0_216 = arith.constant 0 : index
    %727 = vector.load %arg2[%c696, %c0_216] : memref<760x128xf32, #tpu.memory_space<vmem>>, vector<16x64xf32>
    %c712 = arith.constant 712 : index
    %c0_217 = arith.constant 0 : index
    %728 = vector.load %arg2[%c712, %c0_217] : memref<760x128xf32, #tpu.memory_space<vmem>>, vector<1x64xf32>
    %cst_218 = arith.constant dense<0.000000e+00> : vector<8x64xf32>
    %729 = tpu.matmul %387, %726, %cst_218 {dimension_numbers = #tpu.dot_dimension_numbers<[1], [0], [0], [1], [0, 0, 1, 1], [], []>} : vector<8x32xf32>, vector<32x64xf32>, vector<8x64xf32> -> vector<8x64xf32>
    %730 = vector.broadcast %728 : vector<1x64xf32> to vector<8x64xf32>
    %731 = arith.addf %729, %730 : vector<8x64xf32>
    %cst_219 = arith.constant 0.000000e+00 : f32
    %732 = vector.broadcast %cst_219 : f32 to vector<1x16xf32>
    %cst_220 = arith.constant 0.000000e+00 : f32
    %733 = vector.broadcast %cst_220 : f32 to vector<1x16xf32>
    %cst_221 = arith.constant 0.000000e+00 : f32
    %734 = vector.broadcast %cst_221 : f32 to vector<8x16xf32>
    %735 = tpu.iota {dimensions = array<i32: 0>} : vector<8x1xi32>
    %736 = vector.extract_strided_slice %731 {offsets = [7, 0], sizes = [1, 64], strides = [1, 1]} : vector<8x64xf32> to vector<1x64xf32>
    %cst_222 = arith.constant dense<0.000000e+00> : vector<1x64xf32>
    %737 = tpu.matmul %732, %727, %cst_222 {dimension_numbers = #tpu.dot_dimension_numbers<[1], [0], [0], [1], [0, 0, 1, 1], [], []>} : vector<1x16xf32>, vector<16x64xf32>, vector<1x64xf32> -> vector<1x64xf32>
    %738 = arith.addf %736, %737 : vector<1x64xf32>
    %739 = vector.extract_strided_slice %738 {offsets = [0, 0], sizes = [1, 16], strides = [1, 1]} : vector<1x64xf32> to vector<1x16xf32>
    %cst_223 = arith.constant 0.000000e+00 : f32
    %740 = vector.broadcast %cst_223 : f32 to vector<1x16xf32>
    %741 = arith.subf %740, %739 : vector<1x16xf32>
    %742 = math.exp %741 : vector<1x16xf32>
    %cst_224 = arith.constant 1.000000e+00 : f32
    %743 = vector.broadcast %cst_224 : f32 to vector<1x16xf32>
    %744 = arith.addf %743, %742 : vector<1x16xf32>
    %cst_225 = arith.constant 1.000000e+00 : f32
    %745 = vector.broadcast %cst_225 : f32 to vector<1x16xf32>
    %746 = arith.divf %745, %744 : vector<1x16xf32>
    %747 = vector.extract_strided_slice %738 {offsets = [0, 16], sizes = [1, 16], strides = [1, 1]} : vector<1x64xf32> to vector<1x16xf32>
    %cst_226 = arith.constant 0.000000e+00 : f32
    %748 = vector.broadcast %cst_226 : f32 to vector<1x16xf32>
    %749 = arith.subf %748, %747 : vector<1x16xf32>
    %750 = math.exp %749 : vector<1x16xf32>
    %cst_227 = arith.constant 1.000000e+00 : f32
    %751 = vector.broadcast %cst_227 : f32 to vector<1x16xf32>
    %752 = arith.addf %751, %750 : vector<1x16xf32>
    %cst_228 = arith.constant 1.000000e+00 : f32
    %753 = vector.broadcast %cst_228 : f32 to vector<1x16xf32>
    %754 = arith.divf %753, %752 : vector<1x16xf32>
    %755 = vector.extract_strided_slice %738 {offsets = [0, 32], sizes = [1, 16], strides = [1, 1]} : vector<1x64xf32> to vector<1x16xf32>
    %756 = math.tanh %755 : vector<1x16xf32>
    %757 = vector.extract_strided_slice %738 {offsets = [0, 48], sizes = [1, 16], strides = [1, 1]} : vector<1x64xf32> to vector<1x16xf32>
    %cst_229 = arith.constant 0.000000e+00 : f32
    %758 = vector.broadcast %cst_229 : f32 to vector<1x16xf32>
    %759 = arith.subf %758, %757 : vector<1x16xf32>
    %760 = math.exp %759 : vector<1x16xf32>
    %cst_230 = arith.constant 1.000000e+00 : f32
    %761 = vector.broadcast %cst_230 : f32 to vector<1x16xf32>
    %762 = arith.addf %761, %760 : vector<1x16xf32>
    %cst_231 = arith.constant 1.000000e+00 : f32
    %763 = vector.broadcast %cst_231 : f32 to vector<1x16xf32>
    %764 = arith.divf %763, %762 : vector<1x16xf32>
    %765 = arith.mulf %754, %733 : vector<1x16xf32>
    %766 = arith.mulf %746, %756 : vector<1x16xf32>
    %767 = arith.addf %765, %766 : vector<1x16xf32>
    %768 = math.tanh %767 : vector<1x16xf32>
    %769 = arith.mulf %764, %768 : vector<1x16xf32>
    %c7_i32_232 = arith.constant 7 : i32
    %770 = vector.broadcast %c7_i32_232 : i32 to vector<8x1xi32>
    %771 = arith.cmpi eq, %735, %770 : vector<8x1xi32>
    %772 = vector.shape_cast %771 : vector<8x1xi1> to vector<8x1xi1>
    %773 = vector.broadcast %772 : vector<8x1xi1> to vector<8x16xi1>
    %774 = vector.shape_cast %769 : vector<1x16xf32> to vector<1x16xf32>
    %775 = vector.broadcast %774 : vector<1x16xf32> to vector<8x16xf32>
    %776 = arith.select %773, %775, %734 : vector<8x16xi1>, vector<8x16xf32>
    %777 = vector.extract_strided_slice %731 {offsets = [6, 0], sizes = [1, 64], strides = [1, 1]} : vector<8x64xf32> to vector<1x64xf32>
    %cst_233 = arith.constant dense<0.000000e+00> : vector<1x64xf32>
    %778 = tpu.matmul %769, %727, %cst_233 {dimension_numbers = #tpu.dot_dimension_numbers<[1], [0], [0], [1], [0, 0, 1, 1], [], []>} : vector<1x16xf32>, vector<16x64xf32>, vector<1x64xf32> -> vector<1x64xf32>
    %779 = arith.addf %777, %778 : vector<1x64xf32>
    %780 = vector.extract_strided_slice %779 {offsets = [0, 0], sizes = [1, 16], strides = [1, 1]} : vector<1x64xf32> to vector<1x16xf32>
    %cst_234 = arith.constant 0.000000e+00 : f32
    %781 = vector.broadcast %cst_234 : f32 to vector<1x16xf32>
    %782 = arith.subf %781, %780 : vector<1x16xf32>
    %783 = math.exp %782 : vector<1x16xf32>
    %cst_235 = arith.constant 1.000000e+00 : f32
    %784 = vector.broadcast %cst_235 : f32 to vector<1x16xf32>
    %785 = arith.addf %784, %783 : vector<1x16xf32>
    %cst_236 = arith.constant 1.000000e+00 : f32
    %786 = vector.broadcast %cst_236 : f32 to vector<1x16xf32>
    %787 = arith.divf %786, %785 : vector<1x16xf32>
    %788 = vector.extract_strided_slice %779 {offsets = [0, 16], sizes = [1, 16], strides = [1, 1]} : vector<1x64xf32> to vector<1x16xf32>
    %cst_237 = arith.constant 0.000000e+00 : f32
    %789 = vector.broadcast %cst_237 : f32 to vector<1x16xf32>
    %790 = arith.subf %789, %788 : vector<1x16xf32>
    %791 = math.exp %790 : vector<1x16xf32>
    %cst_238 = arith.constant 1.000000e+00 : f32
    %792 = vector.broadcast %cst_238 : f32 to vector<1x16xf32>
    %793 = arith.addf %792, %791 : vector<1x16xf32>
    %cst_239 = arith.constant 1.000000e+00 : f32
    %794 = vector.broadcast %cst_239 : f32 to vector<1x16xf32>
    %795 = arith.divf %794, %793 : vector<1x16xf32>
    %796 = vector.extract_strided_slice %779 {offsets = [0, 32], sizes = [1, 16], strides = [1, 1]} : vector<1x64xf32> to vector<1x16xf32>
    %797 = math.tanh %796 : vector<1x16xf32>
    %798 = vector.extract_strided_slice %779 {offsets = [0, 48], sizes = [1, 16], strides = [1, 1]} : vector<1x64xf32> to vector<1x16xf32>
    %cst_240 = arith.constant 0.000000e+00 : f32
    %799 = vector.broadcast %cst_240 : f32 to vector<1x16xf32>
    %800 = arith.subf %799, %798 : vector<1x16xf32>
    %801 = math.exp %800 : vector<1x16xf32>
    %cst_241 = arith.constant 1.000000e+00 : f32
    %802 = vector.broadcast %cst_241 : f32 to vector<1x16xf32>
    %803 = arith.addf %802, %801 : vector<1x16xf32>
    %cst_242 = arith.constant 1.000000e+00 : f32
    %804 = vector.broadcast %cst_242 : f32 to vector<1x16xf32>
    %805 = arith.divf %804, %803 : vector<1x16xf32>
    %806 = arith.mulf %795, %767 : vector<1x16xf32>
    %807 = arith.mulf %787, %797 : vector<1x16xf32>
    %808 = arith.addf %806, %807 : vector<1x16xf32>
    %809 = math.tanh %808 : vector<1x16xf32>
    %810 = arith.mulf %805, %809 : vector<1x16xf32>
    %c6_i32_243 = arith.constant 6 : i32
    %811 = vector.broadcast %c6_i32_243 : i32 to vector<8x1xi32>
    %812 = arith.cmpi eq, %735, %811 : vector<8x1xi32>
    %813 = vector.shape_cast %812 : vector<8x1xi1> to vector<8x1xi1>
    %814 = vector.broadcast %813 : vector<8x1xi1> to vector<8x16xi1>
    %815 = vector.shape_cast %810 : vector<1x16xf32> to vector<1x16xf32>
    %816 = vector.broadcast %815 : vector<1x16xf32> to vector<8x16xf32>
    %817 = arith.select %814, %816, %776 : vector<8x16xi1>, vector<8x16xf32>
    %818 = vector.extract_strided_slice %731 {offsets = [5, 0], sizes = [1, 64], strides = [1, 1]} : vector<8x64xf32> to vector<1x64xf32>
    %cst_244 = arith.constant dense<0.000000e+00> : vector<1x64xf32>
    %819 = tpu.matmul %810, %727, %cst_244 {dimension_numbers = #tpu.dot_dimension_numbers<[1], [0], [0], [1], [0, 0, 1, 1], [], []>} : vector<1x16xf32>, vector<16x64xf32>, vector<1x64xf32> -> vector<1x64xf32>
    %820 = arith.addf %818, %819 : vector<1x64xf32>
    %821 = vector.extract_strided_slice %820 {offsets = [0, 0], sizes = [1, 16], strides = [1, 1]} : vector<1x64xf32> to vector<1x16xf32>
    %cst_245 = arith.constant 0.000000e+00 : f32
    %822 = vector.broadcast %cst_245 : f32 to vector<1x16xf32>
    %823 = arith.subf %822, %821 : vector<1x16xf32>
    %824 = math.exp %823 : vector<1x16xf32>
    %cst_246 = arith.constant 1.000000e+00 : f32
    %825 = vector.broadcast %cst_246 : f32 to vector<1x16xf32>
    %826 = arith.addf %825, %824 : vector<1x16xf32>
    %cst_247 = arith.constant 1.000000e+00 : f32
    %827 = vector.broadcast %cst_247 : f32 to vector<1x16xf32>
    %828 = arith.divf %827, %826 : vector<1x16xf32>
    %829 = vector.extract_strided_slice %820 {offsets = [0, 16], sizes = [1, 16], strides = [1, 1]} : vector<1x64xf32> to vector<1x16xf32>
    %cst_248 = arith.constant 0.000000e+00 : f32
    %830 = vector.broadcast %cst_248 : f32 to vector<1x16xf32>
    %831 = arith.subf %830, %829 : vector<1x16xf32>
    %832 = math.exp %831 : vector<1x16xf32>
    %cst_249 = arith.constant 1.000000e+00 : f32
    %833 = vector.broadcast %cst_249 : f32 to vector<1x16xf32>
    %834 = arith.addf %833, %832 : vector<1x16xf32>
    %cst_250 = arith.constant 1.000000e+00 : f32
    %835 = vector.broadcast %cst_250 : f32 to vector<1x16xf32>
    %836 = arith.divf %835, %834 : vector<1x16xf32>
    %837 = vector.extract_strided_slice %820 {offsets = [0, 32], sizes = [1, 16], strides = [1, 1]} : vector<1x64xf32> to vector<1x16xf32>
    %838 = math.tanh %837 : vector<1x16xf32>
    %839 = vector.extract_strided_slice %820 {offsets = [0, 48], sizes = [1, 16], strides = [1, 1]} : vector<1x64xf32> to vector<1x16xf32>
    %cst_251 = arith.constant 0.000000e+00 : f32
    %840 = vector.broadcast %cst_251 : f32 to vector<1x16xf32>
    %841 = arith.subf %840, %839 : vector<1x16xf32>
    %842 = math.exp %841 : vector<1x16xf32>
    %cst_252 = arith.constant 1.000000e+00 : f32
    %843 = vector.broadcast %cst_252 : f32 to vector<1x16xf32>
    %844 = arith.addf %843, %842 : vector<1x16xf32>
    %cst_253 = arith.constant 1.000000e+00 : f32
    %845 = vector.broadcast %cst_253 : f32 to vector<1x16xf32>
    %846 = arith.divf %845, %844 : vector<1x16xf32>
    %847 = arith.mulf %836, %808 : vector<1x16xf32>
    %848 = arith.mulf %828, %838 : vector<1x16xf32>
    %849 = arith.addf %847, %848 : vector<1x16xf32>
    %850 = math.tanh %849 : vector<1x16xf32>
    %851 = arith.mulf %846, %850 : vector<1x16xf32>
    %c5_i32_254 = arith.constant 5 : i32
    %852 = vector.broadcast %c5_i32_254 : i32 to vector<8x1xi32>
    %853 = arith.cmpi eq, %735, %852 : vector<8x1xi32>
    %854 = vector.shape_cast %853 : vector<8x1xi1> to vector<8x1xi1>
    %855 = vector.broadcast %854 : vector<8x1xi1> to vector<8x16xi1>
    %856 = vector.shape_cast %851 : vector<1x16xf32> to vector<1x16xf32>
    %857 = vector.broadcast %856 : vector<1x16xf32> to vector<8x16xf32>
    %858 = arith.select %855, %857, %817 : vector<8x16xi1>, vector<8x16xf32>
    %859 = vector.extract_strided_slice %731 {offsets = [4, 0], sizes = [1, 64], strides = [1, 1]} : vector<8x64xf32> to vector<1x64xf32>
    %cst_255 = arith.constant dense<0.000000e+00> : vector<1x64xf32>
    %860 = tpu.matmul %851, %727, %cst_255 {dimension_numbers = #tpu.dot_dimension_numbers<[1], [0], [0], [1], [0, 0, 1, 1], [], []>} : vector<1x16xf32>, vector<16x64xf32>, vector<1x64xf32> -> vector<1x64xf32>
    %861 = arith.addf %859, %860 : vector<1x64xf32>
    %862 = vector.extract_strided_slice %861 {offsets = [0, 0], sizes = [1, 16], strides = [1, 1]} : vector<1x64xf32> to vector<1x16xf32>
    %cst_256 = arith.constant 0.000000e+00 : f32
    %863 = vector.broadcast %cst_256 : f32 to vector<1x16xf32>
    %864 = arith.subf %863, %862 : vector<1x16xf32>
    %865 = math.exp %864 : vector<1x16xf32>
    %cst_257 = arith.constant 1.000000e+00 : f32
    %866 = vector.broadcast %cst_257 : f32 to vector<1x16xf32>
    %867 = arith.addf %866, %865 : vector<1x16xf32>
    %cst_258 = arith.constant 1.000000e+00 : f32
    %868 = vector.broadcast %cst_258 : f32 to vector<1x16xf32>
    %869 = arith.divf %868, %867 : vector<1x16xf32>
    %870 = vector.extract_strided_slice %861 {offsets = [0, 16], sizes = [1, 16], strides = [1, 1]} : vector<1x64xf32> to vector<1x16xf32>
    %cst_259 = arith.constant 0.000000e+00 : f32
    %871 = vector.broadcast %cst_259 : f32 to vector<1x16xf32>
    %872 = arith.subf %871, %870 : vector<1x16xf32>
    %873 = math.exp %872 : vector<1x16xf32>
    %cst_260 = arith.constant 1.000000e+00 : f32
    %874 = vector.broadcast %cst_260 : f32 to vector<1x16xf32>
    %875 = arith.addf %874, %873 : vector<1x16xf32>
    %cst_261 = arith.constant 1.000000e+00 : f32
    %876 = vector.broadcast %cst_261 : f32 to vector<1x16xf32>
    %877 = arith.divf %876, %875 : vector<1x16xf32>
    %878 = vector.extract_strided_slice %861 {offsets = [0, 32], sizes = [1, 16], strides = [1, 1]} : vector<1x64xf32> to vector<1x16xf32>
    %879 = math.tanh %878 : vector<1x16xf32>
    %880 = vector.extract_strided_slice %861 {offsets = [0, 48], sizes = [1, 16], strides = [1, 1]} : vector<1x64xf32> to vector<1x16xf32>
    %cst_262 = arith.constant 0.000000e+00 : f32
    %881 = vector.broadcast %cst_262 : f32 to vector<1x16xf32>
    %882 = arith.subf %881, %880 : vector<1x16xf32>
    %883 = math.exp %882 : vector<1x16xf32>
    %cst_263 = arith.constant 1.000000e+00 : f32
    %884 = vector.broadcast %cst_263 : f32 to vector<1x16xf32>
    %885 = arith.addf %884, %883 : vector<1x16xf32>
    %cst_264 = arith.constant 1.000000e+00 : f32
    %886 = vector.broadcast %cst_264 : f32 to vector<1x16xf32>
    %887 = arith.divf %886, %885 : vector<1x16xf32>
    %888 = arith.mulf %877, %849 : vector<1x16xf32>
    %889 = arith.mulf %869, %879 : vector<1x16xf32>
    %890 = arith.addf %888, %889 : vector<1x16xf32>
    %891 = math.tanh %890 : vector<1x16xf32>
    %892 = arith.mulf %887, %891 : vector<1x16xf32>
    %c4_i32_265 = arith.constant 4 : i32
    %893 = vector.broadcast %c4_i32_265 : i32 to vector<8x1xi32>
    %894 = arith.cmpi eq, %735, %893 : vector<8x1xi32>
    %895 = vector.shape_cast %894 : vector<8x1xi1> to vector<8x1xi1>
    %896 = vector.broadcast %895 : vector<8x1xi1> to vector<8x16xi1>
    %897 = vector.shape_cast %892 : vector<1x16xf32> to vector<1x16xf32>
    %898 = vector.broadcast %897 : vector<1x16xf32> to vector<8x16xf32>
    %899 = arith.select %896, %898, %858 : vector<8x16xi1>, vector<8x16xf32>
    %900 = vector.extract_strided_slice %731 {offsets = [3, 0], sizes = [1, 64], strides = [1, 1]} : vector<8x64xf32> to vector<1x64xf32>
    %cst_266 = arith.constant dense<0.000000e+00> : vector<1x64xf32>
    %901 = tpu.matmul %892, %727, %cst_266 {dimension_numbers = #tpu.dot_dimension_numbers<[1], [0], [0], [1], [0, 0, 1, 1], [], []>} : vector<1x16xf32>, vector<16x64xf32>, vector<1x64xf32> -> vector<1x64xf32>
    %902 = arith.addf %900, %901 : vector<1x64xf32>
    %903 = vector.extract_strided_slice %902 {offsets = [0, 0], sizes = [1, 16], strides = [1, 1]} : vector<1x64xf32> to vector<1x16xf32>
    %cst_267 = arith.constant 0.000000e+00 : f32
    %904 = vector.broadcast %cst_267 : f32 to vector<1x16xf32>
    %905 = arith.subf %904, %903 : vector<1x16xf32>
    %906 = math.exp %905 : vector<1x16xf32>
    %cst_268 = arith.constant 1.000000e+00 : f32
    %907 = vector.broadcast %cst_268 : f32 to vector<1x16xf32>
    %908 = arith.addf %907, %906 : vector<1x16xf32>
    %cst_269 = arith.constant 1.000000e+00 : f32
    %909 = vector.broadcast %cst_269 : f32 to vector<1x16xf32>
    %910 = arith.divf %909, %908 : vector<1x16xf32>
    %911 = vector.extract_strided_slice %902 {offsets = [0, 16], sizes = [1, 16], strides = [1, 1]} : vector<1x64xf32> to vector<1x16xf32>
    %cst_270 = arith.constant 0.000000e+00 : f32
    %912 = vector.broadcast %cst_270 : f32 to vector<1x16xf32>
    %913 = arith.subf %912, %911 : vector<1x16xf32>
    %914 = math.exp %913 : vector<1x16xf32>
    %cst_271 = arith.constant 1.000000e+00 : f32
    %915 = vector.broadcast %cst_271 : f32 to vector<1x16xf32>
    %916 = arith.addf %915, %914 : vector<1x16xf32>
    %cst_272 = arith.constant 1.000000e+00 : f32
    %917 = vector.broadcast %cst_272 : f32 to vector<1x16xf32>
    %918 = arith.divf %917, %916 : vector<1x16xf32>
    %919 = vector.extract_strided_slice %902 {offsets = [0, 32], sizes = [1, 16], strides = [1, 1]} : vector<1x64xf32> to vector<1x16xf32>
    %920 = math.tanh %919 : vector<1x16xf32>
    %921 = vector.extract_strided_slice %902 {offsets = [0, 48], sizes = [1, 16], strides = [1, 1]} : vector<1x64xf32> to vector<1x16xf32>
    %cst_273 = arith.constant 0.000000e+00 : f32
    %922 = vector.broadcast %cst_273 : f32 to vector<1x16xf32>
    %923 = arith.subf %922, %921 : vector<1x16xf32>
    %924 = math.exp %923 : vector<1x16xf32>
    %cst_274 = arith.constant 1.000000e+00 : f32
    %925 = vector.broadcast %cst_274 : f32 to vector<1x16xf32>
    %926 = arith.addf %925, %924 : vector<1x16xf32>
    %cst_275 = arith.constant 1.000000e+00 : f32
    %927 = vector.broadcast %cst_275 : f32 to vector<1x16xf32>
    %928 = arith.divf %927, %926 : vector<1x16xf32>
    %929 = arith.mulf %918, %890 : vector<1x16xf32>
    %930 = arith.mulf %910, %920 : vector<1x16xf32>
    %931 = arith.addf %929, %930 : vector<1x16xf32>
    %932 = math.tanh %931 : vector<1x16xf32>
    %933 = arith.mulf %928, %932 : vector<1x16xf32>
    %c3_i32_276 = arith.constant 3 : i32
    %934 = vector.broadcast %c3_i32_276 : i32 to vector<8x1xi32>
    %935 = arith.cmpi eq, %735, %934 : vector<8x1xi32>
    %936 = vector.shape_cast %935 : vector<8x1xi1> to vector<8x1xi1>
    %937 = vector.broadcast %936 : vector<8x1xi1> to vector<8x16xi1>
    %938 = vector.shape_cast %933 : vector<1x16xf32> to vector<1x16xf32>
    %939 = vector.broadcast %938 : vector<1x16xf32> to vector<8x16xf32>
    %940 = arith.select %937, %939, %899 : vector<8x16xi1>, vector<8x16xf32>
    %941 = vector.extract_strided_slice %731 {offsets = [2, 0], sizes = [1, 64], strides = [1, 1]} : vector<8x64xf32> to vector<1x64xf32>
    %cst_277 = arith.constant dense<0.000000e+00> : vector<1x64xf32>
    %942 = tpu.matmul %933, %727, %cst_277 {dimension_numbers = #tpu.dot_dimension_numbers<[1], [0], [0], [1], [0, 0, 1, 1], [], []>} : vector<1x16xf32>, vector<16x64xf32>, vector<1x64xf32> -> vector<1x64xf32>
    %943 = arith.addf %941, %942 : vector<1x64xf32>
    %944 = vector.extract_strided_slice %943 {offsets = [0, 0], sizes = [1, 16], strides = [1, 1]} : vector<1x64xf32> to vector<1x16xf32>
    %cst_278 = arith.constant 0.000000e+00 : f32
    %945 = vector.broadcast %cst_278 : f32 to vector<1x16xf32>
    %946 = arith.subf %945, %944 : vector<1x16xf32>
    %947 = math.exp %946 : vector<1x16xf32>
    %cst_279 = arith.constant 1.000000e+00 : f32
    %948 = vector.broadcast %cst_279 : f32 to vector<1x16xf32>
    %949 = arith.addf %948, %947 : vector<1x16xf32>
    %cst_280 = arith.constant 1.000000e+00 : f32
    %950 = vector.broadcast %cst_280 : f32 to vector<1x16xf32>
    %951 = arith.divf %950, %949 : vector<1x16xf32>
    %952 = vector.extract_strided_slice %943 {offsets = [0, 16], sizes = [1, 16], strides = [1, 1]} : vector<1x64xf32> to vector<1x16xf32>
    %cst_281 = arith.constant 0.000000e+00 : f32
    %953 = vector.broadcast %cst_281 : f32 to vector<1x16xf32>
    %954 = arith.subf %953, %952 : vector<1x16xf32>
    %955 = math.exp %954 : vector<1x16xf32>
    %cst_282 = arith.constant 1.000000e+00 : f32
    %956 = vector.broadcast %cst_282 : f32 to vector<1x16xf32>
    %957 = arith.addf %956, %955 : vector<1x16xf32>
    %cst_283 = arith.constant 1.000000e+00 : f32
    %958 = vector.broadcast %cst_283 : f32 to vector<1x16xf32>
    %959 = arith.divf %958, %957 : vector<1x16xf32>
    %960 = vector.extract_strided_slice %943 {offsets = [0, 32], sizes = [1, 16], strides = [1, 1]} : vector<1x64xf32> to vector<1x16xf32>
    %961 = math.tanh %960 : vector<1x16xf32>
    %962 = vector.extract_strided_slice %943 {offsets = [0, 48], sizes = [1, 16], strides = [1, 1]} : vector<1x64xf32> to vector<1x16xf32>
    %cst_284 = arith.constant 0.000000e+00 : f32
    %963 = vector.broadcast %cst_284 : f32 to vector<1x16xf32>
    %964 = arith.subf %963, %962 : vector<1x16xf32>
    %965 = math.exp %964 : vector<1x16xf32>
    %cst_285 = arith.constant 1.000000e+00 : f32
    %966 = vector.broadcast %cst_285 : f32 to vector<1x16xf32>
    %967 = arith.addf %966, %965 : vector<1x16xf32>
    %cst_286 = arith.constant 1.000000e+00 : f32
    %968 = vector.broadcast %cst_286 : f32 to vector<1x16xf32>
    %969 = arith.divf %968, %967 : vector<1x16xf32>
    %970 = arith.mulf %959, %931 : vector<1x16xf32>
    %971 = arith.mulf %951, %961 : vector<1x16xf32>
    %972 = arith.addf %970, %971 : vector<1x16xf32>
    %973 = math.tanh %972 : vector<1x16xf32>
    %974 = arith.mulf %969, %973 : vector<1x16xf32>
    %c2_i32_287 = arith.constant 2 : i32
    %975 = vector.broadcast %c2_i32_287 : i32 to vector<8x1xi32>
    %976 = arith.cmpi eq, %735, %975 : vector<8x1xi32>
    %977 = vector.shape_cast %976 : vector<8x1xi1> to vector<8x1xi1>
    %978 = vector.broadcast %977 : vector<8x1xi1> to vector<8x16xi1>
    %979 = vector.shape_cast %974 : vector<1x16xf32> to vector<1x16xf32>
    %980 = vector.broadcast %979 : vector<1x16xf32> to vector<8x16xf32>
    %981 = arith.select %978, %980, %940 : vector<8x16xi1>, vector<8x16xf32>
    %982 = vector.extract_strided_slice %731 {offsets = [1, 0], sizes = [1, 64], strides = [1, 1]} : vector<8x64xf32> to vector<1x64xf32>
    %cst_288 = arith.constant dense<0.000000e+00> : vector<1x64xf32>
    %983 = tpu.matmul %974, %727, %cst_288 {dimension_numbers = #tpu.dot_dimension_numbers<[1], [0], [0], [1], [0, 0, 1, 1], [], []>} : vector<1x16xf32>, vector<16x64xf32>, vector<1x64xf32> -> vector<1x64xf32>
    %984 = arith.addf %982, %983 : vector<1x64xf32>
    %985 = vector.extract_strided_slice %984 {offsets = [0, 0], sizes = [1, 16], strides = [1, 1]} : vector<1x64xf32> to vector<1x16xf32>
    %cst_289 = arith.constant 0.000000e+00 : f32
    %986 = vector.broadcast %cst_289 : f32 to vector<1x16xf32>
    %987 = arith.subf %986, %985 : vector<1x16xf32>
    %988 = math.exp %987 : vector<1x16xf32>
    %cst_290 = arith.constant 1.000000e+00 : f32
    %989 = vector.broadcast %cst_290 : f32 to vector<1x16xf32>
    %990 = arith.addf %989, %988 : vector<1x16xf32>
    %cst_291 = arith.constant 1.000000e+00 : f32
    %991 = vector.broadcast %cst_291 : f32 to vector<1x16xf32>
    %992 = arith.divf %991, %990 : vector<1x16xf32>
    %993 = vector.extract_strided_slice %984 {offsets = [0, 16], sizes = [1, 16], strides = [1, 1]} : vector<1x64xf32> to vector<1x16xf32>
    %cst_292 = arith.constant 0.000000e+00 : f32
    %994 = vector.broadcast %cst_292 : f32 to vector<1x16xf32>
    %995 = arith.subf %994, %993 : vector<1x16xf32>
    %996 = math.exp %995 : vector<1x16xf32>
    %cst_293 = arith.constant 1.000000e+00 : f32
    %997 = vector.broadcast %cst_293 : f32 to vector<1x16xf32>
    %998 = arith.addf %997, %996 : vector<1x16xf32>
    %cst_294 = arith.constant 1.000000e+00 : f32
    %999 = vector.broadcast %cst_294 : f32 to vector<1x16xf32>
    %1000 = arith.divf %999, %998 : vector<1x16xf32>
    %1001 = vector.extract_strided_slice %984 {offsets = [0, 32], sizes = [1, 16], strides = [1, 1]} : vector<1x64xf32> to vector<1x16xf32>
    %1002 = math.tanh %1001 : vector<1x16xf32>
    %1003 = vector.extract_strided_slice %984 {offsets = [0, 48], sizes = [1, 16], strides = [1, 1]} : vector<1x64xf32> to vector<1x16xf32>
    %cst_295 = arith.constant 0.000000e+00 : f32
    %1004 = vector.broadcast %cst_295 : f32 to vector<1x16xf32>
    %1005 = arith.subf %1004, %1003 : vector<1x16xf32>
    %1006 = math.exp %1005 : vector<1x16xf32>
    %cst_296 = arith.constant 1.000000e+00 : f32
    %1007 = vector.broadcast %cst_296 : f32 to vector<1x16xf32>
    %1008 = arith.addf %1007, %1006 : vector<1x16xf32>
    %cst_297 = arith.constant 1.000000e+00 : f32
    %1009 = vector.broadcast %cst_297 : f32 to vector<1x16xf32>
    %1010 = arith.divf %1009, %1008 : vector<1x16xf32>
    %1011 = arith.mulf %1000, %972 : vector<1x16xf32>
    %1012 = arith.mulf %992, %1002 : vector<1x16xf32>
    %1013 = arith.addf %1011, %1012 : vector<1x16xf32>
    %1014 = math.tanh %1013 : vector<1x16xf32>
    %1015 = arith.mulf %1010, %1014 : vector<1x16xf32>
    %c1_i32_298 = arith.constant 1 : i32
    %1016 = vector.broadcast %c1_i32_298 : i32 to vector<8x1xi32>
    %1017 = arith.cmpi eq, %735, %1016 : vector<8x1xi32>
    %1018 = vector.shape_cast %1017 : vector<8x1xi1> to vector<8x1xi1>
    %1019 = vector.broadcast %1018 : vector<8x1xi1> to vector<8x16xi1>
    %1020 = vector.shape_cast %1015 : vector<1x16xf32> to vector<1x16xf32>
    %1021 = vector.broadcast %1020 : vector<1x16xf32> to vector<8x16xf32>
    %1022 = arith.select %1019, %1021, %981 : vector<8x16xi1>, vector<8x16xf32>
    %1023 = vector.extract_strided_slice %731 {offsets = [0, 0], sizes = [1, 64], strides = [1, 1]} : vector<8x64xf32> to vector<1x64xf32>
    %cst_299 = arith.constant dense<0.000000e+00> : vector<1x64xf32>
    %1024 = tpu.matmul %1015, %727, %cst_299 {dimension_numbers = #tpu.dot_dimension_numbers<[1], [0], [0], [1], [0, 0, 1, 1], [], []>} : vector<1x16xf32>, vector<16x64xf32>, vector<1x64xf32> -> vector<1x64xf32>
    %1025 = arith.addf %1023, %1024 : vector<1x64xf32>
    %1026 = vector.extract_strided_slice %1025 {offsets = [0, 0], sizes = [1, 16], strides = [1, 1]} : vector<1x64xf32> to vector<1x16xf32>
    %cst_300 = arith.constant 0.000000e+00 : f32
    %1027 = vector.broadcast %cst_300 : f32 to vector<1x16xf32>
    %1028 = arith.subf %1027, %1026 : vector<1x16xf32>
    %1029 = math.exp %1028 : vector<1x16xf32>
    %cst_301 = arith.constant 1.000000e+00 : f32
    %1030 = vector.broadcast %cst_301 : f32 to vector<1x16xf32>
    %1031 = arith.addf %1030, %1029 : vector<1x16xf32>
    %cst_302 = arith.constant 1.000000e+00 : f32
    %1032 = vector.broadcast %cst_302 : f32 to vector<1x16xf32>
    %1033 = arith.divf %1032, %1031 : vector<1x16xf32>
    %1034 = vector.extract_strided_slice %1025 {offsets = [0, 16], sizes = [1, 16], strides = [1, 1]} : vector<1x64xf32> to vector<1x16xf32>
    %cst_303 = arith.constant 0.000000e+00 : f32
    %1035 = vector.broadcast %cst_303 : f32 to vector<1x16xf32>
    %1036 = arith.subf %1035, %1034 : vector<1x16xf32>
    %1037 = math.exp %1036 : vector<1x16xf32>
    %cst_304 = arith.constant 1.000000e+00 : f32
    %1038 = vector.broadcast %cst_304 : f32 to vector<1x16xf32>
    %1039 = arith.addf %1038, %1037 : vector<1x16xf32>
    %cst_305 = arith.constant 1.000000e+00 : f32
    %1040 = vector.broadcast %cst_305 : f32 to vector<1x16xf32>
    %1041 = arith.divf %1040, %1039 : vector<1x16xf32>
    %1042 = vector.extract_strided_slice %1025 {offsets = [0, 32], sizes = [1, 16], strides = [1, 1]} : vector<1x64xf32> to vector<1x16xf32>
    %1043 = math.tanh %1042 : vector<1x16xf32>
    %1044 = vector.extract_strided_slice %1025 {offsets = [0, 48], sizes = [1, 16], strides = [1, 1]} : vector<1x64xf32> to vector<1x16xf32>
    %cst_306 = arith.constant 0.000000e+00 : f32
    %1045 = vector.broadcast %cst_306 : f32 to vector<1x16xf32>
    %1046 = arith.subf %1045, %1044 : vector<1x16xf32>
    %1047 = math.exp %1046 : vector<1x16xf32>
    %cst_307 = arith.constant 1.000000e+00 : f32
    %1048 = vector.broadcast %cst_307 : f32 to vector<1x16xf32>
    %1049 = arith.addf %1048, %1047 : vector<1x16xf32>
    %cst_308 = arith.constant 1.000000e+00 : f32
    %1050 = vector.broadcast %cst_308 : f32 to vector<1x16xf32>
    %1051 = arith.divf %1050, %1049 : vector<1x16xf32>
    %1052 = arith.mulf %1041, %1013 : vector<1x16xf32>
    %1053 = arith.mulf %1033, %1043 : vector<1x16xf32>
    %1054 = arith.addf %1052, %1053 : vector<1x16xf32>
    %1055 = math.tanh %1054 : vector<1x16xf32>
    %1056 = arith.mulf %1051, %1055 : vector<1x16xf32>
    %c0_i32_309 = arith.constant 0 : i32
    %1057 = vector.broadcast %c0_i32_309 : i32 to vector<8x1xi32>
    %1058 = arith.cmpi eq, %735, %1057 : vector<8x1xi32>
    %1059 = vector.shape_cast %1058 : vector<8x1xi1> to vector<8x1xi1>
    %1060 = vector.broadcast %1059 : vector<8x1xi1> to vector<8x16xi1>
    %1061 = vector.shape_cast %1056 : vector<1x16xf32> to vector<1x16xf32>
    %1062 = vector.broadcast %1061 : vector<1x16xf32> to vector<8x16xf32>
    %1063 = arith.select %1060, %1062, %1022 : vector<8x16xi1>, vector<8x16xf32>
    %cst_310 = arith.constant dense<0.000000e+00> : vector<8x9xf32>
    %1064 = tpu.matmul %725, %385, %cst_310 {dimension_numbers = #tpu.dot_dimension_numbers<[1], [0], [0], [1], [0, 0, 1, 1], [], []>} : vector<8x16xf32>, vector<16x9xf32>, vector<8x9xf32> -> vector<8x9xf32>
    %cst_311 = arith.constant dense<0.000000e+00> : vector<8x9xf32>
    %1065 = tpu.matmul %1063, %386, %cst_311 {dimension_numbers = #tpu.dot_dimension_numbers<[1], [0], [0], [1], [0, 0, 1, 1], [], []>} : vector<8x16xf32>, vector<16x9xf32>, vector<8x9xf32> -> vector<8x9xf32>
    %1066 = arith.addf %1064, %1065 : vector<8x9xf32>
    %1067 = vector.broadcast %384 : vector<1x9xf32> to vector<8x9xf32>
    %1068 = arith.addf %1066, %1067 : vector<8x9xf32>
    %cst_312 = arith.constant dense<0xFF800000> : vector<8xf32>
    %1069 = vector.multi_reduction <maximumf>, %1068, %cst_312 [1] : vector<8x9xf32> to vector<8xf32>
    %1070 = vector.shape_cast %1069 : vector<8xf32> to vector<8x1xf32>
    %1071 = tpu.iota {dimensions = array<i32: 1>} : vector<8x9xi32>
    %1072 = vector.broadcast %1070 : vector<8x1xf32> to vector<8x9xf32>
    %1073 = arith.cmpf oeq, %1068, %1072 : vector<8x9xf32>
    %c9_i32 = arith.constant 9 : i32
    %1074 = vector.broadcast %c9_i32 : i32 to vector<8x9xi32>
    %1075 = arith.select %1073, %1071, %1074 : vector<8x9xi1>, vector<8x9xi32>
    %cst_313 = arith.constant dense<2147483647> : vector<8xi32>
    %1076 = vector.multi_reduction <minsi>, %1075, %cst_313 [1] : vector<8x9xi32> to vector<8xi32>
    %1077 = vector.shape_cast %1076 : vector<8xi32> to vector<8x1xi32>
    %c0_314 = arith.constant 0 : index
    %c0_315 = arith.constant 0 : index
    %1078 = vector.load %arg3[%c0_314, %c0_315] : memref<16x1xi32, #tpu.memory_space<vmem>>, vector<8x1xi32>
    tpu.vector_store %arg3[%c0_314, %c0_315], %1077 {strides = array<i32>} : memref<16x1xi32, #tpu.memory_space<vmem>>, vector<8x1xi32>,
    %1079 = vector.extract_strided_slice %382 {offsets = [8, 0], sizes = [8, 32], strides = [1, 1]} : vector<16x32xf32> to vector<8x32xf32>
    %c608_316 = arith.constant 608 : index
    %c0_317 = arith.constant 0 : index
    %1080 = vector.load %arg2[%c608_316, %c0_317] : memref<760x128xf32, #tpu.memory_space<vmem>>, vector<32x64xf32>
    %c640_318 = arith.constant 640 : index
    %c0_319 = arith.constant 0 : index
    %1081 = vector.load %arg2[%c640_318, %c0_319] : memref<760x128xf32, #tpu.memory_space<vmem>>, vector<16x64xf32>
    %c656_320 = arith.constant 656 : index
    %c0_321 = arith.constant 0 : index
    %1082 = vector.load %arg2[%c656_320, %c0_321] : memref<760x128xf32, #tpu.memory_space<vmem>>, vector<1x64xf32>
    %cst_322 = arith.constant dense<0.000000e+00> : vector<8x64xf32>
    %1083 = tpu.matmul %1079, %1080, %cst_322 {dimension_numbers = #tpu.dot_dimension_numbers<[1], [0], [0], [1], [0, 0, 1, 1], [], []>} : vector<8x32xf32>, vector<32x64xf32>, vector<8x64xf32> -> vector<8x64xf32>
    %1084 = vector.broadcast %1082 : vector<1x64xf32> to vector<8x64xf32>
    %1085 = arith.addf %1083, %1084 : vector<8x64xf32>
    %cst_323 = arith.constant 0.000000e+00 : f32
    %1086 = vector.broadcast %cst_323 : f32 to vector<1x16xf32>
    %cst_324 = arith.constant 0.000000e+00 : f32
    %1087 = vector.broadcast %cst_324 : f32 to vector<1x16xf32>
    %cst_325 = arith.constant 0.000000e+00 : f32
    %1088 = vector.broadcast %cst_325 : f32 to vector<8x16xf32>
    %1089 = tpu.iota {dimensions = array<i32: 0>} : vector<8x1xi32>
    %1090 = vector.extract_strided_slice %1085 {offsets = [0, 0], sizes = [1, 64], strides = [1, 1]} : vector<8x64xf32> to vector<1x64xf32>
    %cst_326 = arith.constant dense<0.000000e+00> : vector<1x64xf32>
    %1091 = tpu.matmul %1086, %1081, %cst_326 {dimension_numbers = #tpu.dot_dimension_numbers<[1], [0], [0], [1], [0, 0, 1, 1], [], []>} : vector<1x16xf32>, vector<16x64xf32>, vector<1x64xf32> -> vector<1x64xf32>
    %1092 = arith.addf %1090, %1091 : vector<1x64xf32>
    %1093 = vector.extract_strided_slice %1092 {offsets = [0, 0], sizes = [1, 16], strides = [1, 1]} : vector<1x64xf32> to vector<1x16xf32>
    %cst_327 = arith.constant 0.000000e+00 : f32
    %1094 = vector.broadcast %cst_327 : f32 to vector<1x16xf32>
    %1095 = arith.subf %1094, %1093 : vector<1x16xf32>
    %1096 = math.exp %1095 : vector<1x16xf32>
    %cst_328 = arith.constant 1.000000e+00 : f32
    %1097 = vector.broadcast %cst_328 : f32 to vector<1x16xf32>
    %1098 = arith.addf %1097, %1096 : vector<1x16xf32>
    %cst_329 = arith.constant 1.000000e+00 : f32
    %1099 = vector.broadcast %cst_329 : f32 to vector<1x16xf32>
    %1100 = arith.divf %1099, %1098 : vector<1x16xf32>
    %1101 = vector.extract_strided_slice %1092 {offsets = [0, 16], sizes = [1, 16], strides = [1, 1]} : vector<1x64xf32> to vector<1x16xf32>
    %cst_330 = arith.constant 0.000000e+00 : f32
    %1102 = vector.broadcast %cst_330 : f32 to vector<1x16xf32>
    %1103 = arith.subf %1102, %1101 : vector<1x16xf32>
    %1104 = math.exp %1103 : vector<1x16xf32>
    %cst_331 = arith.constant 1.000000e+00 : f32
    %1105 = vector.broadcast %cst_331 : f32 to vector<1x16xf32>
    %1106 = arith.addf %1105, %1104 : vector<1x16xf32>
    %cst_332 = arith.constant 1.000000e+00 : f32
    %1107 = vector.broadcast %cst_332 : f32 to vector<1x16xf32>
    %1108 = arith.divf %1107, %1106 : vector<1x16xf32>
    %1109 = vector.extract_strided_slice %1092 {offsets = [0, 32], sizes = [1, 16], strides = [1, 1]} : vector<1x64xf32> to vector<1x16xf32>
    %1110 = math.tanh %1109 : vector<1x16xf32>
    %1111 = vector.extract_strided_slice %1092 {offsets = [0, 48], sizes = [1, 16], strides = [1, 1]} : vector<1x64xf32> to vector<1x16xf32>
    %cst_333 = arith.constant 0.000000e+00 : f32
    %1112 = vector.broadcast %cst_333 : f32 to vector<1x16xf32>
    %1113 = arith.subf %1112, %1111 : vector<1x16xf32>
    %1114 = math.exp %1113 : vector<1x16xf32>
    %cst_334 = arith.constant 1.000000e+00 : f32
    %1115 = vector.broadcast %cst_334 : f32 to vector<1x16xf32>
    %1116 = arith.addf %1115, %1114 : vector<1x16xf32>
    %cst_335 = arith.constant 1.000000e+00 : f32
    %1117 = vector.broadcast %cst_335 : f32 to vector<1x16xf32>
    %1118 = arith.divf %1117, %1116 : vector<1x16xf32>
    %1119 = arith.mulf %1108, %1087 : vector<1x16xf32>
    %1120 = arith.mulf %1100, %1110 : vector<1x16xf32>
    %1121 = arith.addf %1119, %1120 : vector<1x16xf32>
    %1122 = math.tanh %1121 : vector<1x16xf32>
    %1123 = arith.mulf %1118, %1122 : vector<1x16xf32>
    %c0_i32_336 = arith.constant 0 : i32
    %1124 = vector.broadcast %c0_i32_336 : i32 to vector<8x1xi32>
    %1125 = arith.cmpi eq, %1089, %1124 : vector<8x1xi32>
    %1126 = vector.shape_cast %1125 : vector<8x1xi1> to vector<8x1xi1>
    %1127 = vector.broadcast %1126 : vector<8x1xi1> to vector<8x16xi1>
    %1128 = vector.shape_cast %1123 : vector<1x16xf32> to vector<1x16xf32>
    %1129 = vector.broadcast %1128 : vector<1x16xf32> to vector<8x16xf32>
    %1130 = arith.select %1127, %1129, %1088 : vector<8x16xi1>, vector<8x16xf32>
    %1131 = vector.extract_strided_slice %1085 {offsets = [1, 0], sizes = [1, 64], strides = [1, 1]} : vector<8x64xf32> to vector<1x64xf32>
    %cst_337 = arith.constant dense<0.000000e+00> : vector<1x64xf32>
    %1132 = tpu.matmul %1123, %1081, %cst_337 {dimension_numbers = #tpu.dot_dimension_numbers<[1], [0], [0], [1], [0, 0, 1, 1], [], []>} : vector<1x16xf32>, vector<16x64xf32>, vector<1x64xf32> -> vector<1x64xf32>
    %1133 = arith.addf %1131, %1132 : vector<1x64xf32>
    %1134 = vector.extract_strided_slice %1133 {offsets = [0, 0], sizes = [1, 16], strides = [1, 1]} : vector<1x64xf32> to vector<1x16xf32>
    %cst_338 = arith.constant 0.000000e+00 : f32
    %1135 = vector.broadcast %cst_338 : f32 to vector<1x16xf32>
    %1136 = arith.subf %1135, %1134 : vector<1x16xf32>
    %1137 = math.exp %1136 : vector<1x16xf32>
    %cst_339 = arith.constant 1.000000e+00 : f32
    %1138 = vector.broadcast %cst_339 : f32 to vector<1x16xf32>
    %1139 = arith.addf %1138, %1137 : vector<1x16xf32>
    %cst_340 = arith.constant 1.000000e+00 : f32
    %1140 = vector.broadcast %cst_340 : f32 to vector<1x16xf32>
    %1141 = arith.divf %1140, %1139 : vector<1x16xf32>
    %1142 = vector.extract_strided_slice %1133 {offsets = [0, 16], sizes = [1, 16], strides = [1, 1]} : vector<1x64xf32> to vector<1x16xf32>
    %cst_341 = arith.constant 0.000000e+00 : f32
    %1143 = vector.broadcast %cst_341 : f32 to vector<1x16xf32>
    %1144 = arith.subf %1143, %1142 : vector<1x16xf32>
    %1145 = math.exp %1144 : vector<1x16xf32>
    %cst_342 = arith.constant 1.000000e+00 : f32
    %1146 = vector.broadcast %cst_342 : f32 to vector<1x16xf32>
    %1147 = arith.addf %1146, %1145 : vector<1x16xf32>
    %cst_343 = arith.constant 1.000000e+00 : f32
    %1148 = vector.broadcast %cst_343 : f32 to vector<1x16xf32>
    %1149 = arith.divf %1148, %1147 : vector<1x16xf32>
    %1150 = vector.extract_strided_slice %1133 {offsets = [0, 32], sizes = [1, 16], strides = [1, 1]} : vector<1x64xf32> to vector<1x16xf32>
    %1151 = math.tanh %1150 : vector<1x16xf32>
    %1152 = vector.extract_strided_slice %1133 {offsets = [0, 48], sizes = [1, 16], strides = [1, 1]} : vector<1x64xf32> to vector<1x16xf32>
    %cst_344 = arith.constant 0.000000e+00 : f32
    %1153 = vector.broadcast %cst_344 : f32 to vector<1x16xf32>
    %1154 = arith.subf %1153, %1152 : vector<1x16xf32>
    %1155 = math.exp %1154 : vector<1x16xf32>
    %cst_345 = arith.constant 1.000000e+00 : f32
    %1156 = vector.broadcast %cst_345 : f32 to vector<1x16xf32>
    %1157 = arith.addf %1156, %1155 : vector<1x16xf32>
    %cst_346 = arith.constant 1.000000e+00 : f32
    %1158 = vector.broadcast %cst_346 : f32 to vector<1x16xf32>
    %1159 = arith.divf %1158, %1157 : vector<1x16xf32>
    %1160 = arith.mulf %1149, %1121 : vector<1x16xf32>
    %1161 = arith.mulf %1141, %1151 : vector<1x16xf32>
    %1162 = arith.addf %1160, %1161 : vector<1x16xf32>
    %1163 = math.tanh %1162 : vector<1x16xf32>
    %1164 = arith.mulf %1159, %1163 : vector<1x16xf32>
    %c1_i32_347 = arith.constant 1 : i32
    %1165 = vector.broadcast %c1_i32_347 : i32 to vector<8x1xi32>
    %1166 = arith.cmpi eq, %1089, %1165 : vector<8x1xi32>
    %1167 = vector.shape_cast %1166 : vector<8x1xi1> to vector<8x1xi1>
    %1168 = vector.broadcast %1167 : vector<8x1xi1> to vector<8x16xi1>
    %1169 = vector.shape_cast %1164 : vector<1x16xf32> to vector<1x16xf32>
    %1170 = vector.broadcast %1169 : vector<1x16xf32> to vector<8x16xf32>
    %1171 = arith.select %1168, %1170, %1130 : vector<8x16xi1>, vector<8x16xf32>
    %1172 = vector.extract_strided_slice %1085 {offsets = [2, 0], sizes = [1, 64], strides = [1, 1]} : vector<8x64xf32> to vector<1x64xf32>
    %cst_348 = arith.constant dense<0.000000e+00> : vector<1x64xf32>
    %1173 = tpu.matmul %1164, %1081, %cst_348 {dimension_numbers = #tpu.dot_dimension_numbers<[1], [0], [0], [1], [0, 0, 1, 1], [], []>} : vector<1x16xf32>, vector<16x64xf32>, vector<1x64xf32> -> vector<1x64xf32>
    %1174 = arith.addf %1172, %1173 : vector<1x64xf32>
    %1175 = vector.extract_strided_slice %1174 {offsets = [0, 0], sizes = [1, 16], strides = [1, 1]} : vector<1x64xf32> to vector<1x16xf32>
    %cst_349 = arith.constant 0.000000e+00 : f32
    %1176 = vector.broadcast %cst_349 : f32 to vector<1x16xf32>
    %1177 = arith.subf %1176, %1175 : vector<1x16xf32>
    %1178 = math.exp %1177 : vector<1x16xf32>
    %cst_350 = arith.constant 1.000000e+00 : f32
    %1179 = vector.broadcast %cst_350 : f32 to vector<1x16xf32>
    %1180 = arith.addf %1179, %1178 : vector<1x16xf32>
    %cst_351 = arith.constant 1.000000e+00 : f32
    %1181 = vector.broadcast %cst_351 : f32 to vector<1x16xf32>
    %1182 = arith.divf %1181, %1180 : vector<1x16xf32>
    %1183 = vector.extract_strided_slice %1174 {offsets = [0, 16], sizes = [1, 16], strides = [1, 1]} : vector<1x64xf32> to vector<1x16xf32>
    %cst_352 = arith.constant 0.000000e+00 : f32
    %1184 = vector.broadcast %cst_352 : f32 to vector<1x16xf32>
    %1185 = arith.subf %1184, %1183 : vector<1x16xf32>
    %1186 = math.exp %1185 : vector<1x16xf32>
    %cst_353 = arith.constant 1.000000e+00 : f32
    %1187 = vector.broadcast %cst_353 : f32 to vector<1x16xf32>
    %1188 = arith.addf %1187, %1186 : vector<1x16xf32>
    %cst_354 = arith.constant 1.000000e+00 : f32
    %1189 = vector.broadcast %cst_354 : f32 to vector<1x16xf32>
    %1190 = arith.divf %1189, %1188 : vector<1x16xf32>
    %1191 = vector.extract_strided_slice %1174 {offsets = [0, 32], sizes = [1, 16], strides = [1, 1]} : vector<1x64xf32> to vector<1x16xf32>
    %1192 = math.tanh %1191 : vector<1x16xf32>
    %1193 = vector.extract_strided_slice %1174 {offsets = [0, 48], sizes = [1, 16], strides = [1, 1]} : vector<1x64xf32> to vector<1x16xf32>
    %cst_355 = arith.constant 0.000000e+00 : f32
    %1194 = vector.broadcast %cst_355 : f32 to vector<1x16xf32>
    %1195 = arith.subf %1194, %1193 : vector<1x16xf32>
    %1196 = math.exp %1195 : vector<1x16xf32>
    %cst_356 = arith.constant 1.000000e+00 : f32
    %1197 = vector.broadcast %cst_356 : f32 to vector<1x16xf32>
    %1198 = arith.addf %1197, %1196 : vector<1x16xf32>
    %cst_357 = arith.constant 1.000000e+00 : f32
    %1199 = vector.broadcast %cst_357 : f32 to vector<1x16xf32>
    %1200 = arith.divf %1199, %1198 : vector<1x16xf32>
    %1201 = arith.mulf %1190, %1162 : vector<1x16xf32>
    %1202 = arith.mulf %1182, %1192 : vector<1x16xf32>
    %1203 = arith.addf %1201, %1202 : vector<1x16xf32>
    %1204 = math.tanh %1203 : vector<1x16xf32>
    %1205 = arith.mulf %1200, %1204 : vector<1x16xf32>
    %c2_i32_358 = arith.constant 2 : i32
    %1206 = vector.broadcast %c2_i32_358 : i32 to vector<8x1xi32>
    %1207 = arith.cmpi eq, %1089, %1206 : vector<8x1xi32>
    %1208 = vector.shape_cast %1207 : vector<8x1xi1> to vector<8x1xi1>
    %1209 = vector.broadcast %1208 : vector<8x1xi1> to vector<8x16xi1>
    %1210 = vector.shape_cast %1205 : vector<1x16xf32> to vector<1x16xf32>
    %1211 = vector.broadcast %1210 : vector<1x16xf32> to vector<8x16xf32>
    %1212 = arith.select %1209, %1211, %1171 : vector<8x16xi1>, vector<8x16xf32>
    %1213 = vector.extract_strided_slice %1085 {offsets = [3, 0], sizes = [1, 64], strides = [1, 1]} : vector<8x64xf32> to vector<1x64xf32>
    %cst_359 = arith.constant dense<0.000000e+00> : vector<1x64xf32>
    %1214 = tpu.matmul %1205, %1081, %cst_359 {dimension_numbers = #tpu.dot_dimension_numbers<[1], [0], [0], [1], [0, 0, 1, 1], [], []>} : vector<1x16xf32>, vector<16x64xf32>, vector<1x64xf32> -> vector<1x64xf32>
    %1215 = arith.addf %1213, %1214 : vector<1x64xf32>
    %1216 = vector.extract_strided_slice %1215 {offsets = [0, 0], sizes = [1, 16], strides = [1, 1]} : vector<1x64xf32> to vector<1x16xf32>
    %cst_360 = arith.constant 0.000000e+00 : f32
    %1217 = vector.broadcast %cst_360 : f32 to vector<1x16xf32>
    %1218 = arith.subf %1217, %1216 : vector<1x16xf32>
    %1219 = math.exp %1218 : vector<1x16xf32>
    %cst_361 = arith.constant 1.000000e+00 : f32
    %1220 = vector.broadcast %cst_361 : f32 to vector<1x16xf32>
    %1221 = arith.addf %1220, %1219 : vector<1x16xf32>
    %cst_362 = arith.constant 1.000000e+00 : f32
    %1222 = vector.broadcast %cst_362 : f32 to vector<1x16xf32>
    %1223 = arith.divf %1222, %1221 : vector<1x16xf32>
    %1224 = vector.extract_strided_slice %1215 {offsets = [0, 16], sizes = [1, 16], strides = [1, 1]} : vector<1x64xf32> to vector<1x16xf32>
    %cst_363 = arith.constant 0.000000e+00 : f32
    %1225 = vector.broadcast %cst_363 : f32 to vector<1x16xf32>
    %1226 = arith.subf %1225, %1224 : vector<1x16xf32>
    %1227 = math.exp %1226 : vector<1x16xf32>
    %cst_364 = arith.constant 1.000000e+00 : f32
    %1228 = vector.broadcast %cst_364 : f32 to vector<1x16xf32>
    %1229 = arith.addf %1228, %1227 : vector<1x16xf32>
    %cst_365 = arith.constant 1.000000e+00 : f32
    %1230 = vector.broadcast %cst_365 : f32 to vector<1x16xf32>
    %1231 = arith.divf %1230, %1229 : vector<1x16xf32>
    %1232 = vector.extract_strided_slice %1215 {offsets = [0, 32], sizes = [1, 16], strides = [1, 1]} : vector<1x64xf32> to vector<1x16xf32>
    %1233 = math.tanh %1232 : vector<1x16xf32>
    %1234 = vector.extract_strided_slice %1215 {offsets = [0, 48], sizes = [1, 16], strides = [1, 1]} : vector<1x64xf32> to vector<1x16xf32>
    %cst_366 = arith.constant 0.000000e+00 : f32
    %1235 = vector.broadcast %cst_366 : f32 to vector<1x16xf32>
    %1236 = arith.subf %1235, %1234 : vector<1x16xf32>
    %1237 = math.exp %1236 : vector<1x16xf32>
    %cst_367 = arith.constant 1.000000e+00 : f32
    %1238 = vector.broadcast %cst_367 : f32 to vector<1x16xf32>
    %1239 = arith.addf %1238, %1237 : vector<1x16xf32>
    %cst_368 = arith.constant 1.000000e+00 : f32
    %1240 = vector.broadcast %cst_368 : f32 to vector<1x16xf32>
    %1241 = arith.divf %1240, %1239 : vector<1x16xf32>
    %1242 = arith.mulf %1231, %1203 : vector<1x16xf32>
    %1243 = arith.mulf %1223, %1233 : vector<1x16xf32>
    %1244 = arith.addf %1242, %1243 : vector<1x16xf32>
    %1245 = math.tanh %1244 : vector<1x16xf32>
    %1246 = arith.mulf %1241, %1245 : vector<1x16xf32>
    %c3_i32_369 = arith.constant 3 : i32
    %1247 = vector.broadcast %c3_i32_369 : i32 to vector<8x1xi32>
    %1248 = arith.cmpi eq, %1089, %1247 : vector<8x1xi32>
    %1249 = vector.shape_cast %1248 : vector<8x1xi1> to vector<8x1xi1>
    %1250 = vector.broadcast %1249 : vector<8x1xi1> to vector<8x16xi1>
    %1251 = vector.shape_cast %1246 : vector<1x16xf32> to vector<1x16xf32>
    %1252 = vector.broadcast %1251 : vector<1x16xf32> to vector<8x16xf32>
    %1253 = arith.select %1250, %1252, %1212 : vector<8x16xi1>, vector<8x16xf32>
    %1254 = vector.extract_strided_slice %1085 {offsets = [4, 0], sizes = [1, 64], strides = [1, 1]} : vector<8x64xf32> to vector<1x64xf32>
    %cst_370 = arith.constant dense<0.000000e+00> : vector<1x64xf32>
    %1255 = tpu.matmul %1246, %1081, %cst_370 {dimension_numbers = #tpu.dot_dimension_numbers<[1], [0], [0], [1], [0, 0, 1, 1], [], []>} : vector<1x16xf32>, vector<16x64xf32>, vector<1x64xf32> -> vector<1x64xf32>
    %1256 = arith.addf %1254, %1255 : vector<1x64xf32>
    %1257 = vector.extract_strided_slice %1256 {offsets = [0, 0], sizes = [1, 16], strides = [1, 1]} : vector<1x64xf32> to vector<1x16xf32>
    %cst_371 = arith.constant 0.000000e+00 : f32
    %1258 = vector.broadcast %cst_371 : f32 to vector<1x16xf32>
    %1259 = arith.subf %1258, %1257 : vector<1x16xf32>
    %1260 = math.exp %1259 : vector<1x16xf32>
    %cst_372 = arith.constant 1.000000e+00 : f32
    %1261 = vector.broadcast %cst_372 : f32 to vector<1x16xf32>
    %1262 = arith.addf %1261, %1260 : vector<1x16xf32>
    %cst_373 = arith.constant 1.000000e+00 : f32
    %1263 = vector.broadcast %cst_373 : f32 to vector<1x16xf32>
    %1264 = arith.divf %1263, %1262 : vector<1x16xf32>
    %1265 = vector.extract_strided_slice %1256 {offsets = [0, 16], sizes = [1, 16], strides = [1, 1]} : vector<1x64xf32> to vector<1x16xf32>
    %cst_374 = arith.constant 0.000000e+00 : f32
    %1266 = vector.broadcast %cst_374 : f32 to vector<1x16xf32>
    %1267 = arith.subf %1266, %1265 : vector<1x16xf32>
    %1268 = math.exp %1267 : vector<1x16xf32>
    %cst_375 = arith.constant 1.000000e+00 : f32
    %1269 = vector.broadcast %cst_375 : f32 to vector<1x16xf32>
    %1270 = arith.addf %1269, %1268 : vector<1x16xf32>
    %cst_376 = arith.constant 1.000000e+00 : f32
    %1271 = vector.broadcast %cst_376 : f32 to vector<1x16xf32>
    %1272 = arith.divf %1271, %1270 : vector<1x16xf32>
    %1273 = vector.extract_strided_slice %1256 {offsets = [0, 32], sizes = [1, 16], strides = [1, 1]} : vector<1x64xf32> to vector<1x16xf32>
    %1274 = math.tanh %1273 : vector<1x16xf32>
    %1275 = vector.extract_strided_slice %1256 {offsets = [0, 48], sizes = [1, 16], strides = [1, 1]} : vector<1x64xf32> to vector<1x16xf32>
    %cst_377 = arith.constant 0.000000e+00 : f32
    %1276 = vector.broadcast %cst_377 : f32 to vector<1x16xf32>
    %1277 = arith.subf %1276, %1275 : vector<1x16xf32>
    %1278 = math.exp %1277 : vector<1x16xf32>
    %cst_378 = arith.constant 1.000000e+00 : f32
    %1279 = vector.broadcast %cst_378 : f32 to vector<1x16xf32>
    %1280 = arith.addf %1279, %1278 : vector<1x16xf32>
    %cst_379 = arith.constant 1.000000e+00 : f32
    %1281 = vector.broadcast %cst_379 : f32 to vector<1x16xf32>
    %1282 = arith.divf %1281, %1280 : vector<1x16xf32>
    %1283 = arith.mulf %1272, %1244 : vector<1x16xf32>
    %1284 = arith.mulf %1264, %1274 : vector<1x16xf32>
    %1285 = arith.addf %1283, %1284 : vector<1x16xf32>
    %1286 = math.tanh %1285 : vector<1x16xf32>
    %1287 = arith.mulf %1282, %1286 : vector<1x16xf32>
    %c4_i32_380 = arith.constant 4 : i32
    %1288 = vector.broadcast %c4_i32_380 : i32 to vector<8x1xi32>
    %1289 = arith.cmpi eq, %1089, %1288 : vector<8x1xi32>
    %1290 = vector.shape_cast %1289 : vector<8x1xi1> to vector<8x1xi1>
    %1291 = vector.broadcast %1290 : vector<8x1xi1> to vector<8x16xi1>
    %1292 = vector.shape_cast %1287 : vector<1x16xf32> to vector<1x16xf32>
    %1293 = vector.broadcast %1292 : vector<1x16xf32> to vector<8x16xf32>
    %1294 = arith.select %1291, %1293, %1253 : vector<8x16xi1>, vector<8x16xf32>
    %1295 = vector.extract_strided_slice %1085 {offsets = [5, 0], sizes = [1, 64], strides = [1, 1]} : vector<8x64xf32> to vector<1x64xf32>
    %cst_381 = arith.constant dense<0.000000e+00> : vector<1x64xf32>
    %1296 = tpu.matmul %1287, %1081, %cst_381 {dimension_numbers = #tpu.dot_dimension_numbers<[1], [0], [0], [1], [0, 0, 1, 1], [], []>} : vector<1x16xf32>, vector<16x64xf32>, vector<1x64xf32> -> vector<1x64xf32>
    %1297 = arith.addf %1295, %1296 : vector<1x64xf32>
    %1298 = vector.extract_strided_slice %1297 {offsets = [0, 0], sizes = [1, 16], strides = [1, 1]} : vector<1x64xf32> to vector<1x16xf32>
    %cst_382 = arith.constant 0.000000e+00 : f32
    %1299 = vector.broadcast %cst_382 : f32 to vector<1x16xf32>
    %1300 = arith.subf %1299, %1298 : vector<1x16xf32>
    %1301 = math.exp %1300 : vector<1x16xf32>
    %cst_383 = arith.constant 1.000000e+00 : f32
    %1302 = vector.broadcast %cst_383 : f32 to vector<1x16xf32>
    %1303 = arith.addf %1302, %1301 : vector<1x16xf32>
    %cst_384 = arith.constant 1.000000e+00 : f32
    %1304 = vector.broadcast %cst_384 : f32 to vector<1x16xf32>
    %1305 = arith.divf %1304, %1303 : vector<1x16xf32>
    %1306 = vector.extract_strided_slice %1297 {offsets = [0, 16], sizes = [1, 16], strides = [1, 1]} : vector<1x64xf32> to vector<1x16xf32>
    %cst_385 = arith.constant 0.000000e+00 : f32
    %1307 = vector.broadcast %cst_385 : f32 to vector<1x16xf32>
    %1308 = arith.subf %1307, %1306 : vector<1x16xf32>
    %1309 = math.exp %1308 : vector<1x16xf32>
    %cst_386 = arith.constant 1.000000e+00 : f32
    %1310 = vector.broadcast %cst_386 : f32 to vector<1x16xf32>
    %1311 = arith.addf %1310, %1309 : vector<1x16xf32>
    %cst_387 = arith.constant 1.000000e+00 : f32
    %1312 = vector.broadcast %cst_387 : f32 to vector<1x16xf32>
    %1313 = arith.divf %1312, %1311 : vector<1x16xf32>
    %1314 = vector.extract_strided_slice %1297 {offsets = [0, 32], sizes = [1, 16], strides = [1, 1]} : vector<1x64xf32> to vector<1x16xf32>
    %1315 = math.tanh %1314 : vector<1x16xf32>
    %1316 = vector.extract_strided_slice %1297 {offsets = [0, 48], sizes = [1, 16], strides = [1, 1]} : vector<1x64xf32> to vector<1x16xf32>
    %cst_388 = arith.constant 0.000000e+00 : f32
    %1317 = vector.broadcast %cst_388 : f32 to vector<1x16xf32>
    %1318 = arith.subf %1317, %1316 : vector<1x16xf32>
    %1319 = math.exp %1318 : vector<1x16xf32>
    %cst_389 = arith.constant 1.000000e+00 : f32
    %1320 = vector.broadcast %cst_389 : f32 to vector<1x16xf32>
    %1321 = arith.addf %1320, %1319 : vector<1x16xf32>
    %cst_390 = arith.constant 1.000000e+00 : f32
    %1322 = vector.broadcast %cst_390 : f32 to vector<1x16xf32>
    %1323 = arith.divf %1322, %1321 : vector<1x16xf32>
    %1324 = arith.mulf %1313, %1285 : vector<1x16xf32>
    %1325 = arith.mulf %1305, %1315 : vector<1x16xf32>
    %1326 = arith.addf %1324, %1325 : vector<1x16xf32>
    %1327 = math.tanh %1326 : vector<1x16xf32>
    %1328 = arith.mulf %1323, %1327 : vector<1x16xf32>
    %c5_i32_391 = arith.constant 5 : i32
    %1329 = vector.broadcast %c5_i32_391 : i32 to vector<8x1xi32>
    %1330 = arith.cmpi eq, %1089, %1329 : vector<8x1xi32>
    %1331 = vector.shape_cast %1330 : vector<8x1xi1> to vector<8x1xi1>
    %1332 = vector.broadcast %1331 : vector<8x1xi1> to vector<8x16xi1>
    %1333 = vector.shape_cast %1328 : vector<1x16xf32> to vector<1x16xf32>
    %1334 = vector.broadcast %1333 : vector<1x16xf32> to vector<8x16xf32>
    %1335 = arith.select %1332, %1334, %1294 : vector<8x16xi1>, vector<8x16xf32>
    %1336 = vector.extract_strided_slice %1085 {offsets = [6, 0], sizes = [1, 64], strides = [1, 1]} : vector<8x64xf32> to vector<1x64xf32>
    %cst_392 = arith.constant dense<0.000000e+00> : vector<1x64xf32>
    %1337 = tpu.matmul %1328, %1081, %cst_392 {dimension_numbers = #tpu.dot_dimension_numbers<[1], [0], [0], [1], [0, 0, 1, 1], [], []>} : vector<1x16xf32>, vector<16x64xf32>, vector<1x64xf32> -> vector<1x64xf32>
    %1338 = arith.addf %1336, %1337 : vector<1x64xf32>
    %1339 = vector.extract_strided_slice %1338 {offsets = [0, 0], sizes = [1, 16], strides = [1, 1]} : vector<1x64xf32> to vector<1x16xf32>
    %cst_393 = arith.constant 0.000000e+00 : f32
    %1340 = vector.broadcast %cst_393 : f32 to vector<1x16xf32>
    %1341 = arith.subf %1340, %1339 : vector<1x16xf32>
    %1342 = math.exp %1341 : vector<1x16xf32>
    %cst_394 = arith.constant 1.000000e+00 : f32
    %1343 = vector.broadcast %cst_394 : f32 to vector<1x16xf32>
    %1344 = arith.addf %1343, %1342 : vector<1x16xf32>
    %cst_395 = arith.constant 1.000000e+00 : f32
    %1345 = vector.broadcast %cst_395 : f32 to vector<1x16xf32>
    %1346 = arith.divf %1345, %1344 : vector<1x16xf32>
    %1347 = vector.extract_strided_slice %1338 {offsets = [0, 16], sizes = [1, 16], strides = [1, 1]} : vector<1x64xf32> to vector<1x16xf32>
    %cst_396 = arith.constant 0.000000e+00 : f32
    %1348 = vector.broadcast %cst_396 : f32 to vector<1x16xf32>
    %1349 = arith.subf %1348, %1347 : vector<1x16xf32>
    %1350 = math.exp %1349 : vector<1x16xf32>
    %cst_397 = arith.constant 1.000000e+00 : f32
    %1351 = vector.broadcast %cst_397 : f32 to vector<1x16xf32>
    %1352 = arith.addf %1351, %1350 : vector<1x16xf32>
    %cst_398 = arith.constant 1.000000e+00 : f32
    %1353 = vector.broadcast %cst_398 : f32 to vector<1x16xf32>
    %1354 = arith.divf %1353, %1352 : vector<1x16xf32>
    %1355 = vector.extract_strided_slice %1338 {offsets = [0, 32], sizes = [1, 16], strides = [1, 1]} : vector<1x64xf32> to vector<1x16xf32>
    %1356 = math.tanh %1355 : vector<1x16xf32>
    %1357 = vector.extract_strided_slice %1338 {offsets = [0, 48], sizes = [1, 16], strides = [1, 1]} : vector<1x64xf32> to vector<1x16xf32>
    %cst_399 = arith.constant 0.000000e+00 : f32
    %1358 = vector.broadcast %cst_399 : f32 to vector<1x16xf32>
    %1359 = arith.subf %1358, %1357 : vector<1x16xf32>
    %1360 = math.exp %1359 : vector<1x16xf32>
    %cst_400 = arith.constant 1.000000e+00 : f32
    %1361 = vector.broadcast %cst_400 : f32 to vector<1x16xf32>
    %1362 = arith.addf %1361, %1360 : vector<1x16xf32>
    %cst_401 = arith.constant 1.000000e+00 : f32
    %1363 = vector.broadcast %cst_401 : f32 to vector<1x16xf32>
    %1364 = arith.divf %1363, %1362 : vector<1x16xf32>
    %1365 = arith.mulf %1354, %1326 : vector<1x16xf32>
    %1366 = arith.mulf %1346, %1356 : vector<1x16xf32>
    %1367 = arith.addf %1365, %1366 : vector<1x16xf32>
    %1368 = math.tanh %1367 : vector<1x16xf32>
    %1369 = arith.mulf %1364, %1368 : vector<1x16xf32>
    %c6_i32_402 = arith.constant 6 : i32
    %1370 = vector.broadcast %c6_i32_402 : i32 to vector<8x1xi32>
    %1371 = arith.cmpi eq, %1089, %1370 : vector<8x1xi32>
    %1372 = vector.shape_cast %1371 : vector<8x1xi1> to vector<8x1xi1>
    %1373 = vector.broadcast %1372 : vector<8x1xi1> to vector<8x16xi1>
    %1374 = vector.shape_cast %1369 : vector<1x16xf32> to vector<1x16xf32>
    %1375 = vector.broadcast %1374 : vector<1x16xf32> to vector<8x16xf32>
    %1376 = arith.select %1373, %1375, %1335 : vector<8x16xi1>, vector<8x16xf32>
    %1377 = vector.extract_strided_slice %1085 {offsets = [7, 0], sizes = [1, 64], strides = [1, 1]} : vector<8x64xf32> to vector<1x64xf32>
    %cst_403 = arith.constant dense<0.000000e+00> : vector<1x64xf32>
    %1378 = tpu.matmul %1369, %1081, %cst_403 {dimension_numbers = #tpu.dot_dimension_numbers<[1], [0], [0], [1], [0, 0, 1, 1], [], []>} : vector<1x16xf32>, vector<16x64xf32>, vector<1x64xf32> -> vector<1x64xf32>
    %1379 = arith.addf %1377, %1378 : vector<1x64xf32>
    %1380 = vector.extract_strided_slice %1379 {offsets = [0, 0], sizes = [1, 16], strides = [1, 1]} : vector<1x64xf32> to vector<1x16xf32>
    %cst_404 = arith.constant 0.000000e+00 : f32
    %1381 = vector.broadcast %cst_404 : f32 to vector<1x16xf32>
    %1382 = arith.subf %1381, %1380 : vector<1x16xf32>
    %1383 = math.exp %1382 : vector<1x16xf32>
    %cst_405 = arith.constant 1.000000e+00 : f32
    %1384 = vector.broadcast %cst_405 : f32 to vector<1x16xf32>
    %1385 = arith.addf %1384, %1383 : vector<1x16xf32>
    %cst_406 = arith.constant 1.000000e+00 : f32
    %1386 = vector.broadcast %cst_406 : f32 to vector<1x16xf32>
    %1387 = arith.divf %1386, %1385 : vector<1x16xf32>
    %1388 = vector.extract_strided_slice %1379 {offsets = [0, 16], sizes = [1, 16], strides = [1, 1]} : vector<1x64xf32> to vector<1x16xf32>
    %cst_407 = arith.constant 0.000000e+00 : f32
    %1389 = vector.broadcast %cst_407 : f32 to vector<1x16xf32>
    %1390 = arith.subf %1389, %1388 : vector<1x16xf32>
    %1391 = math.exp %1390 : vector<1x16xf32>
    %cst_408 = arith.constant 1.000000e+00 : f32
    %1392 = vector.broadcast %cst_408 : f32 to vector<1x16xf32>
    %1393 = arith.addf %1392, %1391 : vector<1x16xf32>
    %cst_409 = arith.constant 1.000000e+00 : f32
    %1394 = vector.broadcast %cst_409 : f32 to vector<1x16xf32>
    %1395 = arith.divf %1394, %1393 : vector<1x16xf32>
    %1396 = vector.extract_strided_slice %1379 {offsets = [0, 32], sizes = [1, 16], strides = [1, 1]} : vector<1x64xf32> to vector<1x16xf32>
    %1397 = math.tanh %1396 : vector<1x16xf32>
    %1398 = vector.extract_strided_slice %1379 {offsets = [0, 48], sizes = [1, 16], strides = [1, 1]} : vector<1x64xf32> to vector<1x16xf32>
    %cst_410 = arith.constant 0.000000e+00 : f32
    %1399 = vector.broadcast %cst_410 : f32 to vector<1x16xf32>
    %1400 = arith.subf %1399, %1398 : vector<1x16xf32>
    %1401 = math.exp %1400 : vector<1x16xf32>
    %cst_411 = arith.constant 1.000000e+00 : f32
    %1402 = vector.broadcast %cst_411 : f32 to vector<1x16xf32>
    %1403 = arith.addf %1402, %1401 : vector<1x16xf32>
    %cst_412 = arith.constant 1.000000e+00 : f32
    %1404 = vector.broadcast %cst_412 : f32 to vector<1x16xf32>
    %1405 = arith.divf %1404, %1403 : vector<1x16xf32>
    %1406 = arith.mulf %1395, %1367 : vector<1x16xf32>
    %1407 = arith.mulf %1387, %1397 : vector<1x16xf32>
    %1408 = arith.addf %1406, %1407 : vector<1x16xf32>
    %1409 = math.tanh %1408 : vector<1x16xf32>
    %1410 = arith.mulf %1405, %1409 : vector<1x16xf32>
    %c7_i32_413 = arith.constant 7 : i32
    %1411 = vector.broadcast %c7_i32_413 : i32 to vector<8x1xi32>
    %1412 = arith.cmpi eq, %1089, %1411 : vector<8x1xi32>
    %1413 = vector.shape_cast %1412 : vector<8x1xi1> to vector<8x1xi1>
    %1414 = vector.broadcast %1413 : vector<8x1xi1> to vector<8x16xi1>
    %1415 = vector.shape_cast %1410 : vector<1x16xf32> to vector<1x16xf32>
    %1416 = vector.broadcast %1415 : vector<1x16xf32> to vector<8x16xf32>
    %1417 = arith.select %1414, %1416, %1376 : vector<8x16xi1>, vector<8x16xf32>
    %c664_414 = arith.constant 664 : index
    %c0_415 = arith.constant 0 : index
    %1418 = vector.load %arg2[%c664_414, %c0_415] : memref<760x128xf32, #tpu.memory_space<vmem>>, vector<32x64xf32>
    %c696_416 = arith.constant 696 : index
    %c0_417 = arith.constant 0 : index
    %1419 = vector.load %arg2[%c696_416, %c0_417] : memref<760x128xf32, #tpu.memory_space<vmem>>, vector<16x64xf32>
    %c712_418 = arith.constant 712 : index
    %c0_419 = arith.constant 0 : index
    %1420 = vector.load %arg2[%c712_418, %c0_419] : memref<760x128xf32, #tpu.memory_space<vmem>>, vector<1x64xf32>
    %cst_420 = arith.constant dense<0.000000e+00> : vector<8x64xf32>
    %1421 = tpu.matmul %1079, %1418, %cst_420 {dimension_numbers = #tpu.dot_dimension_numbers<[1], [0], [0], [1], [0, 0, 1, 1], [], []>} : vector<8x32xf32>, vector<32x64xf32>, vector<8x64xf32> -> vector<8x64xf32>
    %1422 = vector.broadcast %1420 : vector<1x64xf32> to vector<8x64xf32>
    %1423 = arith.addf %1421, %1422 : vector<8x64xf32>
    %cst_421 = arith.constant 0.000000e+00 : f32
    %1424 = vector.broadcast %cst_421 : f32 to vector<1x16xf32>
    %cst_422 = arith.constant 0.000000e+00 : f32
    %1425 = vector.broadcast %cst_422 : f32 to vector<1x16xf32>
    %cst_423 = arith.constant 0.000000e+00 : f32
    %1426 = vector.broadcast %cst_423 : f32 to vector<8x16xf32>
    %1427 = tpu.iota {dimensions = array<i32: 0>} : vector<8x1xi32>
    %1428 = vector.extract_strided_slice %1423 {offsets = [7, 0], sizes = [1, 64], strides = [1, 1]} : vector<8x64xf32> to vector<1x64xf32>
    %cst_424 = arith.constant dense<0.000000e+00> : vector<1x64xf32>
    %1429 = tpu.matmul %1424, %1419, %cst_424 {dimension_numbers = #tpu.dot_dimension_numbers<[1], [0], [0], [1], [0, 0, 1, 1], [], []>} : vector<1x16xf32>, vector<16x64xf32>, vector<1x64xf32> -> vector<1x64xf32>
    %1430 = arith.addf %1428, %1429 : vector<1x64xf32>
    %1431 = vector.extract_strided_slice %1430 {offsets = [0, 0], sizes = [1, 16], strides = [1, 1]} : vector<1x64xf32> to vector<1x16xf32>
    %cst_425 = arith.constant 0.000000e+00 : f32
    %1432 = vector.broadcast %cst_425 : f32 to vector<1x16xf32>
    %1433 = arith.subf %1432, %1431 : vector<1x16xf32>
    %1434 = math.exp %1433 : vector<1x16xf32>
    %cst_426 = arith.constant 1.000000e+00 : f32
    %1435 = vector.broadcast %cst_426 : f32 to vector<1x16xf32>
    %1436 = arith.addf %1435, %1434 : vector<1x16xf32>
    %cst_427 = arith.constant 1.000000e+00 : f32
    %1437 = vector.broadcast %cst_427 : f32 to vector<1x16xf32>
    %1438 = arith.divf %1437, %1436 : vector<1x16xf32>
    %1439 = vector.extract_strided_slice %1430 {offsets = [0, 16], sizes = [1, 16], strides = [1, 1]} : vector<1x64xf32> to vector<1x16xf32>
    %cst_428 = arith.constant 0.000000e+00 : f32
    %1440 = vector.broadcast %cst_428 : f32 to vector<1x16xf32>
    %1441 = arith.subf %1440, %1439 : vector<1x16xf32>
    %1442 = math.exp %1441 : vector<1x16xf32>
    %cst_429 = arith.constant 1.000000e+00 : f32
    %1443 = vector.broadcast %cst_429 : f32 to vector<1x16xf32>
    %1444 = arith.addf %1443, %1442 : vector<1x16xf32>
    %cst_430 = arith.constant 1.000000e+00 : f32
    %1445 = vector.broadcast %cst_430 : f32 to vector<1x16xf32>
    %1446 = arith.divf %1445, %1444 : vector<1x16xf32>
    %1447 = vector.extract_strided_slice %1430 {offsets = [0, 32], sizes = [1, 16], strides = [1, 1]} : vector<1x64xf32> to vector<1x16xf32>
    %1448 = math.tanh %1447 : vector<1x16xf32>
    %1449 = vector.extract_strided_slice %1430 {offsets = [0, 48], sizes = [1, 16], strides = [1, 1]} : vector<1x64xf32> to vector<1x16xf32>
    %cst_431 = arith.constant 0.000000e+00 : f32
    %1450 = vector.broadcast %cst_431 : f32 to vector<1x16xf32>
    %1451 = arith.subf %1450, %1449 : vector<1x16xf32>
    %1452 = math.exp %1451 : vector<1x16xf32>
    %cst_432 = arith.constant 1.000000e+00 : f32
    %1453 = vector.broadcast %cst_432 : f32 to vector<1x16xf32>
    %1454 = arith.addf %1453, %1452 : vector<1x16xf32>
    %cst_433 = arith.constant 1.000000e+00 : f32
    %1455 = vector.broadcast %cst_433 : f32 to vector<1x16xf32>
    %1456 = arith.divf %1455, %1454 : vector<1x16xf32>
    %1457 = arith.mulf %1446, %1425 : vector<1x16xf32>
    %1458 = arith.mulf %1438, %1448 : vector<1x16xf32>
    %1459 = arith.addf %1457, %1458 : vector<1x16xf32>
    %1460 = math.tanh %1459 : vector<1x16xf32>
    %1461 = arith.mulf %1456, %1460 : vector<1x16xf32>
    %c7_i32_434 = arith.constant 7 : i32
    %1462 = vector.broadcast %c7_i32_434 : i32 to vector<8x1xi32>
    %1463 = arith.cmpi eq, %1427, %1462 : vector<8x1xi32>
    %1464 = vector.shape_cast %1463 : vector<8x1xi1> to vector<8x1xi1>
    %1465 = vector.broadcast %1464 : vector<8x1xi1> to vector<8x16xi1>
    %1466 = vector.shape_cast %1461 : vector<1x16xf32> to vector<1x16xf32>
    %1467 = vector.broadcast %1466 : vector<1x16xf32> to vector<8x16xf32>
    %1468 = arith.select %1465, %1467, %1426 : vector<8x16xi1>, vector<8x16xf32>
    %1469 = vector.extract_strided_slice %1423 {offsets = [6, 0], sizes = [1, 64], strides = [1, 1]} : vector<8x64xf32> to vector<1x64xf32>
    %cst_435 = arith.constant dense<0.000000e+00> : vector<1x64xf32>
    %1470 = tpu.matmul %1461, %1419, %cst_435 {dimension_numbers = #tpu.dot_dimension_numbers<[1], [0], [0], [1], [0, 0, 1, 1], [], []>} : vector<1x16xf32>, vector<16x64xf32>, vector<1x64xf32> -> vector<1x64xf32>
    %1471 = arith.addf %1469, %1470 : vector<1x64xf32>
    %1472 = vector.extract_strided_slice %1471 {offsets = [0, 0], sizes = [1, 16], strides = [1, 1]} : vector<1x64xf32> to vector<1x16xf32>
    %cst_436 = arith.constant 0.000000e+00 : f32
    %1473 = vector.broadcast %cst_436 : f32 to vector<1x16xf32>
    %1474 = arith.subf %1473, %1472 : vector<1x16xf32>
    %1475 = math.exp %1474 : vector<1x16xf32>
    %cst_437 = arith.constant 1.000000e+00 : f32
    %1476 = vector.broadcast %cst_437 : f32 to vector<1x16xf32>
    %1477 = arith.addf %1476, %1475 : vector<1x16xf32>
    %cst_438 = arith.constant 1.000000e+00 : f32
    %1478 = vector.broadcast %cst_438 : f32 to vector<1x16xf32>
    %1479 = arith.divf %1478, %1477 : vector<1x16xf32>
    %1480 = vector.extract_strided_slice %1471 {offsets = [0, 16], sizes = [1, 16], strides = [1, 1]} : vector<1x64xf32> to vector<1x16xf32>
    %cst_439 = arith.constant 0.000000e+00 : f32
    %1481 = vector.broadcast %cst_439 : f32 to vector<1x16xf32>
    %1482 = arith.subf %1481, %1480 : vector<1x16xf32>
    %1483 = math.exp %1482 : vector<1x16xf32>
    %cst_440 = arith.constant 1.000000e+00 : f32
    %1484 = vector.broadcast %cst_440 : f32 to vector<1x16xf32>
    %1485 = arith.addf %1484, %1483 : vector<1x16xf32>
    %cst_441 = arith.constant 1.000000e+00 : f32
    %1486 = vector.broadcast %cst_441 : f32 to vector<1x16xf32>
    %1487 = arith.divf %1486, %1485 : vector<1x16xf32>
    %1488 = vector.extract_strided_slice %1471 {offsets = [0, 32], sizes = [1, 16], strides = [1, 1]} : vector<1x64xf32> to vector<1x16xf32>
    %1489 = math.tanh %1488 : vector<1x16xf32>
    %1490 = vector.extract_strided_slice %1471 {offsets = [0, 48], sizes = [1, 16], strides = [1, 1]} : vector<1x64xf32> to vector<1x16xf32>
    %cst_442 = arith.constant 0.000000e+00 : f32
    %1491 = vector.broadcast %cst_442 : f32 to vector<1x16xf32>
    %1492 = arith.subf %1491, %1490 : vector<1x16xf32>
    %1493 = math.exp %1492 : vector<1x16xf32>
    %cst_443 = arith.constant 1.000000e+00 : f32
    %1494 = vector.broadcast %cst_443 : f32 to vector<1x16xf32>
    %1495 = arith.addf %1494, %1493 : vector<1x16xf32>
    %cst_444 = arith.constant 1.000000e+00 : f32
    %1496 = vector.broadcast %cst_444 : f32 to vector<1x16xf32>
    %1497 = arith.divf %1496, %1495 : vector<1x16xf32>
    %1498 = arith.mulf %1487, %1459 : vector<1x16xf32>
    %1499 = arith.mulf %1479, %1489 : vector<1x16xf32>
    %1500 = arith.addf %1498, %1499 : vector<1x16xf32>
    %1501 = math.tanh %1500 : vector<1x16xf32>
    %1502 = arith.mulf %1497, %1501 : vector<1x16xf32>
    %c6_i32_445 = arith.constant 6 : i32
    %1503 = vector.broadcast %c6_i32_445 : i32 to vector<8x1xi32>
    %1504 = arith.cmpi eq, %1427, %1503 : vector<8x1xi32>
    %1505 = vector.shape_cast %1504 : vector<8x1xi1> to vector<8x1xi1>
    %1506 = vector.broadcast %1505 : vector<8x1xi1> to vector<8x16xi1>
    %1507 = vector.shape_cast %1502 : vector<1x16xf32> to vector<1x16xf32>
    %1508 = vector.broadcast %1507 : vector<1x16xf32> to vector<8x16xf32>
    %1509 = arith.select %1506, %1508, %1468 : vector<8x16xi1>, vector<8x16xf32>
    %1510 = vector.extract_strided_slice %1423 {offsets = [5, 0], sizes = [1, 64], strides = [1, 1]} : vector<8x64xf32> to vector<1x64xf32>
    %cst_446 = arith.constant dense<0.000000e+00> : vector<1x64xf32>
    %1511 = tpu.matmul %1502, %1419, %cst_446 {dimension_numbers = #tpu.dot_dimension_numbers<[1], [0], [0], [1], [0, 0, 1, 1], [], []>} : vector<1x16xf32>, vector<16x64xf32>, vector<1x64xf32> -> vector<1x64xf32>
    %1512 = arith.addf %1510, %1511 : vector<1x64xf32>
    %1513 = vector.extract_strided_slice %1512 {offsets = [0, 0], sizes = [1, 16], strides = [1, 1]} : vector<1x64xf32> to vector<1x16xf32>
    %cst_447 = arith.constant 0.000000e+00 : f32
    %1514 = vector.broadcast %cst_447 : f32 to vector<1x16xf32>
    %1515 = arith.subf %1514, %1513 : vector<1x16xf32>
    %1516 = math.exp %1515 : vector<1x16xf32>
    %cst_448 = arith.constant 1.000000e+00 : f32
    %1517 = vector.broadcast %cst_448 : f32 to vector<1x16xf32>
    %1518 = arith.addf %1517, %1516 : vector<1x16xf32>
    %cst_449 = arith.constant 1.000000e+00 : f32
    %1519 = vector.broadcast %cst_449 : f32 to vector<1x16xf32>
    %1520 = arith.divf %1519, %1518 : vector<1x16xf32>
    %1521 = vector.extract_strided_slice %1512 {offsets = [0, 16], sizes = [1, 16], strides = [1, 1]} : vector<1x64xf32> to vector<1x16xf32>
    %cst_450 = arith.constant 0.000000e+00 : f32
    %1522 = vector.broadcast %cst_450 : f32 to vector<1x16xf32>
    %1523 = arith.subf %1522, %1521 : vector<1x16xf32>
    %1524 = math.exp %1523 : vector<1x16xf32>
    %cst_451 = arith.constant 1.000000e+00 : f32
    %1525 = vector.broadcast %cst_451 : f32 to vector<1x16xf32>
    %1526 = arith.addf %1525, %1524 : vector<1x16xf32>
    %cst_452 = arith.constant 1.000000e+00 : f32
    %1527 = vector.broadcast %cst_452 : f32 to vector<1x16xf32>
    %1528 = arith.divf %1527, %1526 : vector<1x16xf32>
    %1529 = vector.extract_strided_slice %1512 {offsets = [0, 32], sizes = [1, 16], strides = [1, 1]} : vector<1x64xf32> to vector<1x16xf32>
    %1530 = math.tanh %1529 : vector<1x16xf32>
    %1531 = vector.extract_strided_slice %1512 {offsets = [0, 48], sizes = [1, 16], strides = [1, 1]} : vector<1x64xf32> to vector<1x16xf32>
    %cst_453 = arith.constant 0.000000e+00 : f32
    %1532 = vector.broadcast %cst_453 : f32 to vector<1x16xf32>
    %1533 = arith.subf %1532, %1531 : vector<1x16xf32>
    %1534 = math.exp %1533 : vector<1x16xf32>
    %cst_454 = arith.constant 1.000000e+00 : f32
    %1535 = vector.broadcast %cst_454 : f32 to vector<1x16xf32>
    %1536 = arith.addf %1535, %1534 : vector<1x16xf32>
    %cst_455 = arith.constant 1.000000e+00 : f32
    %1537 = vector.broadcast %cst_455 : f32 to vector<1x16xf32>
    %1538 = arith.divf %1537, %1536 : vector<1x16xf32>
    %1539 = arith.mulf %1528, %1500 : vector<1x16xf32>
    %1540 = arith.mulf %1520, %1530 : vector<1x16xf32>
    %1541 = arith.addf %1539, %1540 : vector<1x16xf32>
    %1542 = math.tanh %1541 : vector<1x16xf32>
    %1543 = arith.mulf %1538, %1542 : vector<1x16xf32>
    %c5_i32_456 = arith.constant 5 : i32
    %1544 = vector.broadcast %c5_i32_456 : i32 to vector<8x1xi32>
    %1545 = arith.cmpi eq, %1427, %1544 : vector<8x1xi32>
    %1546 = vector.shape_cast %1545 : vector<8x1xi1> to vector<8x1xi1>
    %1547 = vector.broadcast %1546 : vector<8x1xi1> to vector<8x16xi1>
    %1548 = vector.shape_cast %1543 : vector<1x16xf32> to vector<1x16xf32>
    %1549 = vector.broadcast %1548 : vector<1x16xf32> to vector<8x16xf32>
    %1550 = arith.select %1547, %1549, %1509 : vector<8x16xi1>, vector<8x16xf32>
    %1551 = vector.extract_strided_slice %1423 {offsets = [4, 0], sizes = [1, 64], strides = [1, 1]} : vector<8x64xf32> to vector<1x64xf32>
    %cst_457 = arith.constant dense<0.000000e+00> : vector<1x64xf32>
    %1552 = tpu.matmul %1543, %1419, %cst_457 {dimension_numbers = #tpu.dot_dimension_numbers<[1], [0], [0], [1], [0, 0, 1, 1], [], []>} : vector<1x16xf32>, vector<16x64xf32>, vector<1x64xf32> -> vector<1x64xf32>
    %1553 = arith.addf %1551, %1552 : vector<1x64xf32>
    %1554 = vector.extract_strided_slice %1553 {offsets = [0, 0], sizes = [1, 16], strides = [1, 1]} : vector<1x64xf32> to vector<1x16xf32>
    %cst_458 = arith.constant 0.000000e+00 : f32
    %1555 = vector.broadcast %cst_458 : f32 to vector<1x16xf32>
    %1556 = arith.subf %1555, %1554 : vector<1x16xf32>
    %1557 = math.exp %1556 : vector<1x16xf32>
    %cst_459 = arith.constant 1.000000e+00 : f32
    %1558 = vector.broadcast %cst_459 : f32 to vector<1x16xf32>
    %1559 = arith.addf %1558, %1557 : vector<1x16xf32>
    %cst_460 = arith.constant 1.000000e+00 : f32
    %1560 = vector.broadcast %cst_460 : f32 to vector<1x16xf32>
    %1561 = arith.divf %1560, %1559 : vector<1x16xf32>
    %1562 = vector.extract_strided_slice %1553 {offsets = [0, 16], sizes = [1, 16], strides = [1, 1]} : vector<1x64xf32> to vector<1x16xf32>
    %cst_461 = arith.constant 0.000000e+00 : f32
    %1563 = vector.broadcast %cst_461 : f32 to vector<1x16xf32>
    %1564 = arith.subf %1563, %1562 : vector<1x16xf32>
    %1565 = math.exp %1564 : vector<1x16xf32>
    %cst_462 = arith.constant 1.000000e+00 : f32
    %1566 = vector.broadcast %cst_462 : f32 to vector<1x16xf32>
    %1567 = arith.addf %1566, %1565 : vector<1x16xf32>
    %cst_463 = arith.constant 1.000000e+00 : f32
    %1568 = vector.broadcast %cst_463 : f32 to vector<1x16xf32>
    %1569 = arith.divf %1568, %1567 : vector<1x16xf32>
    %1570 = vector.extract_strided_slice %1553 {offsets = [0, 32], sizes = [1, 16], strides = [1, 1]} : vector<1x64xf32> to vector<1x16xf32>
    %1571 = math.tanh %1570 : vector<1x16xf32>
    %1572 = vector.extract_strided_slice %1553 {offsets = [0, 48], sizes = [1, 16], strides = [1, 1]} : vector<1x64xf32> to vector<1x16xf32>
    %cst_464 = arith.constant 0.000000e+00 : f32
    %1573 = vector.broadcast %cst_464 : f32 to vector<1x16xf32>
    %1574 = arith.subf %1573, %1572 : vector<1x16xf32>
    %1575 = math.exp %1574 : vector<1x16xf32>
    %cst_465 = arith.constant 1.000000e+00 : f32
    %1576 = vector.broadcast %cst_465 : f32 to vector<1x16xf32>
    %1577 = arith.addf %1576, %1575 : vector<1x16xf32>
    %cst_466 = arith.constant 1.000000e+00 : f32
    %1578 = vector.broadcast %cst_466 : f32 to vector<1x16xf32>
    %1579 = arith.divf %1578, %1577 : vector<1x16xf32>
    %1580 = arith.mulf %1569, %1541 : vector<1x16xf32>
    %1581 = arith.mulf %1561, %1571 : vector<1x16xf32>
    %1582 = arith.addf %1580, %1581 : vector<1x16xf32>
    %1583 = math.tanh %1582 : vector<1x16xf32>
    %1584 = arith.mulf %1579, %1583 : vector<1x16xf32>
    %c4_i32_467 = arith.constant 4 : i32
    %1585 = vector.broadcast %c4_i32_467 : i32 to vector<8x1xi32>
    %1586 = arith.cmpi eq, %1427, %1585 : vector<8x1xi32>
    %1587 = vector.shape_cast %1586 : vector<8x1xi1> to vector<8x1xi1>
    %1588 = vector.broadcast %1587 : vector<8x1xi1> to vector<8x16xi1>
    %1589 = vector.shape_cast %1584 : vector<1x16xf32> to vector<1x16xf32>
    %1590 = vector.broadcast %1589 : vector<1x16xf32> to vector<8x16xf32>
    %1591 = arith.select %1588, %1590, %1550 : vector<8x16xi1>, vector<8x16xf32>
    %1592 = vector.extract_strided_slice %1423 {offsets = [3, 0], sizes = [1, 64], strides = [1, 1]} : vector<8x64xf32> to vector<1x64xf32>
    %cst_468 = arith.constant dense<0.000000e+00> : vector<1x64xf32>
    %1593 = tpu.matmul %1584, %1419, %cst_468 {dimension_numbers = #tpu.dot_dimension_numbers<[1], [0], [0], [1], [0, 0, 1, 1], [], []>} : vector<1x16xf32>, vector<16x64xf32>, vector<1x64xf32> -> vector<1x64xf32>
    %1594 = arith.addf %1592, %1593 : vector<1x64xf32>
    %1595 = vector.extract_strided_slice %1594 {offsets = [0, 0], sizes = [1, 16], strides = [1, 1]} : vector<1x64xf32> to vector<1x16xf32>
    %cst_469 = arith.constant 0.000000e+00 : f32
    %1596 = vector.broadcast %cst_469 : f32 to vector<1x16xf32>
    %1597 = arith.subf %1596, %1595 : vector<1x16xf32>
    %1598 = math.exp %1597 : vector<1x16xf32>
    %cst_470 = arith.constant 1.000000e+00 : f32
    %1599 = vector.broadcast %cst_470 : f32 to vector<1x16xf32>
    %1600 = arith.addf %1599, %1598 : vector<1x16xf32>
    %cst_471 = arith.constant 1.000000e+00 : f32
    %1601 = vector.broadcast %cst_471 : f32 to vector<1x16xf32>
    %1602 = arith.divf %1601, %1600 : vector<1x16xf32>
    %1603 = vector.extract_strided_slice %1594 {offsets = [0, 16], sizes = [1, 16], strides = [1, 1]} : vector<1x64xf32> to vector<1x16xf32>
    %cst_472 = arith.constant 0.000000e+00 : f32
    %1604 = vector.broadcast %cst_472 : f32 to vector<1x16xf32>
    %1605 = arith.subf %1604, %1603 : vector<1x16xf32>
    %1606 = math.exp %1605 : vector<1x16xf32>
    %cst_473 = arith.constant 1.000000e+00 : f32
    %1607 = vector.broadcast %cst_473 : f32 to vector<1x16xf32>
    %1608 = arith.addf %1607, %1606 : vector<1x16xf32>
    %cst_474 = arith.constant 1.000000e+00 : f32
    %1609 = vector.broadcast %cst_474 : f32 to vector<1x16xf32>
    %1610 = arith.divf %1609, %1608 : vector<1x16xf32>
    %1611 = vector.extract_strided_slice %1594 {offsets = [0, 32], sizes = [1, 16], strides = [1, 1]} : vector<1x64xf32> to vector<1x16xf32>
    %1612 = math.tanh %1611 : vector<1x16xf32>
    %1613 = vector.extract_strided_slice %1594 {offsets = [0, 48], sizes = [1, 16], strides = [1, 1]} : vector<1x64xf32> to vector<1x16xf32>
    %cst_475 = arith.constant 0.000000e+00 : f32
    %1614 = vector.broadcast %cst_475 : f32 to vector<1x16xf32>
    %1615 = arith.subf %1614, %1613 : vector<1x16xf32>
    %1616 = math.exp %1615 : vector<1x16xf32>
    %cst_476 = arith.constant 1.000000e+00 : f32
    %1617 = vector.broadcast %cst_476 : f32 to vector<1x16xf32>
    %1618 = arith.addf %1617, %1616 : vector<1x16xf32>
    %cst_477 = arith.constant 1.000000e+00 : f32
    %1619 = vector.broadcast %cst_477 : f32 to vector<1x16xf32>
    %1620 = arith.divf %1619, %1618 : vector<1x16xf32>
    %1621 = arith.mulf %1610, %1582 : vector<1x16xf32>
    %1622 = arith.mulf %1602, %1612 : vector<1x16xf32>
    %1623 = arith.addf %1621, %1622 : vector<1x16xf32>
    %1624 = math.tanh %1623 : vector<1x16xf32>
    %1625 = arith.mulf %1620, %1624 : vector<1x16xf32>
    %c3_i32_478 = arith.constant 3 : i32
    %1626 = vector.broadcast %c3_i32_478 : i32 to vector<8x1xi32>
    %1627 = arith.cmpi eq, %1427, %1626 : vector<8x1xi32>
    %1628 = vector.shape_cast %1627 : vector<8x1xi1> to vector<8x1xi1>
    %1629 = vector.broadcast %1628 : vector<8x1xi1> to vector<8x16xi1>
    %1630 = vector.shape_cast %1625 : vector<1x16xf32> to vector<1x16xf32>
    %1631 = vector.broadcast %1630 : vector<1x16xf32> to vector<8x16xf32>
    %1632 = arith.select %1629, %1631, %1591 : vector<8x16xi1>, vector<8x16xf32>
    %1633 = vector.extract_strided_slice %1423 {offsets = [2, 0], sizes = [1, 64], strides = [1, 1]} : vector<8x64xf32> to vector<1x64xf32>
    %cst_479 = arith.constant dense<0.000000e+00> : vector<1x64xf32>
    %1634 = tpu.matmul %1625, %1419, %cst_479 {dimension_numbers = #tpu.dot_dimension_numbers<[1], [0], [0], [1], [0, 0, 1, 1], [], []>} : vector<1x16xf32>, vector<16x64xf32>, vector<1x64xf32> -> vector<1x64xf32>
    %1635 = arith.addf %1633, %1634 : vector<1x64xf32>
    %1636 = vector.extract_strided_slice %1635 {offsets = [0, 0], sizes = [1, 16], strides = [1, 1]} : vector<1x64xf32> to vector<1x16xf32>
    %cst_480 = arith.constant 0.000000e+00 : f32
    %1637 = vector.broadcast %cst_480 : f32 to vector<1x16xf32>
    %1638 = arith.subf %1637, %1636 : vector<1x16xf32>
    %1639 = math.exp %1638 : vector<1x16xf32>
    %cst_481 = arith.constant 1.000000e+00 : f32
    %1640 = vector.broadcast %cst_481 : f32 to vector<1x16xf32>
    %1641 = arith.addf %1640, %1639 : vector<1x16xf32>
    %cst_482 = arith.constant 1.000000e+00 : f32
    %1642 = vector.broadcast %cst_482 : f32 to vector<1x16xf32>
    %1643 = arith.divf %1642, %1641 : vector<1x16xf32>
    %1644 = vector.extract_strided_slice %1635 {offsets = [0, 16], sizes = [1, 16], strides = [1, 1]} : vector<1x64xf32> to vector<1x16xf32>
    %cst_483 = arith.constant 0.000000e+00 : f32
    %1645 = vector.broadcast %cst_483 : f32 to vector<1x16xf32>
    %1646 = arith.subf %1645, %1644 : vector<1x16xf32>
    %1647 = math.exp %1646 : vector<1x16xf32>
    %cst_484 = arith.constant 1.000000e+00 : f32
    %1648 = vector.broadcast %cst_484 : f32 to vector<1x16xf32>
    %1649 = arith.addf %1648, %1647 : vector<1x16xf32>
    %cst_485 = arith.constant 1.000000e+00 : f32
    %1650 = vector.broadcast %cst_485 : f32 to vector<1x16xf32>
    %1651 = arith.divf %1650, %1649 : vector<1x16xf32>
    %1652 = vector.extract_strided_slice %1635 {offsets = [0, 32], sizes = [1, 16], strides = [1, 1]} : vector<1x64xf32> to vector<1x16xf32>
    %1653 = math.tanh %1652 : vector<1x16xf32>
    %1654 = vector.extract_strided_slice %1635 {offsets = [0, 48], sizes = [1, 16], strides = [1, 1]} : vector<1x64xf32> to vector<1x16xf32>
    %cst_486 = arith.constant 0.000000e+00 : f32
    %1655 = vector.broadcast %cst_486 : f32 to vector<1x16xf32>
    %1656 = arith.subf %1655, %1654 : vector<1x16xf32>
    %1657 = math.exp %1656 : vector<1x16xf32>
    %cst_487 = arith.constant 1.000000e+00 : f32
    %1658 = vector.broadcast %cst_487 : f32 to vector<1x16xf32>
    %1659 = arith.addf %1658, %1657 : vector<1x16xf32>
    %cst_488 = arith.constant 1.000000e+00 : f32
    %1660 = vector.broadcast %cst_488 : f32 to vector<1x16xf32>
    %1661 = arith.divf %1660, %1659 : vector<1x16xf32>
    %1662 = arith.mulf %1651, %1623 : vector<1x16xf32>
    %1663 = arith.mulf %1643, %1653 : vector<1x16xf32>
    %1664 = arith.addf %1662, %1663 : vector<1x16xf32>
    %1665 = math.tanh %1664 : vector<1x16xf32>
    %1666 = arith.mulf %1661, %1665 : vector<1x16xf32>
    %c2_i32_489 = arith.constant 2 : i32
    %1667 = vector.broadcast %c2_i32_489 : i32 to vector<8x1xi32>
    %1668 = arith.cmpi eq, %1427, %1667 : vector<8x1xi32>
    %1669 = vector.shape_cast %1668 : vector<8x1xi1> to vector<8x1xi1>
    %1670 = vector.broadcast %1669 : vector<8x1xi1> to vector<8x16xi1>
    %1671 = vector.shape_cast %1666 : vector<1x16xf32> to vector<1x16xf32>
    %1672 = vector.broadcast %1671 : vector<1x16xf32> to vector<8x16xf32>
    %1673 = arith.select %1670, %1672, %1632 : vector<8x16xi1>, vector<8x16xf32>
    %1674 = vector.extract_strided_slice %1423 {offsets = [1, 0], sizes = [1, 64], strides = [1, 1]} : vector<8x64xf32> to vector<1x64xf32>
    %cst_490 = arith.constant dense<0.000000e+00> : vector<1x64xf32>
    %1675 = tpu.matmul %1666, %1419, %cst_490 {dimension_numbers = #tpu.dot_dimension_numbers<[1], [0], [0], [1], [0, 0, 1, 1], [], []>} : vector<1x16xf32>, vector<16x64xf32>, vector<1x64xf32> -> vector<1x64xf32>
    %1676 = arith.addf %1674, %1675 : vector<1x64xf32>
    %1677 = vector.extract_strided_slice %1676 {offsets = [0, 0], sizes = [1, 16], strides = [1, 1]} : vector<1x64xf32> to vector<1x16xf32>
    %cst_491 = arith.constant 0.000000e+00 : f32
    %1678 = vector.broadcast %cst_491 : f32 to vector<1x16xf32>
    %1679 = arith.subf %1678, %1677 : vector<1x16xf32>
    %1680 = math.exp %1679 : vector<1x16xf32>
    %cst_492 = arith.constant 1.000000e+00 : f32
    %1681 = vector.broadcast %cst_492 : f32 to vector<1x16xf32>
    %1682 = arith.addf %1681, %1680 : vector<1x16xf32>
    %cst_493 = arith.constant 1.000000e+00 : f32
    %1683 = vector.broadcast %cst_493 : f32 to vector<1x16xf32>
    %1684 = arith.divf %1683, %1682 : vector<1x16xf32>
    %1685 = vector.extract_strided_slice %1676 {offsets = [0, 16], sizes = [1, 16], strides = [1, 1]} : vector<1x64xf32> to vector<1x16xf32>
    %cst_494 = arith.constant 0.000000e+00 : f32
    %1686 = vector.broadcast %cst_494 : f32 to vector<1x16xf32>
    %1687 = arith.subf %1686, %1685 : vector<1x16xf32>
    %1688 = math.exp %1687 : vector<1x16xf32>
    %cst_495 = arith.constant 1.000000e+00 : f32
    %1689 = vector.broadcast %cst_495 : f32 to vector<1x16xf32>
    %1690 = arith.addf %1689, %1688 : vector<1x16xf32>
    %cst_496 = arith.constant 1.000000e+00 : f32
    %1691 = vector.broadcast %cst_496 : f32 to vector<1x16xf32>
    %1692 = arith.divf %1691, %1690 : vector<1x16xf32>
    %1693 = vector.extract_strided_slice %1676 {offsets = [0, 32], sizes = [1, 16], strides = [1, 1]} : vector<1x64xf32> to vector<1x16xf32>
    %1694 = math.tanh %1693 : vector<1x16xf32>
    %1695 = vector.extract_strided_slice %1676 {offsets = [0, 48], sizes = [1, 16], strides = [1, 1]} : vector<1x64xf32> to vector<1x16xf32>
    %cst_497 = arith.constant 0.000000e+00 : f32
    %1696 = vector.broadcast %cst_497 : f32 to vector<1x16xf32>
    %1697 = arith.subf %1696, %1695 : vector<1x16xf32>
    %1698 = math.exp %1697 : vector<1x16xf32>
    %cst_498 = arith.constant 1.000000e+00 : f32
    %1699 = vector.broadcast %cst_498 : f32 to vector<1x16xf32>
    %1700 = arith.addf %1699, %1698 : vector<1x16xf32>
    %cst_499 = arith.constant 1.000000e+00 : f32
    %1701 = vector.broadcast %cst_499 : f32 to vector<1x16xf32>
    %1702 = arith.divf %1701, %1700 : vector<1x16xf32>
    %1703 = arith.mulf %1692, %1664 : vector<1x16xf32>
    %1704 = arith.mulf %1684, %1694 : vector<1x16xf32>
    %1705 = arith.addf %1703, %1704 : vector<1x16xf32>
    %1706 = math.tanh %1705 : vector<1x16xf32>
    %1707 = arith.mulf %1702, %1706 : vector<1x16xf32>
    %c1_i32_500 = arith.constant 1 : i32
    %1708 = vector.broadcast %c1_i32_500 : i32 to vector<8x1xi32>
    %1709 = arith.cmpi eq, %1427, %1708 : vector<8x1xi32>
    %1710 = vector.shape_cast %1709 : vector<8x1xi1> to vector<8x1xi1>
    %1711 = vector.broadcast %1710 : vector<8x1xi1> to vector<8x16xi1>
    %1712 = vector.shape_cast %1707 : vector<1x16xf32> to vector<1x16xf32>
    %1713 = vector.broadcast %1712 : vector<1x16xf32> to vector<8x16xf32>
    %1714 = arith.select %1711, %1713, %1673 : vector<8x16xi1>, vector<8x16xf32>
    %1715 = vector.extract_strided_slice %1423 {offsets = [0, 0], sizes = [1, 64], strides = [1, 1]} : vector<8x64xf32> to vector<1x64xf32>
    %cst_501 = arith.constant dense<0.000000e+00> : vector<1x64xf32>
    %1716 = tpu.matmul %1707, %1419, %cst_501 {dimension_numbers = #tpu.dot_dimension_numbers<[1], [0], [0], [1], [0, 0, 1, 1], [], []>} : vector<1x16xf32>, vector<16x64xf32>, vector<1x64xf32> -> vector<1x64xf32>
    %1717 = arith.addf %1715, %1716 : vector<1x64xf32>
    %1718 = vector.extract_strided_slice %1717 {offsets = [0, 0], sizes = [1, 16], strides = [1, 1]} : vector<1x64xf32> to vector<1x16xf32>
    %cst_502 = arith.constant 0.000000e+00 : f32
    %1719 = vector.broadcast %cst_502 : f32 to vector<1x16xf32>
    %1720 = arith.subf %1719, %1718 : vector<1x16xf32>
    %1721 = math.exp %1720 : vector<1x16xf32>
    %cst_503 = arith.constant 1.000000e+00 : f32
    %1722 = vector.broadcast %cst_503 : f32 to vector<1x16xf32>
    %1723 = arith.addf %1722, %1721 : vector<1x16xf32>
    %cst_504 = arith.constant 1.000000e+00 : f32
    %1724 = vector.broadcast %cst_504 : f32 to vector<1x16xf32>
    %1725 = arith.divf %1724, %1723 : vector<1x16xf32>
    %1726 = vector.extract_strided_slice %1717 {offsets = [0, 16], sizes = [1, 16], strides = [1, 1]} : vector<1x64xf32> to vector<1x16xf32>
    %cst_505 = arith.constant 0.000000e+00 : f32
    %1727 = vector.broadcast %cst_505 : f32 to vector<1x16xf32>
    %1728 = arith.subf %1727, %1726 : vector<1x16xf32>
    %1729 = math.exp %1728 : vector<1x16xf32>
    %cst_506 = arith.constant 1.000000e+00 : f32
    %1730 = vector.broadcast %cst_506 : f32 to vector<1x16xf32>
    %1731 = arith.addf %1730, %1729 : vector<1x16xf32>
    %cst_507 = arith.constant 1.000000e+00 : f32
    %1732 = vector.broadcast %cst_507 : f32 to vector<1x16xf32>
    %1733 = arith.divf %1732, %1731 : vector<1x16xf32>
    %1734 = vector.extract_strided_slice %1717 {offsets = [0, 32], sizes = [1, 16], strides = [1, 1]} : vector<1x64xf32> to vector<1x16xf32>
    %1735 = math.tanh %1734 : vector<1x16xf32>
    %1736 = vector.extract_strided_slice %1717 {offsets = [0, 48], sizes = [1, 16], strides = [1, 1]} : vector<1x64xf32> to vector<1x16xf32>
    %cst_508 = arith.constant 0.000000e+00 : f32
    %1737 = vector.broadcast %cst_508 : f32 to vector<1x16xf32>
    %1738 = arith.subf %1737, %1736 : vector<1x16xf32>
    %1739 = math.exp %1738 : vector<1x16xf32>
    %cst_509 = arith.constant 1.000000e+00 : f32
    %1740 = vector.broadcast %cst_509 : f32 to vector<1x16xf32>
    %1741 = arith.addf %1740, %1739 : vector<1x16xf32>
    %cst_510 = arith.constant 1.000000e+00 : f32
    %1742 = vector.broadcast %cst_510 : f32 to vector<1x16xf32>
    %1743 = arith.divf %1742, %1741 : vector<1x16xf32>
    %1744 = arith.mulf %1733, %1705 : vector<1x16xf32>
    %1745 = arith.mulf %1725, %1735 : vector<1x16xf32>
    %1746 = arith.addf %1744, %1745 : vector<1x16xf32>
    %1747 = math.tanh %1746 : vector<1x16xf32>
    %1748 = arith.mulf %1743, %1747 : vector<1x16xf32>
    %c0_i32_511 = arith.constant 0 : i32
    %1749 = vector.broadcast %c0_i32_511 : i32 to vector<8x1xi32>
    %1750 = arith.cmpi eq, %1427, %1749 : vector<8x1xi32>
    %1751 = vector.shape_cast %1750 : vector<8x1xi1> to vector<8x1xi1>
    %1752 = vector.broadcast %1751 : vector<8x1xi1> to vector<8x16xi1>
    %1753 = vector.shape_cast %1748 : vector<1x16xf32> to vector<1x16xf32>
    %1754 = vector.broadcast %1753 : vector<1x16xf32> to vector<8x16xf32>
    %1755 = arith.select %1752, %1754, %1714 : vector<8x16xi1>, vector<8x16xf32>
    %cst_512 = arith.constant dense<0.000000e+00> : vector<8x9xf32>
    %1756 = tpu.matmul %1417, %385, %cst_512 {dimension_numbers = #tpu.dot_dimension_numbers<[1], [0], [0], [1], [0, 0, 1, 1], [], []>} : vector<8x16xf32>, vector<16x9xf32>, vector<8x9xf32> -> vector<8x9xf32>
    %cst_513 = arith.constant dense<0.000000e+00> : vector<8x9xf32>
    %1757 = tpu.matmul %1755, %386, %cst_513 {dimension_numbers = #tpu.dot_dimension_numbers<[1], [0], [0], [1], [0, 0, 1, 1], [], []>} : vector<8x16xf32>, vector<16x9xf32>, vector<8x9xf32> -> vector<8x9xf32>
    %1758 = arith.addf %1756, %1757 : vector<8x9xf32>
    %1759 = vector.broadcast %384 : vector<1x9xf32> to vector<8x9xf32>
    %1760 = arith.addf %1758, %1759 : vector<8x9xf32>
    %cst_514 = arith.constant dense<0xFF800000> : vector<8xf32>
    %1761 = vector.multi_reduction <maximumf>, %1760, %cst_514 [1] : vector<8x9xf32> to vector<8xf32>
    %1762 = vector.shape_cast %1761 : vector<8xf32> to vector<8x1xf32>
    %1763 = tpu.iota {dimensions = array<i32: 1>} : vector<8x9xi32>
    %1764 = vector.broadcast %1762 : vector<8x1xf32> to vector<8x9xf32>
    %1765 = arith.cmpf oeq, %1760, %1764 : vector<8x9xf32>
    %c9_i32_515 = arith.constant 9 : i32
    %1766 = vector.broadcast %c9_i32_515 : i32 to vector<8x9xi32>
    %1767 = arith.select %1765, %1763, %1766 : vector<8x9xi1>, vector<8x9xi32>
    %cst_516 = arith.constant dense<2147483647> : vector<8xi32>
    %1768 = vector.multi_reduction <minsi>, %1767, %cst_516 [1] : vector<8x9xi32> to vector<8xi32>
    %1769 = vector.shape_cast %1768 : vector<8xi32> to vector<8x1xi32>
    %c8 = arith.constant 8 : index
    %c0_517 = arith.constant 0 : index
    %1770 = vector.load %arg3[%c8, %c0_517] : memref<16x1xi32, #tpu.memory_space<vmem>>, vector<8x1xi32>
    tpu.vector_store %arg3[%c8, %c0_517], %1769 {strides = array<i32>} : memref<16x1xi32, #tpu.memory_space<vmem>>, vector<8x1xi32>,
    return
  }
}

</mosaic_0001>

<llo_original>
// kernel: tpu_custom_call.1
$region0: #{tpu_custom_call.1}
  #allocation0 [shape = 'u32[]', space=smem, size = 0x4, offset = 0x4, fixed_abs, tag = 'smem constant byte address 0x4 - core index']
  #allocation1 [shape = 'u32[144,128]{1,0:T(1,128)}', space=vmem, size = 0x12000, scoped, tag = 'internal scratch']
  %s0 = inlined_call_operand.vmem [shape: s32[16,1], index: 0, kind: input, shape index: {}]
  %s1 = inlined_call_operand.vmem [shape: f32[2,8], index: 1, kind: input, shape index: {}]
  %s2 = inlined_call_operand.hbm [shape: f32[760,128], index: 2, kind: input, shape index: {}]
  %s3 = inlined_call_operand.vmem [shape: s32[16,1], index: 3, kind: output, shape index: {}]
  %s4 = sld [smem:[#allocation0]]
  $region26: #{tpu_custom_call.1} parent=0
    _
  %s6 = ssub.s32 1, %s4
  %s7 = scalar_select 0, %s6, %s4
  $region1: #{tpu_custom_call.1} parent=0
    #allocation2 [shape = 'u8[389120]{0}', space=vmem, size = 0x5f000, scoped, tag = 'input window, operand 2, single buffered']
    #allocation3 [shape = 's32[1]{0}', space=sflag, size = 0x4, scoped, tag = 'scoped memory for tpu_custom_call.1']
    %8 = vsyncpa [#allocation3], 0
    // Predicated region
    $region2: #{tpu_custom_call.1} parent=1 // pred_check
      _
    $region3: #{tpu_custom_call.1} parent=1 // pred_check_branch
      %10 = sbr.rel (0) target = $region5
    $region4: #{tpu_custom_call.1} parent=1 // pred_region
      _
    $region5: #{tpu_custom_call.1} parent=1 // pred_fallthru
      _
    // Predicated region
    $region6: #{tpu_custom_call.1} parent=1 // pred_check
      _
    $region7: #{tpu_custom_call.1} parent=1 // pred_check_branch
      %12 = sbr.rel (0) target = $region9
    $region8: #{tpu_custom_call.1} parent=1 // pred_region
      _
    $region9: #{tpu_custom_call.1} parent=1 // pred_fallthru
      _
    // Predicated region
    $region10: #{tpu_custom_call.1} parent=1 // pred_check
      _
    $region11: #{tpu_custom_call.1} parent=1 // pred_check_branch
      %14 = sbr.rel (0) target = $region13
    $region12: #{tpu_custom_call.1} parent=1 // pred_region
      %s16 = ssub.s32 12160, 12160
      %17 = vsyncadd [#allocation3], %s16
      %s18 = sshll.u32 [#allocation2], 4
      %s19 = int_to_ptr.vmem [resolvable:$true] %s18
      %24 = dma.hbm_to_vmem [thread:$0]  %s2, 12160, %s19, [#allocation3], 128, 128, 8
    $region13: #{tpu_custom_call.1} parent=1 // pred_fallthru
      _
    // Predicated region
    $region14: #{tpu_custom_call.1} parent=1 // pred_check
      _
    $region15: #{tpu_custom_call.1} parent=1 // pred_check_branch
      %26 = sbr.rel (0) target = $region17
    $region16: #{tpu_custom_call.1} parent=1 // pred_region
      %27 = dma.done [#allocation3], 12160
    $region17: #{tpu_custom_call.1} parent=1 // pred_fallthru
      _
    %v28 = vld [vmem:[%s0] sm:$0xff]
    %v29 = vld [vmem:[%s0 + $0x8] sm:$0xff]
    %v30 = vlaneseq
    %v31 = vand.u32 %v30, 127
    %32 = vset.pattern.permute.xlu0 0
    %33 = vperm.xlu0 %32, %v28
    %v34 = vpop.permute.xlu0 %33
    %35 = vset.pattern.permute.xlu0 0
    %36 = vperm.xlu0 %35, %v29
    %v37 = vpop.permute.xlu0 %36
    %vm38 = vcmp.eq.s32.totalorder %v31, %v34
    %vm39 = vcmp.eq.s32.totalorder %v31, %v37
    %v40 = vsel %vm38, 1, 0
    %v41 = vsel %vm39, 1, 0
    %v42 = vcvt.s32.f32 %v40
    %v43 = vcvt.s32.f32 %v41
    %v44 = vld [vmem:[#allocation2] sm:$0xff]
    %v45 = vld [vmem:[#allocation2 + $0x8] sm:$0xff]
    %v46 = vld [vmem:[#allocation2 + $0x10] sm:$0xff]
    %v47 = vld [vmem:[#allocation2 + $0x18] sm:$0xff]
    %v48 = vld [vmem:[#allocation2 + $0x20] sm:$0xff]
    %v49 = vld [vmem:[#allocation2 + $0x28] sm:$0xff]
    %v50 = vld [vmem:[#allocation2 + $0x30] sm:$0xff]
    %v51 = vld [vmem:[#allocation2 + $0x38] sm:$0xff]
    %v52 = vld [vmem:[#allocation2 + $0x40] sm:$0xff]
    %v53 = vld [vmem:[#allocation2 + $0x48] sm:$0xff]
    %v54 = vld [vmem:[#allocation2 + $0x50] sm:$0xff]
    %v55 = vld [vmem:[#allocation2 + $0x58] sm:$0xff]
    %v56 = vld [vmem:[#allocation2 + $0x60] sm:$0xff]
    %v57 = vld [vmem:[#allocation2 + $0x68] sm:$0xff]
    %v58 = vld [vmem:[#allocation2 + $0x70] sm:$0xff]
    %v59 = vld [vmem:[#allocation2 + $0x78] sm:$0xff]
    %v60 = vld [vmem:[#allocation2 + $0x80] sm:$0xff]
    %61 = vmatprep.subr.mxu0 0.0
    %62 = vmatpush1.msra.mxu0 %v59
    %63 = vmatprep.subr.mxu0 0.0
    %64 = vmatpush1.msra.mxu0 %v58
    %65 = vmatprep.subr.mxu0 0.0
    %66 = vmatpush1.msra.mxu0 %v57
    %67 = vmatprep.subr.mxu0 0.0
    %68 = vmatpush1.msra.mxu0 %v56
    %69 = vmatprep.subr.mxu0 0.0
    %70 = vmatpush1.msra.mxu0 %v55
    %71 = vmatprep.subr.mxu0 0.0
    %72 = vmatpush1.msra.mxu0 %v54
    %73 = vmatprep.subr.mxu0 0.0
    %74 = vmatpush1.msra.mxu0 %v53
    %75 = vmatprep.subr.mxu0 0.0
    %76 = vmatpush1.msra.mxu0 %v52
    %77 = vmatprep.subr.mxu0 0.0
    %78 = vmatpush1.msra.mxu0 %v51
    %79 = vmatprep.subr.mxu0 0.0
    %80 = vmatpush1.msra.mxu0 %v50
    %81 = vmatprep.subr.mxu0 0.0
    %82 = vmatpush1.msra.mxu0 %v49
    %83 = vmatprep.subr.mxu0 0.0
    %84 = vmatpush1.msra.mxu0 %v48
    %85 = vmatprep.subr.mxu0 0.0
    %86 = vmatpush1.msra.mxu0 %v47
    %87 = vmatprep.subr.mxu0 0.0
    %88 = vmatpush1.msra.mxu0 %v46
    %89 = vmatprep.subr.mxu0 0.0
    %90 = vmatpush1.msra.mxu0 %v45
    %91 = vmatprep.subr.mxu0 0.0
    %92 = vmatpush1.msra.mxu0 %v44
    %93 = vmatprep.subr.mxu0 0.0
    %94 = vmatpush2.msra.mxu0 0.0
    %95 = vmatprep.subr.mxu0 0.0
    %96 = vmatpush2.msra.mxu0 0.0
    %97 = vmatprep.subr.mxu0 0.0
    %98 = vmatpush2.msra.mxu0 0.0
    %99 = vmatprep.subr.mxu0 0.0
    %100 = vmatpush2.msra.mxu0 0.0
    %101 = vmatprep.subr.mxu0 0.0
    %102 = vmatpush2.msra.mxu0 0.0
    %103 = vmatprep.subr.mxu0 0.0
    %104 = vmatpush2.msra.mxu0 0.0
    %105 = vmatprep.subr.mxu0 0.0
    %106 = vmatpush2.msra.mxu0 0.0
    %107 = vmatprep.subr.mxu0 0.0
    %108 = vmatpush2.msra.mxu0 0.0
    %109 = vmatprep.subr.mxu0 0.0
    %110 = vmatpush2.msra.mxu0 0.0
    %111 = vmatprep.subr.mxu0 0.0
    %112 = vmatpush2.msra.mxu0 0.0
    %113 = vmatprep.subr.mxu0 0.0
    %114 = vmatpush2.msra.mxu0 0.0
    %115 = vmatprep.subr.mxu0 0.0
    %116 = vmatpush2.msra.mxu0 0.0
    %117 = vmatprep.subr.mxu0 0.0
    %118 = vmatpush2.msra.mxu0 0.0
    %119 = vmatprep.subr.mxu0 0.0
    %120 = vmatpush2.msra.mxu0 0.0
    %121 = vmatprep.subr.mxu0 0.0
    %122 = vmatpush2.msra.mxu0 0.0
    %123 = vmatprep.subr.mxu0 0.0
    %124 = vmatpush2.msra.mxu0 0.0
    %125 = vmatprep.mubr.f32.mxu0 0.0
    %126 = vmatmul.mubr.f32.gmra.mxu0 %v42
    %v127 = vpop.f32.mrf.mxu0
    %v128 = vadd.f32 %v60, %v127
    %v129 = vpop.f32.mrf.mxu0
    %130 = vmatprep.mubr.f32.mxu0 0.0
    %131 = vmatmul.mubr.f32.gmra.mxu0 %v43
    %v132 = vpop.f32.mrf.mxu0
    %v133 = vadd.f32 %v60, %v132
    %v134 = vpop.f32.mrf.mxu0
    %135 = vdwg.mxu0
    %v136 = vld [vmem:[#allocation2 + $0x88] sm:$0x1]
    %v137 = vlaneseq
    %v138 = vshrl.u32 %v137, 7
    %v139 = vsub.s32 0, %v138
    %v140 = vrot.slane %v136, %v139
    %v141 = vadd.f32 %v128, %v140
    %v142 = vadd.f32 %v133, %v140
    %v143 = vld [vmem:[#allocation2 + $0x90] sm:$0x1]
    %v144 = vld [vmem:[#allocation2 + $0x98] sm:$0x1]
    %vm145 = vcmask 261120
    %v146 = vsel %vm145, %v141, 0.0
    %147 = vadd.xlane.f32.xlu0 %v146
    %v148 = vpop.xlane.xlu0 %147
    %v149 = vsel %vm145, %v142, 0.0
    %150 = vadd.xlane.f32.xlu0 %v149
    %v151 = vpop.xlane.xlu0 %150
    %v152 = vrcp.pop 32.0
    %v153 = vmul.f32 %v148, %v152
    %v154 = vmul.f32 %v151, %v152
    %v155 = vsub.f32 %v141, %v153
    %v156 = vsub.f32 %v142, %v154
    %v157 = vmul.f32 %v155, %v155
    %v158 = vmul.f32 %v156, %v156
    %v159 = vsel %vm145, %v157, 0.0
    %160 = vadd.xlane.f32.xlu0 %v159
    %v161 = vpop.xlane.xlu0 %160
    %v162 = vsel %vm145, %v158, 0.0
    %163 = vadd.xlane.f32.xlu0 %v162
    %v164 = vpop.xlane.xlu0 %163
    %v165 = vmul.f32 %v161, %v152
    %v166 = vmul.f32 %v164, %v152
    %v167 = vadd.f32 %v165, 1e-12
    %v168 = vadd.f32 %v166, 1e-12
    %v169 = vrsqrt.pop %v167
    %v170 = vrsqrt.pop %v168
    %v171 = vmul.f32 %v155, %v169
    %v172 = vmul.f32 %v156, %v170
    %v173 = vlaneseq
    %v174 = vshrl.u32 %v173, 7
    %v175 = vsub.s32 0, %v174
    %v176 = vrot.slane %v143, %v175
    %v177 = vmul.f32 %v171, %v176
    %v178 = vmul.f32 %v172, %v176
    %v179 = vlaneseq
    %v180 = vshrl.u32 %v179, 7
    %v181 = vsub.s32 0, %v180
    %v182 = vrot.slane %v144, %v181
    %v183 = vadd.f32 %v177, %v182
    %v184 = vadd.f32 %v178, %v182
    %v185 = vld [vmem:[%s1] sm:$0x3]
    %v186 = vsub.f32 1.0, %v185
    %v187 = vmul.f32 %v186, -10000.0
    %v188 = vld [vmem:[#allocation2 + $0xa0] sm:$0xff]
    %v189 = vld [vmem:[#allocation2 + $0xa8] sm:$0xff]
    %v190 = vld [vmem:[#allocation2 + $0xb0] sm:$0xff]
    %v191 = vld [vmem:[#allocation2 + $0xb8] sm:$0xff]
    %v192 = vld [vmem:[#allocation2 + $0xc0] sm:$0x1]
    %v193 = vlaneseq
    %v194 = vshrl.u32 %v193, 7
    %v195 = vsub.s32 0, %v194
    %v196 = vrot.slane %v192, %v195
    %v198 = vsel %vm145, %v183, 0
    %v201 = vsel %vm145, %v184, 0
    %203 = vmatprep.subr.mxu0 0.0
    %204 = vmatpush1.msra.mxu0 0.0
    %205 = vmatprep.subr.mxu0 0.0
    %206 = vmatpush1.msra.mxu0 0.0
    %207 = vmatprep.subr.mxu0 0.0
    %208 = vmatpush1.msra.mxu0 0.0
    %209 = vmatprep.subr.mxu0 0.0
    %210 = vmatpush1.msra.mxu0 0.0
    %211 = vmatprep.subr.mxu0 0.0
    %212 = vmatpush1.msra.mxu0 0.0
    %213 = vmatprep.subr.mxu0 0.0
    %214 = vmatpush1.msra.mxu0 0.0
    %215 = vmatprep.subr.mxu0 0.0
    %216 = vmatpush1.msra.mxu0 0.0
    %217 = vmatprep.subr.mxu0 0.0
    %218 = vmatpush1.msra.mxu0 0.0
    %219 = vmatprep.subr.mxu0 0.0
    %220 = vmatpush1.msra.mxu0 0.0
    %221 = vmatprep.subr.mxu0 0.0
    %222 = vmatpush1.msra.mxu0 0.0
    %223 = vmatprep.subr.mxu0 0.0
    %224 = vmatpush1.msra.mxu0 0.0
    %225 = vmatprep.subr.mxu0 0.0
    %226 = vmatpush1.msra.mxu0 0.0
    %227 = vmatprep.subr.mxu0 0.0
    %228 = vmatpush1.msra.mxu0 %v191
    %229 = vmatprep.subr.mxu0 0.0
    %230 = vmatpush1.msra.mxu0 %v190
    %231 = vmatprep.subr.mxu0 0.0
    %232 = vmatpush1.msra.mxu0 %v189
    %233 = vmatprep.subr.mxu0 0.0
    %234 = vmatpush1.msra.mxu0 %v188
    %235 = vmatprep.subr.mxu0 0.0
    %236 = vmatpush2.msra.mxu0 0.0
    %237 = vmatprep.subr.mxu0 0.0
    %238 = vmatpush2.msra.mxu0 0.0
    %239 = vmatprep.subr.mxu0 0.0
    %240 = vmatpush2.msra.mxu0 0.0
    %241 = vmatprep.subr.mxu0 0.0
    %242 = vmatpush2.msra.mxu0 0.0
    %243 = vmatprep.subr.mxu0 0.0
    %244 = vmatpush2.msra.mxu0 0.0
    %245 = vmatprep.subr.mxu0 0.0
    %246 = vmatpush2.msra.mxu0 0.0
    %247 = vmatprep.subr.mxu0 0.0
    %248 = vmatpush2.msra.mxu0 0.0
    %249 = vmatprep.subr.mxu0 0.0
    %250 = vmatpush2.msra.mxu0 0.0
    %251 = vmatprep.subr.mxu0 0.0
    %252 = vmatpush2.msra.mxu0 0.0
    %253 = vmatprep.subr.mxu0 0.0
    %254 = vmatpush2.msra.mxu0 0.0
    %255 = vmatprep.subr.mxu0 0.0
    %256 = vmatpush2.msra.mxu0 0.0
    %257 = vmatprep.subr.mxu0 0.0
    %258 = vmatpush2.msra.mxu0 0.0
    %259 = vmatprep.subr.mxu0 0.0
    %260 = vmatpush2.msra.mxu0 0.0
    %261 = vmatprep.subr.mxu0 0.0
    %262 = vmatpush2.msra.mxu0 0.0
    %263 = vmatprep.subr.mxu0 0.0
    %264 = vmatpush2.msra.mxu0 0.0
    %265 = vmatprep.subr.mxu0 0.0
    %266 = vmatpush2.msra.mxu0 0.0
    %267 = vmatprep.mubr.f32.mxu0 0.0
    %268 = vmatmul.mubr.f32.gmra.mxu0 %v198
    %v269 = vpop.f32.mrf.mxu0
    %v270 = vadd.f32 %v196, %v269
    %v271 = vpop.f32.mrf.mxu0
    %272 = vmatprep.mubr.f32.mxu0 0.0
    %273 = vmatmul.mubr.f32.gmra.mxu0 %v201
    %v274 = vpop.f32.mrf.mxu0
    %v275 = vadd.f32 %v196, %v274
    %v276 = vpop.f32.mrf.mxu0
    %277 = vdwg.mxu0
    %v278 = vld [vmem:[#allocation2 + $0xc8] sm:$0xff]
    %v279 = vld [vmem:[#allocation2 + $0xd0] sm:$0xff]
    %v280 = vld [vmem:[#allocation2 + $0xd8] sm:$0xff]
    %v281 = vld [vmem:[#allocation2 + $0xe0] sm:$0xff]
    %283 = vrot.lane.b32.xlu0 %v270, 96
    %v284 = vpop.permute.xlu0 %283
    %vm285 = vcmask 130048
    %v286 = vsel %vm285, %v270, 0
    %v288 = vsel %vm285, %v284, 0
    %290 = vmatprep.subr.mxu0 0.0
    %291 = vmatpush1.xpose.msra.mxu0 0.0
    %292 = vmatprep.subr.mxu0 0.0
    %293 = vmatpush1.xpose.msra.mxu0 0.0
    %294 = vmatprep.subr.mxu0 0.0
    %295 = vmatpush1.xpose.msra.mxu0 0.0
    %296 = vmatprep.subr.mxu0 0.0
    %297 = vmatpush1.xpose.msra.mxu0 0.0
    %298 = vmatprep.subr.mxu0 0.0
    %299 = vmatpush1.xpose.msra.mxu0 0.0
    %300 = vmatprep.subr.mxu0 0.0
    %301 = vmatpush1.xpose.msra.mxu0 0.0
    %302 = vmatprep.subr.mxu0 0.0
    %303 = vmatpush1.xpose.msra.mxu0 0.0
    %304 = vmatprep.subr.mxu0 0.0
    %305 = vmatpush1.xpose.msra.mxu0 0.0
    %306 = vmatprep.subr.mxu0 0.0
    %307 = vmatpush1.xpose.msra.mxu0 0.0
    %308 = vmatprep.subr.mxu0 0.0
    %309 = vmatpush1.xpose.msra.mxu0 0.0
    %310 = vmatprep.subr.mxu0 0.0
    %311 = vmatpush1.xpose.msra.mxu0 0.0
    %312 = vmatprep.subr.mxu0 0.0
    %313 = vmatpush1.xpose.msra.mxu0 0.0
    %314 = vmatprep.subr.mxu0 0.0
    %315 = vmatpush1.xpose.msra.mxu0 0.0
    %316 = vmatprep.subr.mxu0 0.0
    %317 = vmatpush1.xpose.msra.mxu0 0.0
    %318 = vmatprep.subr.mxu0 0.0
    %319 = vmatpush1.xpose.msra.mxu0 0.0
    %320 = vmatprep.subr.mxu0 0.0
    %321 = vmatpush1.xpose.msra.mxu0 %v288
    %322 = vmatprep.subr.mxu0 0.0
    %323 = vmatpush2.xpose.msra.mxu0 0.0
    %324 = vmatprep.subr.mxu0 0.0
    %325 = vmatpush2.xpose.msra.mxu0 0.0
    %326 = vmatprep.subr.mxu0 0.0
    %327 = vmatpush2.xpose.msra.mxu0 0.0
    %328 = vmatprep.subr.mxu0 0.0
    %329 = vmatpush2.xpose.msra.mxu0 0.0
    %330 = vmatprep.subr.mxu0 0.0
    %331 = vmatpush2.xpose.msra.mxu0 0.0
    %332 = vmatprep.subr.mxu0 0.0
    %333 = vmatpush2.xpose.msra.mxu0 0.0
    %334 = vmatprep.subr.mxu0 0.0
    %335 = vmatpush2.xpose.msra.mxu0 0.0
    %336 = vmatprep.subr.mxu0 0.0
    %337 = vmatpush2.xpose.msra.mxu0 0.0
    %338 = vmatprep.subr.mxu0 0.0
    %339 = vmatpush2.xpose.msra.mxu0 0.0
    %340 = vmatprep.subr.mxu0 0.0
    %341 = vmatpush2.xpose.msra.mxu0 0.0
    %342 = vmatprep.subr.mxu0 0.0
    %343 = vmatpush2.xpose.msra.mxu0 0.0
    %344 = vmatprep.subr.mxu0 0.0
    %345 = vmatpush2.xpose.msra.mxu0 0.0
    %346 = vmatprep.subr.mxu0 0.0
    %347 = vmatpush2.xpose.msra.mxu0 0.0
    %348 = vmatprep.subr.mxu0 0.0
    %349 = vmatpush2.xpose.msra.mxu0 0.0
    %350 = vmatprep.subr.mxu0 0.0
    %351 = vmatpush2.xpose.msra.mxu0 0.0
    %352 = vmatprep.subr.mxu0 0.0
    %353 = vmatpush2.xpose.msra.mxu0 0.0
    %354 = vmatprep.mubr.f32.mxu0 0.0
    %355 = vmatmul.mubr.f32.gmra.mxu0 %v286
    %v356 = vpop.f32.mrf.mxu0
    %v357 = vadd.f32 0.0, %v356
    %v358 = vpop.f32.mrf.mxu0
    %359 = vdwg.mxu0
    %v360 = vmul.f32 %v357, 0.25
    %v361 = vlaneseq
    %v362 = vshrl.u32 %v361, 7
    %v363 = vsub.s32 0, %v362
    %v364 = vrot.slane %v187, %v363
    %v365 = vadd.f32 %v360, %v364
    %vm366 = vcmask 64512
    %v367 = vsel %vm366, %v365, -inf
    %368 = vmax.xlane.f32.xlu0 %v367
    %v369 = vpop.xlane.xlu0 %368
    %v370 = vsub.f32 %v365, %v369
    %v371 = vmul.f32 %v370, 1.442695
    %v372 = vpow.pop %v371
    %v373 = vsel %vm366, %v372, 0.0
    %374 = vadd.xlane.f32.xlu0 %v373
    %v375 = vpop.xlane.xlu0 %374
    %v376 = vrcp.pop %v375
    %v377 = vmul.f32 %v372, %v376
    %378 = vrot.lane.b32.xlu0 %v270, 64
    %v379 = vpop.permute.xlu0 %378
    %v382 = vsel %vm366, %v377, 0
    %384 = vmatprep.subr.mxu0 0.0
    %385 = vmatpush1.msra.mxu0 0.0
    %386 = vmatprep.subr.mxu0 0.0
    %387 = vmatpush1.msra.mxu0 0.0
    %388 = vmatprep.subr.mxu0 0.0
    %389 = vmatpush1.msra.mxu0 0.0
    %390 = vmatprep.subr.mxu0 0.0
    %391 = vmatpush1.msra.mxu0 0.0
    %392 = vmatprep.subr.mxu0 0.0
    %393 = vmatpush1.msra.mxu0 0.0
    %394 = vmatprep.subr.mxu0 0.0
    %395 = vmatpush1.msra.mxu0 0.0
    %396 = vmatprep.subr.mxu0 0.0
    %397 = vmatpush1.msra.mxu0 0.0
    %398 = vmatprep.subr.mxu0 0.0
    %399 = vmatpush1.msra.mxu0 0.0
    %400 = vmatprep.subr.mxu0 0.0
    %401 = vmatpush1.msra.mxu0 0.0
    %402 = vmatprep.subr.mxu0 0.0
    %403 = vmatpush1.msra.mxu0 0.0
    %404 = vmatprep.subr.mxu0 0.0
    %405 = vmatpush1.msra.mxu0 0.0
    %406 = vmatprep.subr.mxu0 0.0
    %407 = vmatpush1.msra.mxu0 0.0
    %408 = vmatprep.subr.mxu0 0.0
    %409 = vmatpush1.msra.mxu0 0.0
    %410 = vmatprep.subr.mxu0 0.0
    %411 = vmatpush1.msra.mxu0 0.0
    %412 = vmatprep.subr.mxu0 0.0
    %413 = vmatpush1.msra.mxu0 0.0
    %414 = vmatprep.subr.mxu0 0.0
    %415 = vmatpush1.msra.mxu0 %v379
    %416 = vmatprep.subr.mxu0 0.0
    %417 = vmatpush2.msra.mxu0 0.0
    %418 = vmatprep.subr.mxu0 0.0
    %419 = vmatpush2.msra.mxu0 0.0
    %420 = vmatprep.subr.mxu0 0.0
    %421 = vmatpush2.msra.mxu0 0.0
    %422 = vmatprep.subr.mxu0 0.0
    %423 = vmatpush2.msra.mxu0 0.0
    %424 = vmatprep.subr.mxu0 0.0
    %425 = vmatpush2.msra.mxu0 0.0
    %426 = vmatprep.subr.mxu0 0.0
    %427 = vmatpush2.msra.mxu0 0.0
    %428 = vmatprep.subr.mxu0 0.0
    %429 = vmatpush2.msra.mxu0 0.0
    %430 = vmatprep.subr.mxu0 0.0
    %431 = vmatpush2.msra.mxu0 0.0
    %432 = vmatprep.subr.mxu0 0.0
    %433 = vmatpush2.msra.mxu0 0.0
    %434 = vmatprep.subr.mxu0 0.0
    %435 = vmatpush2.msra.mxu0 0.0
    %436 = vmatprep.subr.mxu0 0.0
    %437 = vmatpush2.msra.mxu0 0.0
    %438 = vmatprep.subr.mxu0 0.0
    %439 = vmatpush2.msra.mxu0 0.0
    %440 = vmatprep.subr.mxu0 0.0
    %441 = vmatpush2.msra.mxu0 0.0
    %442 = vmatprep.subr.mxu0 0.0
    %443 = vmatpush2.msra.mxu0 0.0
    %444 = vmatprep.subr.mxu0 0.0
    %445 = vmatpush2.msra.mxu0 0.0
    %446 = vmatprep.subr.mxu0 0.0
    %447 = vmatpush2.msra.mxu0 0.0
    %448 = vmatprep.mubr.f32.mxu0 0.0
    %449 = vmatmul.mubr.f32.gmra.mxu0 %v382
    %v450 = vpop.f32.mrf.mxu0
    %v451 = vadd.f32 0.0, %v450
    %v452 = vpop.f32.mrf.mxu0
    %453 = vdwg.mxu0
    %454 = vrot.lane.b32.xlu0 %v270, 112
    %v455 = vpop.permute.xlu0 %454
    %456 = vrot.lane.b32.xlu0 %v270, 80
    %v457 = vpop.permute.xlu0 %456
    %v458 = vsel %vm285, %v455, 0
    %v460 = vsel %vm285, %v457, 0
    %462 = vmatprep.subr.mxu0 0.0
    %463 = vmatpush1.xpose.msra.mxu0 0.0
    %464 = vmatprep.subr.mxu0 0.0
    %465 = vmatpush1.xpose.msra.mxu0 0.0
    %466 = vmatprep.subr.mxu0 0.0
    %467 = vmatpush1.xpose.msra.mxu0 0.0
    %468 = vmatprep.subr.mxu0 0.0
    %469 = vmatpush1.xpose.msra.mxu0 0.0
    %470 = vmatprep.subr.mxu0 0.0
    %471 = vmatpush1.xpose.msra.mxu0 0.0
    %472 = vmatprep.subr.mxu0 0.0
    %473 = vmatpush1.xpose.msra.mxu0 0.0
    %474 = vmatprep.subr.mxu0 0.0
    %475 = vmatpush1.xpose.msra.mxu0 0.0
    %476 = vmatprep.subr.mxu0 0.0
    %477 = vmatpush1.xpose.msra.mxu0 0.0
    %478 = vmatprep.subr.mxu0 0.0
    %479 = vmatpush1.xpose.msra.mxu0 0.0
    %480 = vmatprep.subr.mxu0 0.0
    %481 = vmatpush1.xpose.msra.mxu0 0.0
    %482 = vmatprep.subr.mxu0 0.0
    %483 = vmatpush1.xpose.msra.mxu0 0.0
    %484 = vmatprep.subr.mxu0 0.0
    %485 = vmatpush1.xpose.msra.mxu0 0.0
    %486 = vmatprep.subr.mxu0 0.0
    %487 = vmatpush1.xpose.msra.mxu0 0.0
    %488 = vmatprep.subr.mxu0 0.0
    %489 = vmatpush1.xpose.msra.mxu0 0.0
    %490 = vmatprep.subr.mxu0 0.0
    %491 = vmatpush1.xpose.msra.mxu0 0.0
    %492 = vmatprep.subr.mxu0 0.0
    %493 = vmatpush1.xpose.msra.mxu0 %v460
    %494 = vmatprep.subr.mxu0 0.0
    %495 = vmatpush2.xpose.msra.mxu0 0.0
    %496 = vmatprep.subr.mxu0 0.0
    %497 = vmatpush2.xpose.msra.mxu0 0.0
    %498 = vmatprep.subr.mxu0 0.0
    %499 = vmatpush2.xpose.msra.mxu0 0.0
    %500 = vmatprep.subr.mxu0 0.0
    %501 = vmatpush2.xpose.msra.mxu0 0.0
    %502 = vmatprep.subr.mxu0 0.0
    %503 = vmatpush2.xpose.msra.mxu0 0.0
    %504 = vmatprep.subr.mxu0 0.0
    %505 = vmatpush2.xpose.msra.mxu0 0.0
    %506 = vmatprep.subr.mxu0 0.0
    %507 = vmatpush2.xpose.msra.mxu0 0.0
    %508 = vmatprep.subr.mxu0 0.0
    %509 = vmatpush2.xpose.msra.mxu0 0.0
    %510 = vmatprep.subr.mxu0 0.0
    %511 = vmatpush2.xpose.msra.mxu0 0.0
    %512 = vmatprep.subr.mxu0 0.0
    %513 = vmatpush2.xpose.msra.mxu0 0.0
    %514 = vmatprep.subr.mxu0 0.0
    %515 = vmatpush2.xpose.msra.mxu0 0.0
    %516 = vmatprep.subr.mxu0 0.0
    %517 = vmatpush2.xpose.msra.mxu0 0.0
    %518 = vmatprep.subr.mxu0 0.0
    %519 = vmatpush2.xpose.msra.mxu0 0.0
    %520 = vmatprep.subr.mxu0 0.0
    %521 = vmatpush2.xpose.msra.mxu0 0.0
    %522 = vmatprep.subr.mxu0 0.0
    %523 = vmatpush2.xpose.msra.mxu0 0.0
    %524 = vmatprep.subr.mxu0 0.0
    %525 = vmatpush2.xpose.msra.mxu0 0.0
    %526 = vmatprep.mubr.f32.mxu0 0.0
    %527 = vmatmul.mubr.f32.gmra.mxu0 %v458
    %v528 = vpop.f32.mrf.mxu0
    %v529 = vadd.f32 0.0, %v528
    %v530 = vpop.f32.mrf.mxu0
    %531 = vdwg.mxu0
    %v532 = vmul.f32 %v529, 0.25
    %v533 = vadd.f32 %v532, %v364
    %v534 = vsel %vm366, %v533, -inf
    %535 = vmax.xlane.f32.xlu0 %v534
    %v536 = vpop.xlane.xlu0 %535
    %v537 = vsub.f32 %v533, %v536
    %v538 = vmul.f32 %v537, 1.442695
    %v539 = vpow.pop %v538
    %v540 = vsel %vm366, %v539, 0.0
    %541 = vadd.xlane.f32.xlu0 %v540
    %v542 = vpop.xlane.xlu0 %541
    %v543 = vrcp.pop %v542
    %v544 = vmul.f32 %v539, %v543
    %545 = vrot.lane.b32.xlu0 %v270, 48
    %v546 = vpop.permute.xlu0 %545
    %v549 = vsel %vm366, %v544, 0
    %551 = vmatprep.subr.mxu0 0.0
    %552 = vmatpush1.msra.mxu0 0.0
    %553 = vmatprep.subr.mxu0 0.0
    %554 = vmatpush1.msra.mxu0 0.0
    %555 = vmatprep.subr.mxu0 0.0
    %556 = vmatpush1.msra.mxu0 0.0
    %557 = vmatprep.subr.mxu0 0.0
    %558 = vmatpush1.msra.mxu0 0.0
    %559 = vmatprep.subr.mxu0 0.0
    %560 = vmatpush1.msra.mxu0 0.0
    %561 = vmatprep.subr.mxu0 0.0
    %562 = vmatpush1.msra.mxu0 0.0
    %563 = vmatprep.subr.mxu0 0.0
    %564 = vmatpush1.msra.mxu0 0.0
    %565 = vmatprep.subr.mxu0 0.0
    %566 = vmatpush1.msra.mxu0 0.0
    %567 = vmatprep.subr.mxu0 0.0
    %568 = vmatpush1.msra.mxu0 0.0
    %569 = vmatprep.subr.mxu0 0.0
    %570 = vmatpush1.msra.mxu0 0.0
    %571 = vmatprep.subr.mxu0 0.0
    %572 = vmatpush1.msra.mxu0 0.0
    %573 = vmatprep.subr.mxu0 0.0
    %574 = vmatpush1.msra.mxu0 0.0
    %575 = vmatprep.subr.mxu0 0.0
    %576 = vmatpush1.msra.mxu0 0.0
    %577 = vmatprep.subr.mxu0 0.0
    %578 = vmatpush1.msra.mxu0 0.0
    %579 = vmatprep.subr.mxu0 0.0
    %580 = vmatpush1.msra.mxu0 0.0
    %581 = vmatprep.subr.mxu0 0.0
    %582 = vmatpush1.msra.mxu0 %v546
    %583 = vmatprep.subr.mxu0 0.0
    %584 = vmatpush2.msra.mxu0 0.0
    %585 = vmatprep.subr.mxu0 0.0
    %586 = vmatpush2.msra.mxu0 0.0
    %587 = vmatprep.subr.mxu0 0.0
    %588 = vmatpush2.msra.mxu0 0.0
    %589 = vmatprep.subr.mxu0 0.0
    %590 = vmatpush2.msra.mxu0 0.0
    %591 = vmatprep.subr.mxu0 0.0
    %592 = vmatpush2.msra.mxu0 0.0
    %593 = vmatprep.subr.mxu0 0.0
    %594 = vmatpush2.msra.mxu0 0.0
    %595 = vmatprep.subr.mxu0 0.0
    %596 = vmatpush2.msra.mxu0 0.0
    %597 = vmatprep.subr.mxu0 0.0
    %598 = vmatpush2.msra.mxu0 0.0
    %599 = vmatprep.subr.mxu0 0.0
    %600 = vmatpush2.msra.mxu0 0.0
    %601 = vmatprep.subr.mxu0 0.0
    %602 = vmatpush2.msra.mxu0 0.0
    %603 = vmatprep.subr.mxu0 0.0
    %604 = vmatpush2.msra.mxu0 0.0
    %605 = vmatprep.subr.mxu0 0.0
    %606 = vmatpush2.msra.mxu0 0.0
    %607 = vmatprep.subr.mxu0 0.0
    %608 = vmatpush2.msra.mxu0 0.0
    %609 = vmatprep.subr.mxu0 0.0
    %610 = vmatpush2.msra.mxu0 0.0
    %611 = vmatprep.subr.mxu0 0.0
    %612 = vmatpush2.msra.mxu0 0.0
    %613 = vmatprep.subr.mxu0 0.0
    %614 = vmatpush2.msra.mxu0 0.0
    %615 = vmatprep.mubr.f32.mxu0 0.0
    %616 = vmatmul.mubr.f32.gmra.mxu0 %v549
    %v617 = vpop.f32.mrf.mxu0
    %v618 = vadd.f32 0.0, %v617
    %v619 = vpop.f32.mrf.mxu0
    %620 = vdwg.mxu0
    %v622 = vsel %vm285, %v618, 0
    %624 = vmatprep.subr.mxu0 0.0
    %625 = vmatpush1.msra.mxu0 0.0
    %626 = vmatprep.subr.mxu0 0.0
    %627 = vmatpush1.msra.mxu0 0.0
    %628 = vmatprep.subr.mxu0 0.0
    %629 = vmatpush1.msra.mxu0 0.0
    %630 = vmatprep.subr.mxu0 0.0
    %631 = vmatpush1.msra.mxu0 0.0
    %632 = vmatprep.subr.mxu0 0.0
    %633 = vmatpush1.msra.mxu0 0.0
    %634 = vmatprep.subr.mxu0 0.0
    %635 = vmatpush1.msra.mxu0 0.0
    %636 = vmatprep.subr.mxu0 0.0
    %637 = vmatpush1.msra.mxu0 0.0
    %638 = vmatprep.subr.mxu0 0.0
    %639 = vmatpush1.msra.mxu0 0.0
    %640 = vmatprep.subr.mxu0 0.0
    %641 = vmatpush1.msra.mxu0 0.0
    %642 = vmatprep.subr.mxu0 0.0
    %643 = vmatpush1.msra.mxu0 0.0
    %644 = vmatprep.subr.mxu0 0.0
    %645 = vmatpush1.msra.mxu0 0.0
    %646 = vmatprep.subr.mxu0 0.0
    %647 = vmatpush1.msra.mxu0 0.0
    %648 = vmatprep.subr.mxu0 0.0
    %649 = vmatpush1.msra.mxu0 0.0
    %650 = vmatprep.subr.mxu0 0.0
    %651 = vmatpush1.msra.mxu0 0.0
    %652 = vmatprep.subr.mxu0 0.0
    %653 = vmatpush1.msra.mxu0 %v281
    %654 = vmatprep.subr.mxu0 0.0
    %655 = vmatpush1.msra.mxu0 %v280
    %656 = vmatprep.subr.mxu0 0.0
    %657 = vmatpush2.msra.mxu0 0.0
    %658 = vmatprep.subr.mxu0 0.0
    %659 = vmatpush2.msra.mxu0 0.0
    %660 = vmatprep.subr.mxu0 0.0
    %661 = vmatpush2.msra.mxu0 0.0
    %662 = vmatprep.subr.mxu0 0.0
    %663 = vmatpush2.msra.mxu0 0.0
    %664 = vmatprep.subr.mxu0 0.0
    %665 = vmatpush2.msra.mxu0 0.0
    %666 = vmatprep.subr.mxu0 0.0
    %667 = vmatpush2.msra.mxu0 0.0
    %668 = vmatprep.subr.mxu0 0.0
    %669 = vmatpush2.msra.mxu0 0.0
    %670 = vmatprep.subr.mxu0 0.0
    %671 = vmatpush2.msra.mxu0 0.0
    %672 = vmatprep.subr.mxu0 0.0
    %673 = vmatpush2.msra.mxu0 0.0
    %674 = vmatprep.subr.mxu0 0.0
    %675 = vmatpush2.msra.mxu0 0.0
    %676 = vmatprep.subr.mxu0 0.0
    %677 = vmatpush2.msra.mxu0 0.0
    %678 = vmatprep.subr.mxu0 0.0
    %679 = vmatpush2.msra.mxu0 0.0
    %680 = vmatprep.subr.mxu0 0.0
    %681 = vmatpush2.msra.mxu0 0.0
    %682 = vmatprep.subr.mxu0 0.0
    %683 = vmatpush2.msra.mxu0 0.0
    %684 = vmatprep.subr.mxu0 0.0
    %685 = vmatpush2.msra.mxu0 0.0
    %686 = vmatprep.subr.mxu0 0.0
    %687 = vmatpush2.msra.mxu0 0.0
    %688 = vmatprep.mubr.f32.mxu0 0.0
    %689 = vmatmul.mubr.f32.gmra.mxu0 %v622
    %v690 = vpop.f32.mrf.mxu0
    %v691 = vadd.f32 0.0, %v690
    %v692 = vpop.f32.mrf.mxu0
    %693 = vdwg.mxu0
    %v695 = vsel %vm285, %v451, 0
    %697 = vmatprep.subr.mxu0 0.0
    %698 = vmatpush1.msra.mxu0 0.0
    %699 = vmatprep.subr.mxu0 0.0
    %700 = vmatpush1.msra.mxu0 0.0
    %701 = vmatprep.subr.mxu0 0.0
    %702 = vmatpush1.msra.mxu0 0.0
    %703 = vmatprep.subr.mxu0 0.0
    %704 = vmatpush1.msra.mxu0 0.0
    %705 = vmatprep.subr.mxu0 0.0
    %706 = vmatpush1.msra.mxu0 0.0
    %707 = vmatprep.subr.mxu0 0.0
    %708 = vmatpush1.msra.mxu0 0.0
    %709 = vmatprep.subr.mxu0 0.0
    %710 = vmatpush1.msra.mxu0 0.0
    %711 = vmatprep.subr.mxu0 0.0
    %712 = vmatpush1.msra.mxu0 0.0
    %713 = vmatprep.subr.mxu0 0.0
    %714 = vmatpush1.msra.mxu0 0.0
    %715 = vmatprep.subr.mxu0 0.0
    %716 = vmatpush1.msra.mxu0 0.0
    %717 = vmatprep.subr.mxu0 0.0
    %718 = vmatpush1.msra.mxu0 0.0
    %719 = vmatprep.subr.mxu0 0.0
    %720 = vmatpush1.msra.mxu0 0.0
    %721 = vmatprep.subr.mxu0 0.0
    %722 = vmatpush1.msra.mxu0 0.0
    %723 = vmatprep.subr.mxu0 0.0
    %724 = vmatpush1.msra.mxu0 0.0
    %725 = vmatprep.subr.mxu0 0.0
    %726 = vmatpush1.msra.mxu0 %v279
    %727 = vmatprep.subr.mxu0 0.0
    %728 = vmatpush1.msra.mxu0 %v278
    %729 = vmatprep.subr.mxu0 0.0
    %730 = vmatpush2.msra.mxu0 0.0
    %731 = vmatprep.subr.mxu0 0.0
    %732 = vmatpush2.msra.mxu0 0.0
    %733 = vmatprep.subr.mxu0 0.0
    %734 = vmatpush2.msra.mxu0 0.0
    %735 = vmatprep.subr.mxu0 0.0
    %736 = vmatpush2.msra.mxu0 0.0
    %737 = vmatprep.subr.mxu0 0.0
    %738 = vmatpush2.msra.mxu0 0.0
    %739 = vmatprep.subr.mxu0 0.0
    %740 = vmatpush2.msra.mxu0 0.0
    %741 = vmatprep.subr.mxu0 0.0
    %742 = vmatpush2.msra.mxu0 0.0
    %743 = vmatprep.subr.mxu0 0.0
    %744 = vmatpush2.msra.mxu0 0.0
    %745 = vmatprep.subr.mxu0 0.0
    %746 = vmatpush2.msra.mxu0 0.0
    %747 = vmatprep.subr.mxu0 0.0
    %748 = vmatpush2.msra.mxu0 0.0
    %749 = vmatprep.subr.mxu0 0.0
    %750 = vmatpush2.msra.mxu0 0.0
    %751 = vmatprep.subr.mxu0 0.0
    %752 = vmatpush2.msra.mxu0 0.0
    %753 = vmatprep.subr.mxu0 0.0
    %754 = vmatpush2.msra.mxu0 0.0
    %755 = vmatprep.subr.mxu0 0.0
    %756 = vmatpush2.msra.mxu0 0.0
    %757 = vmatprep.subr.mxu0 0.0
    %758 = vmatpush2.msra.mxu0 0.0
    %759 = vmatprep.subr.mxu0 0.0
    %760 = vmatpush2.msra.mxu0 0.0
    %761 = vmatprep.mubr.f32.mxu0 0.0
    %762 = vmatmul.mubr.f32.gmra.mxu0 %v695
    %v763 = vpop.f32.mrf.mxu0
    %v764 = vadd.f32 %v691, %v763
    %v765 = vpop.f32.mrf.mxu0
    %766 = vdwg.mxu0
    %768 = vrot.lane.b32.xlu0 %v275, 96
    %v769 = vpop.permute.xlu0 %768
    %v770 = vsel %vm285, %v275, 0
    %v772 = vsel %vm285, %v769, 0
    %774 = vmatprep.subr.mxu0 0.0
    %775 = vmatpush1.xpose.msra.mxu0 0.0
    %776 = vmatprep.subr.mxu0 0.0
    %777 = vmatpush1.xpose.msra.mxu0 0.0
    %778 = vmatprep.subr.mxu0 0.0
    %779 = vmatpush1.xpose.msra.mxu0 0.0
    %780 = vmatprep.subr.mxu0 0.0
    %781 = vmatpush1.xpose.msra.mxu0 0.0
    %782 = vmatprep.subr.mxu0 0.0
    %783 = vmatpush1.xpose.msra.mxu0 0.0
    %784 = vmatprep.subr.mxu0 0.0
    %785 = vmatpush1.xpose.msra.mxu0 0.0
    %786 = vmatprep.subr.mxu0 0.0
    %787 = vmatpush1.xpose.msra.mxu0 0.0
    %788 = vmatprep.subr.mxu0 0.0
    %789 = vmatpush1.xpose.msra.mxu0 0.0
    %790 = vmatprep.subr.mxu0 0.0
    %791 = vmatpush1.xpose.msra.mxu0 0.0
    %792 = vmatprep.subr.mxu0 0.0
    %793 = vmatpush1.xpose.msra.mxu0 0.0
    %794 = vmatprep.subr.mxu0 0.0
    %795 = vmatpush1.xpose.msra.mxu0 0.0
    %796 = vmatprep.subr.mxu0 0.0
    %797 = vmatpush1.xpose.msra.mxu0 0.0
    %798 = vmatprep.subr.mxu0 0.0
    %799 = vmatpush1.xpose.msra.mxu0 0.0
    %800 = vmatprep.subr.mxu0 0.0
    %801 = vmatpush1.xpose.msra.mxu0 0.0
    %802 = vmatprep.subr.mxu0 0.0
    %803 = vmatpush1.xpose.msra.mxu0 0.0
    %804 = vmatprep.subr.mxu0 0.0
    %805 = vmatpush1.xpose.msra.mxu0 %v772
    %806 = vmatprep.subr.mxu0 0.0
    %807 = vmatpush2.xpose.msra.mxu0 0.0
    %808 = vmatprep.subr.mxu0 0.0
    %809 = vmatpush2.xpose.msra.mxu0 0.0
    %810 = vmatprep.subr.mxu0 0.0
    %811 = vmatpush2.xpose.msra.mxu0 0.0
    %812 = vmatprep.subr.mxu0 0.0
    %813 = vmatpush2.xpose.msra.mxu0 0.0
    %814 = vmatprep.subr.mxu0 0.0
    %815 = vmatpush2.xpose.msra.mxu0 0.0
    %816 = vmatprep.subr.mxu0 0.0
    %817 = vmatpush2.xpose.msra.mxu0 0.0
    %818 = vmatprep.subr.mxu0 0.0
    %819 = vmatpush2.xpose.msra.mxu0 0.0
    %820 = vmatprep.subr.mxu0 0.0
    %821 = vmatpush2.xpose.msra.mxu0 0.0
    %822 = vmatprep.subr.mxu0 0.0
    %823 = vmatpush2.xpose.msra.mxu0 0.0
    %824 = vmatprep.subr.mxu0 0.0
    %825 = vmatpush2.xpose.msra.mxu0 0.0
    %826 = vmatprep.subr.mxu0 0.0
    %827 = vmatpush2.xpose.msra.mxu0 0.0
    %828 = vmatprep.subr.mxu0 0.0
    %829 = vmatpush2.xpose.msra.mxu0 0.0
    %830 = vmatprep.subr.mxu0 0.0
    %831 = vmatpush2.xpose.msra.mxu0 0.0
    %832 = vmatprep.subr.mxu0 0.0
    %833 = vmatpush2.xpose.msra.mxu0 0.0
    %834 = vmatprep.subr.mxu0 0.0
    %835 = vmatpush2.xpose.msra.mxu0 0.0
    %836 = vmatprep.subr.mxu0 0.0
    %837 = vmatpush2.xpose.msra.mxu0 0.0
    %838 = vmatprep.mubr.f32.mxu0 0.0
    %839 = vmatmul.mubr.f32.gmra.mxu0 %v770
    %v840 = vpop.f32.mrf.mxu0
    %v841 = vadd.f32 0.0, %v840
    %v842 = vpop.f32.mrf.mxu0
    %843 = vdwg.mxu0
    %v844 = vmul.f32 %v841, 0.25
    %v845 = vlaneseq
    %v846 = vshrl.u32 %v845, 7
    %v847 = vsub.s32 1, %v846
    %v848 = vrot.slane %v187, %v847
    %v849 = vadd.f32 %v844, %v848
    %v850 = vsel %vm366, %v849, -inf
    %851 = vmax.xlane.f32.xlu0 %v850
    %v852 = vpop.xlane.xlu0 %851
    %v853 = vsub.f32 %v849, %v852
    %v854 = vmul.f32 %v853, 1.442695
    %v855 = vpow.pop %v854
    %v856 = vsel %vm366, %v855, 0.0
    %857 = vadd.xlane.f32.xlu0 %v856
    %v858 = vpop.xlane.xlu0 %857
    %v859 = vrcp.pop %v858
    %v860 = vmul.f32 %v855, %v859
    %861 = vrot.lane.b32.xlu0 %v275, 64
    %v862 = vpop.permute.xlu0 %861
    %v865 = vsel %vm366, %v860, 0
    %867 = vmatprep.subr.mxu0 0.0
    %868 = vmatpush1.msra.mxu0 0.0
    %869 = vmatprep.subr.mxu0 0.0
    %870 = vmatpush1.msra.mxu0 0.0
    %871 = vmatprep.subr.mxu0 0.0
    %872 = vmatpush1.msra.mxu0 0.0
    %873 = vmatprep.subr.mxu0 0.0
    %874 = vmatpush1.msra.mxu0 0.0
    %875 = vmatprep.subr.mxu0 0.0
    %876 = vmatpush1.msra.mxu0 0.0
    %877 = vmatprep.subr.mxu0 0.0
    %878 = vmatpush1.msra.mxu0 0.0
    %879 = vmatprep.subr.mxu0 0.0
    %880 = vmatpush1.msra.mxu0 0.0
    %881 = vmatprep.subr.mxu0 0.0
    %882 = vmatpush1.msra.mxu0 0.0
    %883 = vmatprep.subr.mxu0 0.0
    %884 = vmatpush1.msra.mxu0 0.0
    %885 = vmatprep.subr.mxu0 0.0
    %886 = vmatpush1.msra.mxu0 0.0
    %887 = vmatprep.subr.mxu0 0.0
    %888 = vmatpush1.msra.mxu0 0.0
    %889 = vmatprep.subr.mxu0 0.0
    %890 = vmatpush1.msra.mxu0 0.0
    %891 = vmatprep.subr.mxu0 0.0
    %892 = vmatpush1.msra.mxu0 0.0
    %893 = vmatprep.subr.mxu0 0.0
    %894 = vmatpush1.msra.mxu0 0.0
    %895 = vmatprep.subr.mxu0 0.0
    %896 = vmatpush1.msra.mxu0 0.0
    %897 = vmatprep.subr.mxu0 0.0
    %898 = vmatpush1.msra.mxu0 %v862
    %899 = vmatprep.subr.mxu0 0.0
    %900 = vmatpush2.msra.mxu0 0.0
    %901 = vmatprep.subr.mxu0 0.0
    %902 = vmatpush2.msra.mxu0 0.0
    %903 = vmatprep.subr.mxu0 0.0
    %904 = vmatpush2.msra.mxu0 0.0
    %905 = vmatprep.subr.mxu0 0.0
    %906 = vmatpush2.msra.mxu0 0.0
    %907 = vmatprep.subr.mxu0 0.0
    %908 = vmatpush2.msra.mxu0 0.0
    %909 = vmatprep.subr.mxu0 0.0
    %910 = vmatpush2.msra.mxu0 0.0
    %911 = vmatprep.subr.mxu0 0.0
    %912 = vmatpush2.msra.mxu0 0.0
    %913 = vmatprep.subr.mxu0 0.0
    %914 = vmatpush2.msra.mxu0 0.0
    %915 = vmatprep.subr.mxu0 0.0
    %916 = vmatpush2.msra.mxu0 0.0
    %917 = vmatprep.subr.mxu0 0.0
    %918 = vmatpush2.msra.mxu0 0.0
    %919 = vmatprep.subr.mxu0 0.0
    %920 = vmatpush2.msra.mxu0 0.0
    %921 = vmatprep.subr.mxu0 0.0
    %922 = vmatpush2.msra.mxu0 0.0
    %923 = vmatprep.subr.mxu0 0.0
    %924 = vmatpush2.msra.mxu0 0.0
    %925 = vmatprep.subr.mxu0 0.0
    %926 = vmatpush2.msra.mxu0 0.0
    %927 = vmatprep.subr.mxu0 0.0
    %928 = vmatpush2.msra.mxu0 0.0
    %929 = vmatprep.subr.mxu0 0.0
    %930 = vmatpush2.msra.mxu0 0.0
    %931 = vmatprep.mubr.f32.mxu0 0.0
    %932 = vmatmul.mubr.f32.gmra.mxu0 %v865
    %v933 = vpop.f32.mrf.mxu0
    %v934 = vadd.f32 0.0, %v933
    %v935 = vpop.f32.mrf.mxu0
    %936 = vdwg.mxu0
    %937 = vrot.lane.b32.xlu0 %v275, 112
    %v938 = vpop.permute.xlu0 %937
    %939 = vrot.lane.b32.xlu0 %v275, 80
    %v940 = vpop.permute.xlu0 %939
    %v941 = vsel %vm285, %v938, 0
    %v943 = vsel %vm285, %v940, 0
    %945 = vmatprep.subr.mxu0 0.0
    %946 = vmatpush1.xpose.msra.mxu0 0.0
    %947 = vmatprep.subr.mxu0 0.0
    %948 = vmatpush1.xpose.msra.mxu0 0.0
    %949 = vmatprep.subr.mxu0 0.0
    %950 = vmatpush1.xpose.msra.mxu0 0.0
    %951 = vmatprep.subr.mxu0 0.0
    %952 = vmatpush1.xpose.msra.mxu0 0.0
    %953 = vmatprep.subr.mxu0 0.0
    %954 = vmatpush1.xpose.msra.mxu0 0.0
    %955 = vmatprep.subr.mxu0 0.0
    %956 = vmatpush1.xpose.msra.mxu0 0.0
    %957 = vmatprep.subr.mxu0 0.0
    %958 = vmatpush1.xpose.msra.mxu0 0.0
    %959 = vmatprep.subr.mxu0 0.0
    %960 = vmatpush1.xpose.msra.mxu0 0.0
    %961 = vmatprep.subr.mxu0 0.0
    %962 = vmatpush1.xpose.msra.mxu0 0.0
    %963 = vmatprep.subr.mxu0 0.0
    %964 = vmatpush1.xpose.msra.mxu0 0.0
    %965 = vmatprep.subr.mxu0 0.0
    %966 = vmatpush1.xpose.msra.mxu0 0.0
    %967 = vmatprep.subr.mxu0 0.0
    %968 = vmatpush1.xpose.msra.mxu0 0.0
    %969 = vmatprep.subr.mxu0 0.0
    %970 = vmatpush1.xpose.msra.mxu0 0.0
    %971 = vmatprep.subr.mxu0 0.0
    %972 = vmatpush1.xpose.msra.mxu0 0.0
    %973 = vmatprep.subr.mxu0 0.0
    %974 = vmatpush1.xpose.msra.mxu0 0.0
    %975 = vmatprep.subr.mxu0 0.0
    %976 = vmatpush1.xpose.msra.mxu0 %v943
    %977 = vmatprep.subr.mxu0 0.0
    %978 = vmatpush2.xpose.msra.mxu0 0.0
    %979 = vmatprep.subr.mxu0 0.0
    %980 = vmatpush2.xpose.msra.mxu0 0.0
    %981 = vmatprep.subr.mxu0 0.0
    %982 = vmatpush2.xpose.msra.mxu0 0.0
    %983 = vmatprep.subr.mxu0 0.0
    %984 = vmatpush2.xpose.msra.mxu0 0.0
    %985 = vmatprep.subr.mxu0 0.0
    %986 = vmatpush2.xpose.msra.mxu0 0.0
    %987 = vmatprep.subr.mxu0 0.0
    %988 = vmatpush2.xpose.msra.mxu0 0.0
    %989 = vmatprep.subr.mxu0 0.0
    %990 = vmatpush2.xpose.msra.mxu0 0.0
    %991 = vmatprep.subr.mxu0 0.0
    %992 = vmatpush2.xpose.msra.mxu0 0.0
    %993 = vmatprep.subr.mxu0 0.0
    %994 = vmatpush2.xpose.msra.mxu0 0.0
    %995 = vmatprep.subr.mxu0 0.0
    %996 = vmatpush2.xpose.msra.mxu0 0.0
    %997 = vmatprep.subr.mxu0 0.0
    %998 = vmatpush2.xpose.msra.mxu0 0.0
    %999 = vmatprep.subr.mxu0 0.0
    %1000 = vmatpush2.xpose.msra.mxu0 0.0
    %1001 = vmatprep.subr.mxu0 0.0
    %1002 = vmatpush2.xpose.msra.mxu0 0.0
    %1003 = vmatprep.subr.mxu0 0.0
    %1004 = vmatpush2.xpose.msra.mxu0 0.0
    %1005 = vmatprep.subr.mxu0 0.0
    %1006 = vmatpush2.xpose.msra.mxu0 0.0
    %1007 = vmatprep.subr.mxu0 0.0
    %1008 = vmatpush2.xpose.msra.mxu0 0.0
    %1009 = vmatprep.mubr.f32.mxu0 0.0
    %1010 = vmatmul.mubr.f32.gmra.mxu0 %v941
    %v1011 = vpop.f32.mrf.mxu0
    %v1012 = vadd.f32 0.0, %v1011
    %v1013 = vpop.f32.mrf.mxu0
    %1014 = vdwg.mxu0
    %v1015 = vmul.f32 %v1012, 0.25
    %v1016 = vadd.f32 %v1015, %v848
    %v1017 = vsel %vm366, %v1016, -inf
    %1018 = vmax.xlane.f32.xlu0 %v1017
    %v1019 = vpop.xlane.xlu0 %1018
    %v1020 = vsub.f32 %v1016, %v1019
    %v1021 = vmul.f32 %v1020, 1.442695
    %v1022 = vpow.pop %v1021
    %v1023 = vsel %vm366, %v1022, 0.0
    %1024 = vadd.xlane.f32.xlu0 %v1023
    %v1025 = vpop.xlane.xlu0 %1024
    %v1026 = vrcp.pop %v1025
    %v1027 = vmul.f32 %v1022, %v1026
    %1028 = vrot.lane.b32.xlu0 %v275, 48
    %v1029 = vpop.permute.xlu0 %1028
    %v1032 = vsel %vm366, %v1027, 0
    %1034 = vmatprep.subr.mxu0 0.0
    %1035 = vmatpush1.msra.mxu0 0.0
    %1036 = vmatprep.subr.mxu0 0.0
    %1037 = vmatpush1.msra.mxu0 0.0
    %1038 = vmatprep.subr.mxu0 0.0
    %1039 = vmatpush1.msra.mxu0 0.0
    %1040 = vmatprep.subr.mxu0 0.0
    %1041 = vmatpush1.msra.mxu0 0.0
    %1042 = vmatprep.subr.mxu0 0.0
    %1043 = vmatpush1.msra.mxu0 0.0
    %1044 = vmatprep.subr.mxu0 0.0
    %1045 = vmatpush1.msra.mxu0 0.0
    %1046 = vmatprep.subr.mxu0 0.0
    %1047 = vmatpush1.msra.mxu0 0.0
    %1048 = vmatprep.subr.mxu0 0.0
    %1049 = vmatpush1.msra.mxu0 0.0
    %1050 = vmatprep.subr.mxu0 0.0
    %1051 = vmatpush1.msra.mxu0 0.0
    %1052 = vmatprep.subr.mxu0 0.0
    %1053 = vmatpush1.msra.mxu0 0.0
    %1054 = vmatprep.subr.mxu0 0.0
    %1055 = vmatpush1.msra.mxu0 0.0
    %1056 = vmatprep.subr.mxu0 0.0
    %1057 = vmatpush1.msra.mxu0 0.0
    %1058 = vmatprep.subr.mxu0 0.0
    %1059 = vmatpush1.msra.mxu0 0.0
    %1060 = vmatprep.subr.mxu0 0.0
    %1061 = vmatpush1.msra.mxu0 0.0
    %1062 = vmatprep.subr.mxu0 0.0
    %1063 = vmatpush1.msra.mxu0 0.0
    %1064 = vmatprep.subr.mxu0 0.0
    %1065 = vmatpush1.msra.mxu0 %v1029
    %1066 = vmatprep.subr.mxu0 0.0
    %1067 = vmatpush2.msra.mxu0 0.0
    %1068 = vmatprep.subr.mxu0 0.0
    %1069 = vmatpush2.msra.mxu0 0.0
    %1070 = vmatprep.subr.mxu0 0.0
    %1071 = vmatpush2.msra.mxu0 0.0
    %1072 = vmatprep.subr.mxu0 0.0
    %1073 = vmatpush2.msra.mxu0 0.0
    %1074 = vmatprep.subr.mxu0 0.0
    %1075 = vmatpush2.msra.mxu0 0.0
    %1076 = vmatprep.subr.mxu0 0.0
    %1077 = vmatpush2.msra.mxu0 0.0
    %1078 = vmatprep.subr.mxu0 0.0
    %1079 = vmatpush2.msra.mxu0 0.0
    %1080 = vmatprep.subr.mxu0 0.0
    %1081 = vmatpush2.msra.mxu0 0.0
    %1082 = vmatprep.subr.mxu0 0.0
    %1083 = vmatpush2.msra.mxu0 0.0
    %1084 = vmatprep.subr.mxu0 0.0
    %1085 = vmatpush2.msra.mxu0 0.0
    %1086 = vmatprep.subr.mxu0 0.0
    %1087 = vmatpush2.msra.mxu0 0.0
    %1088 = vmatprep.subr.mxu0 0.0
    %1089 = vmatpush2.msra.mxu0 0.0
    %1090 = vmatprep.subr.mxu0 0.0
    %1091 = vmatpush2.msra.mxu0 0.0
    %1092 = vmatprep.subr.mxu0 0.0
    %1093 = vmatpush2.msra.mxu0 0.0
    %1094 = vmatprep.subr.mxu0 0.0
    %1095 = vmatpush2.msra.mxu0 0.0
    %1096 = vmatprep.subr.mxu0 0.0
    %1097 = vmatpush2.msra.mxu0 0.0
    %1098 = vmatprep.mubr.f32.mxu0 0.0
    %1099 = vmatmul.mubr.f32.gmra.mxu0 %v1032
    %v1100 = vpop.f32.mrf.mxu0
    %v1101 = vadd.f32 0.0, %v1100
    %v1102 = vpop.f32.mrf.mxu0
    %1103 = vdwg.mxu0
    %v1105 = vsel %vm285, %v1101, 0
    %1107 = vmatprep.subr.mxu0 0.0
    %1108 = vmatpush1.msra.mxu0 0.0
    %1109 = vmatprep.subr.mxu0 0.0
    %1110 = vmatpush1.msra.mxu0 0.0
    %1111 = vmatprep.subr.mxu0 0.0
    %1112 = vmatpush1.msra.mxu0 0.0
    %1113 = vmatprep.subr.mxu0 0.0
    %1114 = vmatpush1.msra.mxu0 0.0
    %1115 = vmatprep.subr.mxu0 0.0
    %1116 = vmatpush1.msra.mxu0 0.0
    %1117 = vmatprep.subr.mxu0 0.0
    %1118 = vmatpush1.msra.mxu0 0.0
    %1119 = vmatprep.subr.mxu0 0.0
    %1120 = vmatpush1.msra.mxu0 0.0
    %1121 = vmatprep.subr.mxu0 0.0
    %1122 = vmatpush1.msra.mxu0 0.0
    %1123 = vmatprep.subr.mxu0 0.0
    %1124 = vmatpush1.msra.mxu0 0.0
    %1125 = vmatprep.subr.mxu0 0.0
    %1126 = vmatpush1.msra.mxu0 0.0
    %1127 = vmatprep.subr.mxu0 0.0
    %1128 = vmatpush1.msra.mxu0 0.0
    %1129 = vmatprep.subr.mxu0 0.0
    %1130 = vmatpush1.msra.mxu0 0.0
    %1131 = vmatprep.subr.mxu0 0.0
    %1132 = vmatpush1.msra.mxu0 0.0
    %1133 = vmatprep.subr.mxu0 0.0
    %1134 = vmatpush1.msra.mxu0 0.0
    %1135 = vmatprep.subr.mxu0 0.0
    %1136 = vmatpush1.msra.mxu0 %v281
    %1137 = vmatprep.subr.mxu0 0.0
    %1138 = vmatpush1.msra.mxu0 %v280
    %1139 = vmatprep.subr.mxu0 0.0
    %1140 = vmatpush2.msra.mxu0 0.0
    %1141 = vmatprep.subr.mxu0 0.0
    %1142 = vmatpush2.msra.mxu0 0.0
    %1143 = vmatprep.subr.mxu0 0.0
    %1144 = vmatpush2.msra.mxu0 0.0
    %1145 = vmatprep.subr.mxu0 0.0
    %1146 = vmatpush2.msra.mxu0 0.0
    %1147 = vmatprep.subr.mxu0 0.0
    %1148 = vmatpush2.msra.mxu0 0.0
    %1149 = vmatprep.subr.mxu0 0.0
    %1150 = vmatpush2.msra.mxu0 0.0
    %1151 = vmatprep.subr.mxu0 0.0
    %1152 = vmatpush2.msra.mxu0 0.0
    %1153 = vmatprep.subr.mxu0 0.0
    %1154 = vmatpush2.msra.mxu0 0.0
    %1155 = vmatprep.subr.mxu0 0.0
    %1156 = vmatpush2.msra.mxu0 0.0
    %1157 = vmatprep.subr.mxu0 0.0
    %1158 = vmatpush2.msra.mxu0 0.0
    %1159 = vmatprep.subr.mxu0 0.0
    %1160 = vmatpush2.msra.mxu0 0.0
    %1161 = vmatprep.subr.mxu0 0.0
    %1162 = vmatpush2.msra.mxu0 0.0
    %1163 = vmatprep.subr.mxu0 0.0
    %1164 = vmatpush2.msra.mxu0 0.0
    %1165 = vmatprep.subr.mxu0 0.0
    %1166 = vmatpush2.msra.mxu0 0.0
    %1167 = vmatprep.subr.mxu0 0.0
    %1168 = vmatpush2.msra.mxu0 0.0
    %1169 = vmatprep.subr.mxu0 0.0
    %1170 = vmatpush2.msra.mxu0 0.0
    %1171 = vmatprep.mubr.f32.mxu0 0.0
    %1172 = vmatmul.mubr.f32.gmra.mxu0 %v1105
    %v1173 = vpop.f32.mrf.mxu0
    %v1174 = vadd.f32 0.0, %v1173
    %v1175 = vpop.f32.mrf.mxu0
    %1176 = vdwg.mxu0
    %v1178 = vsel %vm285, %v934, 0
    %1180 = vmatprep.subr.mxu0 0.0
    %1181 = vmatpush1.msra.mxu0 0.0
    %1182 = vmatprep.subr.mxu0 0.0
    %1183 = vmatpush1.msra.mxu0 0.0
    %1184 = vmatprep.subr.mxu0 0.0
    %1185 = vmatpush1.msra.mxu0 0.0
    %1186 = vmatprep.subr.mxu0 0.0
    %1187 = vmatpush1.msra.mxu0 0.0
    %1188 = vmatprep.subr.mxu0 0.0
    %1189 = vmatpush1.msra.mxu0 0.0
    %1190 = vmatprep.subr.mxu0 0.0
    %1191 = vmatpush1.msra.mxu0 0.0
    %1192 = vmatprep.subr.mxu0 0.0
    %1193 = vmatpush1.msra.mxu0 0.0
    %1194 = vmatprep.subr.mxu0 0.0
    %1195 = vmatpush1.msra.mxu0 0.0
    %1196 = vmatprep.subr.mxu0 0.0
    %1197 = vmatpush1.msra.mxu0 0.0
    %1198 = vmatprep.subr.mxu0 0.0
    %1199 = vmatpush1.msra.mxu0 0.0
    %1200 = vmatprep.subr.mxu0 0.0
    %1201 = vmatpush1.msra.mxu0 0.0
    %1202 = vmatprep.subr.mxu0 0.0
    %1203 = vmatpush1.msra.mxu0 0.0
    %1204 = vmatprep.subr.mxu0 0.0
    %1205 = vmatpush1.msra.mxu0 0.0
    %1206 = vmatprep.subr.mxu0 0.0
    %1207 = vmatpush1.msra.mxu0 0.0
    %1208 = vmatprep.subr.mxu0 0.0
    %1209 = vmatpush1.msra.mxu0 %v279
    %1210 = vmatprep.subr.mxu0 0.0
    %1211 = vmatpush1.msra.mxu0 %v278
    %1212 = vmatprep.subr.mxu0 0.0
    %1213 = vmatpush2.msra.mxu0 0.0
    %1214 = vmatprep.subr.mxu0 0.0
    %1215 = vmatpush2.msra.mxu0 0.0
    %1216 = vmatprep.subr.mxu0 0.0
    %1217 = vmatpush2.msra.mxu0 0.0
    %1218 = vmatprep.subr.mxu0 0.0
    %1219 = vmatpush2.msra.mxu0 0.0
    %1220 = vmatprep.subr.mxu0 0.0
    %1221 = vmatpush2.msra.mxu0 0.0
    %1222 = vmatprep.subr.mxu0 0.0
    %1223 = vmatpush2.msra.mxu0 0.0
    %1224 = vmatprep.subr.mxu0 0.0
    %1225 = vmatpush2.msra.mxu0 0.0
    %1226 = vmatprep.subr.mxu0 0.0
    %1227 = vmatpush2.msra.mxu0 0.0
    %1228 = vmatprep.subr.mxu0 0.0
    %1229 = vmatpush2.msra.mxu0 0.0
    %1230 = vmatprep.subr.mxu0 0.0
    %1231 = vmatpush2.msra.mxu0 0.0
    %1232 = vmatprep.subr.mxu0 0.0
    %1233 = vmatpush2.msra.mxu0 0.0
    %1234 = vmatprep.subr.mxu0 0.0
    %1235 = vmatpush2.msra.mxu0 0.0
    %1236 = vmatprep.subr.mxu0 0.0
    %1237 = vmatpush2.msra.mxu0 0.0
    %1238 = vmatprep.subr.mxu0 0.0
    %1239 = vmatpush2.msra.mxu0 0.0
    %1240 = vmatprep.subr.mxu0 0.0
    %1241 = vmatpush2.msra.mxu0 0.0
    %1242 = vmatprep.subr.mxu0 0.0
    %1243 = vmatpush2.msra.mxu0 0.0
    %1244 = vmatprep.mubr.f32.mxu0 0.0
    %1245 = vmatmul.mubr.f32.gmra.mxu0 %v1178
    %v1246 = vpop.f32.mrf.mxu0
    %v1247 = vadd.f32 %v1174, %v1246
    %v1248 = vpop.f32.mrf.mxu0
    %1249 = vdwg.mxu0
    %v1250 = vld [vmem:[#allocation2 + $0xe8] sm:$0x1]
    %v1251 = vlaneseq
    %v1252 = vshrl.u32 %v1251, 7
    %v1253 = vsub.s32 0, %v1252
    %v1254 = vrot.slane %v1250, %v1253
    %v1255 = vadd.f32 %v764, %v1254
    %v1256 = vadd.f32 %v1247, %v1254
    %v1257 = vadd.f32 %v183, %v1255
    %v1258 = vadd.f32 %v184, %v1256
    %v1259 = vld [vmem:[#allocation2 + $0xf0] sm:$0x1]
    %v1260 = vld [vmem:[#allocation2 + $0xf8] sm:$0x1]
    %v1261 = vsel %vm145, %v1257, 0.0
    %1262 = vadd.xlane.f32.xlu0 %v1261
    %v1263 = vpop.xlane.xlu0 %1262
    %v1264 = vsel %vm145, %v1258, 0.0
    %1265 = vadd.xlane.f32.xlu0 %v1264
    %v1266 = vpop.xlane.xlu0 %1265
    %v1267 = vmul.f32 %v1263, %v152
    %v1268 = vmul.f32 %v1266, %v152
    %v1269 = vsub.f32 %v1257, %v1267
    %v1270 = vsub.f32 %v1258, %v1268
    %v1271 = vmul.f32 %v1269, %v1269
    %v1272 = vmul.f32 %v1270, %v1270
    %v1273 = vsel %vm145, %v1271, 0.0
    %1274 = vadd.xlane.f32.xlu0 %v1273
    %v1275 = vpop.xlane.xlu0 %1274
    %v1276 = vsel %vm145, %v1272, 0.0
    %1277 = vadd.xlane.f32.xlu0 %v1276
    %v1278 = vpop.xlane.xlu0 %1277
    %v1279 = vmul.f32 %v1275, %v152
    %v1280 = vmul.f32 %v1278, %v152
    %v1281 = vadd.f32 %v1279, 1e-12
    %v1282 = vadd.f32 %v1280, 1e-12
    %v1283 = vrsqrt.pop %v1281
    %v1284 = vrsqrt.pop %v1282
    %v1285 = vmul.f32 %v1269, %v1283
    %v1286 = vmul.f32 %v1270, %v1284
    %v1287 = vlaneseq
    %v1288 = vshrl.u32 %v1287, 7
    %v1289 = vsub.s32 0, %v1288
    %v1290 = vrot.slane %v1259, %v1289
    %v1291 = vmul.f32 %v1285, %v1290
    %v1292 = vmul.f32 %v1286, %v1290
    %v1293 = vlaneseq
    %v1294 = vshrl.u32 %v1293, 7
    %v1295 = vsub.s32 0, %v1294
    %v1296 = vrot.slane %v1260, %v1295
    %v1297 = vadd.f32 %v1291, %v1296
    %v1298 = vadd.f32 %v1292, %v1296
    %v1299 = vld [vmem:[#allocation2 + $0x100] sm:$0xff]
    %v1300 = vld [vmem:[#allocation2 + $0x108] sm:$0xff]
    %v1301 = vld [vmem:[#allocation2 + $0x110] sm:$0xff]
    %v1302 = vld [vmem:[#allocation2 + $0x118] sm:$0xff]
    %v1303 = vld [vmem:[#allocation2 + $0x120] sm:$0x1]
    %v1304 = vlaneseq
    %v1305 = vshrl.u32 %v1304, 7
    %v1306 = vsub.s32 0, %v1305
    %v1307 = vrot.slane %v1303, %v1306
    %v1309 = vsel %vm145, %v1297, 0
    %v1312 = vsel %vm145, %v1298, 0
    %1314 = vmatprep.subr.mxu0 0.0
    %1315 = vmatpush1.msra.mxu0 0.0
    %1316 = vmatprep.subr.mxu0 0.0
    %1317 = vmatpush1.msra.mxu0 0.0
    %1318 = vmatprep.subr.mxu0 0.0
    %1319 = vmatpush1.msra.mxu0 0.0
    %1320 = vmatprep.subr.mxu0 0.0
    %1321 = vmatpush1.msra.mxu0 0.0
    %1322 = vmatprep.subr.mxu0 0.0
    %1323 = vmatpush1.msra.mxu0 0.0
    %1324 = vmatprep.subr.mxu0 0.0
    %1325 = vmatpush1.msra.mxu0 0.0
    %1326 = vmatprep.subr.mxu0 0.0
    %1327 = vmatpush1.msra.mxu0 0.0
    %1328 = vmatprep.subr.mxu0 0.0
    %1329 = vmatpush1.msra.mxu0 0.0
    %1330 = vmatprep.subr.mxu0 0.0
    %1331 = vmatpush1.msra.mxu0 0.0
    %1332 = vmatprep.subr.mxu0 0.0
    %1333 = vmatpush1.msra.mxu0 0.0
    %1334 = vmatprep.subr.mxu0 0.0
    %1335 = vmatpush1.msra.mxu0 0.0
    %1336 = vmatprep.subr.mxu0 0.0
    %1337 = vmatpush1.msra.mxu0 0.0
    %1338 = vmatprep.subr.mxu0 0.0
    %1339 = vmatpush1.msra.mxu0 %v1302
    %1340 = vmatprep.subr.mxu0 0.0
    %1341 = vmatpush1.msra.mxu0 %v1301
    %1342 = vmatprep.subr.mxu0 0.0
    %1343 = vmatpush1.msra.mxu0 %v1300
    %1344 = vmatprep.subr.mxu0 0.0
    %1345 = vmatpush1.msra.mxu0 %v1299
    %1346 = vmatprep.subr.mxu0 0.0
    %1347 = vmatpush2.msra.mxu0 0.0
    %1348 = vmatprep.subr.mxu0 0.0
    %1349 = vmatpush2.msra.mxu0 0.0
    %1350 = vmatprep.subr.mxu0 0.0
    %1351 = vmatpush2.msra.mxu0 0.0
    %1352 = vmatprep.subr.mxu0 0.0
    %1353 = vmatpush2.msra.mxu0 0.0
    %1354 = vmatprep.subr.mxu0 0.0
    %1355 = vmatpush2.msra.mxu0 0.0
    %1356 = vmatprep.subr.mxu0 0.0
    %1357 = vmatpush2.msra.mxu0 0.0
    %1358 = vmatprep.subr.mxu0 0.0
    %1359 = vmatpush2.msra.mxu0 0.0
    %1360 = vmatprep.subr.mxu0 0.0
    %1361 = vmatpush2.msra.mxu0 0.0
    %1362 = vmatprep.subr.mxu0 0.0
    %1363 = vmatpush2.msra.mxu0 0.0
    %1364 = vmatprep.subr.mxu0 0.0
    %1365 = vmatpush2.msra.mxu0 0.0
    %1366 = vmatprep.subr.mxu0 0.0
    %1367 = vmatpush2.msra.mxu0 0.0
    %1368 = vmatprep.subr.mxu0 0.0
    %1369 = vmatpush2.msra.mxu0 0.0
    %1370 = vmatprep.subr.mxu0 0.0
    %1371 = vmatpush2.msra.mxu0 0.0
    %1372 = vmatprep.subr.mxu0 0.0
    %1373 = vmatpush2.msra.mxu0 0.0
    %1374 = vmatprep.subr.mxu0 0.0
    %1375 = vmatpush2.msra.mxu0 0.0
    %1376 = vmatprep.subr.mxu0 0.0
    %1377 = vmatpush2.msra.mxu0 0.0
    %1378 = vmatprep.mubr.f32.mxu0 0.0
    %1379 = vmatmul.mubr.f32.gmra.mxu0 %v1309
    %v1380 = vpop.f32.mrf.mxu0
    %v1381 = vadd.f32 %v1307, %v1380
    %v1382 = vpop.f32.mrf.mxu0
    %1383 = vmatprep.mubr.f32.mxu0 0.0
    %1384 = vmatmul.mubr.f32.gmra.mxu0 %v1312
    %v1385 = vpop.f32.mrf.mxu0
    %v1386 = vadd.f32 %v1307, %v1385
    %v1387 = vpop.f32.mrf.mxu0
    %1388 = vdwg.mxu0
    %v1389 = vmul.f32 %v1381, 0.5
    %v1390 = vmul.f32 %v1386, 0.5
    %v1391 = vmul.f32 %v1381, 0.044715
    %v1392 = vmul.f32 %v1386, 0.044715
    %v1393 = vmul.f32 %v1391, %v1381
    %v1394 = vmul.f32 %v1392, %v1386
    %v1395 = vmul.f32 %v1393, %v1381
    %v1396 = vmul.f32 %v1394, %v1386
    %v1397 = vadd.f32 %v1381, %v1395
    %v1398 = vadd.f32 %v1386, %v1396
    %v1399 = vmul.f32 %v1397, 0.7978846
    %v1400 = vmul.f32 %v1398, 0.7978846
    %v1401 = vtanh.pop %v1399
    %v1402 = vtanh.pop %v1400
    %v1403 = vadd.f32 %v1401, 1.0
    %v1404 = vadd.f32 %v1402, 1.0
    %v1405 = vmul.f32 %v1389, %v1403
    %v1406 = vmul.f32 %v1390, %v1404
    %v1407 = vld [vmem:[#allocation2 + $0x128] sm:$0xff]
    %v1408 = vld [vmem:[#allocation2 + $0x130] sm:$0xff]
    %v1409 = vld [vmem:[#allocation2 + $0x138] sm:$0xff]
    %v1410 = vld [vmem:[#allocation2 + $0x140] sm:$0xff]
    %v1411 = vld [vmem:[#allocation2 + $0x148] sm:$0xff]
    %v1412 = vld [vmem:[#allocation2 + $0x150] sm:$0xff]
    %v1413 = vld [vmem:[#allocation2 + $0x158] sm:$0xff]
    %v1414 = vld [vmem:[#allocation2 + $0x160] sm:$0xff]
    %v1415 = vld [vmem:[#allocation2 + $0x168] sm:$0x1]
    %v1416 = vlaneseq
    %v1417 = vshrl.u32 %v1416, 7
    %v1418 = vsub.s32 0, %v1417
    %v1419 = vrot.slane %v1415, %v1418
    %vm1420 = vcmask 523264
    %v1422 = vsel %vm1420, %v1405, 0
    %v1425 = vsel %vm1420, %v1406, 0
    %1427 = vmatprep.subr.mxu0 0.0
    %1428 = vmatpush1.msra.mxu0 0.0
    %1429 = vmatprep.subr.mxu0 0.0
    %1430 = vmatpush1.msra.mxu0 0.0
    %1431 = vmatprep.subr.mxu0 0.0
    %1432 = vmatpush1.msra.mxu0 0.0
    %1433 = vmatprep.subr.mxu0 0.0
    %1434 = vmatpush1.msra.mxu0 0.0
    %1435 = vmatprep.subr.mxu0 0.0
    %1436 = vmatpush1.msra.mxu0 0.0
    %1437 = vmatprep.subr.mxu0 0.0
    %1438 = vmatpush1.msra.mxu0 0.0
    %1439 = vmatprep.subr.mxu0 0.0
    %1440 = vmatpush1.msra.mxu0 0.0
    %1441 = vmatprep.subr.mxu0 0.0
    %1442 = vmatpush1.msra.mxu0 0.0
    %1443 = vmatprep.subr.mxu0 0.0
    %1444 = vmatpush1.msra.mxu0 %v1414
    %1445 = vmatprep.subr.mxu0 0.0
    %1446 = vmatpush1.msra.mxu0 %v1413
    %1447 = vmatprep.subr.mxu0 0.0
    %1448 = vmatpush1.msra.mxu0 %v1412
    %1449 = vmatprep.subr.mxu0 0.0
    %1450 = vmatpush1.msra.mxu0 %v1411
    %1451 = vmatprep.subr.mxu0 0.0
    %1452 = vmatpush1.msra.mxu0 %v1410
    %1453 = vmatprep.subr.mxu0 0.0
    %1454 = vmatpush1.msra.mxu0 %v1409
    %1455 = vmatprep.subr.mxu0 0.0
    %1456 = vmatpush1.msra.mxu0 %v1408
    %1457 = vmatprep.subr.mxu0 0.0
    %1458 = vmatpush1.msra.mxu0 %v1407
    %1459 = vmatprep.subr.mxu0 0.0
    %1460 = vmatpush2.msra.mxu0 0.0
    %1461 = vmatprep.subr.mxu0 0.0
    %1462 = vmatpush2.msra.mxu0 0.0
    %1463 = vmatprep.subr.mxu0 0.0
    %1464 = vmatpush2.msra.mxu0 0.0
    %1465 = vmatprep.subr.mxu0 0.0
    %1466 = vmatpush2.msra.mxu0 0.0
    %1467 = vmatprep.subr.mxu0 0.0
    %1468 = vmatpush2.msra.mxu0 0.0
    %1469 = vmatprep.subr.mxu0 0.0
    %1470 = vmatpush2.msra.mxu0 0.0
    %1471 = vmatprep.subr.mxu0 0.0
    %1472 = vmatpush2.msra.mxu0 0.0
    %1473 = vmatprep.subr.mxu0 0.0
    %1474 = vmatpush2.msra.mxu0 0.0
    %1475 = vmatprep.subr.mxu0 0.0
    %1476 = vmatpush2.msra.mxu0 0.0
    %1477 = vmatprep.subr.mxu0 0.0
    %1478 = vmatpush2.msra.mxu0 0.0
    %1479 = vmatprep.subr.mxu0 0.0
    %1480 = vmatpush2.msra.mxu0 0.0
    %1481 = vmatprep.subr.mxu0 0.0
    %1482 = vmatpush2.msra.mxu0 0.0
    %1483 = vmatprep.subr.mxu0 0.0
    %1484 = vmatpush2.msra.mxu0 0.0
    %1485 = vmatprep.subr.mxu0 0.0
    %1486 = vmatpush2.msra.mxu0 0.0
    %1487 = vmatprep.subr.mxu0 0.0
    %1488 = vmatpush2.msra.mxu0 0.0
    %1489 = vmatprep.subr.mxu0 0.0
    %1490 = vmatpush2.msra.mxu0 0.0
    %1491 = vmatprep.mubr.f32.mxu0 0.0
    %1492 = vmatmul.mubr.f32.gmra.mxu0 %v1422
    %v1493 = vpop.f32.mrf.mxu0
    %v1494 = vadd.f32 %v1419, %v1493
    %v1495 = vpop.f32.mrf.mxu0
    %1496 = vmatprep.mubr.f32.mxu0 0.0
    %1497 = vmatmul.mubr.f32.gmra.mxu0 %v1425
    %v1498 = vpop.f32.mrf.mxu0
    %v1499 = vadd.f32 %v1419, %v1498
    %v1500 = vpop.f32.mrf.mxu0
    %1501 = vdwg.mxu0
    %v1502 = vadd.f32 %v1297, %v1494
    %v1503 = vadd.f32 %v1298, %v1499
    %v1504 = vld [vmem:[#allocation2 + $0x170] sm:$0x1]
    %v1505 = vld [vmem:[#allocation2 + $0x178] sm:$0x1]
    %v1506 = vsel %vm145, %v1502, 0.0
    %1507 = vadd.xlane.f32.xlu0 %v1506
    %v1508 = vpop.xlane.xlu0 %1507
    %v1509 = vsel %vm145, %v1503, 0.0
    %1510 = vadd.xlane.f32.xlu0 %v1509
    %v1511 = vpop.xlane.xlu0 %1510
    %v1512 = vmul.f32 %v1508, %v152
    %v1513 = vmul.f32 %v1511, %v152
    %v1514 = vsub.f32 %v1502, %v1512
    %v1515 = vsub.f32 %v1503, %v1513
    %v1516 = vmul.f32 %v1514, %v1514
    %v1517 = vmul.f32 %v1515, %v1515
    %v1518 = vsel %vm145, %v1516, 0.0
    %1519 = vadd.xlane.f32.xlu0 %v1518
    %v1520 = vpop.xlane.xlu0 %1519
    %v1521 = vsel %vm145, %v1517, 0.0
    %1522 = vadd.xlane.f32.xlu0 %v1521
    %v1523 = vpop.xlane.xlu0 %1522
    %v1524 = vmul.f32 %v1520, %v152
    %v1525 = vmul.f32 %v1523, %v152
    %v1526 = vadd.f32 %v1524, 1e-12
    %v1527 = vadd.f32 %v1525, 1e-12
    %v1528 = vrsqrt.pop %v1526
    %v1529 = vrsqrt.pop %v1527
    %v1530 = vmul.f32 %v1514, %v1528
    %v1531 = vmul.f32 %v1515, %v1529
    %v1532 = vlaneseq
    %v1533 = vshrl.u32 %v1532, 7
    %v1534 = vsub.s32 0, %v1533
    %v1535 = vrot.slane %v1504, %v1534
    %v1536 = vmul.f32 %v1530, %v1535
    %v1537 = vmul.f32 %v1531, %v1535
    %v1538 = vlaneseq
    %v1539 = vshrl.u32 %v1538, 7
    %v1540 = vsub.s32 0, %v1539
    %v1541 = vrot.slane %v1505, %v1540
    %v1542 = vadd.f32 %v1536, %v1541
    %v1543 = vadd.f32 %v1537, %v1541
    %v1544 = vld [vmem:[#allocation2 + $0x180] sm:$0xff]
    %v1545 = vld [vmem:[#allocation2 + $0x188] sm:$0xff]
    %v1546 = vld [vmem:[#allocation2 + $0x190] sm:$0xff]
    %v1547 = vld [vmem:[#allocation2 + $0x198] sm:$0xff]
    %v1548 = vld [vmem:[#allocation2 + $0x1a0] sm:$0x1]
    %v1549 = vlaneseq
    %v1550 = vshrl.u32 %v1549, 7
    %v1551 = vsub.s32 0, %v1550
    %v1552 = vrot.slane %v1548, %v1551
    %v1554 = vsel %vm145, %v1542, 0
    %v1557 = vsel %vm145, %v1543, 0
    %1559 = vmatprep.subr.mxu0 0.0
    %1560 = vmatpush1.msra.mxu0 0.0
    %1561 = vmatprep.subr.mxu0 0.0
    %1562 = vmatpush1.msra.mxu0 0.0
    %1563 = vmatprep.subr.mxu0 0.0
    %1564 = vmatpush1.msra.mxu0 0.0
    %1565 = vmatprep.subr.mxu0 0.0
    %1566 = vmatpush1.msra.mxu0 0.0
    %1567 = vmatprep.subr.mxu0 0.0
    %1568 = vmatpush1.msra.mxu0 0.0
    %1569 = vmatprep.subr.mxu0 0.0
    %1570 = vmatpush1.msra.mxu0 0.0
    %1571 = vmatprep.subr.mxu0 0.0
    %1572 = vmatpush1.msra.mxu0 0.0
    %1573 = vmatprep.subr.mxu0 0.0
    %1574 = vmatpush1.msra.mxu0 0.0
    %1575 = vmatprep.subr.mxu0 0.0
    %1576 = vmatpush1.msra.mxu0 0.0
    %1577 = vmatprep.subr.mxu0 0.0
    %1578 = vmatpush1.msra.mxu0 0.0
    %1579 = vmatprep.subr.mxu0 0.0
    %1580 = vmatpush1.msra.mxu0 0.0
    %1581 = vmatprep.subr.mxu0 0.0
    %1582 = vmatpush1.msra.mxu0 0.0
    %1583 = vmatprep.subr.mxu0 0.0
    %1584 = vmatpush1.msra.mxu0 %v1547
    %1585 = vmatprep.subr.mxu0 0.0
    %1586 = vmatpush1.msra.mxu0 %v1546
    %1587 = vmatprep.subr.mxu0 0.0
    %1588 = vmatpush1.msra.mxu0 %v1545
    %1589 = vmatprep.subr.mxu0 0.0
    %1590 = vmatpush1.msra.mxu0 %v1544
    %1591 = vmatprep.subr.mxu0 0.0
    %1592 = vmatpush2.msra.mxu0 0.0
    %1593 = vmatprep.subr.mxu0 0.0
    %1594 = vmatpush2.msra.mxu0 0.0
    %1595 = vmatprep.subr.mxu0 0.0
    %1596 = vmatpush2.msra.mxu0 0.0
    %1597 = vmatprep.subr.mxu0 0.0
    %1598 = vmatpush2.msra.mxu0 0.0
    %1599 = vmatprep.subr.mxu0 0.0
    %1600 = vmatpush2.msra.mxu0 0.0
    %1601 = vmatprep.subr.mxu0 0.0
    %1602 = vmatpush2.msra.mxu0 0.0
    %1603 = vmatprep.subr.mxu0 0.0
    %1604 = vmatpush2.msra.mxu0 0.0
    %1605 = vmatprep.subr.mxu0 0.0
    %1606 = vmatpush2.msra.mxu0 0.0
    %1607 = vmatprep.subr.mxu0 0.0
    %1608 = vmatpush2.msra.mxu0 0.0
    %1609 = vmatprep.subr.mxu0 0.0
    %1610 = vmatpush2.msra.mxu0 0.0
    %1611 = vmatprep.subr.mxu0 0.0
    %1612 = vmatpush2.msra.mxu0 0.0
    %1613 = vmatprep.subr.mxu0 0.0
    %1614 = vmatpush2.msra.mxu0 0.0
    %1615 = vmatprep.subr.mxu0 0.0
    %1616 = vmatpush2.msra.mxu0 0.0
    %1617 = vmatprep.subr.mxu0 0.0
    %1618 = vmatpush2.msra.mxu0 0.0
    %1619 = vmatprep.subr.mxu0 0.0
    %1620 = vmatpush2.msra.mxu0 0.0
    %1621 = vmatprep.subr.mxu0 0.0
    %1622 = vmatpush2.msra.mxu0 0.0
    %1623 = vmatprep.mubr.f32.mxu0 0.0
    %1624 = vmatmul.mubr.f32.gmra.mxu0 %v1554
    %v1625 = vpop.f32.mrf.mxu0
    %v1626 = vadd.f32 %v1552, %v1625
    %v1627 = vpop.f32.mrf.mxu0
    %1628 = vmatprep.mubr.f32.mxu0 0.0
    %1629 = vmatmul.mubr.f32.gmra.mxu0 %v1557
    %v1630 = vpop.f32.mrf.mxu0
    %v1631 = vadd.f32 %v1552, %v1630
    %v1632 = vpop.f32.mrf.mxu0
    %1633 = vdwg.mxu0
    %v1634 = vld [vmem:[#allocation2 + $0x1a8] sm:$0xff]
    %v1635 = vld [vmem:[#allocation2 + $0x1b0] sm:$0xff]
    %v1636 = vld [vmem:[#allocation2 + $0x1b8] sm:$0xff]
    %v1637 = vld [vmem:[#allocation2 + $0x1c0] sm:$0xff]
    %1639 = vrot.lane.b32.xlu0 %v1626, 96
    %v1640 = vpop.permute.xlu0 %1639
    %v1641 = vsel %vm285, %v1626, 0
    %v1643 = vsel %vm285, %v1640, 0
    %1645 = vmatprep.subr.mxu0 0.0
    %1646 = vmatpush1.xpose.msra.mxu0 0.0
    %1647 = vmatprep.subr.mxu0 0.0
    %1648 = vmatpush1.xpose.msra.mxu0 0.0
    %1649 = vmatprep.subr.mxu0 0.0
    %1650 = vmatpush1.xpose.msra.mxu0 0.0
    %1651 = vmatprep.subr.mxu0 0.0
    %1652 = vmatpush1.xpose.msra.mxu0 0.0
    %1653 = vmatprep.subr.mxu0 0.0
    %1654 = vmatpush1.xpose.msra.mxu0 0.0
    %1655 = vmatprep.subr.mxu0 0.0
    %1656 = vmatpush1.xpose.msra.mxu0 0.0
    %1657 = vmatprep.subr.mxu0 0.0
    %1658 = vmatpush1.xpose.msra.mxu0 0.0
    %1659 = vmatprep.subr.mxu0 0.0
    %1660 = vmatpush1.xpose.msra.mxu0 0.0
    %1661 = vmatprep.subr.mxu0 0.0
    %1662 = vmatpush1.xpose.msra.mxu0 0.0
    %1663 = vmatprep.subr.mxu0 0.0
    %1664 = vmatpush1.xpose.msra.mxu0 0.0
    %1665 = vmatprep.subr.mxu0 0.0
    %1666 = vmatpush1.xpose.msra.mxu0 0.0
    %1667 = vmatprep.subr.mxu0 0.0
    %1668 = vmatpush1.xpose.msra.mxu0 0.0
    %1669 = vmatprep.subr.mxu0 0.0
    %1670 = vmatpush1.xpose.msra.mxu0 0.0
    %1671 = vmatprep.subr.mxu0 0.0
    %1672 = vmatpush1.xpose.msra.mxu0 0.0
    %1673 = vmatprep.subr.mxu0 0.0
    %1674 = vmatpush1.xpose.msra.mxu0 0.0
    %1675 = vmatprep.subr.mxu0 0.0
    %1676 = vmatpush1.xpose.msra.mxu0 %v1643
    %1677 = vmatprep.subr.mxu0 0.0
    %1678 = vmatpush2.xpose.msra.mxu0 0.0
    %1679 = vmatprep.subr.mxu0 0.0
    %1680 = vmatpush2.xpose.msra.mxu0 0.0
    %1681 = vmatprep.subr.mxu0 0.0
    %1682 = vmatpush2.xpose.msra.mxu0 0.0
    %1683 = vmatprep.subr.mxu0 0.0
    %1684 = vmatpush2.xpose.msra.mxu0 0.0
    %1685 = vmatprep.subr.mxu0 0.0
    %1686 = vmatpush2.xpose.msra.mxu0 0.0
    %1687 = vmatprep.subr.mxu0 0.0
    %1688 = vmatpush2.xpose.msra.mxu0 0.0
    %1689 = vmatprep.subr.mxu0 0.0
    %1690 = vmatpush2.xpose.msra.mxu0 0.0
    %1691 = vmatprep.subr.mxu0 0.0
    %1692 = vmatpush2.xpose.msra.mxu0 0.0
    %1693 = vmatprep.subr.mxu0 0.0
    %1694 = vmatpush2.xpose.msra.mxu0 0.0
    %1695 = vmatprep.subr.mxu0 0.0
    %1696 = vmatpush2.xpose.msra.mxu0 0.0
    %1697 = vmatprep.subr.mxu0 0.0
    %1698 = vmatpush2.xpose.msra.mxu0 0.0
    %1699 = vmatprep.subr.mxu0 0.0
    %1700 = vmatpush2.xpose.msra.mxu0 0.0
    %1701 = vmatprep.subr.mxu0 0.0
    %1702 = vmatpush2.xpose.msra.mxu0 0.0
    %1703 = vmatprep.subr.mxu0 0.0
    %1704 = vmatpush2.xpose.msra.mxu0 0.0
    %1705 = vmatprep.subr.mxu0 0.0
    %1706 = vmatpush2.xpose.msra.mxu0 0.0
    %1707 = vmatprep.subr.mxu0 0.0
    %1708 = vmatpush2.xpose.msra.mxu0 0.0
    %1709 = vmatprep.mubr.f32.mxu0 0.0
    %1710 = vmatmul.mubr.f32.gmra.mxu0 %v1641
    %v1711 = vpop.f32.mrf.mxu0
    %v1712 = vadd.f32 0.0, %v1711
    %v1713 = vpop.f32.mrf.mxu0
    %1714 = vdwg.mxu0
    %v1715 = vmul.f32 %v1712, 0.25
    %v1716 = vadd.f32 %v1715, %v364
    %v1717 = vsel %vm366, %v1716, -inf
    %1718 = vmax.xlane.f32.xlu0 %v1717
    %v1719 = vpop.xlane.xlu0 %1718
    %v1720 = vsub.f32 %v1716, %v1719
    %v1721 = vmul.f32 %v1720, 1.442695
    %v1722 = vpow.pop %v1721
    %v1723 = vsel %vm366, %v1722, 0.0
    %1724 = vadd.xlane.f32.xlu0 %v1723
    %v1725 = vpop.xlane.xlu0 %1724
    %v1726 = vrcp.pop %v1725
    %v1727 = vmul.f32 %v1722, %v1726
    %1728 = vrot.lane.b32.xlu0 %v1626, 64
    %v1729 = vpop.permute.xlu0 %1728
    %v1732 = vsel %vm366, %v1727, 0
    %1734 = vmatprep.subr.mxu0 0.0
    %1735 = vmatpush1.msra.mxu0 0.0
    %1736 = vmatprep.subr.mxu0 0.0
    %1737 = vmatpush1.msra.mxu0 0.0
    %1738 = vmatprep.subr.mxu0 0.0
    %1739 = vmatpush1.msra.mxu0 0.0
    %1740 = vmatprep.subr.mxu0 0.0
    %1741 = vmatpush1.msra.mxu0 0.0
    %1742 = vmatprep.subr.mxu0 0.0
    %1743 = vmatpush1.msra.mxu0 0.0
    %1744 = vmatprep.subr.mxu0 0.0
    %1745 = vmatpush1.msra.mxu0 0.0
    %1746 = vmatprep.subr.mxu0 0.0
    %1747 = vmatpush1.msra.mxu0 0.0
    %1748 = vmatprep.subr.mxu0 0.0
    %1749 = vmatpush1.msra.mxu0 0.0
    %1750 = vmatprep.subr.mxu0 0.0
    %1751 = vmatpush1.msra.mxu0 0.0
    %1752 = vmatprep.subr.mxu0 0.0
    %1753 = vmatpush1.msra.mxu0 0.0
    %1754 = vmatprep.subr.mxu0 0.0
    %1755 = vmatpush1.msra.mxu0 0.0
    %1756 = vmatprep.subr.mxu0 0.0
    %1757 = vmatpush1.msra.mxu0 0.0
    %1758 = vmatprep.subr.mxu0 0.0
    %1759 = vmatpush1.msra.mxu0 0.0
    %1760 = vmatprep.subr.mxu0 0.0
    %1761 = vmatpush1.msra.mxu0 0.0
    %1762 = vmatprep.subr.mxu0 0.0
    %1763 = vmatpush1.msra.mxu0 0.0
    %1764 = vmatprep.subr.mxu0 0.0
    %1765 = vmatpush1.msra.mxu0 %v1729
    %1766 = vmatprep.subr.mxu0 0.0
    %1767 = vmatpush2.msra.mxu0 0.0
    %1768 = vmatprep.subr.mxu0 0.0
    %1769 = vmatpush2.msra.mxu0 0.0
    %1770 = vmatprep.subr.mxu0 0.0
    %1771 = vmatpush2.msra.mxu0 0.0
    %1772 = vmatprep.subr.mxu0 0.0
    %1773 = vmatpush2.msra.mxu0 0.0
    %1774 = vmatprep.subr.mxu0 0.0
    %1775 = vmatpush2.msra.mxu0 0.0
    %1776 = vmatprep.subr.mxu0 0.0
    %1777 = vmatpush2.msra.mxu0 0.0
    %1778 = vmatprep.subr.mxu0 0.0
    %1779 = vmatpush2.msra.mxu0 0.0
    %1780 = vmatprep.subr.mxu0 0.0
    %1781 = vmatpush2.msra.mxu0 0.0
    %1782 = vmatprep.subr.mxu0 0.0
    %1783 = vmatpush2.msra.mxu0 0.0
    %1784 = vmatprep.subr.mxu0 0.0
    %1785 = vmatpush2.msra.mxu0 0.0
    %1786 = vmatprep.subr.mxu0 0.0
    %1787 = vmatpush2.msra.mxu0 0.0
    %1788 = vmatprep.subr.mxu0 0.0
    %1789 = vmatpush2.msra.mxu0 0.0
    %1790 = vmatprep.subr.mxu0 0.0
    %1791 = vmatpush2.msra.mxu0 0.0
    %1792 = vmatprep.subr.mxu0 0.0
    %1793 = vmatpush2.msra.mxu0 0.0
    %1794 = vmatprep.subr.mxu0 0.0
    %1795 = vmatpush2.msra.mxu0 0.0
    %1796 = vmatprep.subr.mxu0 0.0
    %1797 = vmatpush2.msra.mxu0 0.0
    %1798 = vmatprep.mubr.f32.mxu0 0.0
    %1799 = vmatmul.mubr.f32.gmra.mxu0 %v1732
    %v1800 = vpop.f32.mrf.mxu0
    %v1801 = vadd.f32 0.0, %v1800
    %v1802 = vpop.f32.mrf.mxu0
    %1803 = vdwg.mxu0
    %1804 = vrot.lane.b32.xlu0 %v1626, 112
    %v1805 = vpop.permute.xlu0 %1804
    %1806 = vrot.lane.b32.xlu0 %v1626, 80
    %v1807 = vpop.permute.xlu0 %1806
    %v1808 = vsel %vm285, %v1805, 0
    %v1810 = vsel %vm285, %v1807, 0
    %1812 = vmatprep.subr.mxu0 0.0
    %1813 = vmatpush1.xpose.msra.mxu0 0.0
    %1814 = vmatprep.subr.mxu0 0.0
    %1815 = vmatpush1.xpose.msra.mxu0 0.0
    %1816 = vmatprep.subr.mxu0 0.0
    %1817 = vmatpush1.xpose.msra.mxu0 0.0
    %1818 = vmatprep.subr.mxu0 0.0
    %1819 = vmatpush1.xpose.msra.mxu0 0.0
    %1820 = vmatprep.subr.mxu0 0.0
    %1821 = vmatpush1.xpose.msra.mxu0 0.0
    %1822 = vmatprep.subr.mxu0 0.0
    %1823 = vmatpush1.xpose.msra.mxu0 0.0
    %1824 = vmatprep.subr.mxu0 0.0
    %1825 = vmatpush1.xpose.msra.mxu0 0.0
    %1826 = vmatprep.subr.mxu0 0.0
    %1827 = vmatpush1.xpose.msra.mxu0 0.0
    %1828 = vmatprep.subr.mxu0 0.0
    %1829 = vmatpush1.xpose.msra.mxu0 0.0
    %1830 = vmatprep.subr.mxu0 0.0
    %1831 = vmatpush1.xpose.msra.mxu0 0.0
    %1832 = vmatprep.subr.mxu0 0.0
    %1833 = vmatpush1.xpose.msra.mxu0 0.0
    %1834 = vmatprep.subr.mxu0 0.0
    %1835 = vmatpush1.xpose.msra.mxu0 0.0
    %1836 = vmatprep.subr.mxu0 0.0
    %1837 = vmatpush1.xpose.msra.mxu0 0.0
    %1838 = vmatprep.subr.mxu0 0.0
    %1839 = vmatpush1.xpose.msra.mxu0 0.0
    %1840 = vmatprep.subr.mxu0 0.0
    %1841 = vmatpush1.xpose.msra.mxu0 0.0
    %1842 = vmatprep.subr.mxu0 0.0
    %1843 = vmatpush1.xpose.msra.mxu0 %v1810
    %1844 = vmatprep.subr.mxu0 0.0
    %1845 = vmatpush2.xpose.msra.mxu0 0.0
    %1846 = vmatprep.subr.mxu0 0.0
    %1847 = vmatpush2.xpose.msra.mxu0 0.0
    %1848 = vmatprep.subr.mxu0 0.0
    %1849 = vmatpush2.xpose.msra.mxu0 0.0
    %1850 = vmatprep.subr.mxu0 0.0
    %1851 = vmatpush2.xpose.msra.mxu0 0.0
    %1852 = vmatprep.subr.mxu0 0.0
    %1853 = vmatpush2.xpose.msra.mxu0 0.0
    %1854 = vmatprep.subr.mxu0 0.0
    %1855 = vmatpush2.xpose.msra.mxu0 0.0
    %1856 = vmatprep.subr.mxu0 0.0
    %1857 = vmatpush2.xpose.msra.mxu0 0.0
    %1858 = vmatprep.subr.mxu0 0.0
    %1859 = vmatpush2.xpose.msra.mxu0 0.0
    %1860 = vmatprep.subr.mxu0 0.0
    %1861 = vmatpush2.xpose.msra.mxu0 0.0
    %1862 = vmatprep.subr.mxu0 0.0
    %1863 = vmatpush2.xpose.msra.mxu0 0.0
    %1864 = vmatprep.subr.mxu0 0.0
    %1865 = vmatpush2.xpose.msra.mxu0 0.0
    %1866 = vmatprep.subr.mxu0 0.0
    %1867 = vmatpush2.xpose.msra.mxu0 0.0
    %1868 = vmatprep.subr.mxu0 0.0
    %1869 = vmatpush2.xpose.msra.mxu0 0.0
    %1870 = vmatprep.subr.mxu0 0.0
    %1871 = vmatpush2.xpose.msra.mxu0 0.0
    %1872 = vmatprep.subr.mxu0 0.0
    %1873 = vmatpush2.xpose.msra.mxu0 0.0
    %1874 = vmatprep.subr.mxu0 0.0
    %1875 = vmatpush2.xpose.msra.mxu0 0.0
    %1876 = vmatprep.mubr.f32.mxu0 0.0
    %1877 = vmatmul.mubr.f32.gmra.mxu0 %v1808
    %v1878 = vpop.f32.mrf.mxu0
    %v1879 = vadd.f32 0.0, %v1878
    %v1880 = vpop.f32.mrf.mxu0
    %1881 = vdwg.mxu0
    %v1882 = vmul.f32 %v1879, 0.25
    %v1883 = vadd.f32 %v1882, %v364
    %v1884 = vsel %vm366, %v1883, -inf
    %1885 = vmax.xlane.f32.xlu0 %v1884
    %v1886 = vpop.xlane.xlu0 %1885
    %v1887 = vsub.f32 %v1883, %v1886
    %v1888 = vmul.f32 %v1887, 1.442695
    %v1889 = vpow.pop %v1888
    %v1890 = vsel %vm366, %v1889, 0.0
    %1891 = vadd.xlane.f32.xlu0 %v1890
    %v1892 = vpop.xlane.xlu0 %1891
    %v1893 = vrcp.pop %v1892
    %v1894 = vmul.f32 %v1889, %v1893
    %1895 = vrot.lane.b32.xlu0 %v1626, 48
    %v1896 = vpop.permute.xlu0 %1895
    %v1899 = vsel %vm366, %v1894, 0
    %1901 = vmatprep.subr.mxu0 0.0
    %1902 = vmatpush1.msra.mxu0 0.0
    %1903 = vmatprep.subr.mxu0 0.0
    %1904 = vmatpush1.msra.mxu0 0.0
    %1905 = vmatprep.subr.mxu0 0.0
    %1906 = vmatpush1.msra.mxu0 0.0
    %1907 = vmatprep.subr.mxu0 0.0
    %1908 = vmatpush1.msra.mxu0 0.0
    %1909 = vmatprep.subr.mxu0 0.0
    %1910 = vmatpush1.msra.mxu0 0.0
    %1911 = vmatprep.subr.mxu0 0.0
    %1912 = vmatpush1.msra.mxu0 0.0
    %1913 = vmatprep.subr.mxu0 0.0
    %1914 = vmatpush1.msra.mxu0 0.0
    %1915 = vmatprep.subr.mxu0 0.0
    %1916 = vmatpush1.msra.mxu0 0.0
    %1917 = vmatprep.subr.mxu0 0.0
    %1918 = vmatpush1.msra.mxu0 0.0
    %1919 = vmatprep.subr.mxu0 0.0
    %1920 = vmatpush1.msra.mxu0 0.0
    %1921 = vmatprep.subr.mxu0 0.0
    %1922 = vmatpush1.msra.mxu0 0.0
    %1923 = vmatprep.subr.mxu0 0.0
    %1924 = vmatpush1.msra.mxu0 0.0
    %1925 = vmatprep.subr.mxu0 0.0
    %1926 = vmatpush1.msra.mxu0 0.0
    %1927 = vmatprep.subr.mxu0 0.0
    %1928 = vmatpush1.msra.mxu0 0.0
    %1929 = vmatprep.subr.mxu0 0.0
    %1930 = vmatpush1.msra.mxu0 0.0
    %1931 = vmatprep.subr.mxu0 0.0
    %1932 = vmatpush1.msra.mxu0 %v1896
    %1933 = vmatprep.subr.mxu0 0.0
    %1934 = vmatpush2.msra.mxu0 0.0
    %1935 = vmatprep.subr.mxu0 0.0
    %1936 = vmatpush2.msra.mxu0 0.0
    %1937 = vmatprep.subr.mxu0 0.0
    %1938 = vmatpush2.msra.mxu0 0.0
    %1939 = vmatprep.subr.mxu0 0.0
    %1940 = vmatpush2.msra.mxu0 0.0
    %1941 = vmatprep.subr.mxu0 0.0
    %1942 = vmatpush2.msra.mxu0 0.0
    %1943 = vmatprep.subr.mxu0 0.0
    %1944 = vmatpush2.msra.mxu0 0.0
    %1945 = vmatprep.subr.mxu0 0.0
    %1946 = vmatpush2.msra.mxu0 0.0
    %1947 = vmatprep.subr.mxu0 0.0
    %1948 = vmatpush2.msra.mxu0 0.0
    %1949 = vmatprep.subr.mxu0 0.0
    %1950 = vmatpush2.msra.mxu0 0.0
    %1951 = vmatprep.subr.mxu0 0.0
    %1952 = vmatpush2.msra.mxu0 0.0
    %1953 = vmatprep.subr.mxu0 0.0
    %1954 = vmatpush2.msra.mxu0 0.0
    %1955 = vmatprep.subr.mxu0 0.0
    %1956 = vmatpush2.msra.mxu0 0.0
    %1957 = vmatprep.subr.mxu0 0.0
    %1958 = vmatpush2.msra.mxu0 0.0
    %1959 = vmatprep.subr.mxu0 0.0
    %1960 = vmatpush2.msra.mxu0 0.0
    %1961 = vmatprep.subr.mxu0 0.0
    %1962 = vmatpush2.msra.mxu0 0.0
    %1963 = vmatprep.subr.mxu0 0.0
    %1964 = vmatpush2.msra.mxu0 0.0
    %1965 = vmatprep.mubr.f32.mxu0 0.0
    %1966 = vmatmul.mubr.f32.gmra.mxu0 %v1899
    %v1967 = vpop.f32.mrf.mxu0
    %v1968 = vadd.f32 0.0, %v1967
    %v1969 = vpop.f32.mrf.mxu0
    %1970 = vdwg.mxu0
    %v1972 = vsel %vm285, %v1968, 0
    %1974 = vmatprep.subr.mxu0 0.0
    %1975 = vmatpush1.msra.mxu0 0.0
    %1976 = vmatprep.subr.mxu0 0.0
    %1977 = vmatpush1.msra.mxu0 0.0
    %1978 = vmatprep.subr.mxu0 0.0
    %1979 = vmatpush1.msra.mxu0 0.0
    %1980 = vmatprep.subr.mxu0 0.0
    %1981 = vmatpush1.msra.mxu0 0.0
    %1982 = vmatprep.subr.mxu0 0.0
    %1983 = vmatpush1.msra.mxu0 0.0
    %1984 = vmatprep.subr.mxu0 0.0
    %1985 = vmatpush1.msra.mxu0 0.0
    %1986 = vmatprep.subr.mxu0 0.0
    %1987 = vmatpush1.msra.mxu0 0.0
    %1988 = vmatprep.subr.mxu0 0.0
    %1989 = vmatpush1.msra.mxu0 0.0
    %1990 = vmatprep.subr.mxu0 0.0
    %1991 = vmatpush1.msra.mxu0 0.0
    %1992 = vmatprep.subr.mxu0 0.0
    %1993 = vmatpush1.msra.mxu0 0.0
    %1994 = vmatprep.subr.mxu0 0.0
    %1995 = vmatpush1.msra.mxu0 0.0
    %1996 = vmatprep.subr.mxu0 0.0
    %1997 = vmatpush1.msra.mxu0 0.0
    %1998 = vmatprep.subr.mxu0 0.0
    %1999 = vmatpush1.msra.mxu0 0.0
    %2000 = vmatprep.subr.mxu0 0.0
    %2001 = vmatpush1.msra.mxu0 0.0
    %2002 = vmatprep.subr.mxu0 0.0
    %2003 = vmatpush1.msra.mxu0 %v1637
    %2004 = vmatprep.subr.mxu0 0.0
    %2005 = vmatpush1.msra.mxu0 %v1636
    %2006 = vmatprep.subr.mxu0 0.0
    %2007 = vmatpush2.msra.mxu0 0.0
    %2008 = vmatprep.subr.mxu0 0.0
    %2009 = vmatpush2.msra.mxu0 0.0
    %2010 = vmatprep.subr.mxu0 0.0
    %2011 = vmatpush2.msra.mxu0 0.0
    %2012 = vmatprep.subr.mxu0 0.0
    %2013 = vmatpush2.msra.mxu0 0.0
    %2014 = vmatprep.subr.mxu0 0.0
    %2015 = vmatpush2.msra.mxu0 0.0
    %2016 = vmatprep.subr.mxu0 0.0
    %2017 = vmatpush2.msra.mxu0 0.0
    %2018 = vmatprep.subr.mxu0 0.0
    %2019 = vmatpush2.msra.mxu0 0.0
    %2020 = vmatprep.subr.mxu0 0.0
    %2021 = vmatpush2.msra.mxu0 0.0
    %2022 = vmatprep.subr.mxu0 0.0
    %2023 = vmatpush2.msra.mxu0 0.0
    %2024 = vmatprep.subr.mxu0 0.0
    %2025 = vmatpush2.msra.mxu0 0.0
    %2026 = vmatprep.subr.mxu0 0.0
    %2027 = vmatpush2.msra.mxu0 0.0
    %2028 = vmatprep.subr.mxu0 0.0
    %2029 = vmatpush2.msra.mxu0 0.0
    %2030 = vmatprep.subr.mxu0 0.0
    %2031 = vmatpush2.msra.mxu0 0.0
    %2032 = vmatprep.subr.mxu0 0.0
    %2033 = vmatpush2.msra.mxu0 0.0
    %2034 = vmatprep.subr.mxu0 0.0
    %2035 = vmatpush2.msra.mxu0 0.0
    %2036 = vmatprep.subr.mxu0 0.0
    %2037 = vmatpush2.msra.mxu0 0.0
    %2038 = vmatprep.mubr.f32.mxu0 0.0
    %2039 = vmatmul.mubr.f32.gmra.mxu0 %v1972
    %v2040 = vpop.f32.mrf.mxu0
    %v2041 = vadd.f32 0.0, %v2040
    %v2042 = vpop.f32.mrf.mxu0
    %2043 = vdwg.mxu0
    %v2045 = vsel %vm285, %v1801, 0
    %2047 = vmatprep.subr.mxu0 0.0
    %2048 = vmatpush1.msra.mxu0 0.0
    %2049 = vmatprep.subr.mxu0 0.0
    %2050 = vmatpush1.msra.mxu0 0.0
    %2051 = vmatprep.subr.mxu0 0.0
    %2052 = vmatpush1.msra.mxu0 0.0
    %2053 = vmatprep.subr.mxu0 0.0
    %2054 = vmatpush1.msra.mxu0 0.0
    %2055 = vmatprep.subr.mxu0 0.0
    %2056 = vmatpush1.msra.mxu0 0.0
    %2057 = vmatprep.subr.mxu0 0.0
    %2058 = vmatpush1.msra.mxu0 0.0
    %2059 = vmatprep.subr.mxu0 0.0
    %2060 = vmatpush1.msra.mxu0 0.0
    %2061 = vmatprep.subr.mxu0 0.0
    %2062 = vmatpush1.msra.mxu0 0.0
    %2063 = vmatprep.subr.mxu0 0.0
    %2064 = vmatpush1.msra.mxu0 0.0
    %2065 = vmatprep.subr.mxu0 0.0
    %2066 = vmatpush1.msra.mxu0 0.0
    %2067 = vmatprep.subr.mxu0 0.0
    %2068 = vmatpush1.msra.mxu0 0.0
    %2069 = vmatprep.subr.mxu0 0.0
    %2070 = vmatpush1.msra.mxu0 0.0
    %2071 = vmatprep.subr.mxu0 0.0
    %2072 = vmatpush1.msra.mxu0 0.0
    %2073 = vmatprep.subr.mxu0 0.0
    %2074 = vmatpush1.msra.mxu0 0.0
    %2075 = vmatprep.subr.mxu0 0.0
    %2076 = vmatpush1.msra.mxu0 %v1635
    %2077 = vmatprep.subr.mxu0 0.0
    %2078 = vmatpush1.msra.mxu0 %v1634
    %2079 = vmatprep.subr.mxu0 0.0
    %2080 = vmatpush2.msra.mxu0 0.0
    %2081 = vmatprep.subr.mxu0 0.0
    %2082 = vmatpush2.msra.mxu0 0.0
    %2083 = vmatprep.subr.mxu0 0.0
    %2084 = vmatpush2.msra.mxu0 0.0
    %2085 = vmatprep.subr.mxu0 0.0
    %2086 = vmatpush2.msra.mxu0 0.0
    %2087 = vmatprep.subr.mxu0 0.0
    %2088 = vmatpush2.msra.mxu0 0.0
    %2089 = vmatprep.subr.mxu0 0.0
    %2090 = vmatpush2.msra.mxu0 0.0
    %2091 = vmatprep.subr.mxu0 0.0
    %2092 = vmatpush2.msra.mxu0 0.0
    %2093 = vmatprep.subr.mxu0 0.0
    %2094 = vmatpush2.msra.mxu0 0.0
    %2095 = vmatprep.subr.mxu0 0.0
    %2096 = vmatpush2.msra.mxu0 0.0
    %2097 = vmatprep.subr.mxu0 0.0
    %2098 = vmatpush2.msra.mxu0 0.0
    %2099 = vmatprep.subr.mxu0 0.0
    %2100 = vmatpush2.msra.mxu0 0.0
    %2101 = vmatprep.subr.mxu0 0.0
    %2102 = vmatpush2.msra.mxu0 0.0
    %2103 = vmatprep.subr.mxu0 0.0
    %2104 = vmatpush2.msra.mxu0 0.0
    %2105 = vmatprep.subr.mxu0 0.0
    %2106 = vmatpush2.msra.mxu0 0.0
    %2107 = vmatprep.subr.mxu0 0.0
    %2108 = vmatpush2.msra.mxu0 0.0
    %2109 = vmatprep.subr.mxu0 0.0
    %2110 = vmatpush2.msra.mxu0 0.0
    %2111 = vmatprep.mubr.f32.mxu0 0.0
    %2112 = vmatmul.mubr.f32.gmra.mxu0 %v2045
    %v2113 = vpop.f32.mrf.mxu0
    %v2114 = vadd.f32 %v2041, %v2113
    %v2115 = vpop.f32.mrf.mxu0
    %2116 = vdwg.mxu0
    %2118 = vrot.lane.b32.xlu0 %v1631, 96
    %v2119 = vpop.permute.xlu0 %2118
    %v2120 = vsel %vm285, %v1631, 0
    %v2122 = vsel %vm285, %v2119, 0
    %2124 = vmatprep.subr.mxu0 0.0
    %2125 = vmatpush1.xpose.msra.mxu0 0.0
    %2126 = vmatprep.subr.mxu0 0.0
    %2127 = vmatpush1.xpose.msra.mxu0 0.0
    %2128 = vmatprep.subr.mxu0 0.0
    %2129 = vmatpush1.xpose.msra.mxu0 0.0
    %2130 = vmatprep.subr.mxu0 0.0
    %2131 = vmatpush1.xpose.msra.mxu0 0.0
    %2132 = vmatprep.subr.mxu0 0.0
    %2133 = vmatpush1.xpose.msra.mxu0 0.0
    %2134 = vmatprep.subr.mxu0 0.0
    %2135 = vmatpush1.xpose.msra.mxu0 0.0
    %2136 = vmatprep.subr.mxu0 0.0
    %2137 = vmatpush1.xpose.msra.mxu0 0.0
    %2138 = vmatprep.subr.mxu0 0.0
    %2139 = vmatpush1.xpose.msra.mxu0 0.0
    %2140 = vmatprep.subr.mxu0 0.0
    %2141 = vmatpush1.xpose.msra.mxu0 0.0
    %2142 = vmatprep.subr.mxu0 0.0
    %2143 = vmatpush1.xpose.msra.mxu0 0.0
    %2144 = vmatprep.subr.mxu0 0.0
    %2145 = vmatpush1.xpose.msra.mxu0 0.0
    %2146 = vmatprep.subr.mxu0 0.0
    %2147 = vmatpush1.xpose.msra.mxu0 0.0
    %2148 = vmatprep.subr.mxu0 0.0
    %2149 = vmatpush1.xpose.msra.mxu0 0.0
    %2150 = vmatprep.subr.mxu0 0.0
    %2151 = vmatpush1.xpose.msra.mxu0 0.0
    %2152 = vmatprep.subr.mxu0 0.0
    %2153 = vmatpush1.xpose.msra.mxu0 0.0
    %2154 = vmatprep.subr.mxu0 0.0
    %2155 = vmatpush1.xpose.msra.mxu0 %v2122
    %2156 = vmatprep.subr.mxu0 0.0
    %2157 = vmatpush2.xpose.msra.mxu0 0.0
    %2158 = vmatprep.subr.mxu0 0.0
    %2159 = vmatpush2.xpose.msra.mxu0 0.0
    %2160 = vmatprep.subr.mxu0 0.0
    %2161 = vmatpush2.xpose.msra.mxu0 0.0
    %2162 = vmatprep.subr.mxu0 0.0
    %2163 = vmatpush2.xpose.msra.mxu0 0.0
    %2164 = vmatprep.subr.mxu0 0.0
    %2165 = vmatpush2.xpose.msra.mxu0 0.0
    %2166 = vmatprep.subr.mxu0 0.0
    %2167 = vmatpush2.xpose.msra.mxu0 0.0
    %2168 = vmatprep.subr.mxu0 0.0
    %2169 = vmatpush2.xpose.msra.mxu0 0.0
    %2170 = vmatprep.subr.mxu0 0.0
    %2171 = vmatpush2.xpose.msra.mxu0 0.0
    %2172 = vmatprep.subr.mxu0 0.0
    %2173 = vmatpush2.xpose.msra.mxu0 0.0
    %2174 = vmatprep.subr.mxu0 0.0
    %2175 = vmatpush2.xpose.msra.mxu0 0.0
    %2176 = vmatprep.subr.mxu0 0.0
    %2177 = vmatpush2.xpose.msra.mxu0 0.0
    %2178 = vmatprep.subr.mxu0 0.0
    %2179 = vmatpush2.xpose.msra.mxu0 0.0
    %2180 = vmatprep.subr.mxu0 0.0
    %2181 = vmatpush2.xpose.msra.mxu0 0.0
    %2182 = vmatprep.subr.mxu0 0.0
    %2183 = vmatpush2.xpose.msra.mxu0 0.0
    %2184 = vmatprep.subr.mxu0 0.0
    %2185 = vmatpush2.xpose.msra.mxu0 0.0
    %2186 = vmatprep.subr.mxu0 0.0
    %2187 = vmatpush2.xpose.msra.mxu0 0.0
    %2188 = vmatprep.mubr.f32.mxu0 0.0
    %2189 = vmatmul.mubr.f32.gmra.mxu0 %v2120
    %v2190 = vpop.f32.mrf.mxu0
    %v2191 = vadd.f32 0.0, %v2190
    %v2192 = vpop.f32.mrf.mxu0
    %2193 = vdwg.mxu0
    %v2194 = vmul.f32 %v2191, 0.25
    %v2195 = vadd.f32 %v2194, %v848
    %v2196 = vsel %vm366, %v2195, -inf
    %2197 = vmax.xlane.f32.xlu0 %v2196
    %v2198 = vpop.xlane.xlu0 %2197
    %v2199 = vsub.f32 %v2195, %v2198
    %v2200 = vmul.f32 %v2199, 1.442695
    %v2201 = vpow.pop %v2200
    %v2202 = vsel %vm366, %v2201, 0.0
    %2203 = vadd.xlane.f32.xlu0 %v2202
    %v2204 = vpop.xlane.xlu0 %2203
    %v2205 = vrcp.pop %v2204
    %v2206 = vmul.f32 %v2201, %v2205
    %2207 = vrot.lane.b32.xlu0 %v1631, 64
    %v2208 = vpop.permute.xlu0 %2207
    %v2211 = vsel %vm366, %v2206, 0
    %2213 = vmatprep.subr.mxu0 0.0
    %2214 = vmatpush1.msra.mxu0 0.0
    %2215 = vmatprep.subr.mxu0 0.0
    %2216 = vmatpush1.msra.mxu0 0.0
    %2217 = vmatprep.subr.mxu0 0.0
    %2218 = vmatpush1.msra.mxu0 0.0
    %2219 = vmatprep.subr.mxu0 0.0
    %2220 = vmatpush1.msra.mxu0 0.0
    %2221 = vmatprep.subr.mxu0 0.0
    %2222 = vmatpush1.msra.mxu0 0.0
    %2223 = vmatprep.subr.mxu0 0.0
    %2224 = vmatpush1.msra.mxu0 0.0
    %2225 = vmatprep.subr.mxu0 0.0
    %2226 = vmatpush1.msra.mxu0 0.0
    %2227 = vmatprep.subr.mxu0 0.0
    %2228 = vmatpush1.msra.mxu0 0.0
    %2229 = vmatprep.subr.mxu0 0.0
    %2230 = vmatpush1.msra.mxu0 0.0
    %2231 = vmatprep.subr.mxu0 0.0
    %2232 = vmatpush1.msra.mxu0 0.0
    %2233 = vmatprep.subr.mxu0 0.0
    %2234 = vmatpush1.msra.mxu0 0.0
    %2235 = vmatprep.subr.mxu0 0.0
    %2236 = vmatpush1.msra.mxu0 0.0
    %2237 = vmatprep.subr.mxu0 0.0
    %2238 = vmatpush1.msra.mxu0 0.0
    %2239 = vmatprep.subr.mxu0 0.0
    %2240 = vmatpush1.msra.mxu0 0.0
    %2241 = vmatprep.subr.mxu0 0.0
    %2242 = vmatpush1.msra.mxu0 0.0
    %2243 = vmatprep.subr.mxu0 0.0
    %2244 = vmatpush1.msra.mxu0 %v2208
    %2245 = vmatprep.subr.mxu0 0.0
    %2246 = vmatpush2.msra.mxu0 0.0
    %2247 = vmatprep.subr.mxu0 0.0
    %2248 = vmatpush2.msra.mxu0 0.0
    %2249 = vmatprep.subr.mxu0 0.0
    %2250 = vmatpush2.msra.mxu0 0.0
    %2251 = vmatprep.subr.mxu0 0.0
    %2252 = vmatpush2.msra.mxu0 0.0
    %2253 = vmatprep.subr.mxu0 0.0
    %2254 = vmatpush2.msra.mxu0 0.0
    %2255 = vmatprep.subr.mxu0 0.0
    %2256 = vmatpush2.msra.mxu0 0.0
    %2257 = vmatprep.subr.mxu0 0.0
    %2258 = vmatpush2.msra.mxu0 0.0
    %2259 = vmatprep.subr.mxu0 0.0
    %2260 = vmatpush2.msra.mxu0 0.0
    %2261 = vmatprep.subr.mxu0 0.0
    %2262 = vmatpush2.msra.mxu0 0.0
    %2263 = vmatprep.subr.mxu0 0.0
    %2264 = vmatpush2.msra.mxu0 0.0
    %2265 = vmatprep.subr.mxu0 0.0
    %2266 = vmatpush2.msra.mxu0 0.0
    %2267 = vmatprep.subr.mxu0 0.0
    %2268 = vmatpush2.msra.mxu0 0.0
    %2269 = vmatprep.subr.mxu0 0.0
    %2270 = vmatpush2.msra.mxu0 0.0
    %2271 = vmatprep.subr.mxu0 0.0
    %2272 = vmatpush2.msra.mxu0 0.0
    %2273 = vmatprep.subr.mxu0 0.0
    %2274 = vmatpush2.msra.mxu0 0.0
    %2275 = vmatprep.subr.mxu0 0.0
    %2276 = vmatpush2.msra.mxu0 0.0
    %2277 = vmatprep.mubr.f32.mxu0 0.0
    %2278 = vmatmul.mubr.f32.gmra.mxu0 %v2211
    %v2279 = vpop.f32.mrf.mxu0
    %v2280 = vadd.f32 0.0, %v2279
    %v2281 = vpop.f32.mrf.mxu0
    %2282 = vdwg.mxu0
    %2283 = vrot.lane.b32.xlu0 %v1631, 112
    %v2284 = vpop.permute.xlu0 %2283
    %2285 = vrot.lane.b32.xlu0 %v1631, 80
    %v2286 = vpop.permute.xlu0 %2285
    %v2287 = vsel %vm285, %v2284, 0
    %v2289 = vsel %vm285, %v2286, 0
    %2291 = vmatprep.subr.mxu0 0.0
    %2292 = vmatpush1.xpose.msra.mxu0 0.0
    %2293 = vmatprep.subr.mxu0 0.0
    %2294 = vmatpush1.xpose.msra.mxu0 0.0
    %2295 = vmatprep.subr.mxu0 0.0
    %2296 = vmatpush1.xpose.msra.mxu0 0.0
    %2297 = vmatprep.subr.mxu0 0.0
    %2298 = vmatpush1.xpose.msra.mxu0 0.0
    %2299 = vmatprep.subr.mxu0 0.0
    %2300 = vmatpush1.xpose.msra.mxu0 0.0
    %2301 = vmatprep.subr.mxu0 0.0
    %2302 = vmatpush1.xpose.msra.mxu0 0.0
    %2303 = vmatprep.subr.mxu0 0.0
    %2304 = vmatpush1.xpose.msra.mxu0 0.0
    %2305 = vmatprep.subr.mxu0 0.0
    %2306 = vmatpush1.xpose.msra.mxu0 0.0
    %2307 = vmatprep.subr.mxu0 0.0
    %2308 = vmatpush1.xpose.msra.mxu0 0.0
    %2309 = vmatprep.subr.mxu0 0.0
    %2310 = vmatpush1.xpose.msra.mxu0 0.0
    %2311 = vmatprep.subr.mxu0 0.0
    %2312 = vmatpush1.xpose.msra.mxu0 0.0
    %2313 = vmatprep.subr.mxu0 0.0
    %2314 = vmatpush1.xpose.msra.mxu0 0.0
    %2315 = vmatprep.subr.mxu0 0.0
    %2316 = vmatpush1.xpose.msra.mxu0 0.0
    %2317 = vmatprep.subr.mxu0 0.0
    %2318 = vmatpush1.xpose.msra.mxu0 0.0
    %2319 = vmatprep.subr.mxu0 0.0
    %2320 = vmatpush1.xpose.msra.mxu0 0.0
    %2321 = vmatprep.subr.mxu0 0.0
    %2322 = vmatpush1.xpose.msra.mxu0 %v2289
    %2323 = vmatprep.subr.mxu0 0.0
    %2324 = vmatpush2.xpose.msra.mxu0 0.0
    %2325 = vmatprep.subr.mxu0 0.0
    %2326 = vmatpush2.xpose.msra.mxu0 0.0
    %2327 = vmatprep.subr.mxu0 0.0
    %2328 = vmatpush2.xpose.msra.mxu0 0.0
    %2329 = vmatprep.subr.mxu0 0.0
    %2330 = vmatpush2.xpose.msra.mxu0 0.0
    %2331 = vmatprep.subr.mxu0 0.0
    %2332 = vmatpush2.xpose.msra.mxu0 0.0
    %2333 = vmatprep.subr.mxu0 0.0
    %2334 = vmatpush2.xpose.msra.mxu0 0.0
    %2335 = vmatprep.subr.mxu0 0.0
    %2336 = vmatpush2.xpose.msra.mxu0 0.0
    %2337 = vmatprep.subr.mxu0 0.0
    %2338 = vmatpush2.xpose.msra.mxu0 0.0
    %2339 = vmatprep.subr.mxu0 0.0
    %2340 = vmatpush2.xpose.msra.mxu0 0.0
    %2341 = vmatprep.subr.mxu0 0.0
    %2342 = vmatpush2.xpose.msra.mxu0 0.0
    %2343 = vmatprep.subr.mxu0 0.0
    %2344 = vmatpush2.xpose.msra.mxu0 0.0
    %2345 = vmatprep.subr.mxu0 0.0
    %2346 = vmatpush2.xpose.msra.mxu0 0.0
    %2347 = vmatprep.subr.mxu0 0.0
    %2348 = vmatpush2.xpose.msra.mxu0 0.0
    %2349 = vmatprep.subr.mxu0 0.0
    %2350 = vmatpush2.xpose.msra.mxu0 0.0
    %2351 = vmatprep.subr.mxu0 0.0
    %2352 = vmatpush2.xpose.msra.mxu0 0.0
    %2353 = vmatprep.subr.mxu0 0.0
    %2354 = vmatpush2.xpose.msra.mxu0 0.0
    %2355 = vmatprep.mubr.f32.mxu0 0.0
    %2356 = vmatmul.mubr.f32.gmra.mxu0 %v2287
    %v2357 = vpop.f32.mrf.mxu0
    %v2358 = vadd.f32 0.0, %v2357
    %v2359 = vpop.f32.mrf.mxu0
    %2360 = vdwg.mxu0
    %v2361 = vmul.f32 %v2358, 0.25
    %v2362 = vadd.f32 %v2361, %v848
    %v2363 = vsel %vm366, %v2362, -inf
    %2364 = vmax.xlane.f32.xlu0 %v2363
    %v2365 = vpop.xlane.xlu0 %2364
    %v2366 = vsub.f32 %v2362, %v2365
    %v2367 = vmul.f32 %v2366, 1.442695
    %v2368 = vpow.pop %v2367
    %v2369 = vsel %vm366, %v2368, 0.0
    %2370 = vadd.xlane.f32.xlu0 %v2369
    %v2371 = vpop.xlane.xlu0 %2370
    %v2372 = vrcp.pop %v2371
    %v2373 = vmul.f32 %v2368, %v2372
    %2374 = vrot.lane.b32.xlu0 %v1631, 48
    %v2375 = vpop.permute.xlu0 %2374
    %v2378 = vsel %vm366, %v2373, 0
    %2380 = vmatprep.subr.mxu0 0.0
    %2381 = vmatpush1.msra.mxu0 0.0
    %2382 = vmatprep.subr.mxu0 0.0
    %2383 = vmatpush1.msra.mxu0 0.0
    %2384 = vmatprep.subr.mxu0 0.0
    %2385 = vmatpush1.msra.mxu0 0.0
    %2386 = vmatprep.subr.mxu0 0.0
    %2387 = vmatpush1.msra.mxu0 0.0
    %2388 = vmatprep.subr.mxu0 0.0
    %2389 = vmatpush1.msra.mxu0 0.0
    %2390 = vmatprep.subr.mxu0 0.0
    %2391 = vmatpush1.msra.mxu0 0.0
    %2392 = vmatprep.subr.mxu0 0.0
    %2393 = vmatpush1.msra.mxu0 0.0
    %2394 = vmatprep.subr.mxu0 0.0
    %2395 = vmatpush1.msra.mxu0 0.0
    %2396 = vmatprep.subr.mxu0 0.0
    %2397 = vmatpush1.msra.mxu0 0.0
    %2398 = vmatprep.subr.mxu0 0.0
    %2399 = vmatpush1.msra.mxu0 0.0
    %2400 = vmatprep.subr.mxu0 0.0
    %2401 = vmatpush1.msra.mxu0 0.0
    %2402 = vmatprep.subr.mxu0 0.0
    %2403 = vmatpush1.msra.mxu0 0.0
    %2404 = vmatprep.subr.mxu0 0.0
    %2405 = vmatpush1.msra.mxu0 0.0
    %2406 = vmatprep.subr.mxu0 0.0
    %2407 = vmatpush1.msra.mxu0 0.0
    %2408 = vmatprep.subr.mxu0 0.0
    %2409 = vmatpush1.msra.mxu0 0.0
    %2410 = vmatprep.subr.mxu0 0.0
    %2411 = vmatpush1.msra.mxu0 %v2375
    %2412 = vmatprep.subr.mxu0 0.0
    %2413 = vmatpush2.msra.mxu0 0.0
    %2414 = vmatprep.subr.mxu0 0.0
    %2415 = vmatpush2.msra.mxu0 0.0
    %2416 = vmatprep.subr.mxu0 0.0
    %2417 = vmatpush2.msra.mxu0 0.0
    %2418 = vmatprep.subr.mxu0 0.0
    %2419 = vmatpush2.msra.mxu0 0.0
    %2420 = vmatprep.subr.mxu0 0.0
    %2421 = vmatpush2.msra.mxu0 0.0
    %2422 = vmatprep.subr.mxu0 0.0
    %2423 = vmatpush2.msra.mxu0 0.0
    %2424 = vmatprep.subr.mxu0 0.0
    %2425 = vmatpush2.msra.mxu0 0.0
    %2426 = vmatprep.subr.mxu0 0.0
    %2427 = vmatpush2.msra.mxu0 0.0
    %2428 = vmatprep.subr.mxu0 0.0
    %2429 = vmatpush2.msra.mxu0 0.0
    %2430 = vmatprep.subr.mxu0 0.0
    %2431 = vmatpush2.msra.mxu0 0.0
    %2432 = vmatprep.subr.mxu0 0.0
    %2433 = vmatpush2.msra.mxu0 0.0
    %2434 = vmatprep.subr.mxu0 0.0
    %2435 = vmatpush2.msra.mxu0 0.0
    %2436 = vmatprep.subr.mxu0 0.0
    %2437 = vmatpush2.msra.mxu0 0.0
    %2438 = vmatprep.subr.mxu0 0.0
    %2439 = vmatpush2.msra.mxu0 0.0
    %2440 = vmatprep.subr.mxu0 0.0
    %2441 = vmatpush2.msra.mxu0 0.0
    %2442 = vmatprep.subr.mxu0 0.0
    %2443 = vmatpush2.msra.mxu0 0.0
    %2444 = vmatprep.mubr.f32.mxu0 0.0
    %2445 = vmatmul.mubr.f32.gmra.mxu0 %v2378
    %v2446 = vpop.f32.mrf.mxu0
    %v2447 = vadd.f32 0.0, %v2446
    %v2448 = vpop.f32.mrf.mxu0
    %2449 = vdwg.mxu0
    %v2451 = vsel %vm285, %v2447, 0
    %2453 = vmatprep.subr.mxu0 0.0
    %2454 = vmatpush1.msra.mxu0 0.0
    %2455 = vmatprep.subr.mxu0 0.0
    %2456 = vmatpush1.msra.mxu0 0.0
    %2457 = vmatprep.subr.mxu0 0.0
    %2458 = vmatpush1.msra.mxu0 0.0
    %2459 = vmatprep.subr.mxu0 0.0
    %2460 = vmatpush1.msra.mxu0 0.0
    %2461 = vmatprep.subr.mxu0 0.0
    %2462 = vmatpush1.msra.mxu0 0.0
    %2463 = vmatprep.subr.mxu0 0.0
    %2464 = vmatpush1.msra.mxu0 0.0
    %2465 = vmatprep.subr.mxu0 0.0
    %2466 = vmatpush1.msra.mxu0 0.0
    %2467 = vmatprep.subr.mxu0 0.0
    %2468 = vmatpush1.msra.mxu0 0.0
    %2469 = vmatprep.subr.mxu0 0.0
    %2470 = vmatpush1.msra.mxu0 0.0
    %2471 = vmatprep.subr.mxu0 0.0
    %2472 = vmatpush1.msra.mxu0 0.0
    %2473 = vmatprep.subr.mxu0 0.0
    %2474 = vmatpush1.msra.mxu0 0.0
    %2475 = vmatprep.subr.mxu0 0.0
    %2476 = vmatpush1.msra.mxu0 0.0
    %2477 = vmatprep.subr.mxu0 0.0
    %2478 = vmatpush1.msra.mxu0 0.0
    %2479 = vmatprep.subr.mxu0 0.0
    %2480 = vmatpush1.msra.mxu0 0.0
    %2481 = vmatprep.subr.mxu0 0.0
    %2482 = vmatpush1.msra.mxu0 %v1637
    %2483 = vmatprep.subr.mxu0 0.0
    %2484 = vmatpush1.msra.mxu0 %v1636
    %2485 = vmatprep.subr.mxu0 0.0
    %2486 = vmatpush2.msra.mxu0 0.0
    %2487 = vmatprep.subr.mxu0 0.0
    %2488 = vmatpush2.msra.mxu0 0.0
    %2489 = vmatprep.subr.mxu0 0.0
    %2490 = vmatpush2.msra.mxu0 0.0
    %2491 = vmatprep.subr.mxu0 0.0
    %2492 = vmatpush2.msra.mxu0 0.0
    %2493 = vmatprep.subr.mxu0 0.0
    %2494 = vmatpush2.msra.mxu0 0.0
    %2495 = vmatprep.subr.mxu0 0.0
    %2496 = vmatpush2.msra.mxu0 0.0
    %2497 = vmatprep.subr.mxu0 0.0
    %2498 = vmatpush2.msra.mxu0 0.0
    %2499 = vmatprep.subr.mxu0 0.0
    %2500 = vmatpush2.msra.mxu0 0.0
    %2501 = vmatprep.subr.mxu0 0.0
    %2502 = vmatpush2.msra.mxu0 0.0
    %2503 = vmatprep.subr.mxu0 0.0
    %2504 = vmatpush2.msra.mxu0 0.0
    %2505 = vmatprep.subr.mxu0 0.0
    %2506 = vmatpush2.msra.mxu0 0.0
    %2507 = vmatprep.subr.mxu0 0.0
    %2508 = vmatpush2.msra.mxu0 0.0
    %2509 = vmatprep.subr.mxu0 0.0
    %2510 = vmatpush2.msra.mxu0 0.0
    %2511 = vmatprep.subr.mxu0 0.0
    %2512 = vmatpush2.msra.mxu0 0.0
    %2513 = vmatprep.subr.mxu0 0.0
    %2514 = vmatpush2.msra.mxu0 0.0
    %2515 = vmatprep.subr.mxu0 0.0
    %2516 = vmatpush2.msra.mxu0 0.0
    %2517 = vmatprep.mubr.f32.mxu0 0.0
    %2518 = vmatmul.mubr.f32.gmra.mxu0 %v2451
    %v2519 = vpop.f32.mrf.mxu0
    %v2520 = vadd.f32 0.0, %v2519
    %v2521 = vpop.f32.mrf.mxu0
    %2522 = vdwg.mxu0
    %v2524 = vsel %vm285, %v2280, 0
    %2526 = vmatprep.subr.mxu0 0.0
    %2527 = vmatpush1.msra.mxu0 0.0
    %2528 = vmatprep.subr.mxu0 0.0
    %2529 = vmatpush1.msra.mxu0 0.0
    %2530 = vmatprep.subr.mxu0 0.0
    %2531 = vmatpush1.msra.mxu0 0.0
    %2532 = vmatprep.subr.mxu0 0.0
    %2533 = vmatpush1.msra.mxu0 0.0
    %2534 = vmatprep.subr.mxu0 0.0
    %2535 = vmatpush1.msra.mxu0 0.0
    %2536 = vmatprep.subr.mxu0 0.0
    %2537 = vmatpush1.msra.mxu0 0.0
    %2538 = vmatprep.subr.mxu0 0.0
    %2539 = vmatpush1.msra.mxu0 0.0
    %2540 = vmatprep.subr.mxu0 0.0
    %2541 = vmatpush1.msra.mxu0 0.0
    %2542 = vmatprep.subr.mxu0 0.0
    %2543 = vmatpush1.msra.mxu0 0.0
    %2544 = vmatprep.subr.mxu0 0.0
    %2545 = vmatpush1.msra.mxu0 0.0
    %2546 = vmatprep.subr.mxu0 0.0
    %2547 = vmatpush1.msra.mxu0 0.0
    %2548 = vmatprep.subr.mxu0 0.0
    %2549 = vmatpush1.msra.mxu0 0.0
    %2550 = vmatprep.subr.mxu0 0.0
    %2551 = vmatpush1.msra.mxu0 0.0
    %2552 = vmatprep.subr.mxu0 0.0
    %2553 = vmatpush1.msra.mxu0 0.0
    %2554 = vmatprep.subr.mxu0 0.0
    %2555 = vmatpush1.msra.mxu0 %v1635
    %2556 = vmatprep.subr.mxu0 0.0
    %2557 = vmatpush1.msra.mxu0 %v1634
    %2558 = vmatprep.subr.mxu0 0.0
    %2559 = vmatpush2.msra.mxu0 0.0
    %2560 = vmatprep.subr.mxu0 0.0
    %2561 = vmatpush2.msra.mxu0 0.0
    %2562 = vmatprep.subr.mxu0 0.0
    %2563 = vmatpush2.msra.mxu0 0.0
    %2564 = vmatprep.subr.mxu0 0.0
    %2565 = vmatpush2.msra.mxu0 0.0
    %2566 = vmatprep.subr.mxu0 0.0
    %2567 = vmatpush2.msra.mxu0 0.0
    %2568 = vmatprep.subr.mxu0 0.0
    %2569 = vmatpush2.msra.mxu0 0.0
    %2570 = vmatprep.subr.mxu0 0.0
    %2571 = vmatpush2.msra.mxu0 0.0
    %2572 = vmatprep.subr.mxu0 0.0
    %2573 = vmatpush2.msra.mxu0 0.0
    %2574 = vmatprep.subr.mxu0 0.0
    %2575 = vmatpush2.msra.mxu0 0.0
    %2576 = vmatprep.subr.mxu0 0.0
    %2577 = vmatpush2.msra.mxu0 0.0
    %2578 = vmatprep.subr.mxu0 0.0
    %2579 = vmatpush2.msra.mxu0 0.0
    %2580 = vmatprep.subr.mxu0 0.0
    %2581 = vmatpush2.msra.mxu0 0.0
    %2582 = vmatprep.subr.mxu0 0.0
    %2583 = vmatpush2.msra.mxu0 0.0
    %2584 = vmatprep.subr.mxu0 0.0
    %2585 = vmatpush2.msra.mxu0 0.0
    %2586 = vmatprep.subr.mxu0 0.0
    %2587 = vmatpush2.msra.mxu0 0.0
    %2588 = vmatprep.subr.mxu0 0.0
    %2589 = vmatpush2.msra.mxu0 0.0
    %2590 = vmatprep.mubr.f32.mxu0 0.0
    %2591 = vmatmul.mubr.f32.gmra.mxu0 %v2524
    %v2592 = vpop.f32.mrf.mxu0
    %v2593 = vadd.f32 %v2520, %v2592
    %v2594 = vpop.f32.mrf.mxu0
    %2595 = vdwg.mxu0
    %v2596 = vld [vmem:[#allocation2 + $0x1c8] sm:$0x1]
    %v2597 = vlaneseq
    %v2598 = vshrl.u32 %v2597, 7
    %v2599 = vsub.s32 0, %v2598
    %v2600 = vrot.slane %v2596, %v2599
    %v2601 = vadd.f32 %v2114, %v2600
    %v2602 = vadd.f32 %v2593, %v2600
    %v2603 = vadd.f32 %v1542, %v2601
    %v2604 = vadd.f32 %v1543, %v2602
    %v2605 = vld [vmem:[#allocation2 + $0x1d0] sm:$0x1]
    %v2606 = vld [vmem:[#allocation2 + $0x1d8] sm:$0x1]
    %v2607 = vsel %vm145, %v2603, 0.0
    %2608 = vadd.xlane.f32.xlu0 %v2607
    %v2609 = vpop.xlane.xlu0 %2608
    %v2610 = vsel %vm145, %v2604, 0.0
    %2611 = vadd.xlane.f32.xlu0 %v2610
    %v2612 = vpop.xlane.xlu0 %2611
    %v2613 = vmul.f32 %v2609, %v152
    %v2614 = vmul.f32 %v2612, %v152
    %v2615 = vsub.f32 %v2603, %v2613
    %v2616 = vsub.f32 %v2604, %v2614
    %v2617 = vmul.f32 %v2615, %v2615
    %v2618 = vmul.f32 %v2616, %v2616
    %v2619 = vsel %vm145, %v2617, 0.0
    %2620 = vadd.xlane.f32.xlu0 %v2619
    %v2621 = vpop.xlane.xlu0 %2620
    %v2622 = vsel %vm145, %v2618, 0.0
    %2623 = vadd.xlane.f32.xlu0 %v2622
    %v2624 = vpop.xlane.xlu0 %2623
    %v2625 = vmul.f32 %v2621, %v152
    %v2626 = vmul.f32 %v2624, %v152
    %v2627 = vadd.f32 %v2625, 1e-12
    %v2628 = vadd.f32 %v2626, 1e-12
    %v2629 = vrsqrt.pop %v2627
    %v2630 = vrsqrt.pop %v2628
    %v2631 = vmul.f32 %v2615, %v2629
    %v2632 = vmul.f32 %v2616, %v2630
    %v2633 = vlaneseq
    %v2634 = vshrl.u32 %v2633, 7
    %v2635 = vsub.s32 0, %v2634
    %v2636 = vrot.slane %v2605, %v2635
    %v2637 = vmul.f32 %v2631, %v2636
    %v2638 = vmul.f32 %v2632, %v2636
    %v2639 = vlaneseq
    %v2640 = vshrl.u32 %v2639, 7
    %v2641 = vsub.s32 0, %v2640
    %v2642 = vrot.slane %v2606, %v2641
    %v2643 = vadd.f32 %v2637, %v2642
    %v2644 = vadd.f32 %v2638, %v2642
    %v2645 = vld [vmem:[#allocation2 + $0x1e0] sm:$0xff]
    %v2646 = vld [vmem:[#allocation2 + $0x1e8] sm:$0xff]
    %v2647 = vld [vmem:[#allocation2 + $0x1f0] sm:$0xff]
    %v2648 = vld [vmem:[#allocation2 + $0x1f8] sm:$0xff]
    %v2649 = vld [vmem:[#allocation2 + $0x200] sm:$0x1]
    %v2650 = vlaneseq
    %v2651 = vshrl.u32 %v2650, 7
    %v2652 = vsub.s32 0, %v2651
    %v2653 = vrot.slane %v2649, %v2652
    %v2655 = vsel %vm145, %v2643, 0
    %v2658 = vsel %vm145, %v2644, 0
    %2660 = vmatprep.subr.mxu0 0.0
    %2661 = vmatpush1.msra.mxu0 0.0
    %2662 = vmatprep.subr.mxu0 0.0
    %2663 = vmatpush1.msra.mxu0 0.0
    %2664 = vmatprep.subr.mxu0 0.0
    %2665 = vmatpush1.msra.mxu0 0.0
    %2666 = vmatprep.subr.mxu0 0.0
    %2667 = vmatpush1.msra.mxu0 0.0
    %2668 = vmatprep.subr.mxu0 0.0
    %2669 = vmatpush1.msra.mxu0 0.0
    %2670 = vmatprep.subr.mxu0 0.0
    %2671 = vmatpush1.msra.mxu0 0.0
    %2672 = vmatprep.subr.mxu0 0.0
    %2673 = vmatpush1.msra.mxu0 0.0
    %2674 = vmatprep.subr.mxu0 0.0
    %2675 = vmatpush1.msra.mxu0 0.0
    %2676 = vmatprep.subr.mxu0 0.0
    %2677 = vmatpush1.msra.mxu0 0.0
    %2678 = vmatprep.subr.mxu0 0.0
    %2679 = vmatpush1.msra.mxu0 0.0
    %2680 = vmatprep.subr.mxu0 0.0
    %2681 = vmatpush1.msra.mxu0 0.0
    %2682 = vmatprep.subr.mxu0 0.0
    %2683 = vmatpush1.msra.mxu0 0.0
    %2684 = vmatprep.subr.mxu0 0.0
    %2685 = vmatpush1.msra.mxu0 %v2648
    %2686 = vmatprep.subr.mxu0 0.0
    %2687 = vmatpush1.msra.mxu0 %v2647
    %2688 = vmatprep.subr.mxu0 0.0
    %2689 = vmatpush1.msra.mxu0 %v2646
    %2690 = vmatprep.subr.mxu0 0.0
    %2691 = vmatpush1.msra.mxu0 %v2645
    %2692 = vmatprep.subr.mxu0 0.0
    %2693 = vmatpush2.msra.mxu0 0.0
    %2694 = vmatprep.subr.mxu0 0.0
    %2695 = vmatpush2.msra.mxu0 0.0
    %2696 = vmatprep.subr.mxu0 0.0
    %2697 = vmatpush2.msra.mxu0 0.0
    %2698 = vmatprep.subr.mxu0 0.0
    %2699 = vmatpush2.msra.mxu0 0.0
    %2700 = vmatprep.subr.mxu0 0.0
    %2701 = vmatpush2.msra.mxu0 0.0
    %2702 = vmatprep.subr.mxu0 0.0
    %2703 = vmatpush2.msra.mxu0 0.0
    %2704 = vmatprep.subr.mxu0 0.0
    %2705 = vmatpush2.msra.mxu0 0.0
    %2706 = vmatprep.subr.mxu0 0.0
    %2707 = vmatpush2.msra.mxu0 0.0
    %2708 = vmatprep.subr.mxu0 0.0
    %2709 = vmatpush2.msra.mxu0 0.0
    %2710 = vmatprep.subr.mxu0 0.0
    %2711 = vmatpush2.msra.mxu0 0.0
    %2712 = vmatprep.subr.mxu0 0.0
    %2713 = vmatpush2.msra.mxu0 0.0
    %2714 = vmatprep.subr.mxu0 0.0
    %2715 = vmatpush2.msra.mxu0 0.0
    %2716 = vmatprep.subr.mxu0 0.0
    %2717 = vmatpush2.msra.mxu0 0.0
    %2718 = vmatprep.subr.mxu0 0.0
    %2719 = vmatpush2.msra.mxu0 0.0
    %2720 = vmatprep.subr.mxu0 0.0
    %2721 = vmatpush2.msra.mxu0 0.0
    %2722 = vmatprep.subr.mxu0 0.0
    %2723 = vmatpush2.msra.mxu0 0.0
    %2724 = vmatprep.mubr.f32.mxu0 0.0
    %2725 = vmatmul.mubr.f32.gmra.mxu0 %v2655
    %v2726 = vpop.f32.mrf.mxu0
    %v2727 = vadd.f32 %v2653, %v2726
    %v2728 = vpop.f32.mrf.mxu0
    %2729 = vmatprep.mubr.f32.mxu0 0.0
    %2730 = vmatmul.mubr.f32.gmra.mxu0 %v2658
    %v2731 = vpop.f32.mrf.mxu0
    %v2732 = vadd.f32 %v2653, %v2731
    %v2733 = vpop.f32.mrf.mxu0
    %2734 = vdwg.mxu0
    %v2735 = vmul.f32 %v2727, 0.5
    %v2736 = vmul.f32 %v2732, 0.5
    %v2737 = vmul.f32 %v2727, 0.044715
    %v2738 = vmul.f32 %v2732, 0.044715
    %v2739 = vmul.f32 %v2737, %v2727
    %v2740 = vmul.f32 %v2738, %v2732
    %v2741 = vmul.f32 %v2739, %v2727
    %v2742 = vmul.f32 %v2740, %v2732
    %v2743 = vadd.f32 %v2727, %v2741
    %v2744 = vadd.f32 %v2732, %v2742
    %v2745 = vmul.f32 %v2743, 0.7978846
    %v2746 = vmul.f32 %v2744, 0.7978846
    %v2747 = vtanh.pop %v2745
    %v2748 = vtanh.pop %v2746
    %v2749 = vadd.f32 %v2747, 1.0
    %v2750 = vadd.f32 %v2748, 1.0
    %v2751 = vmul.f32 %v2735, %v2749
    %v2752 = vmul.f32 %v2736, %v2750
    %v2753 = vld [vmem:[#allocation2 + $0x208] sm:$0xff]
    %v2754 = vld [vmem:[#allocation2 + $0x210] sm:$0xff]
    %v2755 = vld [vmem:[#allocation2 + $0x218] sm:$0xff]
    %v2756 = vld [vmem:[#allocation2 + $0x220] sm:$0xff]
    %v2757 = vld [vmem:[#allocation2 + $0x228] sm:$0xff]
    %v2758 = vld [vmem:[#allocation2 + $0x230] sm:$0xff]
    %v2759 = vld [vmem:[#allocation2 + $0x238] sm:$0xff]
    %v2760 = vld [vmem:[#allocation2 + $0x240] sm:$0xff]
    %v2761 = vld [vmem:[#allocation2 + $0x248] sm:$0x1]
    %v2762 = vlaneseq
    %v2763 = vshrl.u32 %v2762, 7
    %v2764 = vsub.s32 0, %v2763
    %v2765 = vrot.slane %v2761, %v2764
    %v2767 = vsel %vm1420, %v2751, 0
    %v2770 = vsel %vm1420, %v2752, 0
    %2772 = vmatprep.subr.mxu0 0.0
    %2773 = vmatpush1.msra.mxu0 0.0
    %2774 = vmatprep.subr.mxu0 0.0
    %2775 = vmatpush1.msra.mxu0 0.0
    %2776 = vmatprep.subr.mxu0 0.0
    %2777 = vmatpush1.msra.mxu0 0.0
    %2778 = vmatprep.subr.mxu0 0.0
    %2779 = vmatpush1.msra.mxu0 0.0
    %2780 = vmatprep.subr.mxu0 0.0
    %2781 = vmatpush1.msra.mxu0 0.0
    %2782 = vmatprep.subr.mxu0 0.0
    %2783 = vmatpush1.msra.mxu0 0.0
    %2784 = vmatprep.subr.mxu0 0.0
    %2785 = vmatpush1.msra.mxu0 0.0
    %2786 = vmatprep.subr.mxu0 0.0
    %2787 = vmatpush1.msra.mxu0 0.0
    %2788 = vmatprep.subr.mxu0 0.0
    %2789 = vmatpush1.msra.mxu0 %v2760
    %2790 = vmatprep.subr.mxu0 0.0
    %2791 = vmatpush1.msra.mxu0 %v2759
    %2792 = vmatprep.subr.mxu0 0.0
    %2793 = vmatpush1.msra.mxu0 %v2758
    %2794 = vmatprep.subr.mxu0 0.0
    %2795 = vmatpush1.msra.mxu0 %v2757
    %2796 = vmatprep.subr.mxu0 0.0
    %2797 = vmatpush1.msra.mxu0 %v2756
    %2798 = vmatprep.subr.mxu0 0.0
    %2799 = vmatpush1.msra.mxu0 %v2755
    %2800 = vmatprep.subr.mxu0 0.0
    %2801 = vmatpush1.msra.mxu0 %v2754
    %2802 = vmatprep.subr.mxu0 0.0
    %2803 = vmatpush1.msra.mxu0 %v2753
    %2804 = vmatprep.subr.mxu0 0.0
    %2805 = vmatpush2.msra.mxu0 0.0
    %2806 = vmatprep.subr.mxu0 0.0
    %2807 = vmatpush2.msra.mxu0 0.0
    %2808 = vmatprep.subr.mxu0 0.0
    %2809 = vmatpush2.msra.mxu0 0.0
    %2810 = vmatprep.subr.mxu0 0.0
    %2811 = vmatpush2.msra.mxu0 0.0
    %2812 = vmatprep.subr.mxu0 0.0
    %2813 = vmatpush2.msra.mxu0 0.0
    %2814 = vmatprep.subr.mxu0 0.0
    %2815 = vmatpush2.msra.mxu0 0.0
    %2816 = vmatprep.subr.mxu0 0.0
    %2817 = vmatpush2.msra.mxu0 0.0
    %2818 = vmatprep.subr.mxu0 0.0
    %2819 = vmatpush2.msra.mxu0 0.0
    %2820 = vmatprep.subr.mxu0 0.0
    %2821 = vmatpush2.msra.mxu0 0.0
    %2822 = vmatprep.subr.mxu0 0.0
    %2823 = vmatpush2.msra.mxu0 0.0
    %2824 = vmatprep.subr.mxu0 0.0
    %2825 = vmatpush2.msra.mxu0 0.0
    %2826 = vmatprep.subr.mxu0 0.0
    %2827 = vmatpush2.msra.mxu0 0.0
    %2828 = vmatprep.subr.mxu0 0.0
    %2829 = vmatpush2.msra.mxu0 0.0
    %2830 = vmatprep.subr.mxu0 0.0
    %2831 = vmatpush2.msra.mxu0 0.0
    %2832 = vmatprep.subr.mxu0 0.0
    %2833 = vmatpush2.msra.mxu0 0.0
    %2834 = vmatprep.subr.mxu0 0.0
    %2835 = vmatpush2.msra.mxu0 0.0
    %2836 = vmatprep.mubr.f32.mxu0 0.0
    %2837 = vmatmul.mubr.f32.gmra.mxu0 %v2767
    %v2838 = vpop.f32.mrf.mxu0
    %v2839 = vadd.f32 %v2765, %v2838
    %v2840 = vpop.f32.mrf.mxu0
    %2841 = vmatprep.mubr.f32.mxu0 0.0
    %2842 = vmatmul.mubr.f32.gmra.mxu0 %v2770
    %v2843 = vpop.f32.mrf.mxu0
    %v2844 = vadd.f32 %v2765, %v2843
    %v2845 = vpop.f32.mrf.mxu0
    %2846 = vdwg.mxu0
    %v2847 = vadd.f32 %v2643, %v2839
    %v2848 = vadd.f32 %v2644, %v2844
    %v2849 = vld [vmem:[#allocation2 + $0x250] sm:$0x1]
    %v2850 = vld [vmem:[#allocation2 + $0x258] sm:$0x1]
    %v2851 = vsel %vm145, %v2847, 0.0
    %2852 = vadd.xlane.f32.xlu0 %v2851
    %v2853 = vpop.xlane.xlu0 %2852
    %v2854 = vsel %vm145, %v2848, 0.0
    %2855 = vadd.xlane.f32.xlu0 %v2854
    %v2856 = vpop.xlane.xlu0 %2855
    %v2857 = vmul.f32 %v2853, %v152
    %v2858 = vmul.f32 %v2856, %v152
    %v2859 = vsub.f32 %v2847, %v2857
    %v2860 = vsub.f32 %v2848, %v2858
    %v2861 = vmul.f32 %v2859, %v2859
    %v2862 = vmul.f32 %v2860, %v2860
    %v2863 = vsel %vm145, %v2861, 0.0
    %2864 = vadd.xlane.f32.xlu0 %v2863
    %v2865 = vpop.xlane.xlu0 %2864
    %v2866 = vsel %vm145, %v2862, 0.0
    %2867 = vadd.xlane.f32.xlu0 %v2866
    %v2868 = vpop.xlane.xlu0 %2867
    %v2869 = vmul.f32 %v2865, %v152
    %v2870 = vmul.f32 %v2868, %v152
    %v2871 = vadd.f32 %v2869, 1e-12
    %v2872 = vadd.f32 %v2870, 1e-12
    %v2873 = vrsqrt.pop %v2871
    %v2874 = vrsqrt.pop %v2872
    %v2875 = vmul.f32 %v2859, %v2873
    %v2876 = vmul.f32 %v2860, %v2874
    %v2877 = vlaneseq
    %v2878 = vshrl.u32 %v2877, 7
    %v2879 = vsub.s32 0, %v2878
    %v2880 = vrot.slane %v2849, %v2879
    %v2881 = vmul.f32 %v2875, %v2880
    %v2882 = vmul.f32 %v2876, %v2880
    %v2883 = vlaneseq
    %v2884 = vshrl.u32 %v2883, 7
    %v2885 = vsub.s32 0, %v2884
    %v2886 = vrot.slane %v2850, %v2885
    %v2887 = vadd.f32 %v2881, %v2886
    %v2888 = vadd.f32 %v2882, %v2886
    %v2889 = vld [vmem:[#allocation2 + $0x2d0] sm:$0xff]
    %v2890 = vld [vmem:[#allocation2 + $0x2d8] sm:$0xff]
    %v2891 = vld [vmem:[#allocation2 + $0x2e0] sm:$0xff]
    %v2892 = vld [vmem:[#allocation2 + $0x2e8] sm:$0xff]
    %v2893 = vld [vmem:[#allocation2 + $0x2f0] sm:$0x1]
    %v2894 = vld [vmem:[#allocation2 + $0x260] sm:$0xff]
    %v2895 = vld [vmem:[#allocation2 + $0x268] sm:$0xff]
    %v2896 = vld [vmem:[#allocation2 + $0x270] sm:$0xff]
    %v2897 = vld [vmem:[#allocation2 + $0x278] sm:$0xff]
    %v2898 = vld [vmem:[#allocation2 + $0x280] sm:$0xff]
    %v2899 = vld [vmem:[#allocation2 + $0x288] sm:$0xff]
    %v2900 = vld [vmem:[#allocation2 + $0x290] sm:$0x1]
    %v2901 = vlaneseq
    %v2902 = vshrl.u32 %v2901, 7
    %v2903 = vsub.s32 0, %v2902
    %v2904 = vrot.slane %v2900, %v2903
    %v2906 = vsel %vm145, %v2887, 0
    %2908 = vmatprep.subr.mxu0 0.0
    %2909 = vmatpush1.msra.mxu0 0.0
    %2910 = vmatprep.subr.mxu0 0.0
    %2911 = vmatpush1.msra.mxu0 0.0
    %2912 = vmatprep.subr.mxu0 0.0
    %2913 = vmatpush1.msra.mxu0 0.0
    %2914 = vmatprep.subr.mxu0 0.0
    %2915 = vmatpush1.msra.mxu0 0.0
    %2916 = vmatprep.subr.mxu0 0.0
    %2917 = vmatpush1.msra.mxu0 0.0
    %2918 = vmatprep.subr.mxu0 0.0
    %2919 = vmatpush1.msra.mxu0 0.0
    %2920 = vmatprep.subr.mxu0 0.0
    %2921 = vmatpush1.msra.mxu0 0.0
    %2922 = vmatprep.subr.mxu0 0.0
    %2923 = vmatpush1.msra.mxu0 0.0
    %2924 = vmatprep.subr.mxu0 0.0
    %2925 = vmatpush1.msra.mxu0 0.0
    %2926 = vmatprep.subr.mxu0 0.0
    %2927 = vmatpush1.msra.mxu0 0.0
    %2928 = vmatprep.subr.mxu0 0.0
    %2929 = vmatpush1.msra.mxu0 0.0
    %2930 = vmatprep.subr.mxu0 0.0
    %2931 = vmatpush1.msra.mxu0 0.0
    %2932 = vmatprep.subr.mxu0 0.0
    %2933 = vmatpush1.msra.mxu0 %v2897
    %2934 = vmatprep.subr.mxu0 0.0
    %2935 = vmatpush1.msra.mxu0 %v2896
    %2936 = vmatprep.subr.mxu0 0.0
    %2937 = vmatpush1.msra.mxu0 %v2895
    %2938 = vmatprep.subr.mxu0 0.0
    %2939 = vmatpush1.msra.mxu0 %v2894
    %2940 = vmatprep.subr.mxu0 0.0
    %2941 = vmatpush2.msra.mxu0 0.0
    %2942 = vmatprep.subr.mxu0 0.0
    %2943 = vmatpush2.msra.mxu0 0.0
    %2944 = vmatprep.subr.mxu0 0.0
    %2945 = vmatpush2.msra.mxu0 0.0
    %2946 = vmatprep.subr.mxu0 0.0
    %2947 = vmatpush2.msra.mxu0 0.0
    %2948 = vmatprep.subr.mxu0 0.0
    %2949 = vmatpush2.msra.mxu0 0.0
    %2950 = vmatprep.subr.mxu0 0.0
    %2951 = vmatpush2.msra.mxu0 0.0
    %2952 = vmatprep.subr.mxu0 0.0
    %2953 = vmatpush2.msra.mxu0 0.0
    %2954 = vmatprep.subr.mxu0 0.0
    %2955 = vmatpush2.msra.mxu0 0.0
    %2956 = vmatprep.subr.mxu0 0.0
    %2957 = vmatpush2.msra.mxu0 0.0
    %2958 = vmatprep.subr.mxu0 0.0
    %2959 = vmatpush2.msra.mxu0 0.0
    %2960 = vmatprep.subr.mxu0 0.0
    %2961 = vmatpush2.msra.mxu0 0.0
    %2962 = vmatprep.subr.mxu0 0.0
    %2963 = vmatpush2.msra.mxu0 0.0
    %2964 = vmatprep.subr.mxu0 0.0
    %2965 = vmatpush2.msra.mxu0 0.0
    %2966 = vmatprep.subr.mxu0 0.0
    %2967 = vmatpush2.msra.mxu0 0.0
    %2968 = vmatprep.subr.mxu0 0.0
    %2969 = vmatpush2.msra.mxu0 0.0
    %2970 = vmatprep.subr.mxu0 0.0
    %2971 = vmatpush2.msra.mxu0 0.0
    %2972 = vmatprep.mubr.f32.mxu0 0.0
    %2973 = vmatmul.mubr.f32.gmra.mxu0 %v2906
    %v2974 = vpop.f32.mrf.mxu0
    %v2975 = vadd.f32 %v2904, %v2974
    %v2976 = vpop.f32.mrf.mxu0
    %2977 = vdwg.mxu0
    %v2978 = vlaneseq
    %v2979 = vshrl.u32 %v2978, 7
    %v2981 = vsel %vm285, 0.0, 0
    %2983 = vmatprep.subr.mxu0 0.0
    %2984 = vmatpush1.msra.mxu0 0.0
    %2985 = vmatprep.subr.mxu0 0.0
    %2986 = vmatpush1.msra.mxu0 0.0
    %2987 = vmatprep.subr.mxu0 0.0
    %2988 = vmatpush1.msra.mxu0 0.0
    %2989 = vmatprep.subr.mxu0 0.0
    %2990 = vmatpush1.msra.mxu0 0.0
    %2991 = vmatprep.subr.mxu0 0.0
    %2992 = vmatpush1.msra.mxu0 0.0
    %2993 = vmatprep.subr.mxu0 0.0
    %2994 = vmatpush1.msra.mxu0 0.0
    %2995 = vmatprep.subr.mxu0 0.0
    %2996 = vmatpush1.msra.mxu0 0.0
    %2997 = vmatprep.subr.mxu0 0.0
    %2998 = vmatpush1.msra.mxu0 0.0
    %2999 = vmatprep.subr.mxu0 0.0
    %3000 = vmatpush1.msra.mxu0 0.0
    %3001 = vmatprep.subr.mxu0 0.0
    %3002 = vmatpush1.msra.mxu0 0.0
    %3003 = vmatprep.subr.mxu0 0.0
    %3004 = vmatpush1.msra.mxu0 0.0
    %3005 = vmatprep.subr.mxu0 0.0
    %3006 = vmatpush1.msra.mxu0 0.0
    %3007 = vmatprep.subr.mxu0 0.0
    %3008 = vmatpush1.msra.mxu0 0.0
    %3009 = vmatprep.subr.mxu0 0.0
    %3010 = vmatpush1.msra.mxu0 0.0
    %3011 = vmatprep.subr.mxu0 0.0
    %3012 = vmatpush1.msra.mxu0 %v2899
    %3013 = vmatprep.subr.mxu0 0.0
    %3014 = vmatpush1.msra.mxu0 %v2898
    %3015 = vmatprep.subr.mxu0 0.0
    %3016 = vmatpush2.msra.mxu0 0.0
    %3017 = vmatprep.subr.mxu0 0.0
    %3018 = vmatpush2.msra.mxu0 0.0
    %3019 = vmatprep.subr.mxu0 0.0
    %3020 = vmatpush2.msra.mxu0 0.0
    %3021 = vmatprep.subr.mxu0 0.0
    %3022 = vmatpush2.msra.mxu0 0.0
    %3023 = vmatprep.subr.mxu0 0.0
    %3024 = vmatpush2.msra.mxu0 0.0
    %3025 = vmatprep.subr.mxu0 0.0
    %3026 = vmatpush2.msra.mxu0 0.0
    %3027 = vmatprep.subr.mxu0 0.0
    %3028 = vmatpush2.msra.mxu0 0.0
    %3029 = vmatprep.subr.mxu0 0.0
    %3030 = vmatpush2.msra.mxu0 0.0
    %3031 = vmatprep.subr.mxu0 0.0
    %3032 = vmatpush2.msra.mxu0 0.0
    %3033 = vmatprep.subr.mxu0 0.0
    %3034 = vmatpush2.msra.mxu0 0.0
    %3035 = vmatprep.subr.mxu0 0.0
    %3036 = vmatpush2.msra.mxu0 0.0
    %3037 = vmatprep.subr.mxu0 0.0
    %3038 = vmatpush2.msra.mxu0 0.0
    %3039 = vmatprep.subr.mxu0 0.0
    %3040 = vmatpush2.msra.mxu0 0.0
    %3041 = vmatprep.subr.mxu0 0.0
    %3042 = vmatpush2.msra.mxu0 0.0
    %3043 = vmatprep.subr.mxu0 0.0
    %3044 = vmatpush2.msra.mxu0 0.0
    %3045 = vmatprep.subr.mxu0 0.0
    %3046 = vmatpush2.msra.mxu0 0.0
    %3047 = vmatprep.mubr.f32.mxu0 0.0
    %3048 = vmatmul.mubr.f32.gmra.mxu0 %v2981
    %v3049 = vpop.f32.mrf.mxu0
    %v3050 = vadd.f32 0.0, %v3049
    %v3051 = vpop.f32.mrf.mxu0
    %3052 = vdwg.mxu0
    %v3053 = vadd.f32 %v2975, %v3050
    %v3054 = vsub.f32 0.0, %v3053
    %v3055 = vmul.f32 %v3054, 1.442695
    %v3056 = vpow.pop %v3055
    %v3057 = vadd.f32 %v3056, 1.0
    %v3058 = vrcp.pop %v3057
    %v3059 = vmul.f32 1.0, %v3058
    %v3060 = vtanh.pop %v3053
    %v3061 = vmul.f32 %v3059, 0.0
    %3063 = vrot.lane.b32.xlu0 %v3060, 96
    %v3064 = vpop.permute.xlu0 %3063
    %v3066 = vmul.f32 %v3059, %v3064
    %3068 = vrot.lane.b32.xlu0 %v3066, 16
    %v3069 = vpop.permute.xlu0 %3068
    %v3071 = vadd.f32 %v3061, %v3069
    %v3072 = vtanh.pop %v3071
    %3074 = vrot.lane.b32.xlu0 %v3072, 32
    %v3075 = vpop.permute.xlu0 %3074
    %v3077 = vmul.f32 %v3059, %v3075
    %vm3078 = vcmp.eq.s32.totalorder %v2979, 0
    %v3079 = vsel %vm3078, 1, 0
    %vm3080 = vcmp.eq.s32.totalorder %v3079, 1
    %v3081 = vlaneseq
    %v3082 = vshrl.u32 %v3081, 7
    %v3083 = vsub.s32 0, %v3082
    %v3084 = vrot.slane %v3077, %v3083
    %v3085 = vsel %vm3080, %v3084, 0.0
    %3087 = vrot.lane.b32.xlu0 %v3077, 80
    %v3088 = vpop.permute.xlu0 %3087
    %v3089 = vsel %vm285, %v3088, 0
    %3091 = vmatprep.subr.mxu0 0.0
    %3092 = vmatpush1.msra.mxu0 0.0
    %3093 = vmatprep.subr.mxu0 0.0
    %3094 = vmatpush1.msra.mxu0 0.0
    %3095 = vmatprep.subr.mxu0 0.0
    %3096 = vmatpush1.msra.mxu0 0.0
    %3097 = vmatprep.subr.mxu0 0.0
    %3098 = vmatpush1.msra.mxu0 0.0
    %3099 = vmatprep.subr.mxu0 0.0
    %3100 = vmatpush1.msra.mxu0 0.0
    %3101 = vmatprep.subr.mxu0 0.0
    %3102 = vmatpush1.msra.mxu0 0.0
    %3103 = vmatprep.subr.mxu0 0.0
    %3104 = vmatpush1.msra.mxu0 0.0
    %3105 = vmatprep.subr.mxu0 0.0
    %3106 = vmatpush1.msra.mxu0 0.0
    %3107 = vmatprep.subr.mxu0 0.0
    %3108 = vmatpush1.msra.mxu0 0.0
    %3109 = vmatprep.subr.mxu0 0.0
    %3110 = vmatpush1.msra.mxu0 0.0
    %3111 = vmatprep.subr.mxu0 0.0
    %3112 = vmatpush1.msra.mxu0 0.0
    %3113 = vmatprep.subr.mxu0 0.0
    %3114 = vmatpush1.msra.mxu0 0.0
    %3115 = vmatprep.subr.mxu0 0.0
    %3116 = vmatpush1.msra.mxu0 0.0
    %3117 = vmatprep.subr.mxu0 0.0
    %3118 = vmatpush1.msra.mxu0 0.0
    %3119 = vmatprep.subr.mxu0 0.0
    %3120 = vmatpush1.msra.mxu0 %v2899
    %3121 = vmatprep.subr.mxu0 0.0
    %3122 = vmatpush1.msra.mxu0 %v2898
    %3123 = vmatprep.subr.mxu0 0.0
    %3124 = vmatpush2.msra.mxu0 0.0
    %3125 = vmatprep.subr.mxu0 0.0
    %3126 = vmatpush2.msra.mxu0 0.0
    %3127 = vmatprep.subr.mxu0 0.0
    %3128 = vmatpush2.msra.mxu0 0.0
    %3129 = vmatprep.subr.mxu0 0.0
    %3130 = vmatpush2.msra.mxu0 0.0
    %3131 = vmatprep.subr.mxu0 0.0
    %3132 = vmatpush2.msra.mxu0 0.0
    %3133 = vmatprep.subr.mxu0 0.0
    %3134 = vmatpush2.msra.mxu0 0.0
    %3135 = vmatprep.subr.mxu0 0.0
    %3136 = vmatpush2.msra.mxu0 0.0
    %3137 = vmatprep.subr.mxu0 0.0
    %3138 = vmatpush2.msra.mxu0 0.0
    %3139 = vmatprep.subr.mxu0 0.0
    %3140 = vmatpush2.msra.mxu0 0.0
    %3141 = vmatprep.subr.mxu0 0.0
    %3142 = vmatpush2.msra.mxu0 0.0
    %3143 = vmatprep.subr.mxu0 0.0
    %3144 = vmatpush2.msra.mxu0 0.0
    %3145 = vmatprep.subr.mxu0 0.0
    %3146 = vmatpush2.msra.mxu0 0.0
    %3147 = vmatprep.subr.mxu0 0.0
    %3148 = vmatpush2.msra.mxu0 0.0
    %3149 = vmatprep.subr.mxu0 0.0
    %3150 = vmatpush2.msra.mxu0 0.0
    %3151 = vmatprep.subr.mxu0 0.0
    %3152 = vmatpush2.msra.mxu0 0.0
    %3153 = vmatprep.subr.mxu0 0.0
    %3154 = vmatpush2.msra.mxu0 0.0
    %3155 = vmatprep.mubr.f32.mxu0 0.0
    %3156 = vmatmul.mubr.f32.gmra.mxu0 %v3089
    %v3157 = vpop.f32.mrf.mxu0
    %v3158 = vadd.f32 0.0, %v3157
    %v3159 = vpop.f32.mrf.mxu0
    %3160 = vdwg.mxu0
    %v3162 = vrot.slane %v3158, 7
    %v3164 = vadd.f32 %v2975, %v3162
    %v3165 = vsub.f32 0.0, %v3164
    %v3166 = vmul.f32 %v3165, 1.442695
    %v3167 = vpow.pop %v3166
    %v3168 = vadd.f32 %v3167, 1.0
    %v3169 = vrcp.pop %v3168
    %v3170 = vmul.f32 1.0, %v3169
    %v3171 = vtanh.pop %v3164
    %v3173 = vrot.slane %v3071, 7
    %v3175 = vmul.f32 %v3170, %v3173
    %3177 = vrot.lane.b32.xlu0 %v3171, 96
    %v3178 = vpop.permute.xlu0 %3177
    %v3180 = vmul.f32 %v3170, %v3178
    %3182 = vrot.lane.b32.xlu0 %v3180, 16
    %v3183 = vpop.permute.xlu0 %3182
    %v3185 = vadd.f32 %v3175, %v3183
    %v3186 = vtanh.pop %v3185
    %3188 = vrot.lane.b32.xlu0 %v3186, 32
    %v3189 = vpop.permute.xlu0 %3188
    %v3191 = vmul.f32 %v3170, %v3189
    %vm3192 = vcmp.eq.s32.totalorder %v2979, 1
    %v3193 = vsel %vm3192, 1, 0
    %vm3194 = vcmp.eq.s32.totalorder %v3193, 1
    %v3195 = vlaneseq
    %v3196 = vshrl.u32 %v3195, 7
    %v3197 = vsub.s32 1, %v3196
    %v3198 = vrot.slane %v3191, %v3197
    %v3199 = vsel %vm3194, %v3198, %v3085
    %v3201 = vrot.slane %v3191, 1
    %3202 = vrot.lane.b32.xlu0 %v3201, 80
    %v3203 = vpop.permute.xlu0 %3202
    %v3204 = vsel %vm285, %v3203, 0
    %3206 = vmatprep.subr.mxu0 0.0
    %3207 = vmatpush1.msra.mxu0 0.0
    %3208 = vmatprep.subr.mxu0 0.0
    %3209 = vmatpush1.msra.mxu0 0.0
    %3210 = vmatprep.subr.mxu0 0.0
    %3211 = vmatpush1.msra.mxu0 0.0
    %3212 = vmatprep.subr.mxu0 0.0
    %3213 = vmatpush1.msra.mxu0 0.0
    %3214 = vmatprep.subr.mxu0 0.0
    %3215 = vmatpush1.msra.mxu0 0.0
    %3216 = vmatprep.subr.mxu0 0.0
    %3217 = vmatpush1.msra.mxu0 0.0
    %3218 = vmatprep.subr.mxu0 0.0
    %3219 = vmatpush1.msra.mxu0 0.0
    %3220 = vmatprep.subr.mxu0 0.0
    %3221 = vmatpush1.msra.mxu0 0.0
    %3222 = vmatprep.subr.mxu0 0.0
    %3223 = vmatpush1.msra.mxu0 0.0
    %3224 = vmatprep.subr.mxu0 0.0
    %3225 = vmatpush1.msra.mxu0 0.0
    %3226 = vmatprep.subr.mxu0 0.0
    %3227 = vmatpush1.msra.mxu0 0.0
    %3228 = vmatprep.subr.mxu0 0.0
    %3229 = vmatpush1.msra.mxu0 0.0
    %3230 = vmatprep.subr.mxu0 0.0
    %3231 = vmatpush1.msra.mxu0 0.0
    %3232 = vmatprep.subr.mxu0 0.0
    %3233 = vmatpush1.msra.mxu0 0.0
    %3234 = vmatprep.subr.mxu0 0.0
    %3235 = vmatpush1.msra.mxu0 %v2899
    %3236 = vmatprep.subr.mxu0 0.0
    %3237 = vmatpush1.msra.mxu0 %v2898
    %3238 = vmatprep.subr.mxu0 0.0
    %3239 = vmatpush2.msra.mxu0 0.0
    %3240 = vmatprep.subr.mxu0 0.0
    %3241 = vmatpush2.msra.mxu0 0.0
    %3242 = vmatprep.subr.mxu0 0.0
    %3243 = vmatpush2.msra.mxu0 0.0
    %3244 = vmatprep.subr.mxu0 0.0
    %3245 = vmatpush2.msra.mxu0 0.0
    %3246 = vmatprep.subr.mxu0 0.0
    %3247 = vmatpush2.msra.mxu0 0.0
    %3248 = vmatprep.subr.mxu0 0.0
    %3249 = vmatpush2.msra.mxu0 0.0
    %3250 = vmatprep.subr.mxu0 0.0
    %3251 = vmatpush2.msra.mxu0 0.0
    %3252 = vmatprep.subr.mxu0 0.0
    %3253 = vmatpush2.msra.mxu0 0.0
    %3254 = vmatprep.subr.mxu0 0.0
    %3255 = vmatpush2.msra.mxu0 0.0
    %3256 = vmatprep.subr.mxu0 0.0
    %3257 = vmatpush2.msra.mxu0 0.0
    %3258 = vmatprep.subr.mxu0 0.0
    %3259 = vmatpush2.msra.mxu0 0.0
    %3260 = vmatprep.subr.mxu0 0.0
    %3261 = vmatpush2.msra.mxu0 0.0
    %3262 = vmatprep.subr.mxu0 0.0
    %3263 = vmatpush2.msra.mxu0 0.0
    %3264 = vmatprep.subr.mxu0 0.0
    %3265 = vmatpush2.msra.mxu0 0.0
    %3266 = vmatprep.subr.mxu0 0.0
    %3267 = vmatpush2.msra.mxu0 0.0
    %3268 = vmatprep.subr.mxu0 0.0
    %3269 = vmatpush2.msra.mxu0 0.0
    %3270 = vmatprep.mubr.f32.mxu0 0.0
    %3271 = vmatmul.mubr.f32.gmra.mxu0 %v3204
    %v3272 = vpop.f32.mrf.mxu0
    %v3273 = vadd.f32 0.0, %v3272
    %v3274 = vpop.f32.mrf.mxu0
    %3275 = vdwg.mxu0
    %v3277 = vrot.slane %v3273, 6
    %v3279 = vadd.f32 %v2975, %v3277
    %v3280 = vsub.f32 0.0, %v3279
    %v3281 = vmul.f32 %v3280, 1.442695
    %v3282 = vpow.pop %v3281
    %v3283 = vadd.f32 %v3282, 1.0
    %v3284 = vrcp.pop %v3283
    %v3285 = vmul.f32 1.0, %v3284
    %v3286 = vtanh.pop %v3279
    %v3288 = vrot.slane %v3185, 7
    %v3290 = vmul.f32 %v3285, %v3288
    %3292 = vrot.lane.b32.xlu0 %v3286, 96
    %v3293 = vpop.permute.xlu0 %3292
    %v3295 = vmul.f32 %v3285, %v3293
    %3297 = vrot.lane.b32.xlu0 %v3295, 16
    %v3298 = vpop.permute.xlu0 %3297
    %v3300 = vadd.f32 %v3290, %v3298
    %v3301 = vtanh.pop %v3300
    %3303 = vrot.lane.b32.xlu0 %v3301, 32
    %v3304 = vpop.permute.xlu0 %3303
    %v3306 = vmul.f32 %v3285, %v3304
    %vm3307 = vcmp.eq.s32.totalorder %v2979, 2
    %v3308 = vsel %vm3307, 1, 0
    %vm3309 = vcmp.eq.s32.totalorder %v3308, 1
    %v3310 = vlaneseq
    %v3311 = vshrl.u32 %v3310, 7
    %v3312 = vsub.s32 2, %v3311
    %v3313 = vrot.slane %v3306, %v3312
    %v3314 = vsel %vm3309, %v3313, %v3199
    %v3316 = vrot.slane %v3306, 2
    %3317 = vrot.lane.b32.xlu0 %v3316, 80
    %v3318 = vpop.permute.xlu0 %3317
    %v3319 = vsel %vm285, %v3318, 0
    %3321 = vmatprep.subr.mxu0 0.0
    %3322 = vmatpush1.msra.mxu0 0.0
    %3323 = vmatprep.subr.mxu0 0.0
    %3324 = vmatpush1.msra.mxu0 0.0
    %3325 = vmatprep.subr.mxu0 0.0
    %3326 = vmatpush1.msra.mxu0 0.0
    %3327 = vmatprep.subr.mxu0 0.0
    %3328 = vmatpush1.msra.mxu0 0.0
    %3329 = vmatprep.subr.mxu0 0.0
    %3330 = vmatpush1.msra.mxu0 0.0
    %3331 = vmatprep.subr.mxu0 0.0
    %3332 = vmatpush1.msra.mxu0 0.0
    %3333 = vmatprep.subr.mxu0 0.0
    %3334 = vmatpush1.msra.mxu0 0.0
    %3335 = vmatprep.subr.mxu0 0.0
    %3336 = vmatpush1.msra.mxu0 0.0
    %3337 = vmatprep.subr.mxu0 0.0
    %3338 = vmatpush1.msra.mxu0 0.0
    %3339 = vmatprep.subr.mxu0 0.0
    %3340 = vmatpush1.msra.mxu0 0.0
    %3341 = vmatprep.subr.mxu0 0.0
    %3342 = vmatpush1.msra.mxu0 0.0
    %3343 = vmatprep.subr.mxu0 0.0
    %3344 = vmatpush1.msra.mxu0 0.0
    %3345 = vmatprep.subr.mxu0 0.0
    %3346 = vmatpush1.msra.mxu0 0.0
    %3347 = vmatprep.subr.mxu0 0.0
    %3348 = vmatpush1.msra.mxu0 0.0
    %3349 = vmatprep.subr.mxu0 0.0
    %3350 = vmatpush1.msra.mxu0 %v2899
    %3351 = vmatprep.subr.mxu0 0.0
    %3352 = vmatpush1.msra.mxu0 %v2898
    %3353 = vmatprep.subr.mxu0 0.0
    %3354 = vmatpush2.msra.mxu0 0.0
    %3355 = vmatprep.subr.mxu0 0.0
    %3356 = vmatpush2.msra.mxu0 0.0
    %3357 = vmatprep.subr.mxu0 0.0
    %3358 = vmatpush2.msra.mxu0 0.0
    %3359 = vmatprep.subr.mxu0 0.0
    %3360 = vmatpush2.msra.mxu0 0.0
    %3361 = vmatprep.subr.mxu0 0.0
    %3362 = vmatpush2.msra.mxu0 0.0
    %3363 = vmatprep.subr.mxu0 0.0
    %3364 = vmatpush2.msra.mxu0 0.0
    %3365 = vmatprep.subr.mxu0 0.0
    %3366 = vmatpush2.msra.mxu0 0.0
    %3367 = vmatprep.subr.mxu0 0.0
    %3368 = vmatpush2.msra.mxu0 0.0
    %3369 = vmatprep.subr.mxu0 0.0
    %3370 = vmatpush2.msra.mxu0 0.0
    %3371 = vmatprep.subr.mxu0 0.0
    %3372 = vmatpush2.msra.mxu0 0.0
    %3373 = vmatprep.subr.mxu0 0.0
    %3374 = vmatpush2.msra.mxu0 0.0
    %3375 = vmatprep.subr.mxu0 0.0
    %3376 = vmatpush2.msra.mxu0 0.0
    %3377 = vmatprep.subr.mxu0 0.0
    %3378 = vmatpush2.msra.mxu0 0.0
    %3379 = vmatprep.subr.mxu0 0.0
    %3380 = vmatpush2.msra.mxu0 0.0
    %3381 = vmatprep.subr.mxu0 0.0
    %3382 = vmatpush2.msra.mxu0 0.0
    %3383 = vmatprep.subr.mxu0 0.0
    %3384 = vmatpush2.msra.mxu0 0.0
    %3385 = vmatprep.mubr.f32.mxu0 0.0
    %3386 = vmatmul.mubr.f32.gmra.mxu0 %v3319
    %v3387 = vpop.f32.mrf.mxu0
    %v3388 = vadd.f32 0.0, %v3387
    %v3389 = vpop.f32.mrf.mxu0
    %3390 = vdwg.mxu0
    %v3392 = vrot.slane %v3388, 5
    %v3394 = vadd.f32 %v2975, %v3392
    %v3395 = vsub.f32 0.0, %v3394
    %v3396 = vmul.f32 %v3395, 1.442695
    %v3397 = vpow.pop %v3396
    %v3398 = vadd.f32 %v3397, 1.0
    %v3399 = vrcp.pop %v3398
    %v3400 = vmul.f32 1.0, %v3399
    %v3401 = vtanh.pop %v3394
    %v3403 = vrot.slane %v3300, 7
    %v3405 = vmul.f32 %v3400, %v3403
    %3407 = vrot.lane.b32.xlu0 %v3401, 96
    %v3408 = vpop.permute.xlu0 %3407
    %v3410 = vmul.f32 %v3400, %v3408
    %3412 = vrot.lane.b32.xlu0 %v3410, 16
    %v3413 = vpop.permute.xlu0 %3412
    %v3415 = vadd.f32 %v3405, %v3413
    %v3416 = vtanh.pop %v3415
    %3418 = vrot.lane.b32.xlu0 %v3416, 32
    %v3419 = vpop.permute.xlu0 %3418
    %v3421 = vmul.f32 %v3400, %v3419
    %vm3422 = vcmp.eq.s32.totalorder %v2979, 3
    %v3423 = vsel %vm3422, 1, 0
    %vm3424 = vcmp.eq.s32.totalorder %v3423, 1
    %v3425 = vlaneseq
    %v3426 = vshrl.u32 %v3425, 7
    %v3427 = vsub.s32 3, %v3426
    %v3428 = vrot.slane %v3421, %v3427
    %v3429 = vsel %vm3424, %v3428, %v3314
    %v3431 = vrot.slane %v3421, 3
    %3432 = vrot.lane.b32.xlu0 %v3431, 80
    %v3433 = vpop.permute.xlu0 %3432
    %v3434 = vsel %vm285, %v3433, 0
    %3436 = vmatprep.subr.mxu0 0.0
    %3437 = vmatpush1.msra.mxu0 0.0
    %3438 = vmatprep.subr.mxu0 0.0
    %3439 = vmatpush1.msra.mxu0 0.0
    %3440 = vmatprep.subr.mxu0 0.0
    %3441 = vmatpush1.msra.mxu0 0.0
    %3442 = vmatprep.subr.mxu0 0.0
    %3443 = vmatpush1.msra.mxu0 0.0
    %3444 = vmatprep.subr.mxu0 0.0
    %3445 = vmatpush1.msra.mxu0 0.0
    %3446 = vmatprep.subr.mxu0 0.0
    %3447 = vmatpush1.msra.mxu0 0.0
    %3448 = vmatprep.subr.mxu0 0.0
    %3449 = vmatpush1.msra.mxu0 0.0
    %3450 = vmatprep.subr.mxu0 0.0
    %3451 = vmatpush1.msra.mxu0 0.0
    %3452 = vmatprep.subr.mxu0 0.0
    %3453 = vmatpush1.msra.mxu0 0.0
    %3454 = vmatprep.subr.mxu0 0.0
    %3455 = vmatpush1.msra.mxu0 0.0
    %3456 = vmatprep.subr.mxu0 0.0
    %3457 = vmatpush1.msra.mxu0 0.0
    %3458 = vmatprep.subr.mxu0 0.0
    %3459 = vmatpush1.msra.mxu0 0.0
    %3460 = vmatprep.subr.mxu0 0.0
    %3461 = vmatpush1.msra.mxu0 0.0
    %3462 = vmatprep.subr.mxu0 0.0
    %3463 = vmatpush1.msra.mxu0 0.0
    %3464 = vmatprep.subr.mxu0 0.0
    %3465 = vmatpush1.msra.mxu0 %v2899
    %3466 = vmatprep.subr.mxu0 0.0
    %3467 = vmatpush1.msra.mxu0 %v2898
    %3468 = vmatprep.subr.mxu0 0.0
    %3469 = vmatpush2.msra.mxu0 0.0
    %3470 = vmatprep.subr.mxu0 0.0
    %3471 = vmatpush2.msra.mxu0 0.0
    %3472 = vmatprep.subr.mxu0 0.0
    %3473 = vmatpush2.msra.mxu0 0.0
    %3474 = vmatprep.subr.mxu0 0.0
    %3475 = vmatpush2.msra.mxu0 0.0
    %3476 = vmatprep.subr.mxu0 0.0
    %3477 = vmatpush2.msra.mxu0 0.0
    %3478 = vmatprep.subr.mxu0 0.0
    %3479 = vmatpush2.msra.mxu0 0.0
    %3480 = vmatprep.subr.mxu0 0.0
    %3481 = vmatpush2.msra.mxu0 0.0
    %3482 = vmatprep.subr.mxu0 0.0
    %3483 = vmatpush2.msra.mxu0 0.0
    %3484 = vmatprep.subr.mxu0 0.0
    %3485 = vmatpush2.msra.mxu0 0.0
    %3486 = vmatprep.subr.mxu0 0.0
    %3487 = vmatpush2.msra.mxu0 0.0
    %3488 = vmatprep.subr.mxu0 0.0
    %3489 = vmatpush2.msra.mxu0 0.0
    %3490 = vmatprep.subr.mxu0 0.0
    %3491 = vmatpush2.msra.mxu0 0.0
    %3492 = vmatprep.subr.mxu0 0.0
    %3493 = vmatpush2.msra.mxu0 0.0
    %3494 = vmatprep.subr.mxu0 0.0
    %3495 = vmatpush2.msra.mxu0 0.0
    %3496 = vmatprep.subr.mxu0 0.0
    %3497 = vmatpush2.msra.mxu0 0.0
    %3498 = vmatprep.subr.mxu0 0.0
    %3499 = vmatpush2.msra.mxu0 0.0
    %3500 = vmatprep.mubr.f32.mxu0 0.0
    %3501 = vmatmul.mubr.f32.gmra.mxu0 %v3434
    %v3502 = vpop.f32.mrf.mxu0
    %v3503 = vadd.f32 0.0, %v3502
    %v3504 = vpop.f32.mrf.mxu0
    %3505 = vdwg.mxu0
    %v3507 = vrot.slane %v3503, 4
    %v3509 = vadd.f32 %v2975, %v3507
    %v3510 = vsub.f32 0.0, %v3509
    %v3511 = vmul.f32 %v3510, 1.442695
    %v3512 = vpow.pop %v3511
    %v3513 = vadd.f32 %v3512, 1.0
    %v3514 = vrcp.pop %v3513
    %v3515 = vmul.f32 1.0, %v3514
    %v3516 = vtanh.pop %v3509
    %v3518 = vrot.slane %v3415, 7
    %v3520 = vmul.f32 %v3515, %v3518
    %3522 = vrot.lane.b32.xlu0 %v3516, 96
    %v3523 = vpop.permute.xlu0 %3522
    %v3525 = vmul.f32 %v3515, %v3523
    %3527 = vrot.lane.b32.xlu0 %v3525, 16
    %v3528 = vpop.permute.xlu0 %3527
    %v3530 = vadd.f32 %v3520, %v3528
    %v3531 = vtanh.pop %v3530
    %3533 = vrot.lane.b32.xlu0 %v3531, 32
    %v3534 = vpop.permute.xlu0 %3533
    %v3536 = vmul.f32 %v3515, %v3534
    %vm3537 = vcmp.eq.s32.totalorder %v2979, 4
    %v3538 = vsel %vm3537, 1, 0
    %vm3539 = vcmp.eq.s32.totalorder %v3538, 1
    %v3540 = vlaneseq
    %v3541 = vshrl.u32 %v3540, 7
    %v3542 = vsub.s32 4, %v3541
    %v3543 = vrot.slane %v3536, %v3542
    %v3544 = vsel %vm3539, %v3543, %v3429
    %v3546 = vrot.slane %v3536, 4
    %3547 = vrot.lane.b32.xlu0 %v3546, 80
    %v3548 = vpop.permute.xlu0 %3547
    %v3549 = vsel %vm285, %v3548, 0
    %3551 = vmatprep.subr.mxu0 0.0
    %3552 = vmatpush1.msra.mxu0 0.0
    %3553 = vmatprep.subr.mxu0 0.0
    %3554 = vmatpush1.msra.mxu0 0.0
    %3555 = vmatprep.subr.mxu0 0.0
    %3556 = vmatpush1.msra.mxu0 0.0
    %3557 = vmatprep.subr.mxu0 0.0
    %3558 = vmatpush1.msra.mxu0 0.0
    %3559 = vmatprep.subr.mxu0 0.0
    %3560 = vmatpush1.msra.mxu0 0.0
    %3561 = vmatprep.subr.mxu0 0.0
    %3562 = vmatpush1.msra.mxu0 0.0
    %3563 = vmatprep.subr.mxu0 0.0
    %3564 = vmatpush1.msra.mxu0 0.0
    %3565 = vmatprep.subr.mxu0 0.0
    %3566 = vmatpush1.msra.mxu0 0.0
    %3567 = vmatprep.subr.mxu0 0.0
    %3568 = vmatpush1.msra.mxu0 0.0
    %3569 = vmatprep.subr.mxu0 0.0
    %3570 = vmatpush1.msra.mxu0 0.0
    %3571 = vmatprep.subr.mxu0 0.0
    %3572 = vmatpush1.msra.mxu0 0.0
    %3573 = vmatprep.subr.mxu0 0.0
    %3574 = vmatpush1.msra.mxu0 0.0
    %3575 = vmatprep.subr.mxu0 0.0
    %3576 = vmatpush1.msra.mxu0 0.0
    %3577 = vmatprep.subr.mxu0 0.0
    %3578 = vmatpush1.msra.mxu0 0.0
    %3579 = vmatprep.subr.mxu0 0.0
    %3580 = vmatpush1.msra.mxu0 %v2899
    %3581 = vmatprep.subr.mxu0 0.0
    %3582 = vmatpush1.msra.mxu0 %v2898
    %3583 = vmatprep.subr.mxu0 0.0
    %3584 = vmatpush2.msra.mxu0 0.0
    %3585 = vmatprep.subr.mxu0 0.0
    %3586 = vmatpush2.msra.mxu0 0.0
    %3587 = vmatprep.subr.mxu0 0.0
    %3588 = vmatpush2.msra.mxu0 0.0
    %3589 = vmatprep.subr.mxu0 0.0
    %3590 = vmatpush2.msra.mxu0 0.0
    %3591 = vmatprep.subr.mxu0 0.0
    %3592 = vmatpush2.msra.mxu0 0.0
    %3593 = vmatprep.subr.mxu0 0.0
    %3594 = vmatpush2.msra.mxu0 0.0
    %3595 = vmatprep.subr.mxu0 0.0
    %3596 = vmatpush2.msra.mxu0 0.0
    %3597 = vmatprep.subr.mxu0 0.0
    %3598 = vmatpush2.msra.mxu0 0.0
    %3599 = vmatprep.subr.mxu0 0.0
    %3600 = vmatpush2.msra.mxu0 0.0
    %3601 = vmatprep.subr.mxu0 0.0
    %3602 = vmatpush2.msra.mxu0 0.0
    %3603 = vmatprep.subr.mxu0 0.0
    %3604 = vmatpush2.msra.mxu0 0.0
    %3605 = vmatprep.subr.mxu0 0.0
    %3606 = vmatpush2.msra.mxu0 0.0
    %3607 = vmatprep.subr.mxu0 0.0
    %3608 = vmatpush2.msra.mxu0 0.0
    %3609 = vmatprep.subr.mxu0 0.0
    %3610 = vmatpush2.msra.mxu0 0.0
    %3611 = vmatprep.subr.mxu0 0.0
    %3612 = vmatpush2.msra.mxu0 0.0
    %3613 = vmatprep.subr.mxu0 0.0
    %3614 = vmatpush2.msra.mxu0 0.0
    %3615 = vmatprep.mubr.f32.mxu0 0.0
    %3616 = vmatmul.mubr.f32.gmra.mxu0 %v3549
    %v3617 = vpop.f32.mrf.mxu0
    %v3618 = vadd.f32 0.0, %v3617
    %v3619 = vpop.f32.mrf.mxu0
    %3620 = vdwg.mxu0
    %v3622 = vrot.slane %v3618, 3
    %v3624 = vadd.f32 %v2975, %v3622
    %v3625 = vsub.f32 0.0, %v3624
    %v3626 = vmul.f32 %v3625, 1.442695
    %v3627 = vpow.pop %v3626
    %v3628 = vadd.f32 %v3627, 1.0
    %v3629 = vrcp.pop %v3628
    %v3630 = vmul.f32 1.0, %v3629
    %v3631 = vtanh.pop %v3624
    %v3633 = vrot.slane %v3530, 7
    %v3635 = vmul.f32 %v3630, %v3633
    %3637 = vrot.lane.b32.xlu0 %v3631, 96
    %v3638 = vpop.permute.xlu0 %3637
    %v3640 = vmul.f32 %v3630, %v3638
    %3642 = vrot.lane.b32.xlu0 %v3640, 16
    %v3643 = vpop.permute.xlu0 %3642
    %v3645 = vadd.f32 %v3635, %v3643
    %v3646 = vtanh.pop %v3645
    %3648 = vrot.lane.b32.xlu0 %v3646, 32
    %v3649 = vpop.permute.xlu0 %3648
    %v3651 = vmul.f32 %v3630, %v3649
    %vm3652 = vcmp.eq.s32.totalorder %v2979, 5
    %v3653 = vsel %vm3652, 1, 0
    %vm3654 = vcmp.eq.s32.totalorder %v3653, 1
    %v3655 = vlaneseq
    %v3656 = vshrl.u32 %v3655, 7
    %v3657 = vsub.s32 5, %v3656
    %v3658 = vrot.slane %v3651, %v3657
    %v3659 = vsel %vm3654, %v3658, %v3544
    %v3661 = vrot.slane %v3651, 5
    %3662 = vrot.lane.b32.xlu0 %v3661, 80
    %v3663 = vpop.permute.xlu0 %3662
    %v3664 = vsel %vm285, %v3663, 0
    %3666 = vmatprep.subr.mxu0 0.0
    %3667 = vmatpush1.msra.mxu0 0.0
    %3668 = vmatprep.subr.mxu0 0.0
    %3669 = vmatpush1.msra.mxu0 0.0
    %3670 = vmatprep.subr.mxu0 0.0
    %3671 = vmatpush1.msra.mxu0 0.0
    %3672 = vmatprep.subr.mxu0 0.0
    %3673 = vmatpush1.msra.mxu0 0.0
    %3674 = vmatprep.subr.mxu0 0.0
    %3675 = vmatpush1.msra.mxu0 0.0
    %3676 = vmatprep.subr.mxu0 0.0
    %3677 = vmatpush1.msra.mxu0 0.0
    %3678 = vmatprep.subr.mxu0 0.0
    %3679 = vmatpush1.msra.mxu0 0.0
    %3680 = vmatprep.subr.mxu0 0.0
    %3681 = vmatpush1.msra.mxu0 0.0
    %3682 = vmatprep.subr.mxu0 0.0
    %3683 = vmatpush1.msra.mxu0 0.0
    %3684 = vmatprep.subr.mxu0 0.0
    %3685 = vmatpush1.msra.mxu0 0.0
    %3686 = vmatprep.subr.mxu0 0.0
    %3687 = vmatpush1.msra.mxu0 0.0
    %3688 = vmatprep.subr.mxu0 0.0
    %3689 = vmatpush1.msra.mxu0 0.0
    %3690 = vmatprep.subr.mxu0 0.0
    %3691 = vmatpush1.msra.mxu0 0.0
    %3692 = vmatprep.subr.mxu0 0.0
    %3693 = vmatpush1.msra.mxu0 0.0
    %3694 = vmatprep.subr.mxu0 0.0
    %3695 = vmatpush1.msra.mxu0 %v2899
    %3696 = vmatprep.subr.mxu0 0.0
    %3697 = vmatpush1.msra.mxu0 %v2898
    %3698 = vmatprep.subr.mxu0 0.0
    %3699 = vmatpush2.msra.mxu0 0.0
    %3700 = vmatprep.subr.mxu0 0.0
    %3701 = vmatpush2.msra.mxu0 0.0
    %3702 = vmatprep.subr.mxu0 0.0
    %3703 = vmatpush2.msra.mxu0 0.0
    %3704 = vmatprep.subr.mxu0 0.0
    %3705 = vmatpush2.msra.mxu0 0.0
    %3706 = vmatprep.subr.mxu0 0.0
    %3707 = vmatpush2.msra.mxu0 0.0
    %3708 = vmatprep.subr.mxu0 0.0
    %3709 = vmatpush2.msra.mxu0 0.0
    %3710 = vmatprep.subr.mxu0 0.0
    %3711 = vmatpush2.msra.mxu0 0.0
    %3712 = vmatprep.subr.mxu0 0.0
    %3713 = vmatpush2.msra.mxu0 0.0
    %3714 = vmatprep.subr.mxu0 0.0
    %3715 = vmatpush2.msra.mxu0 0.0
    %3716 = vmatprep.subr.mxu0 0.0
    %3717 = vmatpush2.msra.mxu0 0.0
    %3718 = vmatprep.subr.mxu0 0.0
    %3719 = vmatpush2.msra.mxu0 0.0
    %3720 = vmatprep.subr.mxu0 0.0
    %3721 = vmatpush2.msra.mxu0 0.0
    %3722 = vmatprep.subr.mxu0 0.0
    %3723 = vmatpush2.msra.mxu0 0.0
    %3724 = vmatprep.subr.mxu0 0.0
    %3725 = vmatpush2.msra.mxu0 0.0
    %3726 = vmatprep.subr.mxu0 0.0
    %3727 = vmatpush2.msra.mxu0 0.0
    %3728 = vmatprep.subr.mxu0 0.0
    %3729 = vmatpush2.msra.mxu0 0.0
    %3730 = vmatprep.mubr.f32.mxu0 0.0
    %3731 = vmatmul.mubr.f32.gmra.mxu0 %v3664
    %v3732 = vpop.f32.mrf.mxu0
    %v3733 = vadd.f32 0.0, %v3732
    %v3734 = vpop.f32.mrf.mxu0
    %3735 = vdwg.mxu0
    %v3737 = vrot.slane %v3733, 2
    %v3739 = vadd.f32 %v2975, %v3737
    %v3740 = vsub.f32 0.0, %v3739
    %v3741 = vmul.f32 %v3740, 1.442695
    %v3742 = vpow.pop %v3741
    %v3743 = vadd.f32 %v3742, 1.0
    %v3744 = vrcp.pop %v3743
    %v3745 = vmul.f32 1.0, %v3744
    %v3746 = vtanh.pop %v3739
    %v3748 = vrot.slane %v3645, 7
    %v3750 = vmul.f32 %v3745, %v3748
    %3752 = vrot.lane.b32.xlu0 %v3746, 96
    %v3753 = vpop.permute.xlu0 %3752
    %v3755 = vmul.f32 %v3745, %v3753
    %3757 = vrot.lane.b32.xlu0 %v3755, 16
    %v3758 = vpop.permute.xlu0 %3757
    %v3760 = vadd.f32 %v3750, %v3758
    %v3761 = vtanh.pop %v3760
    %3763 = vrot.lane.b32.xlu0 %v3761, 32
    %v3764 = vpop.permute.xlu0 %3763
    %v3766 = vmul.f32 %v3745, %v3764
    %vm3767 = vcmp.eq.s32.totalorder %v2979, 6
    %v3768 = vsel %vm3767, 1, 0
    %vm3769 = vcmp.eq.s32.totalorder %v3768, 1
    %v3770 = vlaneseq
    %v3771 = vshrl.u32 %v3770, 7
    %v3772 = vsub.s32 6, %v3771
    %v3773 = vrot.slane %v3766, %v3772
    %v3774 = vsel %vm3769, %v3773, %v3659
    %v3776 = vrot.slane %v3766, 6
    %3777 = vrot.lane.b32.xlu0 %v3776, 80
    %v3778 = vpop.permute.xlu0 %3777
    %v3779 = vsel %vm285, %v3778, 0
    %3781 = vmatprep.subr.mxu0 0.0
    %3782 = vmatpush1.msra.mxu0 0.0
    %3783 = vmatprep.subr.mxu0 0.0
    %3784 = vmatpush1.msra.mxu0 0.0
    %3785 = vmatprep.subr.mxu0 0.0
    %3786 = vmatpush1.msra.mxu0 0.0
    %3787 = vmatprep.subr.mxu0 0.0
    %3788 = vmatpush1.msra.mxu0 0.0
    %3789 = vmatprep.subr.mxu0 0.0
    %3790 = vmatpush1.msra.mxu0 0.0
    %3791 = vmatprep.subr.mxu0 0.0
    %3792 = vmatpush1.msra.mxu0 0.0
    %3793 = vmatprep.subr.mxu0 0.0
    %3794 = vmatpush1.msra.mxu0 0.0
    %3795 = vmatprep.subr.mxu0 0.0
    %3796 = vmatpush1.msra.mxu0 0.0
    %3797 = vmatprep.subr.mxu0 0.0
    %3798 = vmatpush1.msra.mxu0 0.0
    %3799 = vmatprep.subr.mxu0 0.0
    %3800 = vmatpush1.msra.mxu0 0.0
    %3801 = vmatprep.subr.mxu0 0.0
    %3802 = vmatpush1.msra.mxu0 0.0
    %3803 = vmatprep.subr.mxu0 0.0
    %3804 = vmatpush1.msra.mxu0 0.0
    %3805 = vmatprep.subr.mxu0 0.0
    %3806 = vmatpush1.msra.mxu0 0.0
    %3807 = vmatprep.subr.mxu0 0.0
    %3808 = vmatpush1.msra.mxu0 0.0
    %3809 = vmatprep.subr.mxu0 0.0
    %3810 = vmatpush1.msra.mxu0 %v2899
    %3811 = vmatprep.subr.mxu0 0.0
    %3812 = vmatpush1.msra.mxu0 %v2898
    %3813 = vmatprep.subr.mxu0 0.0
    %3814 = vmatpush2.msra.mxu0 0.0
    %3815 = vmatprep.subr.mxu0 0.0
    %3816 = vmatpush2.msra.mxu0 0.0
    %3817 = vmatprep.subr.mxu0 0.0
    %3818 = vmatpush2.msra.mxu0 0.0
    %3819 = vmatprep.subr.mxu0 0.0
    %3820 = vmatpush2.msra.mxu0 0.0
    %3821 = vmatprep.subr.mxu0 0.0
    %3822 = vmatpush2.msra.mxu0 0.0
    %3823 = vmatprep.subr.mxu0 0.0
    %3824 = vmatpush2.msra.mxu0 0.0
    %3825 = vmatprep.subr.mxu0 0.0
    %3826 = vmatpush2.msra.mxu0 0.0
    %3827 = vmatprep.subr.mxu0 0.0
    %3828 = vmatpush2.msra.mxu0 0.0
    %3829 = vmatprep.subr.mxu0 0.0
    %3830 = vmatpush2.msra.mxu0 0.0
    %3831 = vmatprep.subr.mxu0 0.0
    %3832 = vmatpush2.msra.mxu0 0.0
    %3833 = vmatprep.subr.mxu0 0.0
    %3834 = vmatpush2.msra.mxu0 0.0
    %3835 = vmatprep.subr.mxu0 0.0
    %3836 = vmatpush2.msra.mxu0 0.0
    %3837 = vmatprep.subr.mxu0 0.0
    %3838 = vmatpush2.msra.mxu0 0.0
    %3839 = vmatprep.subr.mxu0 0.0
    %3840 = vmatpush2.msra.mxu0 0.0
    %3841 = vmatprep.subr.mxu0 0.0
    %3842 = vmatpush2.msra.mxu0 0.0
    %3843 = vmatprep.subr.mxu0 0.0
    %3844 = vmatpush2.msra.mxu0 0.0
    %3845 = vmatprep.mubr.f32.mxu0 0.0
    %3846 = vmatmul.mubr.f32.gmra.mxu0 %v3779
    %v3847 = vpop.f32.mrf.mxu0
    %v3848 = vadd.f32 0.0, %v3847
    %v3849 = vpop.f32.mrf.mxu0
    %3850 = vdwg.mxu0
    %v3852 = vrot.slane %v3848, 1
    %v3854 = vadd.f32 %v2975, %v3852
    %v3855 = vsub.f32 0.0, %v3854
    %v3856 = vmul.f32 %v3855, 1.442695
    %v3857 = vpow.pop %v3856
    %v3858 = vadd.f32 %v3857, 1.0
    %v3859 = vrcp.pop %v3858
    %v3860 = vmul.f32 1.0, %v3859
    %v3861 = vtanh.pop %v3854
    %v3863 = vrot.slane %v3760, 7
    %v3865 = vmul.f32 %v3860, %v3863
    %3867 = vrot.lane.b32.xlu0 %v3861, 96
    %v3868 = vpop.permute.xlu0 %3867
    %v3870 = vmul.f32 %v3860, %v3868
    %3872 = vrot.lane.b32.xlu0 %v3870, 16
    %v3873 = vpop.permute.xlu0 %3872
    %v3875 = vadd.f32 %v3865, %v3873
    %v3876 = vtanh.pop %v3875
    %3878 = vrot.lane.b32.xlu0 %v3876, 32
    %v3879 = vpop.permute.xlu0 %3878
    %v3881 = vmul.f32 %v3860, %v3879
    %vm3882 = vcmp.eq.s32.totalorder %v2979, 7
    %v3883 = vsel %vm3882, 1, 0
    %vm3884 = vcmp.eq.s32.totalorder %v3883, 1
    %v3885 = vlaneseq
    %v3886 = vshrl.u32 %v3885, 7
    %v3887 = vsub.s32 7, %v3886
    %v3888 = vrot.slane %v3881, %v3887
    %v3889 = vsel %vm3884, %v3888, %v3774
    %v3890 = vld [vmem:[#allocation2 + $0x298] sm:$0xff]
    %v3891 = vld [vmem:[#allocation2 + $0x2a0] sm:$0xff]
    %v3892 = vld [vmem:[#allocation2 + $0x2a8] sm:$0xff]
    %v3893 = vld [vmem:[#allocation2 + $0x2b0] sm:$0xff]
    %v3894 = vld [vmem:[#allocation2 + $0x2b8] sm:$0xff]
    %v3895 = vld [vmem:[#allocation2 + $0x2c0] sm:$0xff]
    %v3896 = vld [vmem:[#allocation2 + $0x2c8] sm:$0x1]
    %v3897 = vlaneseq
    %v3898 = vshrl.u32 %v3897, 7
    %v3899 = vsub.s32 0, %v3898
    %v3900 = vrot.slane %v3896, %v3899
    %3901 = vmatprep.subr.mxu0 0.0
    %3902 = vmatpush1.msra.mxu0 0.0
    %3903 = vmatprep.subr.mxu0 0.0
    %3904 = vmatpush1.msra.mxu0 0.0
    %3905 = vmatprep.subr.mxu0 0.0
    %3906 = vmatpush1.msra.mxu0 0.0
    %3907 = vmatprep.subr.mxu0 0.0
    %3908 = vmatpush1.msra.mxu0 0.0
    %3909 = vmatprep.subr.mxu0 0.0
    %3910 = vmatpush1.msra.mxu0 0.0
    %3911 = vmatprep.subr.mxu0 0.0
    %3912 = vmatpush1.msra.mxu0 0.0
    %3913 = vmatprep.subr.mxu0 0.0
    %3914 = vmatpush1.msra.mxu0 0.0
    %3915 = vmatprep.subr.mxu0 0.0
    %3916 = vmatpush1.msra.mxu0 0.0
    %3917 = vmatprep.subr.mxu0 0.0
    %3918 = vmatpush1.msra.mxu0 0.0
    %3919 = vmatprep.subr.mxu0 0.0
    %3920 = vmatpush1.msra.mxu0 0.0
    %3921 = vmatprep.subr.mxu0 0.0
    %3922 = vmatpush1.msra.mxu0 0.0
    %3923 = vmatprep.subr.mxu0 0.0
    %3924 = vmatpush1.msra.mxu0 0.0
    %3925 = vmatprep.subr.mxu0 0.0
    %3926 = vmatpush1.msra.mxu0 %v3893
    %3927 = vmatprep.subr.mxu0 0.0
    %3928 = vmatpush1.msra.mxu0 %v3892
    %3929 = vmatprep.subr.mxu0 0.0
    %3930 = vmatpush1.msra.mxu0 %v3891
    %3931 = vmatprep.subr.mxu0 0.0
    %3932 = vmatpush1.msra.mxu0 %v3890
    %3933 = vmatprep.subr.mxu0 0.0
    %3934 = vmatpush2.msra.mxu0 0.0
    %3935 = vmatprep.subr.mxu0 0.0
    %3936 = vmatpush2.msra.mxu0 0.0
    %3937 = vmatprep.subr.mxu0 0.0
    %3938 = vmatpush2.msra.mxu0 0.0
    %3939 = vmatprep.subr.mxu0 0.0
    %3940 = vmatpush2.msra.mxu0 0.0
    %3941 = vmatprep.subr.mxu0 0.0
    %3942 = vmatpush2.msra.mxu0 0.0
    %3943 = vmatprep.subr.mxu0 0.0
    %3944 = vmatpush2.msra.mxu0 0.0
    %3945 = vmatprep.subr.mxu0 0.0
    %3946 = vmatpush2.msra.mxu0 0.0
    %3947 = vmatprep.subr.mxu0 0.0
    %3948 = vmatpush2.msra.mxu0 0.0
    %3949 = vmatprep.subr.mxu0 0.0
    %3950 = vmatpush2.msra.mxu0 0.0
    %3951 = vmatprep.subr.mxu0 0.0
    %3952 = vmatpush2.msra.mxu0 0.0
    %3953 = vmatprep.subr.mxu0 0.0
    %3954 = vmatpush2.msra.mxu0 0.0
    %3955 = vmatprep.subr.mxu0 0.0
    %3956 = vmatpush2.msra.mxu0 0.0
    %3957 = vmatprep.subr.mxu0 0.0
    %3958 = vmatpush2.msra.mxu0 0.0
    %3959 = vmatprep.subr.mxu0 0.0
    %3960 = vmatpush2.msra.mxu0 0.0
    %3961 = vmatprep.subr.mxu0 0.0
    %3962 = vmatpush2.msra.mxu0 0.0
    %3963 = vmatprep.subr.mxu0 0.0
    %3964 = vmatpush2.msra.mxu0 0.0
    %3965 = vmatprep.mubr.f32.mxu0 0.0
    %3966 = vmatmul.mubr.f32.gmra.mxu0 %v2906
    %v3967 = vpop.f32.mrf.mxu0
    %v3968 = vadd.f32 %v3900, %v3967
    %v3969 = vpop.f32.mrf.mxu0
    %3970 = vdwg.mxu0
    %3971 = vmatprep.subr.mxu0 0.0
    %3972 = vmatpush1.msra.mxu0 0.0
    %3973 = vmatprep.subr.mxu0 0.0
    %3974 = vmatpush1.msra.mxu0 0.0
    %3975 = vmatprep.subr.mxu0 0.0
    %3976 = vmatpush1.msra.mxu0 0.0
    %3977 = vmatprep.subr.mxu0 0.0
    %3978 = vmatpush1.msra.mxu0 0.0
    %3979 = vmatprep.subr.mxu0 0.0
    %3980 = vmatpush1.msra.mxu0 0.0
    %3981 = vmatprep.subr.mxu0 0.0
    %3982 = vmatpush1.msra.mxu0 0.0
    %3983 = vmatprep.subr.mxu0 0.0
    %3984 = vmatpush1.msra.mxu0 0.0
    %3985 = vmatprep.subr.mxu0 0.0
    %3986 = vmatpush1.msra.mxu0 0.0
    %3987 = vmatprep.subr.mxu0 0.0
    %3988 = vmatpush1.msra.mxu0 0.0
    %3989 = vmatprep.subr.mxu0 0.0
    %3990 = vmatpush1.msra.mxu0 0.0
    %3991 = vmatprep.subr.mxu0 0.0
    %3992 = vmatpush1.msra.mxu0 0.0
    %3993 = vmatprep.subr.mxu0 0.0
    %3994 = vmatpush1.msra.mxu0 0.0
    %3995 = vmatprep.subr.mxu0 0.0
    %3996 = vmatpush1.msra.mxu0 0.0
    %3997 = vmatprep.subr.mxu0 0.0
    %3998 = vmatpush1.msra.mxu0 0.0
    %3999 = vmatprep.subr.mxu0 0.0
    %4000 = vmatpush1.msra.mxu0 %v3895
    %4001 = vmatprep.subr.mxu0 0.0
    %4002 = vmatpush1.msra.mxu0 %v3894
    %4003 = vmatprep.subr.mxu0 0.0
    %4004 = vmatpush2.msra.mxu0 0.0
    %4005 = vmatprep.subr.mxu0 0.0
    %4006 = vmatpush2.msra.mxu0 0.0
    %4007 = vmatprep.subr.mxu0 0.0
    %4008 = vmatpush2.msra.mxu0 0.0
    %4009 = vmatprep.subr.mxu0 0.0
    %4010 = vmatpush2.msra.mxu0 0.0
    %4011 = vmatprep.subr.mxu0 0.0
    %4012 = vmatpush2.msra.mxu0 0.0
    %4013 = vmatprep.subr.mxu0 0.0
    %4014 = vmatpush2.msra.mxu0 0.0
    %4015 = vmatprep.subr.mxu0 0.0
    %4016 = vmatpush2.msra.mxu0 0.0
    %4017 = vmatprep.subr.mxu0 0.0
    %4018 = vmatpush2.msra.mxu0 0.0
    %4019 = vmatprep.subr.mxu0 0.0
    %4020 = vmatpush2.msra.mxu0 0.0
    %4021 = vmatprep.subr.mxu0 0.0
    %4022 = vmatpush2.msra.mxu0 0.0
    %4023 = vmatprep.subr.mxu0 0.0
    %4024 = vmatpush2.msra.mxu0 0.0
    %4025 = vmatprep.subr.mxu0 0.0
    %4026 = vmatpush2.msra.mxu0 0.0
    %4027 = vmatprep.subr.mxu0 0.0
    %4028 = vmatpush2.msra.mxu0 0.0
    %4029 = vmatprep.subr.mxu0 0.0
    %4030 = vmatpush2.msra.mxu0 0.0
    %4031 = vmatprep.subr.mxu0 0.0
    %4032 = vmatpush2.msra.mxu0 0.0
    %4033 = vmatprep.subr.mxu0 0.0
    %4034 = vmatpush2.msra.mxu0 0.0
    %4035 = vmatprep.mubr.f32.mxu0 0.0
    %4036 = vmatmul.mubr.f32.gmra.mxu0 %v2981
    %v4037 = vpop.f32.mrf.mxu0
    %v4038 = vadd.f32 0.0, %v4037
    %v4039 = vpop.f32.mrf.mxu0
    %4040 = vdwg.mxu0
    %v4042 = vrot.slane %v4038, 1
    %v4044 = vadd.f32 %v3968, %v4042
    %v4045 = vsub.f32 0.0, %v4044
    %v4046 = vmul.f32 %v4045, 1.442695
    %v4047 = vpow.pop %v4046
    %v4048 = vadd.f32 %v4047, 1.0
    %v4049 = vrcp.pop %v4048
    %v4050 = vmul.f32 1.0, %v4049
    %v4051 = vtanh.pop %v4044
    %v4052 = vmul.f32 %v4050, 0.0
    %4054 = vrot.lane.b32.xlu0 %v4051, 96
    %v4055 = vpop.permute.xlu0 %4054
    %v4057 = vmul.f32 %v4050, %v4055
    %4059 = vrot.lane.b32.xlu0 %v4057, 16
    %v4060 = vpop.permute.xlu0 %4059
    %v4062 = vadd.f32 %v4052, %v4060
    %v4063 = vtanh.pop %v4062
    %4065 = vrot.lane.b32.xlu0 %v4063, 32
    %v4066 = vpop.permute.xlu0 %4065
    %v4068 = vmul.f32 %v4050, %v4066
    %v4069 = vlaneseq
    %v4070 = vshrl.u32 %v4069, 7
    %v4071 = vsub.s32 7, %v4070
    %v4072 = vrot.slane %v4068, %v4071
    %v4073 = vsel %vm3884, %v4072, 0.0
    %v4075 = vrot.slane %v4068, 7
    %4076 = vrot.lane.b32.xlu0 %v4075, 80
    %v4077 = vpop.permute.xlu0 %4076
    %v4078 = vsel %vm285, %v4077, 0
    %4080 = vmatprep.subr.mxu0 0.0
    %4081 = vmatpush1.msra.mxu0 0.0
    %4082 = vmatprep.subr.mxu0 0.0
    %4083 = vmatpush1.msra.mxu0 0.0
    %4084 = vmatprep.subr.mxu0 0.0
    %4085 = vmatpush1.msra.mxu0 0.0
    %4086 = vmatprep.subr.mxu0 0.0
    %4087 = vmatpush1.msra.mxu0 0.0
    %4088 = vmatprep.subr.mxu0 0.0
    %4089 = vmatpush1.msra.mxu0 0.0
    %4090 = vmatprep.subr.mxu0 0.0
    %4091 = vmatpush1.msra.mxu0 0.0
    %4092 = vmatprep.subr.mxu0 0.0
    %4093 = vmatpush1.msra.mxu0 0.0
    %4094 = vmatprep.subr.mxu0 0.0
    %4095 = vmatpush1.msra.mxu0 0.0
    %4096 = vmatprep.subr.mxu0 0.0
    %4097 = vmatpush1.msra.mxu0 0.0
    %4098 = vmatprep.subr.mxu0 0.0
    %4099 = vmatpush1.msra.mxu0 0.0
    %4100 = vmatprep.subr.mxu0 0.0
    %4101 = vmatpush1.msra.mxu0 0.0
    %4102 = vmatprep.subr.mxu0 0.0
    %4103 = vmatpush1.msra.mxu0 0.0
    %4104 = vmatprep.subr.mxu0 0.0
    %4105 = vmatpush1.msra.mxu0 0.0
    %4106 = vmatprep.subr.mxu0 0.0
    %4107 = vmatpush1.msra.mxu0 0.0
    %4108 = vmatprep.subr.mxu0 0.0
    %4109 = vmatpush1.msra.mxu0 %v3895
    %4110 = vmatprep.subr.mxu0 0.0
    %4111 = vmatpush1.msra.mxu0 %v3894
    %4112 = vmatprep.subr.mxu0 0.0
    %4113 = vmatpush2.msra.mxu0 0.0
    %4114 = vmatprep.subr.mxu0 0.0
    %4115 = vmatpush2.msra.mxu0 0.0
    %4116 = vmatprep.subr.mxu0 0.0
    %4117 = vmatpush2.msra.mxu0 0.0
    %4118 = vmatprep.subr.mxu0 0.0
    %4119 = vmatpush2.msra.mxu0 0.0
    %4120 = vmatprep.subr.mxu0 0.0
    %4121 = vmatpush2.msra.mxu0 0.0
    %4122 = vmatprep.subr.mxu0 0.0
    %4123 = vmatpush2.msra.mxu0 0.0
    %4124 = vmatprep.subr.mxu0 0.0
    %4125 = vmatpush2.msra.mxu0 0.0
    %4126 = vmatprep.subr.mxu0 0.0
    %4127 = vmatpush2.msra.mxu0 0.0
    %4128 = vmatprep.subr.mxu0 0.0
    %4129 = vmatpush2.msra.mxu0 0.0
    %4130 = vmatprep.subr.mxu0 0.0
    %4131 = vmatpush2.msra.mxu0 0.0
    %4132 = vmatprep.subr.mxu0 0.0
    %4133 = vmatpush2.msra.mxu0 0.0
    %4134 = vmatprep.subr.mxu0 0.0
    %4135 = vmatpush2.msra.mxu0 0.0
    %4136 = vmatprep.subr.mxu0 0.0
    %4137 = vmatpush2.msra.mxu0 0.0
    %4138 = vmatprep.subr.mxu0 0.0
    %4139 = vmatpush2.msra.mxu0 0.0
    %4140 = vmatprep.subr.mxu0 0.0
    %4141 = vmatpush2.msra.mxu0 0.0
    %4142 = vmatprep.subr.mxu0 0.0
    %4143 = vmatpush2.msra.mxu0 0.0
    %4144 = vmatprep.mubr.f32.mxu0 0.0
    %4145 = vmatmul.mubr.f32.gmra.mxu0 %v4078
    %v4146 = vpop.f32.mrf.mxu0
    %v4147 = vadd.f32 0.0, %v4146
    %v4148 = vpop.f32.mrf.mxu0
    %4149 = vdwg.mxu0
    %v4151 = vrot.slane %v4147, 2
    %v4153 = vadd.f32 %v3968, %v4151
    %v4154 = vsub.f32 0.0, %v4153
    %v4155 = vmul.f32 %v4154, 1.442695
    %v4156 = vpow.pop %v4155
    %v4157 = vadd.f32 %v4156, 1.0
    %v4158 = vrcp.pop %v4157
    %v4159 = vmul.f32 1.0, %v4158
    %v4160 = vtanh.pop %v4153
    %v4162 = vrot.slane %v4062, 1
    %v4164 = vmul.f32 %v4159, %v4162
    %4166 = vrot.lane.b32.xlu0 %v4160, 96
    %v4167 = vpop.permute.xlu0 %4166
    %v4169 = vmul.f32 %v4159, %v4167
    %4171 = vrot.lane.b32.xlu0 %v4169, 16
    %v4172 = vpop.permute.xlu0 %4171
    %v4174 = vadd.f32 %v4164, %v4172
    %v4175 = vtanh.pop %v4174
    %4177 = vrot.lane.b32.xlu0 %v4175, 32
    %v4178 = vpop.permute.xlu0 %4177
    %v4180 = vmul.f32 %v4159, %v4178
    %v4181 = vlaneseq
    %v4182 = vshrl.u32 %v4181, 7
    %v4183 = vsub.s32 6, %v4182
    %v4184 = vrot.slane %v4180, %v4183
    %v4185 = vsel %vm3769, %v4184, %v4073
    %v4187 = vrot.slane %v4180, 6
    %4188 = vrot.lane.b32.xlu0 %v4187, 80
    %v4189 = vpop.permute.xlu0 %4188
    %v4190 = vsel %vm285, %v4189, 0
    %4192 = vmatprep.subr.mxu0 0.0
    %4193 = vmatpush1.msra.mxu0 0.0
    %4194 = vmatprep.subr.mxu0 0.0
    %4195 = vmatpush1.msra.mxu0 0.0
    %4196 = vmatprep.subr.mxu0 0.0
    %4197 = vmatpush1.msra.mxu0 0.0
    %4198 = vmatprep.subr.mxu0 0.0
    %4199 = vmatpush1.msra.mxu0 0.0
    %4200 = vmatprep.subr.mxu0 0.0
    %4201 = vmatpush1.msra.mxu0 0.0
    %4202 = vmatprep.subr.mxu0 0.0
    %4203 = vmatpush1.msra.mxu0 0.0
    %4204 = vmatprep.subr.mxu0 0.0
    %4205 = vmatpush1.msra.mxu0 0.0
    %4206 = vmatprep.subr.mxu0 0.0
    %4207 = vmatpush1.msra.mxu0 0.0
    %4208 = vmatprep.subr.mxu0 0.0
    %4209 = vmatpush1.msra.mxu0 0.0
    %4210 = vmatprep.subr.mxu0 0.0
    %4211 = vmatpush1.msra.mxu0 0.0
    %4212 = vmatprep.subr.mxu0 0.0
    %4213 = vmatpush1.msra.mxu0 0.0
    %4214 = vmatprep.subr.mxu0 0.0
    %4215 = vmatpush1.msra.mxu0 0.0
    %4216 = vmatprep.subr.mxu0 0.0
    %4217 = vmatpush1.msra.mxu0 0.0
    %4218 = vmatprep.subr.mxu0 0.0
    %4219 = vmatpush1.msra.mxu0 0.0
    %4220 = vmatprep.subr.mxu0 0.0
    %4221 = vmatpush1.msra.mxu0 %v3895
    %4222 = vmatprep.subr.mxu0 0.0
    %4223 = vmatpush1.msra.mxu0 %v3894
    %4224 = vmatprep.subr.mxu0 0.0
    %4225 = vmatpush2.msra.mxu0 0.0
    %4226 = vmatprep.subr.mxu0 0.0
    %4227 = vmatpush2.msra.mxu0 0.0
    %4228 = vmatprep.subr.mxu0 0.0
    %4229 = vmatpush2.msra.mxu0 0.0
    %4230 = vmatprep.subr.mxu0 0.0
    %4231 = vmatpush2.msra.mxu0 0.0
    %4232 = vmatprep.subr.mxu0 0.0
    %4233 = vmatpush2.msra.mxu0 0.0
    %4234 = vmatprep.subr.mxu0 0.0
    %4235 = vmatpush2.msra.mxu0 0.0
    %4236 = vmatprep.subr.mxu0 0.0
    %4237 = vmatpush2.msra.mxu0 0.0
    %4238 = vmatprep.subr.mxu0 0.0
    %4239 = vmatpush2.msra.mxu0 0.0
    %4240 = vmatprep.subr.mxu0 0.0
    %4241 = vmatpush2.msra.mxu0 0.0
    %4242 = vmatprep.subr.mxu0 0.0
    %4243 = vmatpush2.msra.mxu0 0.0
    %4244 = vmatprep.subr.mxu0 0.0
    %4245 = vmatpush2.msra.mxu0 0.0
    %4246 = vmatprep.subr.mxu0 0.0
    %4247 = vmatpush2.msra.mxu0 0.0
    %4248 = vmatprep.subr.mxu0 0.0
    %4249 = vmatpush2.msra.mxu0 0.0
    %4250 = vmatprep.subr.mxu0 0.0
    %4251 = vmatpush2.msra.mxu0 0.0
    %4252 = vmatprep.subr.mxu0 0.0
    %4253 = vmatpush2.msra.mxu0 0.0
    %4254 = vmatprep.subr.mxu0 0.0
    %4255 = vmatpush2.msra.mxu0 0.0
    %4256 = vmatprep.mubr.f32.mxu0 0.0
    %4257 = vmatmul.mubr.f32.gmra.mxu0 %v4190
    %v4258 = vpop.f32.mrf.mxu0
    %v4259 = vadd.f32 0.0, %v4258
    %v4260 = vpop.f32.mrf.mxu0
    %4261 = vdwg.mxu0
    %v4263 = vrot.slane %v4259, 3
    %v4265 = vadd.f32 %v3968, %v4263
    %v4266 = vsub.f32 0.0, %v4265
    %v4267 = vmul.f32 %v4266, 1.442695
    %v4268 = vpow.pop %v4267
    %v4269 = vadd.f32 %v4268, 1.0
    %v4270 = vrcp.pop %v4269
    %v4271 = vmul.f32 1.0, %v4270
    %v4272 = vtanh.pop %v4265
    %v4274 = vrot.slane %v4174, 1
    %v4276 = vmul.f32 %v4271, %v4274
    %4278 = vrot.lane.b32.xlu0 %v4272, 96
    %v4279 = vpop.permute.xlu0 %4278
    %v4281 = vmul.f32 %v4271, %v4279
    %4283 = vrot.lane.b32.xlu0 %v4281, 16
    %v4284 = vpop.permute.xlu0 %4283
    %v4286 = vadd.f32 %v4276, %v4284
    %v4287 = vtanh.pop %v4286
    %4289 = vrot.lane.b32.xlu0 %v4287, 32
    %v4290 = vpop.permute.xlu0 %4289
    %v4292 = vmul.f32 %v4271, %v4290
    %v4293 = vlaneseq
    %v4294 = vshrl.u32 %v4293, 7
    %v4295 = vsub.s32 5, %v4294
    %v4296 = vrot.slane %v4292, %v4295
    %v4297 = vsel %vm3654, %v4296, %v4185
    %v4299 = vrot.slane %v4292, 5
    %4300 = vrot.lane.b32.xlu0 %v4299, 80
    %v4301 = vpop.permute.xlu0 %4300
    %v4302 = vsel %vm285, %v4301, 0
    %4304 = vmatprep.subr.mxu0 0.0
    %4305 = vmatpush1.msra.mxu0 0.0
    %4306 = vmatprep.subr.mxu0 0.0
    %4307 = vmatpush1.msra.mxu0 0.0
    %4308 = vmatprep.subr.mxu0 0.0
    %4309 = vmatpush1.msra.mxu0 0.0
    %4310 = vmatprep.subr.mxu0 0.0
    %4311 = vmatpush1.msra.mxu0 0.0
    %4312 = vmatprep.subr.mxu0 0.0
    %4313 = vmatpush1.msra.mxu0 0.0
    %4314 = vmatprep.subr.mxu0 0.0
    %4315 = vmatpush1.msra.mxu0 0.0
    %4316 = vmatprep.subr.mxu0 0.0
    %4317 = vmatpush1.msra.mxu0 0.0
    %4318 = vmatprep.subr.mxu0 0.0
    %4319 = vmatpush1.msra.mxu0 0.0
    %4320 = vmatprep.subr.mxu0 0.0
    %4321 = vmatpush1.msra.mxu0 0.0
    %4322 = vmatprep.subr.mxu0 0.0
    %4323 = vmatpush1.msra.mxu0 0.0
    %4324 = vmatprep.subr.mxu0 0.0
    %4325 = vmatpush1.msra.mxu0 0.0
    %4326 = vmatprep.subr.mxu0 0.0
    %4327 = vmatpush1.msra.mxu0 0.0
    %4328 = vmatprep.subr.mxu0 0.0
    %4329 = vmatpush1.msra.mxu0 0.0
    %4330 = vmatprep.subr.mxu0 0.0
    %4331 = vmatpush1.msra.mxu0 0.0
    %4332 = vmatprep.subr.mxu0 0.0
    %4333 = vmatpush1.msra.mxu0 %v3895
    %4334 = vmatprep.subr.mxu0 0.0
    %4335 = vmatpush1.msra.mxu0 %v3894
    %4336 = vmatprep.subr.mxu0 0.0
    %4337 = vmatpush2.msra.mxu0 0.0
    %4338 = vmatprep.subr.mxu0 0.0
    %4339 = vmatpush2.msra.mxu0 0.0
    %4340 = vmatprep.subr.mxu0 0.0
    %4341 = vmatpush2.msra.mxu0 0.0
    %4342 = vmatprep.subr.mxu0 0.0
    %4343 = vmatpush2.msra.mxu0 0.0
    %4344 = vmatprep.subr.mxu0 0.0
    %4345 = vmatpush2.msra.mxu0 0.0
    %4346 = vmatprep.subr.mxu0 0.0
    %4347 = vmatpush2.msra.mxu0 0.0
    %4348 = vmatprep.subr.mxu0 0.0
    %4349 = vmatpush2.msra.mxu0 0.0
    %4350 = vmatprep.subr.mxu0 0.0
    %4351 = vmatpush2.msra.mxu0 0.0
    %4352 = vmatprep.subr.mxu0 0.0
    %4353 = vmatpush2.msra.mxu0 0.0
    %4354 = vmatprep.subr.mxu0 0.0
    %4355 = vmatpush2.msra.mxu0 0.0
    %4356 = vmatprep.subr.mxu0 0.0
    %4357 = vmatpush2.msra.mxu0 0.0
    %4358 = vmatprep.subr.mxu0 0.0
    %4359 = vmatpush2.msra.mxu0 0.0
    %4360 = vmatprep.subr.mxu0 0.0
    %4361 = vmatpush2.msra.mxu0 0.0
    %4362 = vmatprep.subr.mxu0 0.0
    %4363 = vmatpush2.msra.mxu0 0.0
    %4364 = vmatprep.subr.mxu0 0.0
    %4365 = vmatpush2.msra.mxu0 0.0
    %4366 = vmatprep.subr.mxu0 0.0
    %4367 = vmatpush2.msra.mxu0 0.0
    %4368 = vmatprep.mubr.f32.mxu0 0.0
    %4369 = vmatmul.mubr.f32.gmra.mxu0 %v4302
    %v4370 = vpop.f32.mrf.mxu0
    %v4371 = vadd.f32 0.0, %v4370
    %v4372 = vpop.f32.mrf.mxu0
    %4373 = vdwg.mxu0
    %v4375 = vrot.slane %v4371, 4
    %v4377 = vadd.f32 %v3968, %v4375
    %v4378 = vsub.f32 0.0, %v4377
    %v4379 = vmul.f32 %v4378, 1.442695
    %v4380 = vpow.pop %v4379
    %v4381 = vadd.f32 %v4380, 1.0
    %v4382 = vrcp.pop %v4381
    %v4383 = vmul.f32 1.0, %v4382
    %v4384 = vtanh.pop %v4377
    %v4386 = vrot.slane %v4286, 1
    %v4388 = vmul.f32 %v4383, %v4386
    %4390 = vrot.lane.b32.xlu0 %v4384, 96
    %v4391 = vpop.permute.xlu0 %4390
    %v4393 = vmul.f32 %v4383, %v4391
    %4395 = vrot.lane.b32.xlu0 %v4393, 16
    %v4396 = vpop.permute.xlu0 %4395
    %v4398 = vadd.f32 %v4388, %v4396
    %v4399 = vtanh.pop %v4398
    %4401 = vrot.lane.b32.xlu0 %v4399, 32
    %v4402 = vpop.permute.xlu0 %4401
    %v4404 = vmul.f32 %v4383, %v4402
    %v4405 = vlaneseq
    %v4406 = vshrl.u32 %v4405, 7
    %v4407 = vsub.s32 4, %v4406
    %v4408 = vrot.slane %v4404, %v4407
    %v4409 = vsel %vm3539, %v4408, %v4297
    %v4411 = vrot.slane %v4404, 4
    %4412 = vrot.lane.b32.xlu0 %v4411, 80
    %v4413 = vpop.permute.xlu0 %4412
    %v4414 = vsel %vm285, %v4413, 0
    %4416 = vmatprep.subr.mxu0 0.0
    %4417 = vmatpush1.msra.mxu0 0.0
    %4418 = vmatprep.subr.mxu0 0.0
    %4419 = vmatpush1.msra.mxu0 0.0
    %4420 = vmatprep.subr.mxu0 0.0
    %4421 = vmatpush1.msra.mxu0 0.0
    %4422 = vmatprep.subr.mxu0 0.0
    %4423 = vmatpush1.msra.mxu0 0.0
    %4424 = vmatprep.subr.mxu0 0.0
    %4425 = vmatpush1.msra.mxu0 0.0
    %4426 = vmatprep.subr.mxu0 0.0
    %4427 = vmatpush1.msra.mxu0 0.0
    %4428 = vmatprep.subr.mxu0 0.0
    %4429 = vmatpush1.msra.mxu0 0.0
    %4430 = vmatprep.subr.mxu0 0.0
    %4431 = vmatpush1.msra.mxu0 0.0
    %4432 = vmatprep.subr.mxu0 0.0
    %4433 = vmatpush1.msra.mxu0 0.0
    %4434 = vmatprep.subr.mxu0 0.0
    %4435 = vmatpush1.msra.mxu0 0.0
    %4436 = vmatprep.subr.mxu0 0.0
    %4437 = vmatpush1.msra.mxu0 0.0
    %4438 = vmatprep.subr.mxu0 0.0
    %4439 = vmatpush1.msra.mxu0 0.0
    %4440 = vmatprep.subr.mxu0 0.0
    %4441 = vmatpush1.msra.mxu0 0.0
    %4442 = vmatprep.subr.mxu0 0.0
    %4443 = vmatpush1.msra.mxu0 0.0
    %4444 = vmatprep.subr.mxu0 0.0
    %4445 = vmatpush1.msra.mxu0 %v3895
    %4446 = vmatprep.subr.mxu0 0.0
    %4447 = vmatpush1.msra.mxu0 %v3894
    %4448 = vmatprep.subr.mxu0 0.0
    %4449 = vmatpush2.msra.mxu0 0.0
    %4450 = vmatprep.subr.mxu0 0.0
    %4451 = vmatpush2.msra.mxu0 0.0
    %4452 = vmatprep.subr.mxu0 0.0
    %4453 = vmatpush2.msra.mxu0 0.0
    %4454 = vmatprep.subr.mxu0 0.0
    %4455 = vmatpush2.msra.mxu0 0.0
    %4456 = vmatprep.subr.mxu0 0.0
    %4457 = vmatpush2.msra.mxu0 0.0
    %4458 = vmatprep.subr.mxu0 0.0
    %4459 = vmatpush2.msra.mxu0 0.0
    %4460 = vmatprep.subr.mxu0 0.0
    %4461 = vmatpush2.msra.mxu0 0.0
    %4462 = vmatprep.subr.mxu0 0.0
    %4463 = vmatpush2.msra.mxu0 0.0
    %4464 = vmatprep.subr.mxu0 0.0
    %4465 = vmatpush2.msra.mxu0 0.0
    %4466 = vmatprep.subr.mxu0 0.0
    %4467 = vmatpush2.msra.mxu0 0.0
    %4468 = vmatprep.subr.mxu0 0.0
    %4469 = vmatpush2.msra.mxu0 0.0
    %4470 = vmatprep.subr.mxu0 0.0
    %4471 = vmatpush2.msra.mxu0 0.0
    %4472 = vmatprep.subr.mxu0 0.0
    %4473 = vmatpush2.msra.mxu0 0.0
    %4474 = vmatprep.subr.mxu0 0.0
    %4475 = vmatpush2.msra.mxu0 0.0
    %4476 = vmatprep.subr.mxu0 0.0
    %4477 = vmatpush2.msra.mxu0 0.0
    %4478 = vmatprep.subr.mxu0 0.0
    %4479 = vmatpush2.msra.mxu0 0.0
    %4480 = vmatprep.mubr.f32.mxu0 0.0
    %4481 = vmatmul.mubr.f32.gmra.mxu0 %v4414
    %v4482 = vpop.f32.mrf.mxu0
    %v4483 = vadd.f32 0.0, %v4482
    %v4484 = vpop.f32.mrf.mxu0
    %4485 = vdwg.mxu0
    %v4487 = vrot.slane %v4483, 5
    %v4489 = vadd.f32 %v3968, %v4487
    %v4490 = vsub.f32 0.0, %v4489
    %v4491 = vmul.f32 %v4490, 1.442695
    %v4492 = vpow.pop %v4491
    %v4493 = vadd.f32 %v4492, 1.0
    %v4494 = vrcp.pop %v4493
    %v4495 = vmul.f32 1.0, %v4494
    %v4496 = vtanh.pop %v4489
    %v4498 = vrot.slane %v4398, 1
    %v4500 = vmul.f32 %v4495, %v4498
    %4502 = vrot.lane.b32.xlu0 %v4496, 96
    %v4503 = vpop.permute.xlu0 %4502
    %v4505 = vmul.f32 %v4495, %v4503
    %4507 = vrot.lane.b32.xlu0 %v4505, 16
    %v4508 = vpop.permute.xlu0 %4507
    %v4510 = vadd.f32 %v4500, %v4508
    %v4511 = vtanh.pop %v4510
    %4513 = vrot.lane.b32.xlu0 %v4511, 32
    %v4514 = vpop.permute.xlu0 %4513
    %v4516 = vmul.f32 %v4495, %v4514
    %v4517 = vlaneseq
    %v4518 = vshrl.u32 %v4517, 7
    %v4519 = vsub.s32 3, %v4518
    %v4520 = vrot.slane %v4516, %v4519
    %v4521 = vsel %vm3424, %v4520, %v4409
    %v4523 = vrot.slane %v4516, 3
    %4524 = vrot.lane.b32.xlu0 %v4523, 80
    %v4525 = vpop.permute.xlu0 %4524
    %v4526 = vsel %vm285, %v4525, 0
    %4528 = vmatprep.subr.mxu0 0.0
    %4529 = vmatpush1.msra.mxu0 0.0
    %4530 = vmatprep.subr.mxu0 0.0
    %4531 = vmatpush1.msra.mxu0 0.0
    %4532 = vmatprep.subr.mxu0 0.0
    %4533 = vmatpush1.msra.mxu0 0.0
    %4534 = vmatprep.subr.mxu0 0.0
    %4535 = vmatpush1.msra.mxu0 0.0
    %4536 = vmatprep.subr.mxu0 0.0
    %4537 = vmatpush1.msra.mxu0 0.0
    %4538 = vmatprep.subr.mxu0 0.0
    %4539 = vmatpush1.msra.mxu0 0.0
    %4540 = vmatprep.subr.mxu0 0.0
    %4541 = vmatpush1.msra.mxu0 0.0
    %4542 = vmatprep.subr.mxu0 0.0
    %4543 = vmatpush1.msra.mxu0 0.0
    %4544 = vmatprep.subr.mxu0 0.0
    %4545 = vmatpush1.msra.mxu0 0.0
    %4546 = vmatprep.subr.mxu0 0.0
    %4547 = vmatpush1.msra.mxu0 0.0
    %4548 = vmatprep.subr.mxu0 0.0
    %4549 = vmatpush1.msra.mxu0 0.0
    %4550 = vmatprep.subr.mxu0 0.0
    %4551 = vmatpush1.msra.mxu0 0.0
    %4552 = vmatprep.subr.mxu0 0.0
    %4553 = vmatpush1.msra.mxu0 0.0
    %4554 = vmatprep.subr.mxu0 0.0
    %4555 = vmatpush1.msra.mxu0 0.0
    %4556 = vmatprep.subr.mxu0 0.0
    %4557 = vmatpush1.msra.mxu0 %v3895
    %4558 = vmatprep.subr.mxu0 0.0
    %4559 = vmatpush1.msra.mxu0 %v3894
    %4560 = vmatprep.subr.mxu0 0.0
    %4561 = vmatpush2.msra.mxu0 0.0
    %4562 = vmatprep.subr.mxu0 0.0
    %4563 = vmatpush2.msra.mxu0 0.0
    %4564 = vmatprep.subr.mxu0 0.0
    %4565 = vmatpush2.msra.mxu0 0.0
    %4566 = vmatprep.subr.mxu0 0.0
    %4567 = vmatpush2.msra.mxu0 0.0
    %4568 = vmatprep.subr.mxu0 0.0
    %4569 = vmatpush2.msra.mxu0 0.0
    %4570 = vmatprep.subr.mxu0 0.0
    %4571 = vmatpush2.msra.mxu0 0.0
    %4572 = vmatprep.subr.mxu0 0.0
    %4573 = vmatpush2.msra.mxu0 0.0
    %4574 = vmatprep.subr.mxu0 0.0
    %4575 = vmatpush2.msra.mxu0 0.0
    %4576 = vmatprep.subr.mxu0 0.0
    %4577 = vmatpush2.msra.mxu0 0.0
    %4578 = vmatprep.subr.mxu0 0.0
    %4579 = vmatpush2.msra.mxu0 0.0
    %4580 = vmatprep.subr.mxu0 0.0
    %4581 = vmatpush2.msra.mxu0 0.0
    %4582 = vmatprep.subr.mxu0 0.0
    %4583 = vmatpush2.msra.mxu0 0.0
    %4584 = vmatprep.subr.mxu0 0.0
    %4585 = vmatpush2.msra.mxu0 0.0
    %4586 = vmatprep.subr.mxu0 0.0
    %4587 = vmatpush2.msra.mxu0 0.0
    %4588 = vmatprep.subr.mxu0 0.0
    %4589 = vmatpush2.msra.mxu0 0.0
    %4590 = vmatprep.subr.mxu0 0.0
    %4591 = vmatpush2.msra.mxu0 0.0
    %4592 = vmatprep.mubr.f32.mxu0 0.0
    %4593 = vmatmul.mubr.f32.gmra.mxu0 %v4526
    %v4594 = vpop.f32.mrf.mxu0
    %v4595 = vadd.f32 0.0, %v4594
    %v4596 = vpop.f32.mrf.mxu0
    %4597 = vdwg.mxu0
    %v4599 = vrot.slane %v4595, 6
    %v4601 = vadd.f32 %v3968, %v4599
    %v4602 = vsub.f32 0.0, %v4601
    %v4603 = vmul.f32 %v4602, 1.442695
    %v4604 = vpow.pop %v4603
    %v4605 = vadd.f32 %v4604, 1.0
    %v4606 = vrcp.pop %v4605
    %v4607 = vmul.f32 1.0, %v4606
    %v4608 = vtanh.pop %v4601
    %v4610 = vrot.slane %v4510, 1
    %v4612 = vmul.f32 %v4607, %v4610
    %4614 = vrot.lane.b32.xlu0 %v4608, 96
    %v4615 = vpop.permute.xlu0 %4614
    %v4617 = vmul.f32 %v4607, %v4615
    %4619 = vrot.lane.b32.xlu0 %v4617, 16
    %v4620 = vpop.permute.xlu0 %4619
    %v4622 = vadd.f32 %v4612, %v4620
    %v4623 = vtanh.pop %v4622
    %4625 = vrot.lane.b32.xlu0 %v4623, 32
    %v4626 = vpop.permute.xlu0 %4625
    %v4628 = vmul.f32 %v4607, %v4626
    %v4629 = vlaneseq
    %v4630 = vshrl.u32 %v4629, 7
    %v4631 = vsub.s32 2, %v4630
    %v4632 = vrot.slane %v4628, %v4631
    %v4633 = vsel %vm3309, %v4632, %v4521
    %v4635 = vrot.slane %v4628, 2
    %4636 = vrot.lane.b32.xlu0 %v4635, 80
    %v4637 = vpop.permute.xlu0 %4636
    %v4638 = vsel %vm285, %v4637, 0
    %4640 = vmatprep.subr.mxu0 0.0
    %4641 = vmatpush1.msra.mxu0 0.0
    %4642 = vmatprep.subr.mxu0 0.0
    %4643 = vmatpush1.msra.mxu0 0.0
    %4644 = vmatprep.subr.mxu0 0.0
    %4645 = vmatpush1.msra.mxu0 0.0
    %4646 = vmatprep.subr.mxu0 0.0
    %4647 = vmatpush1.msra.mxu0 0.0
    %4648 = vmatprep.subr.mxu0 0.0
    %4649 = vmatpush1.msra.mxu0 0.0
    %4650 = vmatprep.subr.mxu0 0.0
    %4651 = vmatpush1.msra.mxu0 0.0
    %4652 = vmatprep.subr.mxu0 0.0
    %4653 = vmatpush1.msra.mxu0 0.0
    %4654 = vmatprep.subr.mxu0 0.0
    %4655 = vmatpush1.msra.mxu0 0.0
    %4656 = vmatprep.subr.mxu0 0.0
    %4657 = vmatpush1.msra.mxu0 0.0
    %4658 = vmatprep.subr.mxu0 0.0
    %4659 = vmatpush1.msra.mxu0 0.0
    %4660 = vmatprep.subr.mxu0 0.0
    %4661 = vmatpush1.msra.mxu0 0.0
    %4662 = vmatprep.subr.mxu0 0.0
    %4663 = vmatpush1.msra.mxu0 0.0
    %4664 = vmatprep.subr.mxu0 0.0
    %4665 = vmatpush1.msra.mxu0 0.0
    %4666 = vmatprep.subr.mxu0 0.0
    %4667 = vmatpush1.msra.mxu0 0.0
    %4668 = vmatprep.subr.mxu0 0.0
    %4669 = vmatpush1.msra.mxu0 %v3895
    %4670 = vmatprep.subr.mxu0 0.0
    %4671 = vmatpush1.msra.mxu0 %v3894
    %4672 = vmatprep.subr.mxu0 0.0
    %4673 = vmatpush2.msra.mxu0 0.0
    %4674 = vmatprep.subr.mxu0 0.0
    %4675 = vmatpush2.msra.mxu0 0.0
    %4676 = vmatprep.subr.mxu0 0.0
    %4677 = vmatpush2.msra.mxu0 0.0
    %4678 = vmatprep.subr.mxu0 0.0
    %4679 = vmatpush2.msra.mxu0 0.0
    %4680 = vmatprep.subr.mxu0 0.0
    %4681 = vmatpush2.msra.mxu0 0.0
    %4682 = vmatprep.subr.mxu0 0.0
    %4683 = vmatpush2.msra.mxu0 0.0
    %4684 = vmatprep.subr.mxu0 0.0
    %4685 = vmatpush2.msra.mxu0 0.0
    %4686 = vmatprep.subr.mxu0 0.0
    %4687 = vmatpush2.msra.mxu0 0.0
    %4688 = vmatprep.subr.mxu0 0.0
    %4689 = vmatpush2.msra.mxu0 0.0
    %4690 = vmatprep.subr.mxu0 0.0
    %4691 = vmatpush2.msra.mxu0 0.0
    %4692 = vmatprep.subr.mxu0 0.0
    %4693 = vmatpush2.msra.mxu0 0.0
    %4694 = vmatprep.subr.mxu0 0.0
    %4695 = vmatpush2.msra.mxu0 0.0
    %4696 = vmatprep.subr.mxu0 0.0
    %4697 = vmatpush2.msra.mxu0 0.0
    %4698 = vmatprep.subr.mxu0 0.0
    %4699 = vmatpush2.msra.mxu0 0.0
    %4700 = vmatprep.subr.mxu0 0.0
    %4701 = vmatpush2.msra.mxu0 0.0
    %4702 = vmatprep.subr.mxu0 0.0
    %4703 = vmatpush2.msra.mxu0 0.0
    %4704 = vmatprep.mubr.f32.mxu0 0.0
    %4705 = vmatmul.mubr.f32.gmra.mxu0 %v4638
    %v4706 = vpop.f32.mrf.mxu0
    %v4707 = vadd.f32 0.0, %v4706
    %v4708 = vpop.f32.mrf.mxu0
    %4709 = vdwg.mxu0
    %v4711 = vrot.slane %v4707, 7
    %v4713 = vadd.f32 %v3968, %v4711
    %v4714 = vsub.f32 0.0, %v4713
    %v4715 = vmul.f32 %v4714, 1.442695
    %v4716 = vpow.pop %v4715
    %v4717 = vadd.f32 %v4716, 1.0
    %v4718 = vrcp.pop %v4717
    %v4719 = vmul.f32 1.0, %v4718
    %v4720 = vtanh.pop %v4713
    %v4722 = vrot.slane %v4622, 1
    %v4724 = vmul.f32 %v4719, %v4722
    %4726 = vrot.lane.b32.xlu0 %v4720, 96
    %v4727 = vpop.permute.xlu0 %4726
    %v4729 = vmul.f32 %v4719, %v4727
    %4731 = vrot.lane.b32.xlu0 %v4729, 16
    %v4732 = vpop.permute.xlu0 %4731
    %v4734 = vadd.f32 %v4724, %v4732
    %v4735 = vtanh.pop %v4734
    %4737 = vrot.lane.b32.xlu0 %v4735, 32
    %v4738 = vpop.permute.xlu0 %4737
    %v4740 = vmul.f32 %v4719, %v4738
    %v4741 = vlaneseq
    %v4742 = vshrl.u32 %v4741, 7
    %v4743 = vsub.s32 1, %v4742
    %v4744 = vrot.slane %v4740, %v4743
    %v4745 = vsel %vm3194, %v4744, %v4633
    %v4747 = vrot.slane %v4740, 1
    %4748 = vrot.lane.b32.xlu0 %v4747, 80
    %v4749 = vpop.permute.xlu0 %4748
    %v4750 = vsel %vm285, %v4749, 0
    %4752 = vmatprep.subr.mxu0 0.0
    %4753 = vmatpush1.msra.mxu0 0.0
    %4754 = vmatprep.subr.mxu0 0.0
    %4755 = vmatpush1.msra.mxu0 0.0
    %4756 = vmatprep.subr.mxu0 0.0
    %4757 = vmatpush1.msra.mxu0 0.0
    %4758 = vmatprep.subr.mxu0 0.0
    %4759 = vmatpush1.msra.mxu0 0.0
    %4760 = vmatprep.subr.mxu0 0.0
    %4761 = vmatpush1.msra.mxu0 0.0
    %4762 = vmatprep.subr.mxu0 0.0
    %4763 = vmatpush1.msra.mxu0 0.0
    %4764 = vmatprep.subr.mxu0 0.0
    %4765 = vmatpush1.msra.mxu0 0.0
    %4766 = vmatprep.subr.mxu0 0.0
    %4767 = vmatpush1.msra.mxu0 0.0
    %4768 = vmatprep.subr.mxu0 0.0
    %4769 = vmatpush1.msra.mxu0 0.0
    %4770 = vmatprep.subr.mxu0 0.0
    %4771 = vmatpush1.msra.mxu0 0.0
    %4772 = vmatprep.subr.mxu0 0.0
    %4773 = vmatpush1.msra.mxu0 0.0
    %4774 = vmatprep.subr.mxu0 0.0
    %4775 = vmatpush1.msra.mxu0 0.0
    %4776 = vmatprep.subr.mxu0 0.0
    %4777 = vmatpush1.msra.mxu0 0.0
    %4778 = vmatprep.subr.mxu0 0.0
    %4779 = vmatpush1.msra.mxu0 0.0
    %4780 = vmatprep.subr.mxu0 0.0
    %4781 = vmatpush1.msra.mxu0 %v3895
    %4782 = vmatprep.subr.mxu0 0.0
    %4783 = vmatpush1.msra.mxu0 %v3894
    %4784 = vmatprep.subr.mxu0 0.0
    %4785 = vmatpush2.msra.mxu0 0.0
    %4786 = vmatprep.subr.mxu0 0.0
    %4787 = vmatpush2.msra.mxu0 0.0
    %4788 = vmatprep.subr.mxu0 0.0
    %4789 = vmatpush2.msra.mxu0 0.0
    %4790 = vmatprep.subr.mxu0 0.0
    %4791 = vmatpush2.msra.mxu0 0.0
    %4792 = vmatprep.subr.mxu0 0.0
    %4793 = vmatpush2.msra.mxu0 0.0
    %4794 = vmatprep.subr.mxu0 0.0
    %4795 = vmatpush2.msra.mxu0 0.0
    %4796 = vmatprep.subr.mxu0 0.0
    %4797 = vmatpush2.msra.mxu0 0.0
    %4798 = vmatprep.subr.mxu0 0.0
    %4799 = vmatpush2.msra.mxu0 0.0
    %4800 = vmatprep.subr.mxu0 0.0
    %4801 = vmatpush2.msra.mxu0 0.0
    %4802 = vmatprep.subr.mxu0 0.0
    %4803 = vmatpush2.msra.mxu0 0.0
    %4804 = vmatprep.subr.mxu0 0.0
    %4805 = vmatpush2.msra.mxu0 0.0
    %4806 = vmatprep.subr.mxu0 0.0
    %4807 = vmatpush2.msra.mxu0 0.0
    %4808 = vmatprep.subr.mxu0 0.0
    %4809 = vmatpush2.msra.mxu0 0.0
    %4810 = vmatprep.subr.mxu0 0.0
    %4811 = vmatpush2.msra.mxu0 0.0
    %4812 = vmatprep.subr.mxu0 0.0
    %4813 = vmatpush2.msra.mxu0 0.0
    %4814 = vmatprep.subr.mxu0 0.0
    %4815 = vmatpush2.msra.mxu0 0.0
    %4816 = vmatprep.mubr.f32.mxu0 0.0
    %4817 = vmatmul.mubr.f32.gmra.mxu0 %v4750
    %v4818 = vpop.f32.mrf.mxu0
    %v4819 = vadd.f32 0.0, %v4818
    %v4820 = vpop.f32.mrf.mxu0
    %4821 = vdwg.mxu0
    %v4822 = vadd.f32 %v3968, %v4819
    %v4823 = vsub.f32 0.0, %v4822
    %v4824 = vmul.f32 %v4823, 1.442695
    %v4825 = vpow.pop %v4824
    %v4826 = vadd.f32 %v4825, 1.0
    %v4827 = vrcp.pop %v4826
    %v4828 = vmul.f32 1.0, %v4827
    %v4829 = vtanh.pop %v4822
    %v4831 = vrot.slane %v4734, 1
    %v4833 = vmul.f32 %v4828, %v4831
    %4835 = vrot.lane.b32.xlu0 %v4829, 96
    %v4836 = vpop.permute.xlu0 %4835
    %v4838 = vmul.f32 %v4828, %v4836
    %4840 = vrot.lane.b32.xlu0 %v4838, 16
    %v4841 = vpop.permute.xlu0 %4840
    %v4843 = vadd.f32 %v4833, %v4841
    %v4844 = vtanh.pop %v4843
    %4846 = vrot.lane.b32.xlu0 %v4844, 32
    %v4847 = vpop.permute.xlu0 %4846
    %v4849 = vmul.f32 %v4828, %v4847
    %v4850 = vlaneseq
    %v4851 = vshrl.u32 %v4850, 7
    %v4852 = vsub.s32 0, %v4851
    %v4853 = vrot.slane %v4849, %v4852
    %v4854 = vsel %vm3080, %v4853, %v4745
    %4856 = vrot.lane.b32.xlu0 %v4854, 80
    %v4857 = vpop.permute.xlu0 %4856
    %v4858 = vsel %vm285, %v4857, 0
    %4860 = vmatprep.subr.mxu0 0.0
    %4861 = vmatpush1.msra.mxu0 0.0
    %4862 = vmatprep.subr.mxu0 0.0
    %4863 = vmatpush1.msra.mxu0 0.0
    %4864 = vmatprep.subr.mxu0 0.0
    %4865 = vmatpush1.msra.mxu0 0.0
    %4866 = vmatprep.subr.mxu0 0.0
    %4867 = vmatpush1.msra.mxu0 0.0
    %4868 = vmatprep.subr.mxu0 0.0
    %4869 = vmatpush1.msra.mxu0 0.0
    %4870 = vmatprep.subr.mxu0 0.0
    %4871 = vmatpush1.msra.mxu0 0.0
    %4872 = vmatprep.subr.mxu0 0.0
    %4873 = vmatpush1.msra.mxu0 0.0
    %4874 = vmatprep.subr.mxu0 0.0
    %4875 = vmatpush1.msra.mxu0 0.0
    %4876 = vmatprep.subr.mxu0 0.0
    %4877 = vmatpush1.msra.mxu0 0.0
    %4878 = vmatprep.subr.mxu0 0.0
    %4879 = vmatpush1.msra.mxu0 0.0
    %4880 = vmatprep.subr.mxu0 0.0
    %4881 = vmatpush1.msra.mxu0 0.0
    %4882 = vmatprep.subr.mxu0 0.0
    %4883 = vmatpush1.msra.mxu0 0.0
    %4884 = vmatprep.subr.mxu0 0.0
    %4885 = vmatpush1.msra.mxu0 0.0
    %4886 = vmatprep.subr.mxu0 0.0
    %4887 = vmatpush1.msra.mxu0 0.0
    %4888 = vmatprep.subr.mxu0 0.0
    %4889 = vmatpush1.msra.mxu0 %v2892
    %4890 = vmatprep.subr.mxu0 0.0
    %4891 = vmatpush1.msra.mxu0 %v2891
    %4892 = vmatprep.subr.mxu0 0.0
    %4893 = vmatpush2.msra.mxu0 0.0
    %4894 = vmatprep.subr.mxu0 0.0
    %4895 = vmatpush2.msra.mxu0 0.0
    %4896 = vmatprep.subr.mxu0 0.0
    %4897 = vmatpush2.msra.mxu0 0.0
    %4898 = vmatprep.subr.mxu0 0.0
    %4899 = vmatpush2.msra.mxu0 0.0
    %4900 = vmatprep.subr.mxu0 0.0
    %4901 = vmatpush2.msra.mxu0 0.0
    %4902 = vmatprep.subr.mxu0 0.0
    %4903 = vmatpush2.msra.mxu0 0.0
    %4904 = vmatprep.subr.mxu0 0.0
    %4905 = vmatpush2.msra.mxu0 0.0
    %4906 = vmatprep.subr.mxu0 0.0
    %4907 = vmatpush2.msra.mxu0 0.0
    %4908 = vmatprep.subr.mxu0 0.0
    %4909 = vmatpush2.msra.mxu0 0.0
    %4910 = vmatprep.subr.mxu0 0.0
    %4911 = vmatpush2.msra.mxu0 0.0
    %4912 = vmatprep.subr.mxu0 0.0
    %4913 = vmatpush2.msra.mxu0 0.0
    %4914 = vmatprep.subr.mxu0 0.0
    %4915 = vmatpush2.msra.mxu0 0.0
    %4916 = vmatprep.subr.mxu0 0.0
    %4917 = vmatpush2.msra.mxu0 0.0
    %4918 = vmatprep.subr.mxu0 0.0
    %4919 = vmatpush2.msra.mxu0 0.0
    %4920 = vmatprep.subr.mxu0 0.0
    %4921 = vmatpush2.msra.mxu0 0.0
    %4922 = vmatprep.subr.mxu0 0.0
    %4923 = vmatpush2.msra.mxu0 0.0
    %4924 = vmatprep.mubr.f32.mxu0 0.0
    %4925 = vmatmul.mubr.f32.gmra.mxu0 %v4858
    %v4926 = vpop.f32.mrf.mxu0
    %v4927 = vadd.f32 0.0, %v4926
    %v4928 = vpop.f32.mrf.mxu0
    %4929 = vdwg.mxu0
    %4931 = vrot.lane.b32.xlu0 %v3889, 80
    %v4932 = vpop.permute.xlu0 %4931
    %v4933 = vsel %vm285, %v4932, 0
    %4935 = vmatprep.subr.mxu0 0.0
    %4936 = vmatpush1.msra.mxu0 0.0
    %4937 = vmatprep.subr.mxu0 0.0
    %4938 = vmatpush1.msra.mxu0 0.0
    %4939 = vmatprep.subr.mxu0 0.0
    %4940 = vmatpush1.msra.mxu0 0.0
    %4941 = vmatprep.subr.mxu0 0.0
    %4942 = vmatpush1.msra.mxu0 0.0
    %4943 = vmatprep.subr.mxu0 0.0
    %4944 = vmatpush1.msra.mxu0 0.0
    %4945 = vmatprep.subr.mxu0 0.0
    %4946 = vmatpush1.msra.mxu0 0.0
    %4947 = vmatprep.subr.mxu0 0.0
    %4948 = vmatpush1.msra.mxu0 0.0
    %4949 = vmatprep.subr.mxu0 0.0
    %4950 = vmatpush1.msra.mxu0 0.0
    %4951 = vmatprep.subr.mxu0 0.0
    %4952 = vmatpush1.msra.mxu0 0.0
    %4953 = vmatprep.subr.mxu0 0.0
    %4954 = vmatpush1.msra.mxu0 0.0
    %4955 = vmatprep.subr.mxu0 0.0
    %4956 = vmatpush1.msra.mxu0 0.0
    %4957 = vmatprep.subr.mxu0 0.0
    %4958 = vmatpush1.msra.mxu0 0.0
    %4959 = vmatprep.subr.mxu0 0.0
    %4960 = vmatpush1.msra.mxu0 0.0
    %4961 = vmatprep.subr.mxu0 0.0
    %4962 = vmatpush1.msra.mxu0 0.0
    %4963 = vmatprep.subr.mxu0 0.0
    %4964 = vmatpush1.msra.mxu0 %v2890
    %4965 = vmatprep.subr.mxu0 0.0
    %4966 = vmatpush1.msra.mxu0 %v2889
    %4967 = vmatprep.subr.mxu0 0.0
    %4968 = vmatpush2.msra.mxu0 0.0
    %4969 = vmatprep.subr.mxu0 0.0
    %4970 = vmatpush2.msra.mxu0 0.0
    %4971 = vmatprep.subr.mxu0 0.0
    %4972 = vmatpush2.msra.mxu0 0.0
    %4973 = vmatprep.subr.mxu0 0.0
    %4974 = vmatpush2.msra.mxu0 0.0
    %4975 = vmatprep.subr.mxu0 0.0
    %4976 = vmatpush2.msra.mxu0 0.0
    %4977 = vmatprep.subr.mxu0 0.0
    %4978 = vmatpush2.msra.mxu0 0.0
    %4979 = vmatprep.subr.mxu0 0.0
    %4980 = vmatpush2.msra.mxu0 0.0
    %4981 = vmatprep.subr.mxu0 0.0
    %4982 = vmatpush2.msra.mxu0 0.0
    %4983 = vmatprep.subr.mxu0 0.0
    %4984 = vmatpush2.msra.mxu0 0.0
    %4985 = vmatprep.subr.mxu0 0.0
    %4986 = vmatpush2.msra.mxu0 0.0
    %4987 = vmatprep.subr.mxu0 0.0
    %4988 = vmatpush2.msra.mxu0 0.0
    %4989 = vmatprep.subr.mxu0 0.0
    %4990 = vmatpush2.msra.mxu0 0.0
    %4991 = vmatprep.subr.mxu0 0.0
    %4992 = vmatpush2.msra.mxu0 0.0
    %4993 = vmatprep.subr.mxu0 0.0
    %4994 = vmatpush2.msra.mxu0 0.0
    %4995 = vmatprep.subr.mxu0 0.0
    %4996 = vmatpush2.msra.mxu0 0.0
    %4997 = vmatprep.subr.mxu0 0.0
    %4998 = vmatpush2.msra.mxu0 0.0
    %4999 = vmatprep.mubr.f32.mxu0 0.0
    %5000 = vmatmul.mubr.f32.gmra.mxu0 %v4933
    %v5001 = vpop.f32.mrf.mxu0
    %v5002 = vadd.f32 %v4927, %v5001
    %v5003 = vpop.f32.mrf.mxu0
    %5004 = vdwg.mxu0
    %v5005 = vlaneseq
    %v5006 = vshrl.u32 %v5005, 7
    %v5007 = vsub.s32 0, %v5006
    %v5008 = vrot.slane %v2893, %v5007
    %v5009 = vadd.f32 %v5002, %v5008
    %vm5010 = vcmask 72704
    %v5011 = vsel %vm5010, %v5009, -inf
    %5012 = vmax.xlane.f32.xlu0 %v5011
    %v5013 = vpop.xlane.xlu0 %5012
    %vm5014 = vcmp.eq.f32.partialorder %v5009, %v5013
    %v5015 = vsel %vm5014, %v31, 9
    %v5016 = vsel %vm5010, %v5015, 2147483647
    %v5017 = vand.u32 %v5016, 65535
    %v5018 = vshra.s32 %v5016, 16
    %v5019 = vcvt.s32.f32 %v5017
    %v5020 = vcvt.s32.f32 %v5018
    %5021 = vmin.xlane.f32.xlu0 %v5020
    %v5022 = vpop.xlane.xlu0 %5021
    %vm5023 = vcmp.eq.f32.partialorder %v5020, %v5022
    %v5024 = vsel %vm5023, %v5019, inf
    %5025 = vmin.xlane.f32.xlu0 %v5024
    %v5026 = vpop.xlane.xlu0 %5025
    %v5027 = vcvt.f32.s32 %v5026
    %v5028 = vcvt.f32.s32 %v5022
    %v5029 = vshll.u32 %v5028, 16
    %v5030 = vadd.s32 %v5029, %v5027
    %vm5031 = vcmask 7168
    %5032 = vst.msk [vmem:[%s3] sm:$0xff] %vm5031, %v5030
    %v5033 = vld [vmem:[#allocation2 + $0x260] sm:$0xff]
    %v5034 = vld [vmem:[#allocation2 + $0x268] sm:$0xff]
    %v5035 = vld [vmem:[#allocation2 + $0x270] sm:$0xff]
    %v5036 = vld [vmem:[#allocation2 + $0x278] sm:$0xff]
    %v5037 = vld [vmem:[#allocation2 + $0x280] sm:$0xff]
    %v5038 = vld [vmem:[#allocation2 + $0x288] sm:$0xff]
    %v5039 = vld [vmem:[#allocation2 + $0x290] sm:$0x1]
    %v5040 = vlaneseq
    %v5041 = vshrl.u32 %v5040, 7
    %v5042 = vsub.s32 0, %v5041
    %v5043 = vrot.slane %v5039, %v5042
    %v5045 = vsel %vm145, %v2888, 0
    %5047 = vmatprep.subr.mxu0 0.0
    %5048 = vmatpush1.msra.mxu0 0.0
    %5049 = vmatprep.subr.mxu0 0.0
    %5050 = vmatpush1.msra.mxu0 0.0
    %5051 = vmatprep.subr.mxu0 0.0
    %5052 = vmatpush1.msra.mxu0 0.0
    %5053 = vmatprep.subr.mxu0 0.0
    %5054 = vmatpush1.msra.mxu0 0.0
    %5055 = vmatprep.subr.mxu0 0.0
    %5056 = vmatpush1.msra.mxu0 0.0
    %5057 = vmatprep.subr.mxu0 0.0
    %5058 = vmatpush1.msra.mxu0 0.0
    %5059 = vmatprep.subr.mxu0 0.0
    %5060 = vmatpush1.msra.mxu0 0.0
    %5061 = vmatprep.subr.mxu0 0.0
    %5062 = vmatpush1.msra.mxu0 0.0
    %5063 = vmatprep.subr.mxu0 0.0
    %5064 = vmatpush1.msra.mxu0 0.0
    %5065 = vmatprep.subr.mxu0 0.0
    %5066 = vmatpush1.msra.mxu0 0.0
    %5067 = vmatprep.subr.mxu0 0.0
    %5068 = vmatpush1.msra.mxu0 0.0
    %5069 = vmatprep.subr.mxu0 0.0
    %5070 = vmatpush1.msra.mxu0 0.0
    %5071 = vmatprep.subr.mxu0 0.0
    %5072 = vmatpush1.msra.mxu0 %v5036
    %5073 = vmatprep.subr.mxu0 0.0
    %5074 = vmatpush1.msra.mxu0 %v5035
    %5075 = vmatprep.subr.mxu0 0.0
    %5076 = vmatpush1.msra.mxu0 %v5034
    %5077 = vmatprep.subr.mxu0 0.0
    %5078 = vmatpush1.msra.mxu0 %v5033
    %5079 = vmatprep.subr.mxu0 0.0
    %5080 = vmatpush2.msra.mxu0 0.0
    %5081 = vmatprep.subr.mxu0 0.0
    %5082 = vmatpush2.msra.mxu0 0.0
    %5083 = vmatprep.subr.mxu0 0.0
    %5084 = vmatpush2.msra.mxu0 0.0
    %5085 = vmatprep.subr.mxu0 0.0
    %5086 = vmatpush2.msra.mxu0 0.0
    %5087 = vmatprep.subr.mxu0 0.0
    %5088 = vmatpush2.msra.mxu0 0.0
    %5089 = vmatprep.subr.mxu0 0.0
    %5090 = vmatpush2.msra.mxu0 0.0
    %5091 = vmatprep.subr.mxu0 0.0
    %5092 = vmatpush2.msra.mxu0 0.0
    %5093 = vmatprep.subr.mxu0 0.0
    %5094 = vmatpush2.msra.mxu0 0.0
    %5095 = vmatprep.subr.mxu0 0.0
    %5096 = vmatpush2.msra.mxu0 0.0
    %5097 = vmatprep.subr.mxu0 0.0
    %5098 = vmatpush2.msra.mxu0 0.0
    %5099 = vmatprep.subr.mxu0 0.0
    %5100 = vmatpush2.msra.mxu0 0.0
    %5101 = vmatprep.subr.mxu0 0.0
    %5102 = vmatpush2.msra.mxu0 0.0
    %5103 = vmatprep.subr.mxu0 0.0
    %5104 = vmatpush2.msra.mxu0 0.0
    %5105 = vmatprep.subr.mxu0 0.0
    %5106 = vmatpush2.msra.mxu0 0.0
    %5107 = vmatprep.subr.mxu0 0.0
    %5108 = vmatpush2.msra.mxu0 0.0
    %5109 = vmatprep.subr.mxu0 0.0
    %5110 = vmatpush2.msra.mxu0 0.0
    %5111 = vmatprep.mubr.f32.mxu0 0.0
    %5112 = vmatmul.mubr.f32.gmra.mxu0 %v5045
    %v5113 = vpop.f32.mrf.mxu0
    %v5114 = vadd.f32 %v5043, %v5113
    %v5115 = vpop.f32.mrf.mxu0
    %5116 = vdwg.mxu0
    %5117 = vmatprep.subr.mxu0 0.0
    %5118 = vmatpush1.msra.mxu0 0.0
    %5119 = vmatprep.subr.mxu0 0.0
    %5120 = vmatpush1.msra.mxu0 0.0
    %5121 = vmatprep.subr.mxu0 0.0
    %5122 = vmatpush1.msra.mxu0 0.0
    %5123 = vmatprep.subr.mxu0 0.0
    %5124 = vmatpush1.msra.mxu0 0.0
    %5125 = vmatprep.subr.mxu0 0.0
    %5126 = vmatpush1.msra.mxu0 0.0
    %5127 = vmatprep.subr.mxu0 0.0
    %5128 = vmatpush1.msra.mxu0 0.0
    %5129 = vmatprep.subr.mxu0 0.0
    %5130 = vmatpush1.msra.mxu0 0.0
    %5131 = vmatprep.subr.mxu0 0.0
    %5132 = vmatpush1.msra.mxu0 0.0
    %5133 = vmatprep.subr.mxu0 0.0
    %5134 = vmatpush1.msra.mxu0 0.0
    %5135 = vmatprep.subr.mxu0 0.0
    %5136 = vmatpush1.msra.mxu0 0.0
    %5137 = vmatprep.subr.mxu0 0.0
    %5138 = vmatpush1.msra.mxu0 0.0
    %5139 = vmatprep.subr.mxu0 0.0
    %5140 = vmatpush1.msra.mxu0 0.0
    %5141 = vmatprep.subr.mxu0 0.0
    %5142 = vmatpush1.msra.mxu0 0.0
    %5143 = vmatprep.subr.mxu0 0.0
    %5144 = vmatpush1.msra.mxu0 0.0
    %5145 = vmatprep.subr.mxu0 0.0
    %5146 = vmatpush1.msra.mxu0 %v5038
    %5147 = vmatprep.subr.mxu0 0.0
    %5148 = vmatpush1.msra.mxu0 %v5037
    %5149 = vmatprep.subr.mxu0 0.0
    %5150 = vmatpush2.msra.mxu0 0.0
    %5151 = vmatprep.subr.mxu0 0.0
    %5152 = vmatpush2.msra.mxu0 0.0
    %5153 = vmatprep.subr.mxu0 0.0
    %5154 = vmatpush2.msra.mxu0 0.0
    %5155 = vmatprep.subr.mxu0 0.0
    %5156 = vmatpush2.msra.mxu0 0.0
    %5157 = vmatprep.subr.mxu0 0.0
    %5158 = vmatpush2.msra.mxu0 0.0
    %5159 = vmatprep.subr.mxu0 0.0
    %5160 = vmatpush2.msra.mxu0 0.0
    %5161 = vmatprep.subr.mxu0 0.0
    %5162 = vmatpush2.msra.mxu0 0.0
    %5163 = vmatprep.subr.mxu0 0.0
    %5164 = vmatpush2.msra.mxu0 0.0
    %5165 = vmatprep.subr.mxu0 0.0
    %5166 = vmatpush2.msra.mxu0 0.0
    %5167 = vmatprep.subr.mxu0 0.0
    %5168 = vmatpush2.msra.mxu0 0.0
    %5169 = vmatprep.subr.mxu0 0.0
    %5170 = vmatpush2.msra.mxu0 0.0
    %5171 = vmatprep.subr.mxu0 0.0
    %5172 = vmatpush2.msra.mxu0 0.0
    %5173 = vmatprep.subr.mxu0 0.0
    %5174 = vmatpush2.msra.mxu0 0.0
    %5175 = vmatprep.subr.mxu0 0.0
    %5176 = vmatpush2.msra.mxu0 0.0
    %5177 = vmatprep.subr.mxu0 0.0
    %5178 = vmatpush2.msra.mxu0 0.0
    %5179 = vmatprep.subr.mxu0 0.0
    %5180 = vmatpush2.msra.mxu0 0.0
    %5181 = vmatprep.mubr.f32.mxu0 0.0
    %5182 = vmatmul.mubr.f32.gmra.mxu0 %v2981
    %v5183 = vpop.f32.mrf.mxu0
    %v5184 = vadd.f32 0.0, %v5183
    %v5185 = vpop.f32.mrf.mxu0
    %5186 = vdwg.mxu0
    %v5187 = vadd.f32 %v5114, %v5184
    %v5188 = vsub.f32 0.0, %v5187
    %v5189 = vmul.f32 %v5188, 1.442695
    %v5190 = vpow.pop %v5189
    %v5191 = vadd.f32 %v5190, 1.0
    %v5192 = vrcp.pop %v5191
    %v5193 = vmul.f32 1.0, %v5192
    %v5194 = vtanh.pop %v5187
    %v5195 = vmul.f32 %v5193, 0.0
    %5197 = vrot.lane.b32.xlu0 %v5194, 96
    %v5198 = vpop.permute.xlu0 %5197
    %v5200 = vmul.f32 %v5193, %v5198
    %5202 = vrot.lane.b32.xlu0 %v5200, 16
    %v5203 = vpop.permute.xlu0 %5202
    %v5205 = vadd.f32 %v5195, %v5203
    %v5206 = vtanh.pop %v5205
    %5208 = vrot.lane.b32.xlu0 %v5206, 32
    %v5209 = vpop.permute.xlu0 %5208
    %v5211 = vmul.f32 %v5193, %v5209
    %v5212 = vlaneseq
    %v5213 = vshrl.u32 %v5212, 7
    %v5214 = vsub.s32 0, %v5213
    %v5215 = vrot.slane %v5211, %v5214
    %v5216 = vsel %vm3080, %v5215, 0.0
    %5218 = vrot.lane.b32.xlu0 %v5211, 80
    %v5219 = vpop.permute.xlu0 %5218
    %v5220 = vsel %vm285, %v5219, 0
    %5222 = vmatprep.subr.mxu0 0.0
    %5223 = vmatpush1.msra.mxu0 0.0
    %5224 = vmatprep.subr.mxu0 0.0
    %5225 = vmatpush1.msra.mxu0 0.0
    %5226 = vmatprep.subr.mxu0 0.0
    %5227 = vmatpush1.msra.mxu0 0.0
    %5228 = vmatprep.subr.mxu0 0.0
    %5229 = vmatpush1.msra.mxu0 0.0
    %5230 = vmatprep.subr.mxu0 0.0
    %5231 = vmatpush1.msra.mxu0 0.0
    %5232 = vmatprep.subr.mxu0 0.0
    %5233 = vmatpush1.msra.mxu0 0.0
    %5234 = vmatprep.subr.mxu0 0.0
    %5235 = vmatpush1.msra.mxu0 0.0
    %5236 = vmatprep.subr.mxu0 0.0
    %5237 = vmatpush1.msra.mxu0 0.0
    %5238 = vmatprep.subr.mxu0 0.0
    %5239 = vmatpush1.msra.mxu0 0.0
    %5240 = vmatprep.subr.mxu0 0.0
    %5241 = vmatpush1.msra.mxu0 0.0
    %5242 = vmatprep.subr.mxu0 0.0
    %5243 = vmatpush1.msra.mxu0 0.0
    %5244 = vmatprep.subr.mxu0 0.0
    %5245 = vmatpush1.msra.mxu0 0.0
    %5246 = vmatprep.subr.mxu0 0.0
    %5247 = vmatpush1.msra.mxu0 0.0
    %5248 = vmatprep.subr.mxu0 0.0
    %5249 = vmatpush1.msra.mxu0 0.0
    %5250 = vmatprep.subr.mxu0 0.0
    %5251 = vmatpush1.msra.mxu0 %v5038
    %5252 = vmatprep.subr.mxu0 0.0
    %5253 = vmatpush1.msra.mxu0 %v5037
    %5254 = vmatprep.subr.mxu0 0.0
    %5255 = vmatpush2.msra.mxu0 0.0
    %5256 = vmatprep.subr.mxu0 0.0
    %5257 = vmatpush2.msra.mxu0 0.0
    %5258 = vmatprep.subr.mxu0 0.0
    %5259 = vmatpush2.msra.mxu0 0.0
    %5260 = vmatprep.subr.mxu0 0.0
    %5261 = vmatpush2.msra.mxu0 0.0
    %5262 = vmatprep.subr.mxu0 0.0
    %5263 = vmatpush2.msra.mxu0 0.0
    %5264 = vmatprep.subr.mxu0 0.0
    %5265 = vmatpush2.msra.mxu0 0.0
    %5266 = vmatprep.subr.mxu0 0.0
    %5267 = vmatpush2.msra.mxu0 0.0
    %5268 = vmatprep.subr.mxu0 0.0
    %5269 = vmatpush2.msra.mxu0 0.0
    %5270 = vmatprep.subr.mxu0 0.0
    %5271 = vmatpush2.msra.mxu0 0.0
    %5272 = vmatprep.subr.mxu0 0.0
    %5273 = vmatpush2.msra.mxu0 0.0
    %5274 = vmatprep.subr.mxu0 0.0
    %5275 = vmatpush2.msra.mxu0 0.0
    %5276 = vmatprep.subr.mxu0 0.0
    %5277 = vmatpush2.msra.mxu0 0.0
    %5278 = vmatprep.subr.mxu0 0.0
    %5279 = vmatpush2.msra.mxu0 0.0
    %5280 = vmatprep.subr.mxu0 0.0
    %5281 = vmatpush2.msra.mxu0 0.0
    %5282 = vmatprep.subr.mxu0 0.0
    %5283 = vmatpush2.msra.mxu0 0.0
    %5284 = vmatprep.subr.mxu0 0.0
    %5285 = vmatpush2.msra.mxu0 0.0
    %5286 = vmatprep.mubr.f32.mxu0 0.0
    %5287 = vmatmul.mubr.f32.gmra.mxu0 %v5220
    %v5288 = vpop.f32.mrf.mxu0
    %v5289 = vadd.f32 0.0, %v5288
    %v5290 = vpop.f32.mrf.mxu0
    %5291 = vdwg.mxu0
    %v5293 = vrot.slane %v5289, 7
    %v5295 = vadd.f32 %v5114, %v5293
    %v5296 = vsub.f32 0.0, %v5295
    %v5297 = vmul.f32 %v5296, 1.442695
    %v5298 = vpow.pop %v5297
    %v5299 = vadd.f32 %v5298, 1.0
    %v5300 = vrcp.pop %v5299
    %v5301 = vmul.f32 1.0, %v5300
    %v5302 = vtanh.pop %v5295
    %v5304 = vrot.slane %v5205, 7
    %v5306 = vmul.f32 %v5301, %v5304
    %5308 = vrot.lane.b32.xlu0 %v5302, 96
    %v5309 = vpop.permute.xlu0 %5308
    %v5311 = vmul.f32 %v5301, %v5309
    %5313 = vrot.lane.b32.xlu0 %v5311, 16
    %v5314 = vpop.permute.xlu0 %5313
    %v5316 = vadd.f32 %v5306, %v5314
    %v5317 = vtanh.pop %v5316
    %5319 = vrot.lane.b32.xlu0 %v5317, 32
    %v5320 = vpop.permute.xlu0 %5319
    %v5322 = vmul.f32 %v5301, %v5320
    %v5323 = vlaneseq
    %v5324 = vshrl.u32 %v5323, 7
    %v5325 = vsub.s32 1, %v5324
    %v5326 = vrot.slane %v5322, %v5325
    %v5327 = vsel %vm3194, %v5326, %v5216
    %v5329 = vrot.slane %v5322, 1
    %5330 = vrot.lane.b32.xlu0 %v5329, 80
    %v5331 = vpop.permute.xlu0 %5330
    %v5332 = vsel %vm285, %v5331, 0
    %5334 = vmatprep.subr.mxu0 0.0
    %5335 = vmatpush1.msra.mxu0 0.0
    %5336 = vmatprep.subr.mxu0 0.0
    %5337 = vmatpush1.msra.mxu0 0.0
    %5338 = vmatprep.subr.mxu0 0.0
    %5339 = vmatpush1.msra.mxu0 0.0
    %5340 = vmatprep.subr.mxu0 0.0
    %5341 = vmatpush1.msra.mxu0 0.0
    %5342 = vmatprep.subr.mxu0 0.0
    %5343 = vmatpush1.msra.mxu0 0.0
    %5344 = vmatprep.subr.mxu0 0.0
    %5345 = vmatpush1.msra.mxu0 0.0
    %5346 = vmatprep.subr.mxu0 0.0
    %5347 = vmatpush1.msra.mxu0 0.0
    %5348 = vmatprep.subr.mxu0 0.0
    %5349 = vmatpush1.msra.mxu0 0.0
    %5350 = vmatprep.subr.mxu0 0.0
    %5351 = vmatpush1.msra.mxu0 0.0
    %5352 = vmatprep.subr.mxu0 0.0
    %5353 = vmatpush1.msra.mxu0 0.0
    %5354 = vmatprep.subr.mxu0 0.0
    %5355 = vmatpush1.msra.mxu0 0.0
    %5356 = vmatprep.subr.mxu0 0.0
    %5357 = vmatpush1.msra.mxu0 0.0
    %5358 = vmatprep.subr.mxu0 0.0
    %5359 = vmatpush1.msra.mxu0 0.0
    %5360 = vmatprep.subr.mxu0 0.0
    %5361 = vmatpush1.msra.mxu0 0.0
    %5362 = vmatprep.subr.mxu0 0.0
    %5363 = vmatpush1.msra.mxu0 %v5038
    %5364 = vmatprep.subr.mxu0 0.0
    %5365 = vmatpush1.msra.mxu0 %v5037
    %5366 = vmatprep.subr.mxu0 0.0
    %5367 = vmatpush2.msra.mxu0 0.0
    %5368 = vmatprep.subr.mxu0 0.0
    %5369 = vmatpush2.msra.mxu0 0.0
    %5370 = vmatprep.subr.mxu0 0.0
    %5371 = vmatpush2.msra.mxu0 0.0
    %5372 = vmatprep.subr.mxu0 0.0
    %5373 = vmatpush2.msra.mxu0 0.0
    %5374 = vmatprep.subr.mxu0 0.0
    %5375 = vmatpush2.msra.mxu0 0.0
    %5376 = vmatprep.subr.mxu0 0.0
    %5377 = vmatpush2.msra.mxu0 0.0
    %5378 = vmatprep.subr.mxu0 0.0
    %5379 = vmatpush2.msra.mxu0 0.0
    %5380 = vmatprep.subr.mxu0 0.0
    %5381 = vmatpush2.msra.mxu0 0.0
    %5382 = vmatprep.subr.mxu0 0.0
    %5383 = vmatpush2.msra.mxu0 0.0
    %5384 = vmatprep.subr.mxu0 0.0
    %5385 = vmatpush2.msra.mxu0 0.0
    %5386 = vmatprep.subr.mxu0 0.0
    %5387 = vmatpush2.msra.mxu0 0.0
    %5388 = vmatprep.subr.mxu0 0.0
    %5389 = vmatpush2.msra.mxu0 0.0
    %5390 = vmatprep.subr.mxu0 0.0
    %5391 = vmatpush2.msra.mxu0 0.0
    %5392 = vmatprep.subr.mxu0 0.0
    %5393 = vmatpush2.msra.mxu0 0.0
    %5394 = vmatprep.subr.mxu0 0.0
    %5395 = vmatpush2.msra.mxu0 0.0
    %5396 = vmatprep.subr.mxu0 0.0
    %5397 = vmatpush2.msra.mxu0 0.0
    %5398 = vmatprep.mubr.f32.mxu0 0.0
    %5399 = vmatmul.mubr.f32.gmra.mxu0 %v5332
    %v5400 = vpop.f32.mrf.mxu0
    %v5401 = vadd.f32 0.0, %v5400
    %v5402 = vpop.f32.mrf.mxu0
    %5403 = vdwg.mxu0
    %v5405 = vrot.slane %v5401, 6
    %v5407 = vadd.f32 %v5114, %v5405
    %v5408 = vsub.f32 0.0, %v5407
    %v5409 = vmul.f32 %v5408, 1.442695
    %v5410 = vpow.pop %v5409
    %v5411 = vadd.f32 %v5410, 1.0
    %v5412 = vrcp.pop %v5411
    %v5413 = vmul.f32 1.0, %v5412
    %v5414 = vtanh.pop %v5407
    %v5416 = vrot.slane %v5316, 7
    %v5418 = vmul.f32 %v5413, %v5416
    %5420 = vrot.lane.b32.xlu0 %v5414, 96
    %v5421 = vpop.permute.xlu0 %5420
    %v5423 = vmul.f32 %v5413, %v5421
    %5425 = vrot.lane.b32.xlu0 %v5423, 16
    %v5426 = vpop.permute.xlu0 %5425
    %v5428 = vadd.f32 %v5418, %v5426
    %v5429 = vtanh.pop %v5428
    %5431 = vrot.lane.b32.xlu0 %v5429, 32
    %v5432 = vpop.permute.xlu0 %5431
    %v5434 = vmul.f32 %v5413, %v5432
    %v5435 = vlaneseq
    %v5436 = vshrl.u32 %v5435, 7
    %v5437 = vsub.s32 2, %v5436
    %v5438 = vrot.slane %v5434, %v5437
    %v5439 = vsel %vm3309, %v5438, %v5327
    %v5441 = vrot.slane %v5434, 2
    %5442 = vrot.lane.b32.xlu0 %v5441, 80
    %v5443 = vpop.permute.xlu0 %5442
    %v5444 = vsel %vm285, %v5443, 0
    %5446 = vmatprep.subr.mxu0 0.0
    %5447 = vmatpush1.msra.mxu0 0.0
    %5448 = vmatprep.subr.mxu0 0.0
    %5449 = vmatpush1.msra.mxu0 0.0
    %5450 = vmatprep.subr.mxu0 0.0
    %5451 = vmatpush1.msra.mxu0 0.0
    %5452 = vmatprep.subr.mxu0 0.0
    %5453 = vmatpush1.msra.mxu0 0.0
    %5454 = vmatprep.subr.mxu0 0.0
    %5455 = vmatpush1.msra.mxu0 0.0
    %5456 = vmatprep.subr.mxu0 0.0
    %5457 = vmatpush1.msra.mxu0 0.0
    %5458 = vmatprep.subr.mxu0 0.0
    %5459 = vmatpush1.msra.mxu0 0.0
    %5460 = vmatprep.subr.mxu0 0.0
    %5461 = vmatpush1.msra.mxu0 0.0
    %5462 = vmatprep.subr.mxu0 0.0
    %5463 = vmatpush1.msra.mxu0 0.0
    %5464 = vmatprep.subr.mxu0 0.0
    %5465 = vmatpush1.msra.mxu0 0.0
    %5466 = vmatprep.subr.mxu0 0.0
    %5467 = vmatpush1.msra.mxu0 0.0
    %5468 = vmatprep.subr.mxu0 0.0
    %5469 = vmatpush1.msra.mxu0 0.0
    %5470 = vmatprep.subr.mxu0 0.0
    %5471 = vmatpush1.msra.mxu0 0.0
    %5472 = vmatprep.subr.mxu0 0.0
    %5473 = vmatpush1.msra.mxu0 0.0
    %5474 = vmatprep.subr.mxu0 0.0
    %5475 = vmatpush1.msra.mxu0 %v5038
    %5476 = vmatprep.subr.mxu0 0.0
    %5477 = vmatpush1.msra.mxu0 %v5037
    %5478 = vmatprep.subr.mxu0 0.0
    %5479 = vmatpush2.msra.mxu0 0.0
    %5480 = vmatprep.subr.mxu0 0.0
    %5481 = vmatpush2.msra.mxu0 0.0
    %5482 = vmatprep.subr.mxu0 0.0
    %5483 = vmatpush2.msra.mxu0 0.0
    %5484 = vmatprep.subr.mxu0 0.0
    %5485 = vmatpush2.msra.mxu0 0.0
    %5486 = vmatprep.subr.mxu0 0.0
    %5487 = vmatpush2.msra.mxu0 0.0
    %5488 = vmatprep.subr.mxu0 0.0
    %5489 = vmatpush2.msra.mxu0 0.0
    %5490 = vmatprep.subr.mxu0 0.0
    %5491 = vmatpush2.msra.mxu0 0.0
    %5492 = vmatprep.subr.mxu0 0.0
    %5493 = vmatpush2.msra.mxu0 0.0
    %5494 = vmatprep.subr.mxu0 0.0
    %5495 = vmatpush2.msra.mxu0 0.0
    %5496 = vmatprep.subr.mxu0 0.0
    %5497 = vmatpush2.msra.mxu0 0.0
    %5498 = vmatprep.subr.mxu0 0.0
    %5499 = vmatpush2.msra.mxu0 0.0
    %5500 = vmatprep.subr.mxu0 0.0
    %5501 = vmatpush2.msra.mxu0 0.0
    %5502 = vmatprep.subr.mxu0 0.0
    %5503 = vmatpush2.msra.mxu0 0.0
    %5504 = vmatprep.subr.mxu0 0.0
    %5505 = vmatpush2.msra.mxu0 0.0
    %5506 = vmatprep.subr.mxu0 0.0
    %5507 = vmatpush2.msra.mxu0 0.0
    %5508 = vmatprep.subr.mxu0 0.0
    %5509 = vmatpush2.msra.mxu0 0.0
    %5510 = vmatprep.mubr.f32.mxu0 0.0
    %5511 = vmatmul.mubr.f32.gmra.mxu0 %v5444
    %v5512 = vpop.f32.mrf.mxu0
    %v5513 = vadd.f32 0.0, %v5512
    %v5514 = vpop.f32.mrf.mxu0
    %5515 = vdwg.mxu0
    %v5517 = vrot.slane %v5513, 5
    %v5519 = vadd.f32 %v5114, %v5517
    %v5520 = vsub.f32 0.0, %v5519
    %v5521 = vmul.f32 %v5520, 1.442695
    %v5522 = vpow.pop %v5521
    %v5523 = vadd.f32 %v5522, 1.0
    %v5524 = vrcp.pop %v5523
    %v5525 = vmul.f32 1.0, %v5524
    %v5526 = vtanh.pop %v5519
    %v5528 = vrot.slane %v5428, 7
    %v5530 = vmul.f32 %v5525, %v5528
    %5532 = vrot.lane.b32.xlu0 %v5526, 96
    %v5533 = vpop.permute.xlu0 %5532
    %v5535 = vmul.f32 %v5525, %v5533
    %5537 = vrot.lane.b32.xlu0 %v5535, 16
    %v5538 = vpop.permute.xlu0 %5537
    %v5540 = vadd.f32 %v5530, %v5538
    %v5541 = vtanh.pop %v5540
    %5543 = vrot.lane.b32.xlu0 %v5541, 32
    %v5544 = vpop.permute.xlu0 %5543
    %v5546 = vmul.f32 %v5525, %v5544
    %v5547 = vlaneseq
    %v5548 = vshrl.u32 %v5547, 7
    %v5549 = vsub.s32 3, %v5548
    %v5550 = vrot.slane %v5546, %v5549
    %v5551 = vsel %vm3424, %v5550, %v5439
    %v5553 = vrot.slane %v5546, 3
    %5554 = vrot.lane.b32.xlu0 %v5553, 80
    %v5555 = vpop.permute.xlu0 %5554
    %v5556 = vsel %vm285, %v5555, 0
    %5558 = vmatprep.subr.mxu0 0.0
    %5559 = vmatpush1.msra.mxu0 0.0
    %5560 = vmatprep.subr.mxu0 0.0
    %5561 = vmatpush1.msra.mxu0 0.0
    %5562 = vmatprep.subr.mxu0 0.0
    %5563 = vmatpush1.msra.mxu0 0.0
    %5564 = vmatprep.subr.mxu0 0.0
    %5565 = vmatpush1.msra.mxu0 0.0
    %5566 = vmatprep.subr.mxu0 0.0
    %5567 = vmatpush1.msra.mxu0 0.0
    %5568 = vmatprep.subr.mxu0 0.0
    %5569 = vmatpush1.msra.mxu0 0.0
    %5570 = vmatprep.subr.mxu0 0.0
    %5571 = vmatpush1.msra.mxu0 0.0
    %5572 = vmatprep.subr.mxu0 0.0
    %5573 = vmatpush1.msra.mxu0 0.0
    %5574 = vmatprep.subr.mxu0 0.0
    %5575 = vmatpush1.msra.mxu0 0.0
    %5576 = vmatprep.subr.mxu0 0.0
    %5577 = vmatpush1.msra.mxu0 0.0
    %5578 = vmatprep.subr.mxu0 0.0
    %5579 = vmatpush1.msra.mxu0 0.0
    %5580 = vmatprep.subr.mxu0 0.0
    %5581 = vmatpush1.msra.mxu0 0.0
    %5582 = vmatprep.subr.mxu0 0.0
    %5583 = vmatpush1.msra.mxu0 0.0
    %5584 = vmatprep.subr.mxu0 0.0
    %5585 = vmatpush1.msra.mxu0 0.0
    %5586 = vmatprep.subr.mxu0 0.0
    %5587 = vmatpush1.msra.mxu0 %v5038
    %5588 = vmatprep.subr.mxu0 0.0
    %5589 = vmatpush1.msra.mxu0 %v5037
    %5590 = vmatprep.subr.mxu0 0.0
    %5591 = vmatpush2.msra.mxu0 0.0
    %5592 = vmatprep.subr.mxu0 0.0
    %5593 = vmatpush2.msra.mxu0 0.0
    %5594 = vmatprep.subr.mxu0 0.0
    %5595 = vmatpush2.msra.mxu0 0.0
    %5596 = vmatprep.subr.mxu0 0.0
    %5597 = vmatpush2.msra.mxu0 0.0
    %5598 = vmatprep.subr.mxu0 0.0
    %5599 = vmatpush2.msra.mxu0 0.0
    %5600 = vmatprep.subr.mxu0 0.0
    %5601 = vmatpush2.msra.mxu0 0.0
    %5602 = vmatprep.subr.mxu0 0.0
    %5603 = vmatpush2.msra.mxu0 0.0
    %5604 = vmatprep.subr.mxu0 0.0
    %5605 = vmatpush2.msra.mxu0 0.0
    %5606 = vmatprep.subr.mxu0 0.0
    %5607 = vmatpush2.msra.mxu0 0.0
    %5608 = vmatprep.subr.mxu0 0.0
    %5609 = vmatpush2.msra.mxu0 0.0
    %5610 = vmatprep.subr.mxu0 0.0
    %5611 = vmatpush2.msra.mxu0 0.0
    %5612 = vmatprep.subr.mxu0 0.0
    %5613 = vmatpush2.msra.mxu0 0.0
    %5614 = vmatprep.subr.mxu0 0.0
    %5615 = vmatpush2.msra.mxu0 0.0
    %5616 = vmatprep.subr.mxu0 0.0
    %5617 = vmatpush2.msra.mxu0 0.0
    %5618 = vmatprep.subr.mxu0 0.0
    %5619 = vmatpush2.msra.mxu0 0.0
    %5620 = vmatprep.subr.mxu0 0.0
    %5621 = vmatpush2.msra.mxu0 0.0
    %5622 = vmatprep.mubr.f32.mxu0 0.0
    %5623 = vmatmul.mubr.f32.gmra.mxu0 %v5556
    %v5624 = vpop.f32.mrf.mxu0
    %v5625 = vadd.f32 0.0, %v5624
    %v5626 = vpop.f32.mrf.mxu0
    %5627 = vdwg.mxu0
    %v5629 = vrot.slane %v5625, 4
    %v5631 = vadd.f32 %v5114, %v5629
    %v5632 = vsub.f32 0.0, %v5631
    %v5633 = vmul.f32 %v5632, 1.442695
    %v5634 = vpow.pop %v5633
    %v5635 = vadd.f32 %v5634, 1.0
    %v5636 = vrcp.pop %v5635
    %v5637 = vmul.f32 1.0, %v5636
    %v5638 = vtanh.pop %v5631
    %v5640 = vrot.slane %v5540, 7
    %v5642 = vmul.f32 %v5637, %v5640
    %5644 = vrot.lane.b32.xlu0 %v5638, 96
    %v5645 = vpop.permute.xlu0 %5644
    %v5647 = vmul.f32 %v5637, %v5645
    %5649 = vrot.lane.b32.xlu0 %v5647, 16
    %v5650 = vpop.permute.xlu0 %5649
    %v5652 = vadd.f32 %v5642, %v5650
    %v5653 = vtanh.pop %v5652
    %5655 = vrot.lane.b32.xlu0 %v5653, 32
    %v5656 = vpop.permute.xlu0 %5655
    %v5658 = vmul.f32 %v5637, %v5656
    %v5659 = vlaneseq
    %v5660 = vshrl.u32 %v5659, 7
    %v5661 = vsub.s32 4, %v5660
    %v5662 = vrot.slane %v5658, %v5661
    %v5663 = vsel %vm3539, %v5662, %v5551
    %v5665 = vrot.slane %v5658, 4
    %5666 = vrot.lane.b32.xlu0 %v5665, 80
    %v5667 = vpop.permute.xlu0 %5666
    %v5668 = vsel %vm285, %v5667, 0
    %5670 = vmatprep.subr.mxu0 0.0
    %5671 = vmatpush1.msra.mxu0 0.0
    %5672 = vmatprep.subr.mxu0 0.0
    %5673 = vmatpush1.msra.mxu0 0.0
    %5674 = vmatprep.subr.mxu0 0.0
    %5675 = vmatpush1.msra.mxu0 0.0
    %5676 = vmatprep.subr.mxu0 0.0
    %5677 = vmatpush1.msra.mxu0 0.0
    %5678 = vmatprep.subr.mxu0 0.0
    %5679 = vmatpush1.msra.mxu0 0.0
    %5680 = vmatprep.subr.mxu0 0.0
    %5681 = vmatpush1.msra.mxu0 0.0
    %5682 = vmatprep.subr.mxu0 0.0
    %5683 = vmatpush1.msra.mxu0 0.0
    %5684 = vmatprep.subr.mxu0 0.0
    %5685 = vmatpush1.msra.mxu0 0.0
    %5686 = vmatprep.subr.mxu0 0.0
    %5687 = vmatpush1.msra.mxu0 0.0
    %5688 = vmatprep.subr.mxu0 0.0
    %5689 = vmatpush1.msra.mxu0 0.0
    %5690 = vmatprep.subr.mxu0 0.0
    %5691 = vmatpush1.msra.mxu0 0.0
    %5692 = vmatprep.subr.mxu0 0.0
    %5693 = vmatpush1.msra.mxu0 0.0
    %5694 = vmatprep.subr.mxu0 0.0
    %5695 = vmatpush1.msra.mxu0 0.0
    %5696 = vmatprep.subr.mxu0 0.0
    %5697 = vmatpush1.msra.mxu0 0.0
    %5698 = vmatprep.subr.mxu0 0.0
    %5699 = vmatpush1.msra.mxu0 %v5038
    %5700 = vmatprep.subr.mxu0 0.0
    %5701 = vmatpush1.msra.mxu0 %v5037
    %5702 = vmatprep.subr.mxu0 0.0
    %5703 = vmatpush2.msra.mxu0 0.0
    %5704 = vmatprep.subr.mxu0 0.0
    %5705 = vmatpush2.msra.mxu0 0.0
    %5706 = vmatprep.subr.mxu0 0.0
    %5707 = vmatpush2.msra.mxu0 0.0
    %5708 = vmatprep.subr.mxu0 0.0
    %5709 = vmatpush2.msra.mxu0 0.0
    %5710 = vmatprep.subr.mxu0 0.0
    %5711 = vmatpush2.msra.mxu0 0.0
    %5712 = vmatprep.subr.mxu0 0.0
    %5713 = vmatpush2.msra.mxu0 0.0
    %5714 = vmatprep.subr.mxu0 0.0
    %5715 = vmatpush2.msra.mxu0 0.0
    %5716 = vmatprep.subr.mxu0 0.0
    %5717 = vmatpush2.msra.mxu0 0.0
    %5718 = vmatprep.subr.mxu0 0.0
    %5719 = vmatpush2.msra.mxu0 0.0
    %5720 = vmatprep.subr.mxu0 0.0
    %5721 = vmatpush2.msra.mxu0 0.0
    %5722 = vmatprep.subr.mxu0 0.0
    %5723 = vmatpush2.msra.mxu0 0.0
    %5724 = vmatprep.subr.mxu0 0.0
    %5725 = vmatpush2.msra.mxu0 0.0
    %5726 = vmatprep.subr.mxu0 0.0
    %5727 = vmatpush2.msra.mxu0 0.0
    %5728 = vmatprep.subr.mxu0 0.0
    %5729 = vmatpush2.msra.mxu0 0.0
    %5730 = vmatprep.subr.mxu0 0.0
    %5731 = vmatpush2.msra.mxu0 0.0
    %5732 = vmatprep.subr.mxu0 0.0
    %5733 = vmatpush2.msra.mxu0 0.0
    %5734 = vmatprep.mubr.f32.mxu0 0.0
    %5735 = vmatmul.mubr.f32.gmra.mxu0 %v5668
    %v5736 = vpop.f32.mrf.mxu0
    %v5737 = vadd.f32 0.0, %v5736
    %v5738 = vpop.f32.mrf.mxu0
    %5739 = vdwg.mxu0
    %v5741 = vrot.slane %v5737, 3
    %v5743 = vadd.f32 %v5114, %v5741
    %v5744 = vsub.f32 0.0, %v5743
    %v5745 = vmul.f32 %v5744, 1.442695
    %v5746 = vpow.pop %v5745
    %v5747 = vadd.f32 %v5746, 1.0
    %v5748 = vrcp.pop %v5747
    %v5749 = vmul.f32 1.0, %v5748
    %v5750 = vtanh.pop %v5743
    %v5752 = vrot.slane %v5652, 7
    %v5754 = vmul.f32 %v5749, %v5752
    %5756 = vrot.lane.b32.xlu0 %v5750, 96
    %v5757 = vpop.permute.xlu0 %5756
    %v5759 = vmul.f32 %v5749, %v5757
    %5761 = vrot.lane.b32.xlu0 %v5759, 16
    %v5762 = vpop.permute.xlu0 %5761
    %v5764 = vadd.f32 %v5754, %v5762
    %v5765 = vtanh.pop %v5764
    %5767 = vrot.lane.b32.xlu0 %v5765, 32
    %v5768 = vpop.permute.xlu0 %5767
    %v5770 = vmul.f32 %v5749, %v5768
    %v5771 = vlaneseq
    %v5772 = vshrl.u32 %v5771, 7
    %v5773 = vsub.s32 5, %v5772
    %v5774 = vrot.slane %v5770, %v5773
    %v5775 = vsel %vm3654, %v5774, %v5663
    %v5777 = vrot.slane %v5770, 5
    %5778 = vrot.lane.b32.xlu0 %v5777, 80
    %v5779 = vpop.permute.xlu0 %5778
    %v5780 = vsel %vm285, %v5779, 0
    %5782 = vmatprep.subr.mxu0 0.0
    %5783 = vmatpush1.msra.mxu0 0.0
    %5784 = vmatprep.subr.mxu0 0.0
    %5785 = vmatpush1.msra.mxu0 0.0
    %5786 = vmatprep.subr.mxu0 0.0
    %5787 = vmatpush1.msra.mxu0 0.0
    %5788 = vmatprep.subr.mxu0 0.0
    %5789 = vmatpush1.msra.mxu0 0.0
    %5790 = vmatprep.subr.mxu0 0.0
    %5791 = vmatpush1.msra.mxu0 0.0
    %5792 = vmatprep.subr.mxu0 0.0
    %5793 = vmatpush1.msra.mxu0 0.0
    %5794 = vmatprep.subr.mxu0 0.0
    %5795 = vmatpush1.msra.mxu0 0.0
    %5796 = vmatprep.subr.mxu0 0.0
    %5797 = vmatpush1.msra.mxu0 0.0
    %5798 = vmatprep.subr.mxu0 0.0
    %5799 = vmatpush1.msra.mxu0 0.0
    %5800 = vmatprep.subr.mxu0 0.0
    %5801 = vmatpush1.msra.mxu0 0.0
    %5802 = vmatprep.subr.mxu0 0.0
    %5803 = vmatpush1.msra.mxu0 0.0
    %5804 = vmatprep.subr.mxu0 0.0
    %5805 = vmatpush1.msra.mxu0 0.0
    %5806 = vmatprep.subr.mxu0 0.0
    %5807 = vmatpush1.msra.mxu0 0.0
    %5808 = vmatprep.subr.mxu0 0.0
    %5809 = vmatpush1.msra.mxu0 0.0
    %5810 = vmatprep.subr.mxu0 0.0
    %5811 = vmatpush1.msra.mxu0 %v5038
    %5812 = vmatprep.subr.mxu0 0.0
    %5813 = vmatpush1.msra.mxu0 %v5037
    %5814 = vmatprep.subr.mxu0 0.0
    %5815 = vmatpush2.msra.mxu0 0.0
    %5816 = vmatprep.subr.mxu0 0.0
    %5817 = vmatpush2.msra.mxu0 0.0
    %5818 = vmatprep.subr.mxu0 0.0
    %5819 = vmatpush2.msra.mxu0 0.0
    %5820 = vmatprep.subr.mxu0 0.0
    %5821 = vmatpush2.msra.mxu0 0.0
    %5822 = vmatprep.subr.mxu0 0.0
    %5823 = vmatpush2.msra.mxu0 0.0
    %5824 = vmatprep.subr.mxu0 0.0
    %5825 = vmatpush2.msra.mxu0 0.0
    %5826 = vmatprep.subr.mxu0 0.0
    %5827 = vmatpush2.msra.mxu0 0.0
    %5828 = vmatprep.subr.mxu0 0.0
    %5829 = vmatpush2.msra.mxu0 0.0
    %5830 = vmatprep.subr.mxu0 0.0
    %5831 = vmatpush2.msra.mxu0 0.0
    %5832 = vmatprep.subr.mxu0 0.0
    %5833 = vmatpush2.msra.mxu0 0.0
    %5834 = vmatprep.subr.mxu0 0.0
    %5835 = vmatpush2.msra.mxu0 0.0
    %5836 = vmatprep.subr.mxu0 0.0
    %5837 = vmatpush2.msra.mxu0 0.0
    %5838 = vmatprep.subr.mxu0 0.0
    %5839 = vmatpush2.msra.mxu0 0.0
    %5840 = vmatprep.subr.mxu0 0.0
    %5841 = vmatpush2.msra.mxu0 0.0
    %5842 = vmatprep.subr.mxu0 0.0
    %5843 = vmatpush2.msra.mxu0 0.0
    %5844 = vmatprep.subr.mxu0 0.0
    %5845 = vmatpush2.msra.mxu0 0.0
    %5846 = vmatprep.mubr.f32.mxu0 0.0
    %5847 = vmatmul.mubr.f32.gmra.mxu0 %v5780
    %v5848 = vpop.f32.mrf.mxu0
    %v5849 = vadd.f32 0.0, %v5848
    %v5850 = vpop.f32.mrf.mxu0
    %5851 = vdwg.mxu0
    %v5853 = vrot.slane %v5849, 2
    %v5855 = vadd.f32 %v5114, %v5853
    %v5856 = vsub.f32 0.0, %v5855
    %v5857 = vmul.f32 %v5856, 1.442695
    %v5858 = vpow.pop %v5857
    %v5859 = vadd.f32 %v5858, 1.0
    %v5860 = vrcp.pop %v5859
    %v5861 = vmul.f32 1.0, %v5860
    %v5862 = vtanh.pop %v5855
    %v5864 = vrot.slane %v5764, 7
    %v5866 = vmul.f32 %v5861, %v5864
    %5868 = vrot.lane.b32.xlu0 %v5862, 96
    %v5869 = vpop.permute.xlu0 %5868
    %v5871 = vmul.f32 %v5861, %v5869
    %5873 = vrot.lane.b32.xlu0 %v5871, 16
    %v5874 = vpop.permute.xlu0 %5873
    %v5876 = vadd.f32 %v5866, %v5874
    %v5877 = vtanh.pop %v5876
    %5879 = vrot.lane.b32.xlu0 %v5877, 32
    %v5880 = vpop.permute.xlu0 %5879
    %v5882 = vmul.f32 %v5861, %v5880
    %v5883 = vlaneseq
    %v5884 = vshrl.u32 %v5883, 7
    %v5885 = vsub.s32 6, %v5884
    %v5886 = vrot.slane %v5882, %v5885
    %v5887 = vsel %vm3769, %v5886, %v5775
    %v5889 = vrot.slane %v5882, 6
    %5890 = vrot.lane.b32.xlu0 %v5889, 80
    %v5891 = vpop.permute.xlu0 %5890
    %v5892 = vsel %vm285, %v5891, 0
    %5894 = vmatprep.subr.mxu0 0.0
    %5895 = vmatpush1.msra.mxu0 0.0
    %5896 = vmatprep.subr.mxu0 0.0
    %5897 = vmatpush1.msra.mxu0 0.0
    %5898 = vmatprep.subr.mxu0 0.0
    %5899 = vmatpush1.msra.mxu0 0.0
    %5900 = vmatprep.subr.mxu0 0.0
    %5901 = vmatpush1.msra.mxu0 0.0
    %5902 = vmatprep.subr.mxu0 0.0
    %5903 = vmatpush1.msra.mxu0 0.0
    %5904 = vmatprep.subr.mxu0 0.0
    %5905 = vmatpush1.msra.mxu0 0.0
    %5906 = vmatprep.subr.mxu0 0.0
    %5907 = vmatpush1.msra.mxu0 0.0
    %5908 = vmatprep.subr.mxu0 0.0
    %5909 = vmatpush1.msra.mxu0 0.0
    %5910 = vmatprep.subr.mxu0 0.0
    %5911 = vmatpush1.msra.mxu0 0.0
    %5912 = vmatprep.subr.mxu0 0.0
    %5913 = vmatpush1.msra.mxu0 0.0
    %5914 = vmatprep.subr.mxu0 0.0
    %5915 = vmatpush1.msra.mxu0 0.0
    %5916 = vmatprep.subr.mxu0 0.0
    %5917 = vmatpush1.msra.mxu0 0.0
    %5918 = vmatprep.subr.mxu0 0.0
    %5919 = vmatpush1.msra.mxu0 0.0
    %5920 = vmatprep.subr.mxu0 0.0
    %5921 = vmatpush1.msra.mxu0 0.0
    %5922 = vmatprep.subr.mxu0 0.0
    %5923 = vmatpush1.msra.mxu0 %v5038
    %5924 = vmatprep.subr.mxu0 0.0
    %5925 = vmatpush1.msra.mxu0 %v5037
    %5926 = vmatprep.subr.mxu0 0.0
    %5927 = vmatpush2.msra.mxu0 0.0
    %5928 = vmatprep.subr.mxu0 0.0
    %5929 = vmatpush2.msra.mxu0 0.0
    %5930 = vmatprep.subr.mxu0 0.0
    %5931 = vmatpush2.msra.mxu0 0.0
    %5932 = vmatprep.subr.mxu0 0.0
    %5933 = vmatpush2.msra.mxu0 0.0
    %5934 = vmatprep.subr.mxu0 0.0
    %5935 = vmatpush2.msra.mxu0 0.0
    %5936 = vmatprep.subr.mxu0 0.0
    %5937 = vmatpush2.msra.mxu0 0.0
    %5938 = vmatprep.subr.mxu0 0.0
    %5939 = vmatpush2.msra.mxu0 0.0
    %5940 = vmatprep.subr.mxu0 0.0
    %5941 = vmatpush2.msra.mxu0 0.0
    %5942 = vmatprep.subr.mxu0 0.0
    %5943 = vmatpush2.msra.mxu0 0.0
    %5944 = vmatprep.subr.mxu0 0.0
    %5945 = vmatpush2.msra.mxu0 0.0
    %5946 = vmatprep.subr.mxu0 0.0
    %5947 = vmatpush2.msra.mxu0 0.0
    %5948 = vmatprep.subr.mxu0 0.0
    %5949 = vmatpush2.msra.mxu0 0.0
    %5950 = vmatprep.subr.mxu0 0.0
    %5951 = vmatpush2.msra.mxu0 0.0
    %5952 = vmatprep.subr.mxu0 0.0
    %5953 = vmatpush2.msra.mxu0 0.0
    %5954 = vmatprep.subr.mxu0 0.0
    %5955 = vmatpush2.msra.mxu0 0.0
    %5956 = vmatprep.subr.mxu0 0.0
    %5957 = vmatpush2.msra.mxu0 0.0
    %5958 = vmatprep.mubr.f32.mxu0 0.0
    %5959 = vmatmul.mubr.f32.gmra.mxu0 %v5892
    %v5960 = vpop.f32.mrf.mxu0
    %v5961 = vadd.f32 0.0, %v5960
    %v5962 = vpop.f32.mrf.mxu0
    %5963 = vdwg.mxu0
    %v5965 = vrot.slane %v5961, 1
    %v5967 = vadd.f32 %v5114, %v5965
    %v5968 = vsub.f32 0.0, %v5967
    %v5969 = vmul.f32 %v5968, 1.442695
    %v5970 = vpow.pop %v5969
    %v5971 = vadd.f32 %v5970, 1.0
    %v5972 = vrcp.pop %v5971
    %v5973 = vmul.f32 1.0, %v5972
    %v5974 = vtanh.pop %v5967
    %v5976 = vrot.slane %v5876, 7
    %v5978 = vmul.f32 %v5973, %v5976
    %5980 = vrot.lane.b32.xlu0 %v5974, 96
    %v5981 = vpop.permute.xlu0 %5980
    %v5983 = vmul.f32 %v5973, %v5981
    %5985 = vrot.lane.b32.xlu0 %v5983, 16
    %v5986 = vpop.permute.xlu0 %5985
    %v5988 = vadd.f32 %v5978, %v5986
    %v5989 = vtanh.pop %v5988
    %5991 = vrot.lane.b32.xlu0 %v5989, 32
    %v5992 = vpop.permute.xlu0 %5991
    %v5994 = vmul.f32 %v5973, %v5992
    %v5995 = vlaneseq
    %v5996 = vshrl.u32 %v5995, 7
    %v5997 = vsub.s32 7, %v5996
    %v5998 = vrot.slane %v5994, %v5997
    %v5999 = vsel %vm3884, %v5998, %v5887
    %v6000 = vld [vmem:[#allocation2 + $0x298] sm:$0xff]
    %v6001 = vld [vmem:[#allocation2 + $0x2a0] sm:$0xff]
    %v6002 = vld [vmem:[#allocation2 + $0x2a8] sm:$0xff]
    %v6003 = vld [vmem:[#allocation2 + $0x2b0] sm:$0xff]
    %v6004 = vld [vmem:[#allocation2 + $0x2b8] sm:$0xff]
    %v6005 = vld [vmem:[#allocation2 + $0x2c0] sm:$0xff]
    %v6006 = vld [vmem:[#allocation2 + $0x2c8] sm:$0x1]
    %v6007 = vlaneseq
    %v6008 = vshrl.u32 %v6007, 7
    %v6009 = vsub.s32 0, %v6008
    %v6010 = vrot.slane %v6006, %v6009
    %6011 = vmatprep.subr.mxu0 0.0
    %6012 = vmatpush1.msra.mxu0 0.0
    %6013 = vmatprep.subr.mxu0 0.0
    %6014 = vmatpush1.msra.mxu0 0.0
    %6015 = vmatprep.subr.mxu0 0.0
    %6016 = vmatpush1.msra.mxu0 0.0
    %6017 = vmatprep.subr.mxu0 0.0
    %6018 = vmatpush1.msra.mxu0 0.0
    %6019 = vmatprep.subr.mxu0 0.0
    %6020 = vmatpush1.msra.mxu0 0.0
    %6021 = vmatprep.subr.mxu0 0.0
    %6022 = vmatpush1.msra.mxu0 0.0
    %6023 = vmatprep.subr.mxu0 0.0
    %6024 = vmatpush1.msra.mxu0 0.0
    %6025 = vmatprep.subr.mxu0 0.0
    %6026 = vmatpush1.msra.mxu0 0.0
    %6027 = vmatprep.subr.mxu0 0.0
    %6028 = vmatpush1.msra.mxu0 0.0
    %6029 = vmatprep.subr.mxu0 0.0
    %6030 = vmatpush1.msra.mxu0 0.0
    %6031 = vmatprep.subr.mxu0 0.0
    %6032 = vmatpush1.msra.mxu0 0.0
    %6033 = vmatprep.subr.mxu0 0.0
    %6034 = vmatpush1.msra.mxu0 0.0
    %6035 = vmatprep.subr.mxu0 0.0
    %6036 = vmatpush1.msra.mxu0 %v6003
    %6037 = vmatprep.subr.mxu0 0.0
    %6038 = vmatpush1.msra.mxu0 %v6002
    %6039 = vmatprep.subr.mxu0 0.0
    %6040 = vmatpush1.msra.mxu0 %v6001
    %6041 = vmatprep.subr.mxu0 0.0
    %6042 = vmatpush1.msra.mxu0 %v6000
    %6043 = vmatprep.subr.mxu0 0.0
    %6044 = vmatpush2.msra.mxu0 0.0
    %6045 = vmatprep.subr.mxu0 0.0
    %6046 = vmatpush2.msra.mxu0 0.0
    %6047 = vmatprep.subr.mxu0 0.0
    %6048 = vmatpush2.msra.mxu0 0.0
    %6049 = vmatprep.subr.mxu0 0.0
    %6050 = vmatpush2.msra.mxu0 0.0
    %6051 = vmatprep.subr.mxu0 0.0
    %6052 = vmatpush2.msra.mxu0 0.0
    %6053 = vmatprep.subr.mxu0 0.0
    %6054 = vmatpush2.msra.mxu0 0.0
    %6055 = vmatprep.subr.mxu0 0.0
    %6056 = vmatpush2.msra.mxu0 0.0
    %6057 = vmatprep.subr.mxu0 0.0
    %6058 = vmatpush2.msra.mxu0 0.0
    %6059 = vmatprep.subr.mxu0 0.0
    %6060 = vmatpush2.msra.mxu0 0.0
    %6061 = vmatprep.subr.mxu0 0.0
    %6062 = vmatpush2.msra.mxu0 0.0
    %6063 = vmatprep.subr.mxu0 0.0
    %6064 = vmatpush2.msra.mxu0 0.0
    %6065 = vmatprep.subr.mxu0 0.0
    %6066 = vmatpush2.msra.mxu0 0.0
    %6067 = vmatprep.subr.mxu0 0.0
    %6068 = vmatpush2.msra.mxu0 0.0
    %6069 = vmatprep.subr.mxu0 0.0
    %6070 = vmatpush2.msra.mxu0 0.0
    %6071 = vmatprep.subr.mxu0 0.0
    %6072 = vmatpush2.msra.mxu0 0.0
    %6073 = vmatprep.subr.mxu0 0.0
    %6074 = vmatpush2.msra.mxu0 0.0
    %6075 = vmatprep.mubr.f32.mxu0 0.0
    %6076 = vmatmul.mubr.f32.gmra.mxu0 %v5045
    %v6077 = vpop.f32.mrf.mxu0
    %v6078 = vadd.f32 %v6010, %v6077
    %v6079 = vpop.f32.mrf.mxu0
    %6080 = vdwg.mxu0
    %6081 = vmatprep.subr.mxu0 0.0
    %6082 = vmatpush1.msra.mxu0 0.0
    %6083 = vmatprep.subr.mxu0 0.0
    %6084 = vmatpush1.msra.mxu0 0.0
    %6085 = vmatprep.subr.mxu0 0.0
    %6086 = vmatpush1.msra.mxu0 0.0
    %6087 = vmatprep.subr.mxu0 0.0
    %6088 = vmatpush1.msra.mxu0 0.0
    %6089 = vmatprep.subr.mxu0 0.0
    %6090 = vmatpush1.msra.mxu0 0.0
    %6091 = vmatprep.subr.mxu0 0.0
    %6092 = vmatpush1.msra.mxu0 0.0
    %6093 = vmatprep.subr.mxu0 0.0
    %6094 = vmatpush1.msra.mxu0 0.0
    %6095 = vmatprep.subr.mxu0 0.0
    %6096 = vmatpush1.msra.mxu0 0.0
    %6097 = vmatprep.subr.mxu0 0.0
    %6098 = vmatpush1.msra.mxu0 0.0
    %6099 = vmatprep.subr.mxu0 0.0
    %6100 = vmatpush1.msra.mxu0 0.0
    %6101 = vmatprep.subr.mxu0 0.0
    %6102 = vmatpush1.msra.mxu0 0.0
    %6103 = vmatprep.subr.mxu0 0.0
    %6104 = vmatpush1.msra.mxu0 0.0
    %6105 = vmatprep.subr.mxu0 0.0
    %6106 = vmatpush1.msra.mxu0 0.0
    %6107 = vmatprep.subr.mxu0 0.0
    %6108 = vmatpush1.msra.mxu0 0.0
    %6109 = vmatprep.subr.mxu0 0.0
    %6110 = vmatpush1.msra.mxu0 %v6005
    %6111 = vmatprep.subr.mxu0 0.0
    %6112 = vmatpush1.msra.mxu0 %v6004
    %6113 = vmatprep.subr.mxu0 0.0
    %6114 = vmatpush2.msra.mxu0 0.0
    %6115 = vmatprep.subr.mxu0 0.0
    %6116 = vmatpush2.msra.mxu0 0.0
    %6117 = vmatprep.subr.mxu0 0.0
    %6118 = vmatpush2.msra.mxu0 0.0
    %6119 = vmatprep.subr.mxu0 0.0
    %6120 = vmatpush2.msra.mxu0 0.0
    %6121 = vmatprep.subr.mxu0 0.0
    %6122 = vmatpush2.msra.mxu0 0.0
    %6123 = vmatprep.subr.mxu0 0.0
    %6124 = vmatpush2.msra.mxu0 0.0
    %6125 = vmatprep.subr.mxu0 0.0
    %6126 = vmatpush2.msra.mxu0 0.0
    %6127 = vmatprep.subr.mxu0 0.0
    %6128 = vmatpush2.msra.mxu0 0.0
    %6129 = vmatprep.subr.mxu0 0.0
    %6130 = vmatpush2.msra.mxu0 0.0
    %6131 = vmatprep.subr.mxu0 0.0
    %6132 = vmatpush2.msra.mxu0 0.0
    %6133 = vmatprep.subr.mxu0 0.0
    %6134 = vmatpush2.msra.mxu0 0.0
    %6135 = vmatprep.subr.mxu0 0.0
    %6136 = vmatpush2.msra.mxu0 0.0
    %6137 = vmatprep.subr.mxu0 0.0
    %6138 = vmatpush2.msra.mxu0 0.0
    %6139 = vmatprep.subr.mxu0 0.0
    %6140 = vmatpush2.msra.mxu0 0.0
    %6141 = vmatprep.subr.mxu0 0.0
    %6142 = vmatpush2.msra.mxu0 0.0
    %6143 = vmatprep.subr.mxu0 0.0
    %6144 = vmatpush2.msra.mxu0 0.0
    %6145 = vmatprep.mubr.f32.mxu0 0.0
    %6146 = vmatmul.mubr.f32.gmra.mxu0 %v2981
    %v6147 = vpop.f32.mrf.mxu0
    %v6148 = vadd.f32 0.0, %v6147
    %v6149 = vpop.f32.mrf.mxu0
    %6150 = vdwg.mxu0
    %v6152 = vrot.slane %v6148, 1
    %v6154 = vadd.f32 %v6078, %v6152
    %v6155 = vsub.f32 0.0, %v6154
    %v6156 = vmul.f32 %v6155, 1.442695
    %v6157 = vpow.pop %v6156
    %v6158 = vadd.f32 %v6157, 1.0
    %v6159 = vrcp.pop %v6158
    %v6160 = vmul.f32 1.0, %v6159
    %v6161 = vtanh.pop %v6154
    %v6162 = vmul.f32 %v6160, 0.0
    %6164 = vrot.lane.b32.xlu0 %v6161, 96
    %v6165 = vpop.permute.xlu0 %6164
    %v6167 = vmul.f32 %v6160, %v6165
    %6169 = vrot.lane.b32.xlu0 %v6167, 16
    %v6170 = vpop.permute.xlu0 %6169
    %v6172 = vadd.f32 %v6162, %v6170
    %v6173 = vtanh.pop %v6172
    %6175 = vrot.lane.b32.xlu0 %v6173, 32
    %v6176 = vpop.permute.xlu0 %6175
    %v6178 = vmul.f32 %v6160, %v6176
    %v6179 = vlaneseq
    %v6180 = vshrl.u32 %v6179, 7
    %v6181 = vsub.s32 7, %v6180
    %v6182 = vrot.slane %v6178, %v6181
    %v6183 = vsel %vm3884, %v6182, 0.0
    %v6185 = vrot.slane %v6178, 7
    %6186 = vrot.lane.b32.xlu0 %v6185, 80
    %v6187 = vpop.permute.xlu0 %6186
    %v6188 = vsel %vm285, %v6187, 0
    %6190 = vmatprep.subr.mxu0 0.0
    %6191 = vmatpush1.msra.mxu0 0.0
    %6192 = vmatprep.subr.mxu0 0.0
    %6193 = vmatpush1.msra.mxu0 0.0
    %6194 = vmatprep.subr.mxu0 0.0
    %6195 = vmatpush1.msra.mxu0 0.0
    %6196 = vmatprep.subr.mxu0 0.0
    %6197 = vmatpush1.msra.mxu0 0.0
    %6198 = vmatprep.subr.mxu0 0.0
    %6199 = vmatpush1.msra.mxu0 0.0
    %6200 = vmatprep.subr.mxu0 0.0
    %6201 = vmatpush1.msra.mxu0 0.0
    %6202 = vmatprep.subr.mxu0 0.0
    %6203 = vmatpush1.msra.mxu0 0.0
    %6204 = vmatprep.subr.mxu0 0.0
    %6205 = vmatpush1.msra.mxu0 0.0
    %6206 = vmatprep.subr.mxu0 0.0
    %6207 = vmatpush1.msra.mxu0 0.0
    %6208 = vmatprep.subr.mxu0 0.0
    %6209 = vmatpush1.msra.mxu0 0.0
    %6210 = vmatprep.subr.mxu0 0.0
    %6211 = vmatpush1.msra.mxu0 0.0
    %6212 = vmatprep.subr.mxu0 0.0
    %6213 = vmatpush1.msra.mxu0 0.0
    %6214 = vmatprep.subr.mxu0 0.0
    %6215 = vmatpush1.msra.mxu0 0.0
    %6216 = vmatprep.subr.mxu0 0.0
    %6217 = vmatpush1.msra.mxu0 0.0
    %6218 = vmatprep.subr.mxu0 0.0
    %6219 = vmatpush1.msra.mxu0 %v6005
    %6220 = vmatprep.subr.mxu0 0.0
    %6221 = vmatpush1.msra.mxu0 %v6004
    %6222 = vmatprep.subr.mxu0 0.0
    %6223 = vmatpush2.msra.mxu0 0.0
    %6224 = vmatprep.subr.mxu0 0.0
    %6225 = vmatpush2.msra.mxu0 0.0
    %6226 = vmatprep.subr.mxu0 0.0
    %6227 = vmatpush2.msra.mxu0 0.0
    %6228 = vmatprep.subr.mxu0 0.0
    %6229 = vmatpush2.msra.mxu0 0.0
    %6230 = vmatprep.subr.mxu0 0.0
    %6231 = vmatpush2.msra.mxu0 0.0
    %6232 = vmatprep.subr.mxu0 0.0
    %6233 = vmatpush2.msra.mxu0 0.0
    %6234 = vmatprep.subr.mxu0 0.0
    %6235 = vmatpush2.msra.mxu0 0.0
    %6236 = vmatprep.subr.mxu0 0.0
    %6237 = vmatpush2.msra.mxu0 0.0
    %6238 = vmatprep.subr.mxu0 0.0
    %6239 = vmatpush2.msra.mxu0 0.0
    %6240 = vmatprep.subr.mxu0 0.0
    %6241 = vmatpush2.msra.mxu0 0.0
    %6242 = vmatprep.subr.mxu0 0.0
    %6243 = vmatpush2.msra.mxu0 0.0
    %6244 = vmatprep.subr.mxu0 0.0
    %6245 = vmatpush2.msra.mxu0 0.0
    %6246 = vmatprep.subr.mxu0 0.0
    %6247 = vmatpush2.msra.mxu0 0.0
    %6248 = vmatprep.subr.mxu0 0.0
    %6249 = vmatpush2.msra.mxu0 0.0
    %6250 = vmatprep.subr.mxu0 0.0
    %6251 = vmatpush2.msra.mxu0 0.0
    %6252 = vmatprep.subr.mxu0 0.0
    %6253 = vmatpush2.msra.mxu0 0.0
    %6254 = vmatprep.mubr.f32.mxu0 0.0
    %6255 = vmatmul.mubr.f32.gmra.mxu0 %v6188
    %v6256 = vpop.f32.mrf.mxu0
    %v6257 = vadd.f32 0.0, %v6256
    %v6258 = vpop.f32.mrf.mxu0
    %6259 = vdwg.mxu0
    %v6261 = vrot.slane %v6257, 2
    %v6263 = vadd.f32 %v6078, %v6261
    %v6264 = vsub.f32 0.0, %v6263
    %v6265 = vmul.f32 %v6264, 1.442695
    %v6266 = vpow.pop %v6265
    %v6267 = vadd.f32 %v6266, 1.0
    %v6268 = vrcp.pop %v6267
    %v6269 = vmul.f32 1.0, %v6268
    %v6270 = vtanh.pop %v6263
    %v6272 = vrot.slane %v6172, 1
    %v6274 = vmul.f32 %v6269, %v6272
    %6276 = vrot.lane.b32.xlu0 %v6270, 96
    %v6277 = vpop.permute.xlu0 %6276
    %v6279 = vmul.f32 %v6269, %v6277
    %6281 = vrot.lane.b32.xlu0 %v6279, 16
    %v6282 = vpop.permute.xlu0 %6281
    %v6284 = vadd.f32 %v6274, %v6282
    %v6285 = vtanh.pop %v6284
    %6287 = vrot.lane.b32.xlu0 %v6285, 32
    %v6288 = vpop.permute.xlu0 %6287
    %v6290 = vmul.f32 %v6269, %v6288
    %v6291 = vlaneseq
    %v6292 = vshrl.u32 %v6291, 7
    %v6293 = vsub.s32 6, %v6292
    %v6294 = vrot.slane %v6290, %v6293
    %v6295 = vsel %vm3769, %v6294, %v6183
    %v6297 = vrot.slane %v6290, 6
    %6298 = vrot.lane.b32.xlu0 %v6297, 80
    %v6299 = vpop.permute.xlu0 %6298
    %v6300 = vsel %vm285, %v6299, 0
    %6302 = vmatprep.subr.mxu0 0.0
    %6303 = vmatpush1.msra.mxu0 0.0
    %6304 = vmatprep.subr.mxu0 0.0
    %6305 = vmatpush1.msra.mxu0 0.0
    %6306 = vmatprep.subr.mxu0 0.0
    %6307 = vmatpush1.msra.mxu0 0.0
    %6308 = vmatprep.subr.mxu0 0.0
    %6309 = vmatpush1.msra.mxu0 0.0
    %6310 = vmatprep.subr.mxu0 0.0
    %6311 = vmatpush1.msra.mxu0 0.0
    %6312 = vmatprep.subr.mxu0 0.0
    %6313 = vmatpush1.msra.mxu0 0.0
    %6314 = vmatprep.subr.mxu0 0.0
    %6315 = vmatpush1.msra.mxu0 0.0
    %6316 = vmatprep.subr.mxu0 0.0
    %6317 = vmatpush1.msra.mxu0 0.0
    %6318 = vmatprep.subr.mxu0 0.0
    %6319 = vmatpush1.msra.mxu0 0.0
    %6320 = vmatprep.subr.mxu0 0.0
    %6321 = vmatpush1.msra.mxu0 0.0
    %6322 = vmatprep.subr.mxu0 0.0
    %6323 = vmatpush1.msra.mxu0 0.0
    %6324 = vmatprep.subr.mxu0 0.0
    %6325 = vmatpush1.msra.mxu0 0.0
    %6326 = vmatprep.subr.mxu0 0.0
    %6327 = vmatpush1.msra.mxu0 0.0
    %6328 = vmatprep.subr.mxu0 0.0
    %6329 = vmatpush1.msra.mxu0 0.0
    %6330 = vmatprep.subr.mxu0 0.0
    %6331 = vmatpush1.msra.mxu0 %v6005
    %6332 = vmatprep.subr.mxu0 0.0
    %6333 = vmatpush1.msra.mxu0 %v6004
    %6334 = vmatprep.subr.mxu0 0.0
    %6335 = vmatpush2.msra.mxu0 0.0
    %6336 = vmatprep.subr.mxu0 0.0
    %6337 = vmatpush2.msra.mxu0 0.0
    %6338 = vmatprep.subr.mxu0 0.0
    %6339 = vmatpush2.msra.mxu0 0.0
    %6340 = vmatprep.subr.mxu0 0.0
    %6341 = vmatpush2.msra.mxu0 0.0
    %6342 = vmatprep.subr.mxu0 0.0
    %6343 = vmatpush2.msra.mxu0 0.0
    %6344 = vmatprep.subr.mxu0 0.0
    %6345 = vmatpush2.msra.mxu0 0.0
    %6346 = vmatprep.subr.mxu0 0.0
    %6347 = vmatpush2.msra.mxu0 0.0
    %6348 = vmatprep.subr.mxu0 0.0
    %6349 = vmatpush2.msra.mxu0 0.0
    %6350 = vmatprep.subr.mxu0 0.0
    %6351 = vmatpush2.msra.mxu0 0.0
    %6352 = vmatprep.subr.mxu0 0.0
    %6353 = vmatpush2.msra.mxu0 0.0
    %6354 = vmatprep.subr.mxu0 0.0
    %6355 = vmatpush2.msra.mxu0 0.0
    %6356 = vmatprep.subr.mxu0 0.0
    %6357 = vmatpush2.msra.mxu0 0.0
    %6358 = vmatprep.subr.mxu0 0.0
    %6359 = vmatpush2.msra.mxu0 0.0
    %6360 = vmatprep.subr.mxu0 0.0
    %6361 = vmatpush2.msra.mxu0 0.0
    %6362 = vmatprep.subr.mxu0 0.0
    %6363 = vmatpush2.msra.mxu0 0.0
    %6364 = vmatprep.subr.mxu0 0.0
    %6365 = vmatpush2.msra.mxu0 0.0
    %6366 = vmatprep.mubr.f32.mxu0 0.0
    %6367 = vmatmul.mubr.f32.gmra.mxu0 %v6300
    %v6368 = vpop.f32.mrf.mxu0
    %v6369 = vadd.f32 0.0, %v6368
    %v6370 = vpop.f32.mrf.mxu0
    %6371 = vdwg.mxu0
    %v6373 = vrot.slane %v6369, 3
    %v6375 = vadd.f32 %v6078, %v6373
    %v6376 = vsub.f32 0.0, %v6375
    %v6377 = vmul.f32 %v6376, 1.442695
    %v6378 = vpow.pop %v6377
    %v6379 = vadd.f32 %v6378, 1.0
    %v6380 = vrcp.pop %v6379
    %v6381 = vmul.f32 1.0, %v6380
    %v6382 = vtanh.pop %v6375
    %v6384 = vrot.slane %v6284, 1
    %v6386 = vmul.f32 %v6381, %v6384
    %6388 = vrot.lane.b32.xlu0 %v6382, 96
    %v6389 = vpop.permute.xlu0 %6388
    %v6391 = vmul.f32 %v6381, %v6389
    %6393 = vrot.lane.b32.xlu0 %v6391, 16
    %v6394 = vpop.permute.xlu0 %6393
    %v6396 = vadd.f32 %v6386, %v6394
    %v6397 = vtanh.pop %v6396
    %6399 = vrot.lane.b32.xlu0 %v6397, 32
    %v6400 = vpop.permute.xlu0 %6399
    %v6402 = vmul.f32 %v6381, %v6400
    %v6403 = vlaneseq
    %v6404 = vshrl.u32 %v6403, 7
    %v6405 = vsub.s32 5, %v6404
    %v6406 = vrot.slane %v6402, %v6405
    %v6407 = vsel %vm3654, %v6406, %v6295
    %v6409 = vrot.slane %v6402, 5
    %6410 = vrot.lane.b32.xlu0 %v6409, 80
    %v6411 = vpop.permute.xlu0 %6410
    %v6412 = vsel %vm285, %v6411, 0
    %6414 = vmatprep.subr.mxu0 0.0
    %6415 = vmatpush1.msra.mxu0 0.0
    %6416 = vmatprep.subr.mxu0 0.0
    %6417 = vmatpush1.msra.mxu0 0.0
    %6418 = vmatprep.subr.mxu0 0.0
    %6419 = vmatpush1.msra.mxu0 0.0
    %6420 = vmatprep.subr.mxu0 0.0
    %6421 = vmatpush1.msra.mxu0 0.0
    %6422 = vmatprep.subr.mxu0 0.0
    %6423 = vmatpush1.msra.mxu0 0.0
    %6424 = vmatprep.subr.mxu0 0.0
    %6425 = vmatpush1.msra.mxu0 0.0
    %6426 = vmatprep.subr.mxu0 0.0
    %6427 = vmatpush1.msra.mxu0 0.0
    %6428 = vmatprep.subr.mxu0 0.0
    %6429 = vmatpush1.msra.mxu0 0.0
    %6430 = vmatprep.subr.mxu0 0.0
    %6431 = vmatpush1.msra.mxu0 0.0
    %6432 = vmatprep.subr.mxu0 0.0
    %6433 = vmatpush1.msra.mxu0 0.0
    %6434 = vmatprep.subr.mxu0 0.0
    %6435 = vmatpush1.msra.mxu0 0.0
    %6436 = vmatprep.subr.mxu0 0.0
    %6437 = vmatpush1.msra.mxu0 0.0
    %6438 = vmatprep.subr.mxu0 0.0
    %6439 = vmatpush1.msra.mxu0 0.0
    %6440 = vmatprep.subr.mxu0 0.0
    %6441 = vmatpush1.msra.mxu0 0.0
    %6442 = vmatprep.subr.mxu0 0.0
    %6443 = vmatpush1.msra.mxu0 %v6005
    %6444 = vmatprep.subr.mxu0 0.0
    %6445 = vmatpush1.msra.mxu0 %v6004
    %6446 = vmatprep.subr.mxu0 0.0
    %6447 = vmatpush2.msra.mxu0 0.0
    %6448 = vmatprep.subr.mxu0 0.0
    %6449 = vmatpush2.msra.mxu0 0.0
    %6450 = vmatprep.subr.mxu0 0.0
    %6451 = vmatpush2.msra.mxu0 0.0
    %6452 = vmatprep.subr.mxu0 0.0
    %6453 = vmatpush2.msra.mxu0 0.0
    %6454 = vmatprep.subr.mxu0 0.0
    %6455 = vmatpush2.msra.mxu0 0.0
    %6456 = vmatprep.subr.mxu0 0.0
    %6457 = vmatpush2.msra.mxu0 0.0
    %6458 = vmatprep.subr.mxu0 0.0
    %6459 = vmatpush2.msra.mxu0 0.0
    %6460 = vmatprep.subr.mxu0 0.0
    %6461 = vmatpush2.msra.mxu0 0.0
    %6462 = vmatprep.subr.mxu0 0.0
    %6463 = vmatpush2.msra.mxu0 0.0
    %6464 = vmatprep.subr.mxu0 0.0
    %6465 = vmatpush2.msra.mxu0 0.0
    %6466 = vmatprep.subr.mxu0 0.0
    %6467 = vmatpush2.msra.mxu0 0.0
    %6468 = vmatprep.subr.mxu0 0.0
    %6469 = vmatpush2.msra.mxu0 0.0
    %6470 = vmatprep.subr.mxu0 0.0
    %6471 = vmatpush2.msra.mxu0 0.0
    %6472 = vmatprep.subr.mxu0 0.0
    %6473 = vmatpush2.msra.mxu0 0.0
    %6474 = vmatprep.subr.mxu0 0.0
    %6475 = vmatpush2.msra.mxu0 0.0
    %6476 = vmatprep.subr.mxu0 0.0
    %6477 = vmatpush2.msra.mxu0 0.0
    %6478 = vmatprep.mubr.f32.mxu0 0.0
    %6479 = vmatmul.mubr.f32.gmra.mxu0 %v6412
    %v6480 = vpop.f32.mrf.mxu0
    %v6481 = vadd.f32 0.0, %v6480
    %v6482 = vpop.f32.mrf.mxu0
    %6483 = vdwg.mxu0
    %v6485 = vrot.slane %v6481, 4
    %v6487 = vadd.f32 %v6078, %v6485
    %v6488 = vsub.f32 0.0, %v6487
    %v6489 = vmul.f32 %v6488, 1.442695
    %v6490 = vpow.pop %v6489
    %v6491 = vadd.f32 %v6490, 1.0
    %v6492 = vrcp.pop %v6491
    %v6493 = vmul.f32 1.0, %v6492
    %v6494 = vtanh.pop %v6487
    %v6496 = vrot.slane %v6396, 1
    %v6498 = vmul.f32 %v6493, %v6496
    %6500 = vrot.lane.b32.xlu0 %v6494, 96
    %v6501 = vpop.permute.xlu0 %6500
    %v6503 = vmul.f32 %v6493, %v6501
    %6505 = vrot.lane.b32.xlu0 %v6503, 16
    %v6506 = vpop.permute.xlu0 %6505
    %v6508 = vadd.f32 %v6498, %v6506
    %v6509 = vtanh.pop %v6508
    %6511 = vrot.lane.b32.xlu0 %v6509, 32
    %v6512 = vpop.permute.xlu0 %6511
    %v6514 = vmul.f32 %v6493, %v6512
    %v6515 = vlaneseq
    %v6516 = vshrl.u32 %v6515, 7
    %v6517 = vsub.s32 4, %v6516
    %v6518 = vrot.slane %v6514, %v6517
    %v6519 = vsel %vm3539, %v6518, %v6407
    %v6521 = vrot.slane %v6514, 4
    %6522 = vrot.lane.b32.xlu0 %v6521, 80
    %v6523 = vpop.permute.xlu0 %6522
    %v6524 = vsel %vm285, %v6523, 0
    %6526 = vmatprep.subr.mxu0 0.0
    %6527 = vmatpush1.msra.mxu0 0.0
    %6528 = vmatprep.subr.mxu0 0.0
    %6529 = vmatpush1.msra.mxu0 0.0
    %6530 = vmatprep.subr.mxu0 0.0
    %6531 = vmatpush1.msra.mxu0 0.0
    %6532 = vmatprep.subr.mxu0 0.0
    %6533 = vmatpush1.msra.mxu0 0.0
    %6534 = vmatprep.subr.mxu0 0.0
    %6535 = vmatpush1.msra.mxu0 0.0
    %6536 = vmatprep.subr.mxu0 0.0
    %6537 = vmatpush1.msra.mxu0 0.0
    %6538 = vmatprep.subr.mxu0 0.0
    %6539 = vmatpush1.msra.mxu0 0.0
    %6540 = vmatprep.subr.mxu0 0.0
    %6541 = vmatpush1.msra.mxu0 0.0
    %6542 = vmatprep.subr.mxu0 0.0
    %6543 = vmatpush1.msra.mxu0 0.0
    %6544 = vmatprep.subr.mxu0 0.0
    %6545 = vmatpush1.msra.mxu0 0.0
    %6546 = vmatprep.subr.mxu0 0.0
    %6547 = vmatpush1.msra.mxu0 0.0
    %6548 = vmatprep.subr.mxu0 0.0
    %6549 = vmatpush1.msra.mxu0 0.0
    %6550 = vmatprep.subr.mxu0 0.0
    %6551 = vmatpush1.msra.mxu0 0.0
    %6552 = vmatprep.subr.mxu0 0.0
    %6553 = vmatpush1.msra.mxu0 0.0
    %6554 = vmatprep.subr.mxu0 0.0
    %6555 = vmatpush1.msra.mxu0 %v6005
    %6556 = vmatprep.subr.mxu0 0.0
    %6557 = vmatpush1.msra.mxu0 %v6004
    %6558 = vmatprep.subr.mxu0 0.0
    %6559 = vmatpush2.msra.mxu0 0.0
    %6560 = vmatprep.subr.mxu0 0.0
    %6561 = vmatpush2.msra.mxu0 0.0
    %6562 = vmatprep.subr.mxu0 0.0
    %6563 = vmatpush2.msra.mxu0 0.0
    %6564 = vmatprep.subr.mxu0 0.0
    %6565 = vmatpush2.msra.mxu0 0.0
    %6566 = vmatprep.subr.mxu0 0.0
    %6567 = vmatpush2.msra.mxu0 0.0
    %6568 = vmatprep.subr.mxu0 0.0
    %6569 = vmatpush2.msra.mxu0 0.0
    %6570 = vmatprep.subr.mxu0 0.0
    %6571 = vmatpush2.msra.mxu0 0.0
    %6572 = vmatprep.subr.mxu0 0.0
    %6573 = vmatpush2.msra.mxu0 0.0
    %6574 = vmatprep.subr.mxu0 0.0
    %6575 = vmatpush2.msra.mxu0 0.0
    %6576 = vmatprep.subr.mxu0 0.0
    %6577 = vmatpush2.msra.mxu0 0.0
    %6578 = vmatprep.subr.mxu0 0.0
    %6579 = vmatpush2.msra.mxu0 0.0
    %6580 = vmatprep.subr.mxu0 0.0
    %6581 = vmatpush2.msra.mxu0 0.0
    %6582 = vmatprep.subr.mxu0 0.0
    %6583 = vmatpush2.msra.mxu0 0.0
    %6584 = vmatprep.subr.mxu0 0.0
    %6585 = vmatpush2.msra.mxu0 0.0
    %6586 = vmatprep.subr.mxu0 0.0
    %6587 = vmatpush2.msra.mxu0 0.0
    %6588 = vmatprep.subr.mxu0 0.0
    %6589 = vmatpush2.msra.mxu0 0.0
    %6590 = vmatprep.mubr.f32.mxu0 0.0
    %6591 = vmatmul.mubr.f32.gmra.mxu0 %v6524
    %v6592 = vpop.f32.mrf.mxu0
    %v6593 = vadd.f32 0.0, %v6592
    %v6594 = vpop.f32.mrf.mxu0
    %6595 = vdwg.mxu0
    %v6597 = vrot.slane %v6593, 5
    %v6599 = vadd.f32 %v6078, %v6597
    %v6600 = vsub.f32 0.0, %v6599
    %v6601 = vmul.f32 %v6600, 1.442695
    %v6602 = vpow.pop %v6601
    %v6603 = vadd.f32 %v6602, 1.0
    %v6604 = vrcp.pop %v6603
    %v6605 = vmul.f32 1.0, %v6604
    %v6606 = vtanh.pop %v6599
    %v6608 = vrot.slane %v6508, 1
    %v6610 = vmul.f32 %v6605, %v6608
    %6612 = vrot.lane.b32.xlu0 %v6606, 96
    %v6613 = vpop.permute.xlu0 %6612
    %v6615 = vmul.f32 %v6605, %v6613
    %6617 = vrot.lane.b32.xlu0 %v6615, 16
    %v6618 = vpop.permute.xlu0 %6617
    %v6620 = vadd.f32 %v6610, %v6618
    %v6621 = vtanh.pop %v6620
    %6623 = vrot.lane.b32.xlu0 %v6621, 32
    %v6624 = vpop.permute.xlu0 %6623
    %v6626 = vmul.f32 %v6605, %v6624
    %v6627 = vlaneseq
    %v6628 = vshrl.u32 %v6627, 7
    %v6629 = vsub.s32 3, %v6628
    %v6630 = vrot.slane %v6626, %v6629
    %v6631 = vsel %vm3424, %v6630, %v6519
    %v6633 = vrot.slane %v6626, 3
    %6634 = vrot.lane.b32.xlu0 %v6633, 80
    %v6635 = vpop.permute.xlu0 %6634
    %v6636 = vsel %vm285, %v6635, 0
    %6638 = vmatprep.subr.mxu0 0.0
    %6639 = vmatpush1.msra.mxu0 0.0
    %6640 = vmatprep.subr.mxu0 0.0
    %6641 = vmatpush1.msra.mxu0 0.0
    %6642 = vmatprep.subr.mxu0 0.0
    %6643 = vmatpush1.msra.mxu0 0.0
    %6644 = vmatprep.subr.mxu0 0.0
    %6645 = vmatpush1.msra.mxu0 0.0
    %6646 = vmatprep.subr.mxu0 0.0
    %6647 = vmatpush1.msra.mxu0 0.0
    %6648 = vmatprep.subr.mxu0 0.0
    %6649 = vmatpush1.msra.mxu0 0.0
    %6650 = vmatprep.subr.mxu0 0.0
    %6651 = vmatpush1.msra.mxu0 0.0
    %6652 = vmatprep.subr.mxu0 0.0
    %6653 = vmatpush1.msra.mxu0 0.0
    %6654 = vmatprep.subr.mxu0 0.0
    %6655 = vmatpush1.msra.mxu0 0.0
    %6656 = vmatprep.subr.mxu0 0.0
    %6657 = vmatpush1.msra.mxu0 0.0
    %6658 = vmatprep.subr.mxu0 0.0
    %6659 = vmatpush1.msra.mxu0 0.0
    %6660 = vmatprep.subr.mxu0 0.0
    %6661 = vmatpush1.msra.mxu0 0.0
    %6662 = vmatprep.subr.mxu0 0.0
    %6663 = vmatpush1.msra.mxu0 0.0
    %6664 = vmatprep.subr.mxu0 0.0
    %6665 = vmatpush1.msra.mxu0 0.0
    %6666 = vmatprep.subr.mxu0 0.0
    %6667 = vmatpush1.msra.mxu0 %v6005
    %6668 = vmatprep.subr.mxu0 0.0
    %6669 = vmatpush1.msra.mxu0 %v6004
    %6670 = vmatprep.subr.mxu0 0.0
    %6671 = vmatpush2.msra.mxu0 0.0
    %6672 = vmatprep.subr.mxu0 0.0
    %6673 = vmatpush2.msra.mxu0 0.0
    %6674 = vmatprep.subr.mxu0 0.0
    %6675 = vmatpush2.msra.mxu0 0.0
    %6676 = vmatprep.subr.mxu0 0.0
    %6677 = vmatpush2.msra.mxu0 0.0
    %6678 = vmatprep.subr.mxu0 0.0
    %6679 = vmatpush2.msra.mxu0 0.0
    %6680 = vmatprep.subr.mxu0 0.0
    %6681 = vmatpush2.msra.mxu0 0.0
    %6682 = vmatprep.subr.mxu0 0.0
    %6683 = vmatpush2.msra.mxu0 0.0
    %6684 = vmatprep.subr.mxu0 0.0
    %6685 = vmatpush2.msra.mxu0 0.0
    %6686 = vmatprep.subr.mxu0 0.0
    %6687 = vmatpush2.msra.mxu0 0.0
    %6688 = vmatprep.subr.mxu0 0.0
    %6689 = vmatpush2.msra.mxu0 0.0
    %6690 = vmatprep.subr.mxu0 0.0
    %6691 = vmatpush2.msra.mxu0 0.0
    %6692 = vmatprep.subr.mxu0 0.0
    %6693 = vmatpush2.msra.mxu0 0.0
    %6694 = vmatprep.subr.mxu0 0.0
    %6695 = vmatpush2.msra.mxu0 0.0
    %6696 = vmatprep.subr.mxu0 0.0
    %6697 = vmatpush2.msra.mxu0 0.0
    %6698 = vmatprep.subr.mxu0 0.0
    %6699 = vmatpush2.msra.mxu0 0.0
    %6700 = vmatprep.subr.mxu0 0.0
    %6701 = vmatpush2.msra.mxu0 0.0
    %6702 = vmatprep.mubr.f32.mxu0 0.0
    %6703 = vmatmul.mubr.f32.gmra.mxu0 %v6636
    %v6704 = vpop.f32.mrf.mxu0
    %v6705 = vadd.f32 0.0, %v6704
    %v6706 = vpop.f32.mrf.mxu0
    %6707 = vdwg.mxu0
    %v6709 = vrot.slane %v6705, 6
    %v6711 = vadd.f32 %v6078, %v6709
    %v6712 = vsub.f32 0.0, %v6711
    %v6713 = vmul.f32 %v6712, 1.442695
    %v6714 = vpow.pop %v6713
    %v6715 = vadd.f32 %v6714, 1.0
    %v6716 = vrcp.pop %v6715
    %v6717 = vmul.f32 1.0, %v6716
    %v6718 = vtanh.pop %v6711
    %v6720 = vrot.slane %v6620, 1
    %v6722 = vmul.f32 %v6717, %v6720
    %6724 = vrot.lane.b32.xlu0 %v6718, 96
    %v6725 = vpop.permute.xlu0 %6724
    %v6727 = vmul.f32 %v6717, %v6725
    %6729 = vrot.lane.b32.xlu0 %v6727, 16
    %v6730 = vpop.permute.xlu0 %6729
    %v6732 = vadd.f32 %v6722, %v6730
    %v6733 = vtanh.pop %v6732
    %6735 = vrot.lane.b32.xlu0 %v6733, 32
    %v6736 = vpop.permute.xlu0 %6735
    %v6738 = vmul.f32 %v6717, %v6736
    %v6739 = vlaneseq
    %v6740 = vshrl.u32 %v6739, 7
    %v6741 = vsub.s32 2, %v6740
    %v6742 = vrot.slane %v6738, %v6741
    %v6743 = vsel %vm3309, %v6742, %v6631
    %v6745 = vrot.slane %v6738, 2
    %6746 = vrot.lane.b32.xlu0 %v6745, 80
    %v6747 = vpop.permute.xlu0 %6746
    %v6748 = vsel %vm285, %v6747, 0
    %6750 = vmatprep.subr.mxu0 0.0
    %6751 = vmatpush1.msra.mxu0 0.0
    %6752 = vmatprep.subr.mxu0 0.0
    %6753 = vmatpush1.msra.mxu0 0.0
    %6754 = vmatprep.subr.mxu0 0.0
    %6755 = vmatpush1.msra.mxu0 0.0
    %6756 = vmatprep.subr.mxu0 0.0
    %6757 = vmatpush1.msra.mxu0 0.0
    %6758 = vmatprep.subr.mxu0 0.0
    %6759 = vmatpush1.msra.mxu0 0.0
    %6760 = vmatprep.subr.mxu0 0.0
    %6761 = vmatpush1.msra.mxu0 0.0
    %6762 = vmatprep.subr.mxu0 0.0
    %6763 = vmatpush1.msra.mxu0 0.0
    %6764 = vmatprep.subr.mxu0 0.0
    %6765 = vmatpush1.msra.mxu0 0.0
    %6766 = vmatprep.subr.mxu0 0.0
    %6767 = vmatpush1.msra.mxu0 0.0
    %6768 = vmatprep.subr.mxu0 0.0
    %6769 = vmatpush1.msra.mxu0 0.0
    %6770 = vmatprep.subr.mxu0 0.0
    %6771 = vmatpush1.msra.mxu0 0.0
    %6772 = vmatprep.subr.mxu0 0.0
    %6773 = vmatpush1.msra.mxu0 0.0
    %6774 = vmatprep.subr.mxu0 0.0
    %6775 = vmatpush1.msra.mxu0 0.0
    %6776 = vmatprep.subr.mxu0 0.0
    %6777 = vmatpush1.msra.mxu0 0.0
    %6778 = vmatprep.subr.mxu0 0.0
    %6779 = vmatpush1.msra.mxu0 %v6005
    %6780 = vmatprep.subr.mxu0 0.0
    %6781 = vmatpush1.msra.mxu0 %v6004
    %6782 = vmatprep.subr.mxu0 0.0
    %6783 = vmatpush2.msra.mxu0 0.0
    %6784 = vmatprep.subr.mxu0 0.0
    %6785 = vmatpush2.msra.mxu0 0.0
    %6786 = vmatprep.subr.mxu0 0.0
    %6787 = vmatpush2.msra.mxu0 0.0
    %6788 = vmatprep.subr.mxu0 0.0
    %6789 = vmatpush2.msra.mxu0 0.0
    %6790 = vmatprep.subr.mxu0 0.0
    %6791 = vmatpush2.msra.mxu0 0.0
    %6792 = vmatprep.subr.mxu0 0.0
    %6793 = vmatpush2.msra.mxu0 0.0
    %6794 = vmatprep.subr.mxu0 0.0
    %6795 = vmatpush2.msra.mxu0 0.0
    %6796 = vmatprep.subr.mxu0 0.0
    %6797 = vmatpush2.msra.mxu0 0.0
    %6798 = vmatprep.subr.mxu0 0.0
    %6799 = vmatpush2.msra.mxu0 0.0
    %6800 = vmatprep.subr.mxu0 0.0
    %6801 = vmatpush2.msra.mxu0 0.0
    %6802 = vmatprep.subr.mxu0 0.0
    %6803 = vmatpush2.msra.mxu0 0.0
    %6804 = vmatprep.subr.mxu0 0.0
    %6805 = vmatpush2.msra.mxu0 0.0
    %6806 = vmatprep.subr.mxu0 0.0
    %6807 = vmatpush2.msra.mxu0 0.0
    %6808 = vmatprep.subr.mxu0 0.0
    %6809 = vmatpush2.msra.mxu0 0.0
    %6810 = vmatprep.subr.mxu0 0.0
    %6811 = vmatpush2.msra.mxu0 0.0
    %6812 = vmatprep.subr.mxu0 0.0
    %6813 = vmatpush2.msra.mxu0 0.0
    %6814 = vmatprep.mubr.f32.mxu0 0.0
    %6815 = vmatmul.mubr.f32.gmra.mxu0 %v6748
    %v6816 = vpop.f32.mrf.mxu0
    %v6817 = vadd.f32 0.0, %v6816
    %v6818 = vpop.f32.mrf.mxu0
    %6819 = vdwg.mxu0
    %v6821 = vrot.slane %v6817, 7
    %v6823 = vadd.f32 %v6078, %v6821
    %v6824 = vsub.f32 0.0, %v6823
    %v6825 = vmul.f32 %v6824, 1.442695
    %v6826 = vpow.pop %v6825
    %v6827 = vadd.f32 %v6826, 1.0
    %v6828 = vrcp.pop %v6827
    %v6829 = vmul.f32 1.0, %v6828
    %v6830 = vtanh.pop %v6823
    %v6832 = vrot.slane %v6732, 1
    %v6834 = vmul.f32 %v6829, %v6832
    %6836 = vrot.lane.b32.xlu0 %v6830, 96
    %v6837 = vpop.permute.xlu0 %6836
    %v6839 = vmul.f32 %v6829, %v6837
    %6841 = vrot.lane.b32.xlu0 %v6839, 16
    %v6842 = vpop.permute.xlu0 %6841
    %v6844 = vadd.f32 %v6834, %v6842
    %v6845 = vtanh.pop %v6844
    %6847 = vrot.lane.b32.xlu0 %v6845, 32
    %v6848 = vpop.permute.xlu0 %6847
    %v6850 = vmul.f32 %v6829, %v6848
    %v6851 = vlaneseq
    %v6852 = vshrl.u32 %v6851, 7
    %v6853 = vsub.s32 1, %v6852
    %v6854 = vrot.slane %v6850, %v6853
    %v6855 = vsel %vm3194, %v6854, %v6743
    %v6857 = vrot.slane %v6850, 1
    %6858 = vrot.lane.b32.xlu0 %v6857, 80
    %v6859 = vpop.permute.xlu0 %6858
    %v6860 = vsel %vm285, %v6859, 0
    %6862 = vmatprep.subr.mxu0 0.0
    %6863 = vmatpush1.msra.mxu0 0.0
    %6864 = vmatprep.subr.mxu0 0.0
    %6865 = vmatpush1.msra.mxu0 0.0
    %6866 = vmatprep.subr.mxu0 0.0
    %6867 = vmatpush1.msra.mxu0 0.0
    %6868 = vmatprep.subr.mxu0 0.0
    %6869 = vmatpush1.msra.mxu0 0.0
    %6870 = vmatprep.subr.mxu0 0.0
    %6871 = vmatpush1.msra.mxu0 0.0
    %6872 = vmatprep.subr.mxu0 0.0
    %6873 = vmatpush1.msra.mxu0 0.0
    %6874 = vmatprep.subr.mxu0 0.0
    %6875 = vmatpush1.msra.mxu0 0.0
    %6876 = vmatprep.subr.mxu0 0.0
    %6877 = vmatpush1.msra.mxu0 0.0
    %6878 = vmatprep.subr.mxu0 0.0
    %6879 = vmatpush1.msra.mxu0 0.0
    %6880 = vmatprep.subr.mxu0 0.0
    %6881 = vmatpush1.msra.mxu0 0.0
    %6882 = vmatprep.subr.mxu0 0.0
    %6883 = vmatpush1.msra.mxu0 0.0
    %6884 = vmatprep.subr.mxu0 0.0
    %6885 = vmatpush1.msra.mxu0 0.0
    %6886 = vmatprep.subr.mxu0 0.0
    %6887 = vmatpush1.msra.mxu0 0.0
    %6888 = vmatprep.subr.mxu0 0.0
    %6889 = vmatpush1.msra.mxu0 0.0
    %6890 = vmatprep.subr.mxu0 0.0
    %6891 = vmatpush1.msra.mxu0 %v6005
    %6892 = vmatprep.subr.mxu0 0.0
    %6893 = vmatpush1.msra.mxu0 %v6004
    %6894 = vmatprep.subr.mxu0 0.0
    %6895 = vmatpush2.msra.mxu0 0.0
    %6896 = vmatprep.subr.mxu0 0.0
    %6897 = vmatpush2.msra.mxu0 0.0
    %6898 = vmatprep.subr.mxu0 0.0
    %6899 = vmatpush2.msra.mxu0 0.0
    %6900 = vmatprep.subr.mxu0 0.0
    %6901 = vmatpush2.msra.mxu0 0.0
    %6902 = vmatprep.subr.mxu0 0.0
    %6903 = vmatpush2.msra.mxu0 0.0
    %6904 = vmatprep.subr.mxu0 0.0
    %6905 = vmatpush2.msra.mxu0 0.0
    %6906 = vmatprep.subr.mxu0 0.0
    %6907 = vmatpush2.msra.mxu0 0.0
    %6908 = vmatprep.subr.mxu0 0.0
    %6909 = vmatpush2.msra.mxu0 0.0
    %6910 = vmatprep.subr.mxu0 0.0
    %6911 = vmatpush2.msra.mxu0 0.0
    %6912 = vmatprep.subr.mxu0 0.0
    %6913 = vmatpush2.msra.mxu0 0.0
    %6914 = vmatprep.subr.mxu0 0.0
    %6915 = vmatpush2.msra.mxu0 0.0
    %6916 = vmatprep.subr.mxu0 0.0
    %6917 = vmatpush2.msra.mxu0 0.0
    %6918 = vmatprep.subr.mxu0 0.0
    %6919 = vmatpush2.msra.mxu0 0.0
    %6920 = vmatprep.subr.mxu0 0.0
    %6921 = vmatpush2.msra.mxu0 0.0
    %6922 = vmatprep.subr.mxu0 0.0
    %6923 = vmatpush2.msra.mxu0 0.0
    %6924 = vmatprep.subr.mxu0 0.0
    %6925 = vmatpush2.msra.mxu0 0.0
    %6926 = vmatprep.mubr.f32.mxu0 0.0
    %6927 = vmatmul.mubr.f32.gmra.mxu0 %v6860
    %v6928 = vpop.f32.mrf.mxu0
    %v6929 = vadd.f32 0.0, %v6928
    %v6930 = vpop.f32.mrf.mxu0
    %6931 = vdwg.mxu0
    %v6932 = vadd.f32 %v6078, %v6929
    %v6933 = vsub.f32 0.0, %v6932
    %v6934 = vmul.f32 %v6933, 1.442695
    %v6935 = vpow.pop %v6934
    %v6936 = vadd.f32 %v6935, 1.0
    %v6937 = vrcp.pop %v6936
    %v6938 = vmul.f32 1.0, %v6937
    %v6939 = vtanh.pop %v6932
    %v6941 = vrot.slane %v6844, 1
    %v6943 = vmul.f32 %v6938, %v6941
    %6945 = vrot.lane.b32.xlu0 %v6939, 96
    %v6946 = vpop.permute.xlu0 %6945
    %v6948 = vmul.f32 %v6938, %v6946
    %6950 = vrot.lane.b32.xlu0 %v6948, 16
    %v6951 = vpop.permute.xlu0 %6950
    %v6953 = vadd.f32 %v6943, %v6951
    %v6954 = vtanh.pop %v6953
    %6956 = vrot.lane.b32.xlu0 %v6954, 32
    %v6957 = vpop.permute.xlu0 %6956
    %v6959 = vmul.f32 %v6938, %v6957
    %v6960 = vlaneseq
    %v6961 = vshrl.u32 %v6960, 7
    %v6962 = vsub.s32 0, %v6961
    %v6963 = vrot.slane %v6959, %v6962
    %v6964 = vsel %vm3080, %v6963, %v6855
    %6966 = vrot.lane.b32.xlu0 %v6964, 80
    %v6967 = vpop.permute.xlu0 %6966
    %v6968 = vsel %vm285, %v6967, 0
    %6970 = vmatprep.subr.mxu0 0.0
    %6971 = vmatpush1.msra.mxu0 0.0
    %6972 = vmatprep.subr.mxu0 0.0
    %6973 = vmatpush1.msra.mxu0 0.0
    %6974 = vmatprep.subr.mxu0 0.0
    %6975 = vmatpush1.msra.mxu0 0.0
    %6976 = vmatprep.subr.mxu0 0.0
    %6977 = vmatpush1.msra.mxu0 0.0
    %6978 = vmatprep.subr.mxu0 0.0
    %6979 = vmatpush1.msra.mxu0 0.0
    %6980 = vmatprep.subr.mxu0 0.0
    %6981 = vmatpush1.msra.mxu0 0.0
    %6982 = vmatprep.subr.mxu0 0.0
    %6983 = vmatpush1.msra.mxu0 0.0
    %6984 = vmatprep.subr.mxu0 0.0
    %6985 = vmatpush1.msra.mxu0 0.0
    %6986 = vmatprep.subr.mxu0 0.0
    %6987 = vmatpush1.msra.mxu0 0.0
    %6988 = vmatprep.subr.mxu0 0.0
    %6989 = vmatpush1.msra.mxu0 0.0
    %6990 = vmatprep.subr.mxu0 0.0
    %6991 = vmatpush1.msra.mxu0 0.0
    %6992 = vmatprep.subr.mxu0 0.0
    %6993 = vmatpush1.msra.mxu0 0.0
    %6994 = vmatprep.subr.mxu0 0.0
    %6995 = vmatpush1.msra.mxu0 0.0
    %6996 = vmatprep.subr.mxu0 0.0
    %6997 = vmatpush1.msra.mxu0 0.0
    %6998 = vmatprep.subr.mxu0 0.0
    %6999 = vmatpush1.msra.mxu0 %v2892
    %7000 = vmatprep.subr.mxu0 0.0
    %7001 = vmatpush1.msra.mxu0 %v2891
    %7002 = vmatprep.subr.mxu0 0.0
    %7003 = vmatpush2.msra.mxu0 0.0
    %7004 = vmatprep.subr.mxu0 0.0
    %7005 = vmatpush2.msra.mxu0 0.0
    %7006 = vmatprep.subr.mxu0 0.0
    %7007 = vmatpush2.msra.mxu0 0.0
    %7008 = vmatprep.subr.mxu0 0.0
    %7009 = vmatpush2.msra.mxu0 0.0
    %7010 = vmatprep.subr.mxu0 0.0
    %7011 = vmatpush2.msra.mxu0 0.0
    %7012 = vmatprep.subr.mxu0 0.0
    %7013 = vmatpush2.msra.mxu0 0.0
    %7014 = vmatprep.subr.mxu0 0.0
    %7015 = vmatpush2.msra.mxu0 0.0
    %7016 = vmatprep.subr.mxu0 0.0
    %7017 = vmatpush2.msra.mxu0 0.0
    %7018 = vmatprep.subr.mxu0 0.0
    %7019 = vmatpush2.msra.mxu0 0.0
    %7020 = vmatprep.subr.mxu0 0.0
    %7021 = vmatpush2.msra.mxu0 0.0
    %7022 = vmatprep.subr.mxu0 0.0
    %7023 = vmatpush2.msra.mxu0 0.0
    %7024 = vmatprep.subr.mxu0 0.0
    %7025 = vmatpush2.msra.mxu0 0.0
    %7026 = vmatprep.subr.mxu0 0.0
    %7027 = vmatpush2.msra.mxu0 0.0
    %7028 = vmatprep.subr.mxu0 0.0
    %7029 = vmatpush2.msra.mxu0 0.0
    %7030 = vmatprep.subr.mxu0 0.0
    %7031 = vmatpush2.msra.mxu0 0.0
    %7032 = vmatprep.subr.mxu0 0.0
    %7033 = vmatpush2.msra.mxu0 0.0
    %7034 = vmatprep.mubr.f32.mxu0 0.0
    %7035 = vmatmul.mubr.f32.gmra.mxu0 %v6968
    %v7036 = vpop.f32.mrf.mxu0
    %v7037 = vadd.f32 0.0, %v7036
    %v7038 = vpop.f32.mrf.mxu0
    %7039 = vdwg.mxu0
    %7041 = vrot.lane.b32.xlu0 %v5999, 80
    %v7042 = vpop.permute.xlu0 %7041
    %v7043 = vsel %vm285, %v7042, 0
    %7045 = vmatprep.subr.mxu0 0.0
    %7046 = vmatpush1.msra.mxu0 0.0
    %7047 = vmatprep.subr.mxu0 0.0
    %7048 = vmatpush1.msra.mxu0 0.0
    %7049 = vmatprep.subr.mxu0 0.0
    %7050 = vmatpush1.msra.mxu0 0.0
    %7051 = vmatprep.subr.mxu0 0.0
    %7052 = vmatpush1.msra.mxu0 0.0
    %7053 = vmatprep.subr.mxu0 0.0
    %7054 = vmatpush1.msra.mxu0 0.0
    %7055 = vmatprep.subr.mxu0 0.0
    %7056 = vmatpush1.msra.mxu0 0.0
    %7057 = vmatprep.subr.mxu0 0.0
    %7058 = vmatpush1.msra.mxu0 0.0
    %7059 = vmatprep.subr.mxu0 0.0
    %7060 = vmatpush1.msra.mxu0 0.0
    %7061 = vmatprep.subr.mxu0 0.0
    %7062 = vmatpush1.msra.mxu0 0.0
    %7063 = vmatprep.subr.mxu0 0.0
    %7064 = vmatpush1.msra.mxu0 0.0
    %7065 = vmatprep.subr.mxu0 0.0
    %7066 = vmatpush1.msra.mxu0 0.0
    %7067 = vmatprep.subr.mxu0 0.0
    %7068 = vmatpush1.msra.mxu0 0.0
    %7069 = vmatprep.subr.mxu0 0.0
    %7070 = vmatpush1.msra.mxu0 0.0
    %7071 = vmatprep.subr.mxu0 0.0
    %7072 = vmatpush1.msra.mxu0 0.0
    %7073 = vmatprep.subr.mxu0 0.0
    %7074 = vmatpush1.msra.mxu0 %v2890
    %7075 = vmatprep.subr.mxu0 0.0
    %7076 = vmatpush1.msra.mxu0 %v2889
    %7077 = vmatprep.subr.mxu0 0.0
    %7078 = vmatpush2.msra.mxu0 0.0
    %7079 = vmatprep.subr.mxu0 0.0
    %7080 = vmatpush2.msra.mxu0 0.0
    %7081 = vmatprep.subr.mxu0 0.0
    %7082 = vmatpush2.msra.mxu0 0.0
    %7083 = vmatprep.subr.mxu0 0.0
    %7084 = vmatpush2.msra.mxu0 0.0
    %7085 = vmatprep.subr.mxu0 0.0
    %7086 = vmatpush2.msra.mxu0 0.0
    %7087 = vmatprep.subr.mxu0 0.0
    %7088 = vmatpush2.msra.mxu0 0.0
    %7089 = vmatprep.subr.mxu0 0.0
    %7090 = vmatpush2.msra.mxu0 0.0
    %7091 = vmatprep.subr.mxu0 0.0
    %7092 = vmatpush2.msra.mxu0 0.0
    %7093 = vmatprep.subr.mxu0 0.0
    %7094 = vmatpush2.msra.mxu0 0.0
    %7095 = vmatprep.subr.mxu0 0.0
    %7096 = vmatpush2.msra.mxu0 0.0
    %7097 = vmatprep.subr.mxu0 0.0
    %7098 = vmatpush2.msra.mxu0 0.0
    %7099 = vmatprep.subr.mxu0 0.0
    %7100 = vmatpush2.msra.mxu0 0.0
    %7101 = vmatprep.subr.mxu0 0.0
    %7102 = vmatpush2.msra.mxu0 0.0
    %7103 = vmatprep.subr.mxu0 0.0
    %7104 = vmatpush2.msra.mxu0 0.0
    %7105 = vmatprep.subr.mxu0 0.0
    %7106 = vmatpush2.msra.mxu0 0.0
    %7107 = vmatprep.subr.mxu0 0.0
    %7108 = vmatpush2.msra.mxu0 0.0
    %7109 = vmatprep.mubr.f32.mxu0 0.0
    %7110 = vmatmul.mubr.f32.gmra.mxu0 %v7043
    %v7111 = vpop.f32.mrf.mxu0
    %v7112 = vadd.f32 %v7037, %v7111
    %v7113 = vpop.f32.mrf.mxu0
    %7114 = vdwg.mxu0
    %v7115 = vadd.f32 %v7112, %v5008
    %v7116 = vsel %vm5010, %v7115, -inf
    %7117 = vmax.xlane.f32.xlu0 %v7116
    %v7118 = vpop.xlane.xlu0 %7117
    %vm7119 = vcmp.eq.f32.partialorder %v7115, %v7118
    %v7120 = vsel %vm7119, %v31, 9
    %v7121 = vsel %vm5010, %v7120, 2147483647
    %v7122 = vand.u32 %v7121, 65535
    %v7123 = vshra.s32 %v7121, 16
    %v7124 = vcvt.s32.f32 %v7122
    %v7125 = vcvt.s32.f32 %v7123
    %7126 = vmin.xlane.f32.xlu0 %v7125
    %v7127 = vpop.xlane.xlu0 %7126
    %vm7128 = vcmp.eq.f32.partialorder %v7125, %v7127
    %v7129 = vsel %vm7128, %v7124, inf
    %7130 = vmin.xlane.f32.xlu0 %v7129
    %v7131 = vpop.xlane.xlu0 %7130
    %v7132 = vcvt.f32.s32 %v7131
    %v7133 = vcvt.f32.s32 %v7127
    %v7134 = vshll.u32 %v7133, 16
    %v7135 = vadd.s32 %v7134, %v7132
    %7136 = vst.msk [vmem:[%s3 + $0x8] sm:$0xff] %vm5031, %v7135
    // Predicated region
    $region18: #{tpu_custom_call.1} parent=1 // pred_check
      _
    $region19: #{tpu_custom_call.1} parent=1 // pred_check_branch
      %7138 = sbr.rel (0) target = $region21
    $region20: #{tpu_custom_call.1} parent=1 // pred_region
      _
    $region21: #{tpu_custom_call.1} parent=1 // pred_fallthru
      _
    // Predicated region
    $region22: #{tpu_custom_call.1} parent=1 // pred_check
      _
    $region23: #{tpu_custom_call.1} parent=1 // pred_check_branch
      %7140 = sbr.rel (0) target = $region25
    $region24: #{tpu_custom_call.1} parent=1 // pred_region
      _
    $region25: #{tpu_custom_call.1} parent=1 // pred_fallthru
      _
    %7141 = vsyncpa [#allocation3], 1

</llo_original>
